<compile_context>
chip_gen: v5e
topology: v5e:2x2
jax: 0.10.0
libtpu: 0.0.40
codegen_flags: <defaults>
</compile_context>

<pallas_src>
import jax
import jax.numpy as jnp
from jax import lax
from jax.experimental import pallas as pl
from jax.experimental.pallas import tpu as pltpu
import numpy as np


def _flowhead_kernel(x_ref, w1_ref, b1_ref, w2_ref, b2_ref, o_ref,
                     xpad_ref, hpad_ref):
    # x_ref   : (1, H, W, Cin)        unpadded bf16 NHWC tile for this batch elem
    # w1_ref  : (9*Cin, Chid)         conv1 weights, rows ordered (tap, ci), bf16
    # b1_ref  : (1, Chid)             f32
    # w2_ref  : (9*Chid, Cout)        conv2 weights, rows ordered (tap, ch), bf16
    # b2_ref  : (1, Cout)             f32
    # o_ref   : (1, H, W, Cout)       f32 output
    # xpad_ref: (H+2, W+2, Cin)  bf16 zero-bordered input scratch
    # hpad_ref: (H+2, W+2, Chid) bf16 zero-bordered hidden scratch
    H = o_ref.shape[1]
    W = o_ref.shape[2]
    cin = x_ref.shape[3]
    chid = w1_ref.shape[1]
    cout = o_ref.shape[3]

    # ---- fused padding=1: zero the 1-px border (thin slabs), write interior --
    xpad_ref[0:1, :, :] = jnp.zeros((1, W + 2, cin), dtype=xpad_ref.dtype)
    xpad_ref[H + 1:H + 2, :, :] = jnp.zeros((1, W + 2, cin), dtype=xpad_ref.dtype)
    xpad_ref[:, 0:1, :] = jnp.zeros((H + 2, 1, cin), dtype=xpad_ref.dtype)
    xpad_ref[:, W + 1:W + 2, :] = jnp.zeros((H + 2, 1, cin), dtype=xpad_ref.dtype)
    xpad_ref[1:1 + H, 1:1 + W, :] = x_ref[0]

    # ---- conv1: single K-stacked matmul over im2col (H*W, 9*Cin) ------------
    # 3 sublane-shifted loads (one per kx); ky handled by cheap leading-dim slices.
    xk = [xpad_ref[:, kx:kx + W, :] for kx in range(3)]          # (H+2, W, Cin)
    cols1 = [xk[kx][ky:ky + H] for ky in range(3) for kx in range(3)]  # t = ky*3+kx
    lhs1 = jnp.concatenate(cols1, axis=-1).reshape(H * W, 9 * cin)     # bf16
    acc1 = jnp.dot(lhs1, w1_ref[...], preferred_element_type=jnp.float32)
    hid = jnp.maximum(acc1 + b1_ref[...], 0.0).astype(jnp.bfloat16)    # (H*W, Chid)

    # ---- conv2: pad hidden map, then one K-stacked matmul (H*W, 9*Chid) ------
    hpad_ref[0:1, :, :] = jnp.zeros((1, W + 2, chid), dtype=hpad_ref.dtype)
    hpad_ref[H + 1:H + 2, :, :] = jnp.zeros((1, W + 2, chid), dtype=hpad_ref.dtype)
    hpad_ref[:, 0:1, :] = jnp.zeros((H + 2, 1, chid), dtype=hpad_ref.dtype)
    hpad_ref[:, W + 1:W + 2, :] = jnp.zeros((H + 2, 1, chid), dtype=hpad_ref.dtype)
    hpad_ref[1:1 + H, 1:1 + W, :] = hid.reshape(H, W, chid)

    hk = [hpad_ref[:, kx:kx + W, :] for kx in range(3)]          # (H+2, W, Chid)
    cols2 = [hk[kx][ky:ky + H] for ky in range(3) for kx in range(3)]
    lhs2 = jnp.concatenate(cols2, axis=-1).reshape(H * W, 9 * chid)    # bf16
    out2 = jnp.dot(lhs2, w2_ref[...], preferred_element_type=jnp.float32)
    out2 = out2 + b2_ref[...]                                          # (H*W, Cout) f32

    o_ref[0] = out2.reshape(H, W, cout).astype(o_ref.dtype)


def flowhead_pallas(x_nchw, w1_oihw, b1, w2_oihw, b2):
    """FlowHead forward. x_nchw: (N, Cin, H, W) -> (N, Cout, H, W) float32."""
    N, Cin, H, W = x_nchw.shape
    Chid = w1_oihw.shape[0]
    Cout = w2_oihw.shape[0]

    # NCHW -> NHWC, bf16. No wrapper-side pad: padding is fused into the kernel.
    x_nhwc = jnp.transpose(x_nchw, (0, 2, 3, 1)).astype(jnp.bfloat16)

    # conv1: OIHW -> (9*Cin, Chid), row index = (ky*3+kx)*Cin + ci, bf16
    w1_k = jnp.transpose(w1_oihw, (2, 3, 1, 0)).reshape(9 * Cin, Chid)
    w1_k = w1_k.astype(jnp.bfloat16)
    # conv2: OIHW -> (9*Chid, Cout), row index = (ky*3+kx)*Chid + ch, bf16
    w2_k = jnp.transpose(w2_oihw, (2, 3, 1, 0)).reshape(9 * Chid, Cout)
    w2_k = w2_k.astype(jnp.bfloat16)
    b1_k = b1.reshape(1, Chid).astype(jnp.float32)
    b2_k = b2.reshape(1, Cout).astype(jnp.float32)

    # Right-size the VMEM budget from the actual per-step footprint (+2x headroom),
    # clamped to stay portable to v7x's 64 MiB physical VMEM.
    bf = 2  # bf16 bytes
    per_step = (
        2 * H * W * Cin * bf                                   # input block x2 bufs
        + 2 * H * W * Cout * 4                                 # output block x2 bufs
        + 2 * ((9 * Cin * Chid + 9 * Chid * Cout) * bf
               + (Chid + Cout) * 4)                            # weights/biases x2 bufs
        + (H + 2) * (W + 2) * (Cin + Chid) * bf                # padded scratches
        + H * W * 9 * (Cin + Chid) * bf                        # im2col slabs
        + H * W * Chid * (4 + bf)                              # conv1 f32 acc + bf16 hid
        + H * W * Cout * 4                                     # conv2 f32 result
    )
    vmem_limit = int(min(max(2 * per_step, 32 * 1024 * 1024), 96 * 1024 * 1024))

    out_nhwc = pl.pallas_call(
        _flowhead_kernel,
        out_shape=jax.ShapeDtypeStruct((N, H, W, Cout), jnp.float32),
        grid_spec=pltpu.PrefetchScalarGridSpec(
            num_scalar_prefetch=0,
            grid=(N,),
            in_specs=[
                pl.BlockSpec((1, H, W, Cin), lambda n: (n, 0, 0, 0)),
                pl.BlockSpec((9 * Cin, Chid), lambda n: (0, 0)),
                pl.BlockSpec((1, Chid), lambda n: (0, 0)),
                pl.BlockSpec((9 * Chid, Cout), lambda n: (0, 0)),
                pl.BlockSpec((1, Cout), lambda n: (0, 0)),
            ],
            out_specs=pl.BlockSpec((1, H, W, Cout), lambda n: (n, 0, 0, 0)),
            scratch_shapes=[
                pltpu.VMEM((H + 2, W + 2, Cin), jnp.bfloat16),
                pltpu.VMEM((H + 2, W + 2, Chid), jnp.bfloat16),
            ],
        ),
        compiler_params=pltpu.CompilerParams(
            dimension_semantics=("parallel",),
            vmem_limit_bytes=vmem_limit,
        ),
    )(x_nhwc, w1_k, b1_k, w2_k, b2_k)

    # NHWC -> NCHW to match the PyTorch module's output convention
    # (output is tiny: H*W*Cout f32 per image, so this transpose is cheap).
    return jnp.transpose(out_nhwc, (0, 3, 1, 2))


def flowhead_reference(x_nchw, w1_oihw, b1, w2_oihw, b2):
    """Pure-JAX f32 reference mirroring the PyTorch forward (NCHW convs)."""
    dn = ("NCHW", "OIHW", "NCHW")
    y = lax.conv_general_dilated(
        x_nchw, w1_oihw, window_strides=(1, 1), padding="SAME",
        dimension_numbers=dn) + b1[None, :, None, None]
    y = jnp.maximum(y, 0.0)
    y = lax.conv_general_dilated(
        y, w2_oihw, window_strides=(1, 1), padding="SAME",
        dimension_numbers=dn) + b2[None, :, None, None]
    return y


if __name__ == "__main__":
    # Module-default channel widths (input_dim=128, hidden_dim=256, out_dim=2);
    # small batch / spatial dims keep the test tiny while staying 128-lane aligned.
    N, Cin, H, W = 2, 128, 16, 16
    Chid, Cout = 256, 2

    key = jax.random.PRNGKey(0)
    kx_, k1, k2, k3, k4 = jax.random.split(key, 5)
    x = jax.random.normal(kx_, (N, Cin, H, W), dtype=jnp.float32)
    w1 = 0.05 * jax.random.normal(k1, (Chid, Cin, 3, 3), dtype=jnp.float32)
    b1 = 0.1 * jax.random.normal(k2, (Chid,), dtype=jnp.float32)
    w2 = 0.05 * jax.random.normal(k3, (Cout, Chid, 3, 3), dtype=jnp.float32)
    b2 = 0.1 * jax.random.normal(k4, (Cout,), dtype=jnp.float32)

    out = jax.block_until_ready(flowhead_pallas(x, w1, b1, w2, b2))
    ref = jax.block_until_ready(flowhead_reference(x, w1, b1, w2, b2))

    # bf16 operands with contraction depth up to 9*Chid=2304 (f32 accumulation)
    # => ~0.3-1% relative error vs the f32 reference; scale atol to output RMS.
    ref_np = np.asarray(ref)
    atol = 3e-2 * float(np.sqrt(np.mean(ref_np ** 2))) + 1e-3
    np.testing.assert_allclose(np.asarray(out), ref_np, rtol=2e-2, atol=atol)
    print("KERNEL_OK")
</pallas_src>

<mosaic_0001>
module attributes {stable_mosaic.version = 11 : i64} {
  func.func @_flowhead_kernel(%arg0: i32, %arg1: memref<1x16x16x128xbf16, #tpu.memory_space<vmem>>, %arg2: memref<1152x256xbf16, #tpu.memory_space<vmem>>, %arg3: memref<1x256xf32, #tpu.memory_space<vmem>>, %arg4: memref<2304x2xbf16, #tpu.memory_space<vmem>>, %arg5: memref<1x2xf32, #tpu.memory_space<vmem>>, %arg6: memref<1x16x16x2xf32, #tpu.memory_space<vmem>>, %arg7: memref<18x18x128xbf16, #tpu.memory_space<vmem>>, %arg8: memref<18x18x256xbf16, #tpu.memory_space<vmem>>) attributes {dimension_semantics = [#tpu.dimension_semantics<parallel>], iteration_bounds = array<i64: 2>, scalar_prefetch = 0 : i64, scratch_operands = 2 : i64, tpu.core_type = #tpu.core_type<tc>, window_params = [{transform_indices = @transform_0, window_bounds = array<i64: 1, 16, 16, 128>}, {pipeline_mode = #tpu.pipeline_mode<synchronous>, transform_indices = @transform_1, window_bounds = array<i64: 1152, 256>}, {pipeline_mode = #tpu.pipeline_mode<synchronous>, transform_indices = @transform_2, window_bounds = array<i64: 1, 256>}, {pipeline_mode = #tpu.pipeline_mode<synchronous>, transform_indices = @transform_3, window_bounds = array<i64: 2304, 2>}, {pipeline_mode = #tpu.pipeline_mode<synchronous>, transform_indices = @transform_4, window_bounds = array<i64: 1, 2>}, {transform_indices = @transform_5, window_bounds = array<i64: 1, 16, 16, 2>}]} {
    %cst = arith.constant 0.000000e+00 : bf16
    %0 = vector.broadcast %cst : bf16 to vector<1x18x128xbf16>
    %c0 = arith.constant 0 : index
    %c0_0 = arith.constant 0 : index
    %c0_1 = arith.constant 0 : index
    %1 = vector.load %arg7[%c0, %c0_0, %c0_1] : memref<18x18x128xbf16, #tpu.memory_space<vmem>>, vector<1x18x128xbf16>
    tpu.vector_store %arg7[%c0, %c0_0, %c0_1], %0 {strides = array<i32>} : memref<18x18x128xbf16, #tpu.memory_space<vmem>>, vector<1x18x128xbf16>,
    %cst_2 = arith.constant 0.000000e+00 : bf16
    %2 = vector.broadcast %cst_2 : bf16 to vector<1x18x128xbf16>
    %c17 = arith.constant 17 : index
    %c0_3 = arith.constant 0 : index
    %c0_4 = arith.constant 0 : index
    %3 = vector.load %arg7[%c17, %c0_3, %c0_4] : memref<18x18x128xbf16, #tpu.memory_space<vmem>>, vector<1x18x128xbf16>
    tpu.vector_store %arg7[%c17, %c0_3, %c0_4], %2 {strides = array<i32>} : memref<18x18x128xbf16, #tpu.memory_space<vmem>>, vector<1x18x128xbf16>,
    %cst_5 = arith.constant 0.000000e+00 : bf16
    %4 = vector.broadcast %cst_5 : bf16 to vector<18x1x128xbf16>
    %c0_6 = arith.constant 0 : index
    %c0_7 = arith.constant 0 : index
    %c0_8 = arith.constant 0 : index
    %5 = vector.load %arg7[%c0_6, %c0_7, %c0_8] : memref<18x18x128xbf16, #tpu.memory_space<vmem>>, vector<18x1x128xbf16>
    tpu.vector_store %arg7[%c0_6, %c0_7, %c0_8], %4 {strides = array<i32>} : memref<18x18x128xbf16, #tpu.memory_space<vmem>>, vector<18x1x128xbf16>,
    %cst_9 = arith.constant 0.000000e+00 : bf16
    %6 = vector.broadcast %cst_9 : bf16 to vector<18x1x128xbf16>
    %c0_10 = arith.constant 0 : index
    %c17_11 = arith.constant 17 : index
    %c0_12 = arith.constant 0 : index
    %7 = vector.load %arg7[%c0_10, %c17_11, %c0_12] : memref<18x18x128xbf16, #tpu.memory_space<vmem>>, vector<18x1x128xbf16>
    tpu.vector_store %arg7[%c0_10, %c17_11, %c0_12], %6 {strides = array<i32>} : memref<18x18x128xbf16, #tpu.memory_space<vmem>>, vector<18x1x128xbf16>,
    %c0_13 = arith.constant 0 : index
    %c0_14 = arith.constant 0 : index
    %c0_15 = arith.constant 0 : index
    %c0_16 = arith.constant 0 : index
    %8 = vector.load %arg1[%c0_13, %c0_14, %c0_15, %c0_16] : memref<1x16x16x128xbf16, #tpu.memory_space<vmem>>, vector<1x16x16x128xbf16>
    %9 = vector.shape_cast %8 : vector<1x16x16x128xbf16> to vector<16x16x128xbf16>
    %c1 = arith.constant 1 : index
    %c1_17 = arith.constant 1 : index
    %c0_18 = arith.constant 0 : index
    %10 = vector.load %arg7[%c1, %c1_17, %c0_18] : memref<18x18x128xbf16, #tpu.memory_space<vmem>>, vector<16x16x128xbf16>
    tpu.vector_store %arg7[%c1, %c1_17, %c0_18], %9 {strides = array<i32>} : memref<18x18x128xbf16, #tpu.memory_space<vmem>>, vector<16x16x128xbf16>,
    %c0_19 = arith.constant 0 : index
    %c0_20 = arith.constant 0 : index
    %c0_21 = arith.constant 0 : index
    %11 = vector.load %arg7[%c0_19, %c0_20, %c0_21] : memref<18x18x128xbf16, #tpu.memory_space<vmem>>, vector<18x16x128xbf16>
    %c0_22 = arith.constant 0 : index
    %c1_23 = arith.constant 1 : index
    %c0_24 = arith.constant 0 : index
    %12 = vector.load %arg7[%c0_22, %c1_23, %c0_24] : memref<18x18x128xbf16, #tpu.memory_space<vmem>>, vector<18x16x128xbf16>
    %c0_25 = arith.constant 0 : index
    %c2 = arith.constant 2 : index
    %c0_26 = arith.constant 0 : index
    %13 = vector.load %arg7[%c0_25, %c2, %c0_26] : memref<18x18x128xbf16, #tpu.memory_space<vmem>>, vector<18x16x128xbf16>
    %14 = vector.extract_strided_slice %11 {offsets = [0, 0, 0], sizes = [16, 16, 128], strides = [1, 1, 1]} : vector<18x16x128xbf16> to vector<16x16x128xbf16>
    %15 = vector.extract_strided_slice %12 {offsets = [0, 0, 0], sizes = [16, 16, 128], strides = [1, 1, 1]} : vector<18x16x128xbf16> to vector<16x16x128xbf16>
    %16 = vector.extract_strided_slice %13 {offsets = [0, 0, 0], sizes = [16, 16, 128], strides = [1, 1, 1]} : vector<18x16x128xbf16> to vector<16x16x128xbf16>
    %17 = vector.extract_strided_slice %11 {offsets = [1, 0, 0], sizes = [16, 16, 128], strides = [1, 1, 1]} : vector<18x16x128xbf16> to vector<16x16x128xbf16>
    %18 = vector.extract_strided_slice %12 {offsets = [1, 0, 0], sizes = [16, 16, 128], strides = [1, 1, 1]} : vector<18x16x128xbf16> to vector<16x16x128xbf16>
    %19 = vector.extract_strided_slice %13 {offsets = [1, 0, 0], sizes = [16, 16, 128], strides = [1, 1, 1]} : vector<18x16x128xbf16> to vector<16x16x128xbf16>
    %20 = vector.extract_strided_slice %11 {offsets = [2, 0, 0], sizes = [16, 16, 128], strides = [1, 1, 1]} : vector<18x16x128xbf16> to vector<16x16x128xbf16>
    %21 = vector.extract_strided_slice %12 {offsets = [2, 0, 0], sizes = [16, 16, 128], strides = [1, 1, 1]} : vector<18x16x128xbf16> to vector<16x16x128xbf16>
    %22 = vector.extract_strided_slice %13 {offsets = [2, 0, 0], sizes = [16, 16, 128], strides = [1, 1, 1]} : vector<18x16x128xbf16> to vector<16x16x128xbf16>
    %23 = tpu.concatenate %14, %15, %16, %17, %18, %19, %20, %21, %22 in 2 : vector<16x16x128xbf16>, vector<16x16x128xbf16>, vector<16x16x128xbf16>, vector<16x16x128xbf16>, vector<16x16x128xbf16>, vector<16x16x128xbf16>, vector<16x16x128xbf16>, vector<16x16x128xbf16>, vector<16x16x128xbf16> -> vector<16x16x1152xbf16>
    %24 = vector.shape_cast %23 : vector<16x16x1152xbf16> to vector<256x1152xbf16>
    %c0_27 = arith.constant 0 : index
    %c0_28 = arith.constant 0 : index
    %25 = vector.load %arg2[%c0_27, %c0_28] : memref<1152x256xbf16, #tpu.memory_space<vmem>>, vector<1152x256xbf16>
    %cst_29 = arith.constant dense<0.000000e+00> : vector<256x256xf32>
    %26 = tpu.matmul %24, %25, %cst_29 {dimension_numbers = #tpu.dot_dimension_numbers<[1], [0], [0], [1], [0, 0, 1, 1], [], []>} : vector<256x1152xbf16>, vector<1152x256xbf16>, vector<256x256xf32> -> vector<256x256xf32>
    %c0_30 = arith.constant 0 : index
    %c0_31 = arith.constant 0 : index
    %27 = vector.load %arg3[%c0_30, %c0_31] : memref<1x256xf32, #tpu.memory_space<vmem>>, vector<1x256xf32>
    %28 = vector.broadcast %27 : vector<1x256xf32> to vector<256x256xf32>
    %29 = arith.addf %26, %28 : vector<256x256xf32>
    %cst_32 = arith.constant 0.000000e+00 : f32
    %30 = vector.broadcast %cst_32 : f32 to vector<256x256xf32>
    %31 = arith.maximumf %29, %30 : vector<256x256xf32>
    %32 = arith.truncf %31 : vector<256x256xf32> to vector<256x256xbf16>
    %cst_33 = arith.constant 0.000000e+00 : bf16
    %33 = vector.broadcast %cst_33 : bf16 to vector<1x18x256xbf16>
    %c0_34 = arith.constant 0 : index
    %c0_35 = arith.constant 0 : index
    %c0_36 = arith.constant 0 : index
    %34 = vector.load %arg8[%c0_34, %c0_35, %c0_36] : memref<18x18x256xbf16, #tpu.memory_space<vmem>>, vector<1x18x256xbf16>
    tpu.vector_store %arg8[%c0_34, %c0_35, %c0_36], %33 {strides = array<i32>} : memref<18x18x256xbf16, #tpu.memory_space<vmem>>, vector<1x18x256xbf16>,
    %cst_37 = arith.constant 0.000000e+00 : bf16
    %35 = vector.broadcast %cst_37 : bf16 to vector<1x18x256xbf16>
    %c17_38 = arith.constant 17 : index
    %c0_39 = arith.constant 0 : index
    %c0_40 = arith.constant 0 : index
    %36 = vector.load %arg8[%c17_38, %c0_39, %c0_40] : memref<18x18x256xbf16, #tpu.memory_space<vmem>>, vector<1x18x256xbf16>
    tpu.vector_store %arg8[%c17_38, %c0_39, %c0_40], %35 {strides = array<i32>} : memref<18x18x256xbf16, #tpu.memory_space<vmem>>, vector<1x18x256xbf16>,
    %cst_41 = arith.constant 0.000000e+00 : bf16
    %37 = vector.broadcast %cst_41 : bf16 to vector<18x1x256xbf16>
    %c0_42 = arith.constant 0 : index
    %c0_43 = arith.constant 0 : index
    %c0_44 = arith.constant 0 : index
    %38 = vector.load %arg8[%c0_42, %c0_43, %c0_44] : memref<18x18x256xbf16, #tpu.memory_space<vmem>>, vector<18x1x256xbf16>
    tpu.vector_store %arg8[%c0_42, %c0_43, %c0_44], %37 {strides = array<i32>} : memref<18x18x256xbf16, #tpu.memory_space<vmem>>, vector<18x1x256xbf16>,
    %cst_45 = arith.constant 0.000000e+00 : bf16
    %39 = vector.broadcast %cst_45 : bf16 to vector<18x1x256xbf16>
    %c0_46 = arith.constant 0 : index
    %c17_47 = arith.constant 17 : index
    %c0_48 = arith.constant 0 : index
    %40 = vector.load %arg8[%c0_46, %c17_47, %c0_48] : memref<18x18x256xbf16, #tpu.memory_space<vmem>>, vector<18x1x256xbf16>
    tpu.vector_store %arg8[%c0_46, %c17_47, %c0_48], %39 {strides = array<i32>} : memref<18x18x256xbf16, #tpu.memory_space<vmem>>, vector<18x1x256xbf16>,
    %41 = vector.shape_cast %32 : vector<256x256xbf16> to vector<16x16x256xbf16>
    %c1_49 = arith.constant 1 : index
    %c1_50 = arith.constant 1 : index
    %c0_51 = arith.constant 0 : index
    %42 = vector.load %arg8[%c1_49, %c1_50, %c0_51] : memref<18x18x256xbf16, #tpu.memory_space<vmem>>, vector<16x16x256xbf16>
    tpu.vector_store %arg8[%c1_49, %c1_50, %c0_51], %41 {strides = array<i32>} : memref<18x18x256xbf16, #tpu.memory_space<vmem>>, vector<16x16x256xbf16>,
    %c0_52 = arith.constant 0 : index
    %c0_53 = arith.constant 0 : index
    %c0_54 = arith.constant 0 : index
    %43 = vector.load %arg8[%c0_52, %c0_53, %c0_54] : memref<18x18x256xbf16, #tpu.memory_space<vmem>>, vector<18x16x256xbf16>
    %c0_55 = arith.constant 0 : index
    %c1_56 = arith.constant 1 : index
    %c0_57 = arith.constant 0 : index
    %44 = vector.load %arg8[%c0_55, %c1_56, %c0_57] : memref<18x18x256xbf16, #tpu.memory_space<vmem>>, vector<18x16x256xbf16>
    %c0_58 = arith.constant 0 : index
    %c2_59 = arith.constant 2 : index
    %c0_60 = arith.constant 0 : index
    %45 = vector.load %arg8[%c0_58, %c2_59, %c0_60] : memref<18x18x256xbf16, #tpu.memory_space<vmem>>, vector<18x16x256xbf16>
    %46 = vector.extract_strided_slice %43 {offsets = [0, 0, 0], sizes = [16, 16, 256], strides = [1, 1, 1]} : vector<18x16x256xbf16> to vector<16x16x256xbf16>
    %47 = vector.extract_strided_slice %44 {offsets = [0, 0, 0], sizes = [16, 16, 256], strides = [1, 1, 1]} : vector<18x16x256xbf16> to vector<16x16x256xbf16>
    %48 = vector.extract_strided_slice %45 {offsets = [0, 0, 0], sizes = [16, 16, 256], strides = [1, 1, 1]} : vector<18x16x256xbf16> to vector<16x16x256xbf16>
    %49 = vector.extract_strided_slice %43 {offsets = [1, 0, 0], sizes = [16, 16, 256], strides = [1, 1, 1]} : vector<18x16x256xbf16> to vector<16x16x256xbf16>
    %50 = vector.extract_strided_slice %44 {offsets = [1, 0, 0], sizes = [16, 16, 256], strides = [1, 1, 1]} : vector<18x16x256xbf16> to vector<16x16x256xbf16>
    %51 = vector.extract_strided_slice %45 {offsets = [1, 0, 0], sizes = [16, 16, 256], strides = [1, 1, 1]} : vector<18x16x256xbf16> to vector<16x16x256xbf16>
    %52 = vector.extract_strided_slice %43 {offsets = [2, 0, 0], sizes = [16, 16, 256], strides = [1, 1, 1]} : vector<18x16x256xbf16> to vector<16x16x256xbf16>
    %53 = vector.extract_strided_slice %44 {offsets = [2, 0, 0], sizes = [16, 16, 256], strides = [1, 1, 1]} : vector<18x16x256xbf16> to vector<16x16x256xbf16>
    %54 = vector.extract_strided_slice %45 {offsets = [2, 0, 0], sizes = [16, 16, 256], strides = [1, 1, 1]} : vector<18x16x256xbf16> to vector<16x16x256xbf16>
    %55 = tpu.concatenate %46, %47, %48, %49, %50, %51, %52, %53, %54 in 2 : vector<16x16x256xbf16>, vector<16x16x256xbf16>, vector<16x16x256xbf16>, vector<16x16x256xbf16>, vector<16x16x256xbf16>, vector<16x16x256xbf16>, vector<16x16x256xbf16>, vector<16x16x256xbf16>, vector<16x16x256xbf16> -> vector<16x16x2304xbf16>
    %56 = vector.shape_cast %55 : vector<16x16x2304xbf16> to vector<256x2304xbf16>
    %c0_61 = arith.constant 0 : index
    %c0_62 = arith.constant 0 : index
    %57 = vector.load %arg4[%c0_61, %c0_62] : memref<2304x2xbf16, #tpu.memory_space<vmem>>, vector<2304x2xbf16>
    %cst_63 = arith.constant dense<0.000000e+00> : vector<256x2xf32>
    %58 = tpu.matmul %56, %57, %cst_63 {dimension_numbers = #tpu.dot_dimension_numbers<[1], [0], [0], [1], [0, 0, 1, 1], [], []>} : vector<256x2304xbf16>, vector<2304x2xbf16>, vector<256x2xf32> -> vector<256x2xf32>
    %c0_64 = arith.constant 0 : index
    %c0_65 = arith.constant 0 : index
    %59 = vector.load %arg5[%c0_64, %c0_65] : memref<1x2xf32, #tpu.memory_space<vmem>>, vector<1x2xf32>
    %60 = vector.broadcast %59 : vector<1x2xf32> to vector<256x2xf32>
    %61 = arith.addf %58, %60 : vector<256x2xf32>
    %62 = vector.shape_cast %61 : vector<256x2xf32> to vector<16x16x2xf32>
    %c0_66 = arith.constant 0 : index
    %c0_67 = arith.constant 0 : index
    %c0_68 = arith.constant 0 : index
    %c0_69 = arith.constant 0 : index
    %63 = vector.load %arg6[%c0_66, %c0_67, %c0_68, %c0_69] : memref<1x16x16x2xf32, #tpu.memory_space<vmem>>, vector<1x16x16x2xf32>
    %64 = vector.shape_cast %63 : vector<1x16x16x2xf32> to vector<16x16x2xf32>
    %65 = vector.shape_cast %62 : vector<16x16x2xf32> to vector<1x16x16x2xf32>
    tpu.vector_store %arg6[%c0_66, %c0_67, %c0_68, %c0_69], %65 {strides = array<i32>} : memref<1x16x16x2xf32, #tpu.memory_space<vmem>>, vector<1x16x16x2xf32>,
    return
  }
  func.func @transform_0(%arg0: i32) -> (i32, i32, i32, i32) {
    %c0_i32 = arith.constant 0 : i32
    %c0_i32_0 = arith.constant 0 : i32
    %c0_i32_1 = arith.constant 0 : i32
    %c0_i32_2 = arith.constant 0 : i32
    return %arg0, %c0_i32, %c0_i32_0, %c0_i32_1 : i32, i32, i32, i32
  }
  func.func @transform_1(%arg0: i32) -> (i32, i32) {
    %c0_i32 = arith.constant 0 : i32
    %c0_i32_0 = arith.constant 0 : i32
    %c0_i32_1 = arith.constant 0 : i32
    return %c0_i32, %c0_i32_0 : i32, i32
  }
  func.func @transform_2(%arg0: i32) -> (i32, i32) {
    %c0_i32 = arith.constant 0 : i32
    %c0_i32_0 = arith.constant 0 : i32
    %c0_i32_1 = arith.constant 0 : i32
    return %c0_i32, %c0_i32_0 : i32, i32
  }
  func.func @transform_3(%arg0: i32) -> (i32, i32) {
    %c0_i32 = arith.constant 0 : i32
    %c0_i32_0 = arith.constant 0 : i32
    %c0_i32_1 = arith.constant 0 : i32
    return %c0_i32, %c0_i32_0 : i32, i32
  }
  func.func @transform_4(%arg0: i32) -> (i32, i32) {
    %c0_i32 = arith.constant 0 : i32
    %c0_i32_0 = arith.constant 0 : i32
    %c0_i32_1 = arith.constant 0 : i32
    return %c0_i32, %c0_i32_0 : i32, i32
  }
  func.func @transform_5(%arg0: i32) -> (i32, i32, i32, i32) {
    %c0_i32 = arith.constant 0 : i32
    %c0_i32_0 = arith.constant 0 : i32
    %c0_i32_1 = arith.constant 0 : i32
    %c0_i32_2 = arith.constant 0 : i32
    return %arg0, %c0_i32, %c0_i32_0, %c0_i32_1 : i32, i32, i32, i32
  }
}

</mosaic_0001>

<llo_original>
// kernel: tpu_custom_call.1
$region0: #{tpu_custom_call.1}
  #allocation0 [shape = 'u32[]', space=smem, size = 0x4, offset = 0x4, fixed_abs, tag = 'smem constant byte address 0x4 - core index']
  #allocation1 [shape = 'u32[72,128]{1,0:T(1,128)}', space=vmem, size = 0x9000, scoped, tag = 'internal scratch']
  #allocation2 [shape = 'bf16[18,18,128]{2,1,0:T(8,128)(2,1)}', space=vmem, size = 0x1b000, scoped, tag = 'scratch operand']
  #allocation3 [shape = 'bf16[18,18,256]{2,1,0:T(8,128)(2,1)}', space=vmem, size = 0x36000, scoped, tag = 'scratch operand']
  %s0 = inlined_call_operand.hbm [shape: bf16[2,16,16,128], index: 0, kind: input, shape index: {}]
  %s1 = inlined_call_operand.vmem [shape: bf16[1152,256], index: 1, kind: input, shape index: {}]
  %s2 = inlined_call_operand.vmem [shape: f32[1,256], index: 2, kind: input, shape index: {}]
  %s3 = inlined_call_operand.vmem [shape: bf16[2304,2], index: 3, kind: input, shape index: {}]
  %s4 = inlined_call_operand.vmem [shape: f32[1,2], index: 4, kind: input, shape index: {}]
  %s5 = inlined_call_operand.vmem [shape: f32[2,16,16,2], index: 5, kind: output, shape index: {}]
  %s6 = sld [smem:[#allocation0]]
  $region57: #{tpu_custom_call.1} parent=0
    _
  %s8 = ssub.s32 1, %s6
  %s9 = scalar_select 0, %s8, %s6
  $region1: #{tpu_custom_call.1} parent=0
    #allocation4 [shape = 'u8[131072]{0}', space=vmem, size = 0x20000, scoped, tag = 'input window, operand 0']
    #allocation5 [shape = 's32[2]{0}', space=sflag, size = 0x8, scoped, tag = 'scoped memory for tpu_custom_call.1']
    %10 = vsyncpa [#allocation5], 0
    %s11 = scalar_lea.sflag [#allocation5], 1
    %12 = vsyncpa %s11, 0
    loop: start=0, step=1, limit=4
    $region2: #{tpu_custom_call.1} parent=1 // loop_pre_header
      _
    $region3: #{tpu_custom_call.1} parent=1 // loop_header
      %s14 = sphi 0, %s18
      %p15 = scmp.ge.s32.totalorder %s14, 4
      %s24 = sphi 0, %s26
      %s27 = sphi 0, %s24
      %s28 = sphi 0, %s27
      %s44 = sphi 0, %s28
      %s48 = sphi 0, %s48
      %s50 = sphi 0, %s48
      %s51 = sphi 0, %s50
      %s65 = sphi 0, %s51
      %s69 = sphi 0, %s69
      %s71 = sphi 0, %s69
      %s72 = sphi 0, %s71
      %s86 = sphi 0, %s72
      %s90 = sphi 0, %s90
      %s92 = sphi 0, %s90
      %s93 = sphi 0, %s92
      %s107 = sphi 0, %s93
      %s111 = sphi 0, %s111
      %s113 = sphi 0, %s111
      %s114 = sphi 0, %s113
      %s128 = sphi 0, %s114
      %s134 = sphi 0, %s136
      %s137 = sphi 0, %s134
      %s138 = sphi 0, %s137
      %s154 = sphi 0, %s138
    $region4: #{tpu_custom_call.1} parent=1 // loop_header_branch
      %17 = sbr.rel (%p15) target = $region8
    $region5: #{tpu_custom_call.1} parent=1 // loop_body
      %s19 = ssub.s32 %s14, 1
      %s20 = ssub.s32 %s14, 2
      %s21 = sadd.s32 %s14, 1
      %s22 = ssub.s32 %s14, %s21
      %p23 = scmp.eq.s32.totalorder %s22, 0
      %s25 = sadd.s32 %s24, 1
      %s26 = scalar_select %p23, %s24, %s25
      %p29 = pneg %p23
      %p30 = scmp.eq.s32.totalorder %s14, 1
      %p31 = por %p29, %p30
      %p32 = scmp.ne.s32.totalorder %s24, %s27
      %p33 = scmp.eq.s32.totalorder %s14, 0
      %p34 = por %p32, %p33
      %p35 = scmp.ne.s32.totalorder %s24, %s27
      %p36 = scmp.eq.s32.totalorder %s19, 1
      %p37 = por %p35, %p36
      %p38 = scmp.ne.s32.totalorder %s27, %s28
      %p39 = scmp.eq.s32.totalorder %s19, 0
      %p40 = por %p38, %p39
      %p41 = scmp.ne.s32.totalorder %s27, %s28
      %p42 = scmp.eq.s32.totalorder %s20, 1
      %p43 = por %p41, %p42
      %p45 = scmp.ne.s32.totalorder %s28, %s44
      %p46 = scmp.eq.s32.totalorder %s20, 0
      %p47 = por %p45, %p46
      %s49 = sadd.s32 %s48, 1
      %p52 = scmp.eq.s32.totalorder %s14, 1
      %p53 = scmp.ne.s32.totalorder %s48, %s50
      %p54 = scmp.eq.s32.totalorder %s14, 0
      %p55 = por %p53, %p54
      %p56 = scmp.ne.s32.totalorder %s48, %s50
      %p57 = scmp.eq.s32.totalorder %s19, 1
      %p58 = por %p56, %p57
      %p59 = scmp.ne.s32.totalorder %s50, %s51
      %p60 = scmp.eq.s32.totalorder %s19, 0
      %p61 = por %p59, %p60
      %p62 = scmp.ne.s32.totalorder %s50, %s51
      %p63 = scmp.eq.s32.totalorder %s20, 1
      %p64 = por %p62, %p63
      %p66 = scmp.ne.s32.totalorder %s51, %s65
      %p67 = scmp.eq.s32.totalorder %s20, 0
      %p68 = por %p66, %p67
      %s70 = sadd.s32 %s69, 1
      %p73 = scmp.eq.s32.totalorder %s14, 1
      %p74 = scmp.ne.s32.totalorder %s69, %s71
      %p75 = scmp.eq.s32.totalorder %s14, 0
      %p76 = por %p74, %p75
      %p77 = scmp.ne.s32.totalorder %s69, %s71
      %p78 = scmp.eq.s32.totalorder %s19, 1
      %p79 = por %p77, %p78
      %p80 = scmp.ne.s32.totalorder %s71, %s72
      %p81 = scmp.eq.s32.totalorder %s19, 0
      %p82 = por %p80, %p81
      %p83 = scmp.ne.s32.totalorder %s71, %s72
      %p84 = scmp.eq.s32.totalorder %s20, 1
      %p85 = por %p83, %p84
      %p87 = scmp.ne.s32.totalorder %s72, %s86
      %p88 = scmp.eq.s32.totalorder %s20, 0
      %p89 = por %p87, %p88
      %s91 = sadd.s32 %s90, 1
      %p94 = scmp.eq.s32.totalorder %s14, 1
      %p95 = scmp.ne.s32.totalorder %s90, %s92
      %p96 = scmp.eq.s32.totalorder %s14, 0
      %p97 = por %p95, %p96
      %p98 = scmp.ne.s32.totalorder %s90, %s92
      %p99 = scmp.eq.s32.totalorder %s19, 1
      %p100 = por %p98, %p99
      %p101 = scmp.ne.s32.totalorder %s92, %s93
      %p102 = scmp.eq.s32.totalorder %s19, 0
      %p103 = por %p101, %p102
      %p104 = scmp.ne.s32.totalorder %s92, %s93
      %p105 = scmp.eq.s32.totalorder %s20, 1
      %p106 = por %p104, %p105
      %p108 = scmp.ne.s32.totalorder %s93, %s107
      %p109 = scmp.eq.s32.totalorder %s20, 0
      %p110 = por %p108, %p109
      %s112 = sadd.s32 %s111, 1
      %p115 = scmp.eq.s32.totalorder %s14, 1
      %p116 = scmp.ne.s32.totalorder %s111, %s113
      %p117 = scmp.eq.s32.totalorder %s14, 0
      %p118 = por %p116, %p117
      %p119 = scmp.ne.s32.totalorder %s111, %s113
      %p120 = scmp.eq.s32.totalorder %s19, 1
      %p121 = por %p119, %p120
      %p122 = scmp.ne.s32.totalorder %s113, %s114
      %p123 = scmp.eq.s32.totalorder %s19, 0
      %p124 = por %p122, %p123
      %p125 = scmp.ne.s32.totalorder %s113, %s114
      %p126 = scmp.eq.s32.totalorder %s20, 1
      %p127 = por %p125, %p126
      %p129 = scmp.ne.s32.totalorder %s114, %s128
      %p130 = scmp.eq.s32.totalorder %s20, 0
      %p131 = por %p129, %p130
      %s132 = ssub.s32 %s14, %s21
      %p133 = scmp.eq.s32.totalorder %s132, 0
      %s135 = sadd.s32 %s134, 1
      %s136 = scalar_select %p133, %s134, %s135
      %p139 = pneg %p133
      %p140 = scmp.eq.s32.totalorder %s14, 1
      %p141 = por %p139, %p140
      %p142 = scmp.ne.s32.totalorder %s134, %s137
      %p143 = scmp.eq.s32.totalorder %s14, 0
      %p144 = por %p142, %p143
      %p145 = scmp.ne.s32.totalorder %s134, %s137
      %p146 = scmp.eq.s32.totalorder %s19, 1
      %p147 = por %p145, %p146
      %p148 = scmp.ne.s32.totalorder %s137, %s138
      %p149 = scmp.eq.s32.totalorder %s19, 0
      %p150 = por %p148, %p149
      %p151 = scmp.ne.s32.totalorder %s137, %s138
      %p152 = scmp.eq.s32.totalorder %s20, 1
      %p153 = por %p151, %p152
      %p155 = scmp.ne.s32.totalorder %s138, %s154
      %p156 = scmp.eq.s32.totalorder %s20, 0
      %p157 = por %p155, %p156
      %p158 = scmp.le.s32.totalorder 1, %s14
      %p159 = scmp.lt.s32.totalorder %s14, 3
      %p160 = pnand %p158, %p159
      %p161 = pneg %p160
      // Predicated region
      $region9: #{tpu_custom_call.1} parent=5 // pred_check
        _
      $region10: #{tpu_custom_call.1} parent=5 // pred_check_branch
        %163 = sbr.rel (%p160) target = $region12
      $region11: #{tpu_custom_call.1} parent=5 // pred_region
        %s164 = ssub.s32 %s14, 1
        // Predicated region
        $region13: #{tpu_custom_call.1} parent=11 // pred_check
          %p165 = pneg %p61
        $region14: #{tpu_custom_call.1} parent=11 // pred_check_branch
          %167 = sbr.rel (%p165) target = $region16
        $region15: #{tpu_custom_call.1} parent=11 // pred_region
          _
        $region16: #{tpu_custom_call.1} parent=11 // pred_fallthru
          _
        // Predicated region
        $region17: #{tpu_custom_call.1} parent=11 // pred_check
          %p168 = pneg %p82
        $region18: #{tpu_custom_call.1} parent=11 // pred_check_branch
          %170 = sbr.rel (%p168) target = $region20
        $region19: #{tpu_custom_call.1} parent=11 // pred_region
          _
        $region20: #{tpu_custom_call.1} parent=11 // pred_fallthru
          _
        // Predicated region
        $region21: #{tpu_custom_call.1} parent=11 // pred_check
          %p171 = pneg %p103
        $region22: #{tpu_custom_call.1} parent=11 // pred_check_branch
          %173 = sbr.rel (%p171) target = $region24
        $region23: #{tpu_custom_call.1} parent=11 // pred_region
          _
        $region24: #{tpu_custom_call.1} parent=11 // pred_fallthru
          _
        // Predicated region
        $region25: #{tpu_custom_call.1} parent=11 // pred_check
          %p174 = pneg %p124
        $region26: #{tpu_custom_call.1} parent=11 // pred_check_branch
          %176 = sbr.rel (%p174) target = $region28
        $region27: #{tpu_custom_call.1} parent=11 // pred_region
          _
        $region28: #{tpu_custom_call.1} parent=11 // pred_fallthru
          _
      $region12: #{tpu_custom_call.1} parent=5 // pred_fallthru
        _
      %p177 = scmp.lt.s32.totalorder %s14, 2
      // Predicated region
      $region29: #{tpu_custom_call.1} parent=5 // pred_check
        %p178 = pneg %p177
      $region30: #{tpu_custom_call.1} parent=5 // pred_check_branch
        %180 = sbr.rel (%p178) target = $region32
      $region31: #{tpu_custom_call.1} parent=5 // pred_region
        // Predicated region
        $region33: #{tpu_custom_call.1} parent=31 // pred_check
          %p181 = pneg %p34
        $region34: #{tpu_custom_call.1} parent=31 // pred_check_branch
          %183 = sbr.rel (%p181) target = $region36
        $region35: #{tpu_custom_call.1} parent=31 // pred_region
          %s184 = sand.u32 %s24, 1
          %s185 = scalar_lea.sflag [#allocation5], %s184
          %s186 = sand.u32 %s24, 1
          %s187 = smul.addr %s186, 128
          %s188 = scalar_lea.vmem [#allocation4], %s187
          %190 = vsyncadd %s185, 0
          %s191 = smul.addr %s14, 32
          %s192 = smul.addr %s191, 4
          %s193 = scalar_lea.hbm %s0, %s192
          %s194 = sshll.u32 %s193, 4
          %s195 = int_to_ptr.hbm [resolvable:$true] %s194
          %s196 = sshll.u32 %s188, 4
          %s197 = int_to_ptr.vmem [resolvable:$true] %s196
          %202 = dma.hbm_to_vmem [thread:$0]  %s195, 2048, %s197, %s185, 64, 64, 4
        $region36: #{tpu_custom_call.1} parent=31 // pred_fallthru
          _
      $region32: #{tpu_custom_call.1} parent=5 // pred_fallthru
        _
      %p203 = scmp.le.s32.totalorder 1, %s14
      %p204 = scmp.lt.s32.totalorder %s14, 3
      %p205 = pnand %p203, %p204
      %p206 = pneg %p205
      // Predicated region
      $region37: #{tpu_custom_call.1} parent=5 // pred_check
        _
      $region38: #{tpu_custom_call.1} parent=5 // pred_check_branch
        %208 = sbr.rel (%p205) target = $region40
      $region39: #{tpu_custom_call.1} parent=5 // pred_region
        %s209 = ssub.s32 %s14, 1
        %s210 = sand.u32 %s27, 1
        %s211 = scalar_lea.sflag [#allocation5], %s210
        %s212 = sand.u32 %s27, 1
        %s213 = smul.addr %s212, 128
        %s214 = scalar_lea.vmem [#allocation4], %s213
        // Predicated region
        $region41: #{tpu_custom_call.1} parent=39 // pred_check
          %p215 = pneg %p40
        $region42: #{tpu_custom_call.1} parent=39 // pred_check_branch
          %217 = sbr.rel (%p215) target = $region44
        $region43: #{tpu_custom_call.1} parent=39 // pred_region
          %219 = dma.done %s211, 2048
        $region44: #{tpu_custom_call.1} parent=39 // pred_fallthru
          _
        %s220 = sand.u32 %s27, 1
        %s221 = scalar_lea.sflag [#allocation5], %s220
        %s222 = sand.u32 %s27, 1
        %s223 = smul.addr %s222, 128
        %s224 = scalar_lea.vmem [#allocation4], %s223
        %p225 = pneg %p40
        %p226 = pneg %p37
        %p227 = pneg %p61
        %p228 = pneg %p58
        %p229 = pneg %p82
        %p230 = pneg %p79
        %p231 = pneg %p103
        %p232 = pneg %p100
        %p233 = pneg %p124
        %p234 = pneg %p121
        %p235 = pneg %p150
        %p236 = pneg %p147
        %p237 = scmp.lt.s32.totalorder %s19, 1
        %s238 = scalar_select %p237, %s19, 1
        %s239 = smul.addr %s238, 32
        %s240 = smul.addr %s239, 8
        %s241 = scalar_lea.vmem %s5, %s240
        %p242 = scmp.lt.s32.totalorder %s19, 1
        %s243 = scalar_select %p242, %s19, 1
        %s244 = smul.addr %s243, 32
        %s245 = smul.addr %s244, 8
        %s246 = scalar_lea.vmem %s5, %s245
        %248 = vst [vmem:[#allocation2] sm:$0xf] 0
        %249 = vst [vmem:[#allocation2 + $0x4] sm:$0xf] 0
        %250 = vst [vmem:[#allocation2 + $0x8] sm:$0x1] 0
        %s251 = scalar_lea.vmem [#allocation2], 204
        %252 = vst [vmem:[%s251] sm:$0xf] 0
        %253 = vst [vmem:[%s251 + $0x4] sm:$0xf] 0
        %254 = vst [vmem:[%s251 + $0x8] sm:$0x1] 0
        %vm255 = vcmask 1040384
        %vm256 = vsmask.f32 256
        %vm257 = vmand %vm255, %vm256
        %v258 = vld [vmem:[#allocation2] sm:$0x1]
        %v259 = vsel %vm257, 0, %v258
        %260 = vst [vmem:[#allocation2] sm:$0x1] %v259
        %v261 = vld [vmem:[#allocation2 + $0xc] sm:$0x1]
        %v262 = vsel %vm257, 0, %v261
        %263 = vst [vmem:[#allocation2 + $0xc] sm:$0x1] %v262
        %v264 = vld [vmem:[#allocation2 + $0x18] sm:$0x1]
        %v265 = vsel %vm257, 0, %v264
        %266 = vst [vmem:[#allocation2 + $0x18] sm:$0x1] %v265
        %v267 = vld [vmem:[#allocation2 + $0x24] sm:$0x1]
        %v268 = vsel %vm257, 0, %v267
        %269 = vst [vmem:[#allocation2 + $0x24] sm:$0x1] %v268
        %v270 = vld [vmem:[#allocation2 + $0x30] sm:$0x1]
        %v271 = vsel %vm257, 0, %v270
        %272 = vst [vmem:[#allocation2 + $0x30] sm:$0x1] %v271
        %v273 = vld [vmem:[#allocation2 + $0x3c] sm:$0x1]
        %v274 = vsel %vm257, 0, %v273
        %275 = vst [vmem:[#allocation2 + $0x3c] sm:$0x1] %v274
        %v276 = vld [vmem:[#allocation2 + $0x48] sm:$0x1]
        %v277 = vsel %vm257, 0, %v276
        %278 = vst [vmem:[#allocation2 + $0x48] sm:$0x1] %v277
        %v279 = vld [vmem:[#allocation2 + $0x54] sm:$0x1]
        %v280 = vsel %vm257, 0, %v279
        %281 = vst [vmem:[#allocation2 + $0x54] sm:$0x1] %v280
        %v282 = vld [vmem:[#allocation2 + $0x60] sm:$0x1]
        %v283 = vsel %vm257, 0, %v282
        %284 = vst [vmem:[#allocation2 + $0x60] sm:$0x1] %v283
        %v285 = vld [vmem:[#allocation2 + $0x6c] sm:$0x1]
        %v286 = vsel %vm257, 0, %v285
        %287 = vst [vmem:[#allocation2 + $0x6c] sm:$0x1] %v286
        %v288 = vld [vmem:[#allocation2 + $0x78] sm:$0x1]
        %v289 = vsel %vm257, 0, %v288
        %290 = vst [vmem:[#allocation2 + $0x78] sm:$0x1] %v289
        %v291 = vld [vmem:[#allocation2 + $0x84] sm:$0x1]
        %v292 = vsel %vm257, 0, %v291
        %293 = vst [vmem:[#allocation2 + $0x84] sm:$0x1] %v292
        %v294 = vld [vmem:[#allocation2 + $0x90] sm:$0x1]
        %v295 = vsel %vm257, 0, %v294
        %296 = vst [vmem:[#allocation2 + $0x90] sm:$0x1] %v295
        %v297 = vld [vmem:[#allocation2 + $0x9c] sm:$0x1]
        %v298 = vsel %vm257, 0, %v297
        %299 = vst [vmem:[#allocation2 + $0x9c] sm:$0x1] %v298
        %v300 = vld [vmem:[#allocation2 + $0xa8] sm:$0x1]
        %v301 = vsel %vm257, 0, %v300
        %302 = vst [vmem:[#allocation2 + $0xa8] sm:$0x1] %v301
        %v303 = vld [vmem:[#allocation2 + $0xb4] sm:$0x1]
        %v304 = vsel %vm257, 0, %v303
        %305 = vst [vmem:[#allocation2 + $0xb4] sm:$0x1] %v304
        %v306 = vld [vmem:[#allocation2 + $0xc0] sm:$0x1]
        %v307 = vsel %vm257, 0, %v306
        %308 = vst [vmem:[#allocation2 + $0xc0] sm:$0x1] %v307
        %v309 = vld [vmem:[#allocation2 + $0xcc] sm:$0x1]
        %v310 = vsel %vm257, 0, %v309
        %311 = vst [vmem:[#allocation2 + $0xcc] sm:$0x1] %v310
        %vm312 = vsmask.f32 7938
        %vm313 = vmand %vm255, %vm312
        %v314 = vld [vmem:[#allocation2 + $0x8] sm:$0x1]
        %v315 = vsel %vm313, 0, %v314
        %316 = vst [vmem:[#allocation2 + $0x8] sm:$0x1] %v315
        %v317 = vld [vmem:[#allocation2 + $0x14] sm:$0x1]
        %v318 = vsel %vm313, 0, %v317
        %319 = vst [vmem:[#allocation2 + $0x14] sm:$0x1] %v318
        %v320 = vld [vmem:[#allocation2 + $0x20] sm:$0x1]
        %v321 = vsel %vm313, 0, %v320
        %322 = vst [vmem:[#allocation2 + $0x20] sm:$0x1] %v321
        %v323 = vld [vmem:[#allocation2 + $0x2c] sm:$0x1]
        %v324 = vsel %vm313, 0, %v323
        %325 = vst [vmem:[#allocation2 + $0x2c] sm:$0x1] %v324
        %v326 = vld [vmem:[#allocation2 + $0x38] sm:$0x1]
        %v327 = vsel %vm313, 0, %v326
        %328 = vst [vmem:[#allocation2 + $0x38] sm:$0x1] %v327
        %v329 = vld [vmem:[#allocation2 + $0x44] sm:$0x1]
        %v330 = vsel %vm313, 0, %v329
        %331 = vst [vmem:[#allocation2 + $0x44] sm:$0x1] %v330
        %v332 = vld [vmem:[#allocation2 + $0x50] sm:$0x1]
        %v333 = vsel %vm313, 0, %v332
        %334 = vst [vmem:[#allocation2 + $0x50] sm:$0x1] %v333
        %v335 = vld [vmem:[#allocation2 + $0x5c] sm:$0x1]
        %v336 = vsel %vm313, 0, %v335
        %337 = vst [vmem:[#allocation2 + $0x5c] sm:$0x1] %v336
        %v338 = vld [vmem:[#allocation2 + $0x68] sm:$0x1]
        %v339 = vsel %vm313, 0, %v338
        %340 = vst [vmem:[#allocation2 + $0x68] sm:$0x1] %v339
        %v341 = vld [vmem:[#allocation2 + $0x74] sm:$0x1]
        %v342 = vsel %vm313, 0, %v341
        %343 = vst [vmem:[#allocation2 + $0x74] sm:$0x1] %v342
        %v344 = vld [vmem:[#allocation2 + $0x80] sm:$0x1]
        %v345 = vsel %vm313, 0, %v344
        %346 = vst [vmem:[#allocation2 + $0x80] sm:$0x1] %v345
        %v347 = vld [vmem:[#allocation2 + $0x8c] sm:$0x1]
        %v348 = vsel %vm313, 0, %v347
        %349 = vst [vmem:[#allocation2 + $0x8c] sm:$0x1] %v348
        %v350 = vld [vmem:[#allocation2 + $0x98] sm:$0x1]
        %v351 = vsel %vm313, 0, %v350
        %352 = vst [vmem:[#allocation2 + $0x98] sm:$0x1] %v351
        %v353 = vld [vmem:[#allocation2 + $0xa4] sm:$0x1]
        %v354 = vsel %vm313, 0, %v353
        %355 = vst [vmem:[#allocation2 + $0xa4] sm:$0x1] %v354
        %v356 = vld [vmem:[#allocation2 + $0xb0] sm:$0x1]
        %v357 = vsel %vm313, 0, %v356
        %358 = vst [vmem:[#allocation2 + $0xb0] sm:$0x1] %v357
        %v359 = vld [vmem:[#allocation2 + $0xbc] sm:$0x1]
        %v360 = vsel %vm313, 0, %v359
        %361 = vst [vmem:[#allocation2 + $0xbc] sm:$0x1] %v360
        %v362 = vld [vmem:[#allocation2 + $0xc8] sm:$0x1]
        %v363 = vsel %vm313, 0, %v362
        %364 = vst [vmem:[#allocation2 + $0xc8] sm:$0x1] %v363
        %v365 = vld [vmem:[#allocation2 + $0xd4] sm:$0x1]
        %v366 = vsel %vm313, 0, %v365
        %367 = vst [vmem:[#allocation2 + $0xd4] sm:$0x1] %v366
        %v368 = vld [vmem:[%s214] sm:$0xf]
        %v369 = vld [vmem:[%s214 + $0x4] sm:$0xf]
        %v370 = vld [vmem:[%s214 + $0x8] sm:$0xf]
        %v371 = vld [vmem:[%s214 + $0xc] sm:$0xf]
        %v372 = vld [vmem:[%s214 + $0x10] sm:$0xf]
        %v373 = vld [vmem:[%s214 + $0x14] sm:$0xf]
        %v374 = vld [vmem:[%s214 + $0x18] sm:$0xf]
        %v375 = vld [vmem:[%s214 + $0x1c] sm:$0xf]
        %v376 = vld [vmem:[%s214 + $0x20] sm:$0xf]
        %v377 = vld [vmem:[%s214 + $0x24] sm:$0xf]
        %v378 = vld [vmem:[%s214 + $0x28] sm:$0xf]
        %v379 = vld [vmem:[%s214 + $0x2c] sm:$0xf]
        %v380 = vld [vmem:[%s214 + $0x30] sm:$0xf]
        %v381 = vld [vmem:[%s214 + $0x34] sm:$0xf]
        %v382 = vld [vmem:[%s214 + $0x38] sm:$0xf]
        %v383 = vld [vmem:[%s214 + $0x3c] sm:$0xf]
        %v384 = vld [vmem:[%s214 + $0x40] sm:$0xf]
        %v385 = vld [vmem:[%s214 + $0x44] sm:$0xf]
        %v386 = vld [vmem:[%s214 + $0x48] sm:$0xf]
        %v387 = vld [vmem:[%s214 + $0x4c] sm:$0xf]
        %v388 = vld [vmem:[%s214 + $0x50] sm:$0xf]
        %v389 = vld [vmem:[%s214 + $0x54] sm:$0xf]
        %v390 = vld [vmem:[%s214 + $0x58] sm:$0xf]
        %v391 = vld [vmem:[%s214 + $0x5c] sm:$0xf]
        %v392 = vld [vmem:[%s214 + $0x60] sm:$0xf]
        %v393 = vld [vmem:[%s214 + $0x64] sm:$0xf]
        %v394 = vld [vmem:[%s214 + $0x68] sm:$0xf]
        %v395 = vld [vmem:[%s214 + $0x6c] sm:$0xf]
        %v396 = vld [vmem:[%s214 + $0x70] sm:$0xf]
        %v397 = vld [vmem:[%s214 + $0x74] sm:$0xf]
        %v398 = vld [vmem:[%s214 + $0x78] sm:$0xf]
        %v399 = vld [vmem:[%s214 + $0x7c] sm:$0xf]
        %vm400 = vsmask.f32 4368
        %vm401 = vmor %vm256, %vm400
        %v403 = vshrl.u32 %v368, 16
        %v405 = vrot.slane %v403, 7
        %v406 = vshll.u32 %v368, 16
        %v408 = vor.u32 %v405, %v406
        %v409 = vrot.slane %v405, 4
        %v411 = vshrl.u32 %v369, 16
        %v413 = vrot.slane %v411, 7
        %v414 = vshll.u32 %v369, 16
        %v416 = vor.u32 %v413, %v414
        %v417 = vsel %vm401, %v409, %v416
        %v418 = vrot.slane %v413, 4
        %v420 = vshrl.u32 %v370, 16
        %v422 = vrot.slane %v420, 7
        %v423 = vshll.u32 %v370, 16
        %v425 = vor.u32 %v422, %v423
        %v426 = vrot.slane %v422, 4
        %v428 = vshrl.u32 %v371, 16
        %v430 = vrot.slane %v428, 7
        %v431 = vshll.u32 %v371, 16
        %v433 = vor.u32 %v430, %v431
        %v434 = vsel %vm401, %v426, %v433
        %v435 = vrot.slane %v430, 4
        %v437 = vshrl.u32 %v372, 16
        %v439 = vrot.slane %v437, 7
        %v440 = vshll.u32 %v372, 16
        %v442 = vor.u32 %v439, %v440
        %v443 = vrot.slane %v439, 4
        %v445 = vshrl.u32 %v373, 16
        %v447 = vrot.slane %v445, 7
        %v448 = vshll.u32 %v373, 16
        %v450 = vor.u32 %v447, %v448
        %v451 = vsel %vm401, %v443, %v450
        %v452 = vrot.slane %v447, 4
        %v454 = vshrl.u32 %v374, 16
        %v456 = vrot.slane %v454, 7
        %v457 = vshll.u32 %v374, 16
        %v459 = vor.u32 %v456, %v457
        %v460 = vrot.slane %v456, 4
        %v462 = vshrl.u32 %v375, 16
        %v464 = vrot.slane %v462, 7
        %v465 = vshll.u32 %v375, 16
        %v467 = vor.u32 %v464, %v465
        %v468 = vsel %vm401, %v460, %v467
        %v469 = vrot.slane %v464, 4
        %v471 = vshrl.u32 %v376, 16
        %v473 = vrot.slane %v471, 7
        %v474 = vshll.u32 %v376, 16
        %v476 = vor.u32 %v473, %v474
        %v477 = vrot.slane %v473, 4
        %v479 = vshrl.u32 %v377, 16
        %v481 = vrot.slane %v479, 7
        %v482 = vshll.u32 %v377, 16
        %v484 = vor.u32 %v481, %v482
        %v485 = vsel %vm401, %v477, %v484
        %v486 = vrot.slane %v481, 4
        %v488 = vshrl.u32 %v378, 16
        %v490 = vrot.slane %v488, 7
        %v491 = vshll.u32 %v378, 16
        %v493 = vor.u32 %v490, %v491
        %v494 = vrot.slane %v490, 4
        %v496 = vshrl.u32 %v379, 16
        %v498 = vrot.slane %v496, 7
        %v499 = vshll.u32 %v379, 16
        %v501 = vor.u32 %v498, %v499
        %v502 = vsel %vm401, %v494, %v501
        %v503 = vrot.slane %v498, 4
        %v505 = vshrl.u32 %v380, 16
        %v507 = vrot.slane %v505, 7
        %v508 = vshll.u32 %v380, 16
        %v510 = vor.u32 %v507, %v508
        %v511 = vrot.slane %v507, 4
        %v513 = vshrl.u32 %v381, 16
        %v515 = vrot.slane %v513, 7
        %v516 = vshll.u32 %v381, 16
        %v518 = vor.u32 %v515, %v516
        %v519 = vsel %vm401, %v511, %v518
        %v520 = vrot.slane %v515, 4
        %v522 = vshrl.u32 %v382, 16
        %v524 = vrot.slane %v522, 7
        %v525 = vshll.u32 %v382, 16
        %v527 = vor.u32 %v524, %v525
        %v528 = vrot.slane %v524, 4
        %v530 = vshrl.u32 %v383, 16
        %v532 = vrot.slane %v530, 7
        %v533 = vshll.u32 %v383, 16
        %v535 = vor.u32 %v532, %v533
        %v536 = vsel %vm401, %v528, %v535
        %v537 = vrot.slane %v532, 4
        %v539 = vshrl.u32 %v384, 16
        %v541 = vrot.slane %v539, 7
        %v542 = vshll.u32 %v384, 16
        %v544 = vor.u32 %v541, %v542
        %v545 = vrot.slane %v541, 4
        %v547 = vshrl.u32 %v385, 16
        %v549 = vrot.slane %v547, 7
        %v550 = vshll.u32 %v385, 16
        %v552 = vor.u32 %v549, %v550
        %v553 = vsel %vm401, %v545, %v552
        %v554 = vrot.slane %v549, 4
        %v556 = vshrl.u32 %v386, 16
        %v558 = vrot.slane %v556, 7
        %v559 = vshll.u32 %v386, 16
        %v561 = vor.u32 %v558, %v559
        %v562 = vrot.slane %v558, 4
        %v564 = vshrl.u32 %v387, 16
        %v566 = vrot.slane %v564, 7
        %v567 = vshll.u32 %v387, 16
        %v569 = vor.u32 %v566, %v567
        %v570 = vsel %vm401, %v562, %v569
        %v571 = vrot.slane %v566, 4
        %v573 = vshrl.u32 %v388, 16
        %v575 = vrot.slane %v573, 7
        %v576 = vshll.u32 %v388, 16
        %v578 = vor.u32 %v575, %v576
        %v579 = vrot.slane %v575, 4
        %v581 = vshrl.u32 %v389, 16
        %v583 = vrot.slane %v581, 7
        %v584 = vshll.u32 %v389, 16
        %v586 = vor.u32 %v583, %v584
        %v587 = vsel %vm401, %v579, %v586
        %v588 = vrot.slane %v583, 4
        %v590 = vshrl.u32 %v390, 16
        %v592 = vrot.slane %v590, 7
        %v593 = vshll.u32 %v390, 16
        %v595 = vor.u32 %v592, %v593
        %v596 = vrot.slane %v592, 4
        %v598 = vshrl.u32 %v391, 16
        %v600 = vrot.slane %v598, 7
        %v601 = vshll.u32 %v391, 16
        %v603 = vor.u32 %v600, %v601
        %v604 = vsel %vm401, %v596, %v603
        %v605 = vrot.slane %v600, 4
        %v607 = vshrl.u32 %v392, 16
        %v609 = vrot.slane %v607, 7
        %v610 = vshll.u32 %v392, 16
        %v612 = vor.u32 %v609, %v610
        %v613 = vrot.slane %v609, 4
        %v615 = vshrl.u32 %v393, 16
        %v617 = vrot.slane %v615, 7
        %v618 = vshll.u32 %v393, 16
        %v620 = vor.u32 %v617, %v618
        %v621 = vsel %vm401, %v613, %v620
        %v622 = vrot.slane %v617, 4
        %v624 = vshrl.u32 %v394, 16
        %v626 = vrot.slane %v624, 7
        %v627 = vshll.u32 %v394, 16
        %v629 = vor.u32 %v626, %v627
        %v630 = vrot.slane %v626, 4
        %v632 = vshrl.u32 %v395, 16
        %v634 = vrot.slane %v632, 7
        %v635 = vshll.u32 %v395, 16
        %v637 = vor.u32 %v634, %v635
        %v638 = vsel %vm401, %v630, %v637
        %v639 = vrot.slane %v634, 4
        %v641 = vshrl.u32 %v396, 16
        %v643 = vrot.slane %v641, 7
        %v644 = vshll.u32 %v396, 16
        %v646 = vor.u32 %v643, %v644
        %v647 = vrot.slane %v643, 4
        %v649 = vshrl.u32 %v397, 16
        %v651 = vrot.slane %v649, 7
        %v652 = vshll.u32 %v397, 16
        %v654 = vor.u32 %v651, %v652
        %v655 = vsel %vm401, %v647, %v654
        %v656 = vrot.slane %v651, 4
        %v658 = vshrl.u32 %v398, 16
        %v660 = vrot.slane %v658, 7
        %v661 = vshll.u32 %v398, 16
        %v663 = vor.u32 %v660, %v661
        %v664 = vrot.slane %v660, 4
        %v666 = vshrl.u32 %v399, 16
        %v668 = vrot.slane %v666, 7
        %v669 = vshll.u32 %v399, 16
        %v671 = vor.u32 %v668, %v669
        %v672 = vsel %vm401, %v664, %v671
        %v673 = vrot.slane %v668, 4
        %s722 = scalar_lea.vmem [#allocation2], 12
        %vm723 = vcmask 1043456
        %vm724 = vmand %vm723, %vm312
        %v725 = vld [vmem:[%s722] sm:$0xf]
        %v726 = vsel %vm724, %v408, %v725
        %727 = vst [vmem:[%s722] sm:$0xf] %v726
        %728 = vst [vmem:[%s722 + $0x4] sm:$0xf] %v417
        %v729 = vld [vmem:[%s722 + $0x8] sm:$0x1]
        %v730 = vsel %vm257, %v418, %v729
        %731 = vst [vmem:[%s722 + $0x8] sm:$0x1] %v730
        %v732 = vld [vmem:[%s722 + $0xc] sm:$0xf]
        %v733 = vsel %vm724, %v425, %v732
        %734 = vst [vmem:[%s722 + $0xc] sm:$0xf] %v733
        %735 = vst [vmem:[%s722 + $0x10] sm:$0xf] %v434
        %v736 = vld [vmem:[%s722 + $0x14] sm:$0x1]
        %v737 = vsel %vm257, %v435, %v736
        %738 = vst [vmem:[%s722 + $0x14] sm:$0x1] %v737
        %v739 = vld [vmem:[%s722 + $0x18] sm:$0xf]
        %v740 = vsel %vm724, %v442, %v739
        %741 = vst [vmem:[%s722 + $0x18] sm:$0xf] %v740
        %742 = vst [vmem:[%s722 + $0x1c] sm:$0xf] %v451
        %v743 = vld [vmem:[%s722 + $0x20] sm:$0x1]
        %v744 = vsel %vm257, %v452, %v743
        %745 = vst [vmem:[%s722 + $0x20] sm:$0x1] %v744
        %v746 = vld [vmem:[%s722 + $0x24] sm:$0xf]
        %v747 = vsel %vm724, %v459, %v746
        %748 = vst [vmem:[%s722 + $0x24] sm:$0xf] %v747
        %749 = vst [vmem:[%s722 + $0x28] sm:$0xf] %v468
        %v750 = vld [vmem:[%s722 + $0x2c] sm:$0x1]
        %v751 = vsel %vm257, %v469, %v750
        %752 = vst [vmem:[%s722 + $0x2c] sm:$0x1] %v751
        %v753 = vld [vmem:[%s722 + $0x30] sm:$0xf]
        %v754 = vsel %vm724, %v476, %v753
        %755 = vst [vmem:[%s722 + $0x30] sm:$0xf] %v754
        %756 = vst [vmem:[%s722 + $0x34] sm:$0xf] %v485
        %v757 = vld [vmem:[%s722 + $0x38] sm:$0x1]
        %v758 = vsel %vm257, %v486, %v757
        %759 = vst [vmem:[%s722 + $0x38] sm:$0x1] %v758
        %v760 = vld [vmem:[%s722 + $0x3c] sm:$0xf]
        %v761 = vsel %vm724, %v493, %v760
        %762 = vst [vmem:[%s722 + $0x3c] sm:$0xf] %v761
        %763 = vst [vmem:[%s722 + $0x40] sm:$0xf] %v502
        %v764 = vld [vmem:[%s722 + $0x44] sm:$0x1]
        %v765 = vsel %vm257, %v503, %v764
        %766 = vst [vmem:[%s722 + $0x44] sm:$0x1] %v765
        %v767 = vld [vmem:[%s722 + $0x48] sm:$0xf]
        %v768 = vsel %vm724, %v510, %v767
        %769 = vst [vmem:[%s722 + $0x48] sm:$0xf] %v768
        %770 = vst [vmem:[%s722 + $0x4c] sm:$0xf] %v519
        %v771 = vld [vmem:[%s722 + $0x50] sm:$0x1]
        %v772 = vsel %vm257, %v520, %v771
        %773 = vst [vmem:[%s722 + $0x50] sm:$0x1] %v772
        %v774 = vld [vmem:[%s722 + $0x54] sm:$0xf]
        %v775 = vsel %vm724, %v527, %v774
        %776 = vst [vmem:[%s722 + $0x54] sm:$0xf] %v775
        %777 = vst [vmem:[%s722 + $0x58] sm:$0xf] %v536
        %v778 = vld [vmem:[%s722 + $0x5c] sm:$0x1]
        %v779 = vsel %vm257, %v537, %v778
        %780 = vst [vmem:[%s722 + $0x5c] sm:$0x1] %v779
        %v781 = vld [vmem:[%s722 + $0x60] sm:$0xf]
        %v782 = vsel %vm724, %v544, %v781
        %783 = vst [vmem:[%s722 + $0x60] sm:$0xf] %v782
        %784 = vst [vmem:[%s722 + $0x64] sm:$0xf] %v553
        %v785 = vld [vmem:[%s722 + $0x68] sm:$0x1]
        %v786 = vsel %vm257, %v554, %v785
        %787 = vst [vmem:[%s722 + $0x68] sm:$0x1] %v786
        %v788 = vld [vmem:[%s722 + $0x6c] sm:$0xf]
        %v789 = vsel %vm724, %v561, %v788
        %790 = vst [vmem:[%s722 + $0x6c] sm:$0xf] %v789
        %791 = vst [vmem:[%s722 + $0x70] sm:$0xf] %v570
        %v792 = vld [vmem:[%s722 + $0x74] sm:$0x1]
        %v793 = vsel %vm257, %v571, %v792
        %794 = vst [vmem:[%s722 + $0x74] sm:$0x1] %v793
        %v795 = vld [vmem:[%s722 + $0x78] sm:$0xf]
        %v796 = vsel %vm724, %v578, %v795
        %797 = vst [vmem:[%s722 + $0x78] sm:$0xf] %v796
        %798 = vst [vmem:[%s722 + $0x7c] sm:$0xf] %v587
        %v799 = vld [vmem:[%s722 + $0x80] sm:$0x1]
        %v800 = vsel %vm257, %v588, %v799
        %801 = vst [vmem:[%s722 + $0x80] sm:$0x1] %v800
        %v802 = vld [vmem:[%s722 + $0x84] sm:$0xf]
        %v803 = vsel %vm724, %v595, %v802
        %804 = vst [vmem:[%s722 + $0x84] sm:$0xf] %v803
        %805 = vst [vmem:[%s722 + $0x88] sm:$0xf] %v604
        %v806 = vld [vmem:[%s722 + $0x8c] sm:$0x1]
        %v807 = vsel %vm257, %v605, %v806
        %808 = vst [vmem:[%s722 + $0x8c] sm:$0x1] %v807
        %v809 = vld [vmem:[%s722 + $0x90] sm:$0xf]
        %v810 = vsel %vm724, %v612, %v809
        %811 = vst [vmem:[%s722 + $0x90] sm:$0xf] %v810
        %812 = vst [vmem:[%s722 + $0x94] sm:$0xf] %v621
        %v813 = vld [vmem:[%s722 + $0x98] sm:$0x1]
        %v814 = vsel %vm257, %v622, %v813
        %815 = vst [vmem:[%s722 + $0x98] sm:$0x1] %v814
        %v816 = vld [vmem:[%s722 + $0x9c] sm:$0xf]
        %v817 = vsel %vm724, %v629, %v816
        %818 = vst [vmem:[%s722 + $0x9c] sm:$0xf] %v817
        %819 = vst [vmem:[%s722 + $0xa0] sm:$0xf] %v638
        %v820 = vld [vmem:[%s722 + $0xa4] sm:$0x1]
        %v821 = vsel %vm257, %v639, %v820
        %822 = vst [vmem:[%s722 + $0xa4] sm:$0x1] %v821
        %v823 = vld [vmem:[%s722 + $0xa8] sm:$0xf]
        %v824 = vsel %vm724, %v646, %v823
        %825 = vst [vmem:[%s722 + $0xa8] sm:$0xf] %v824
        %826 = vst [vmem:[%s722 + $0xac] sm:$0xf] %v655
        %v827 = vld [vmem:[%s722 + $0xb0] sm:$0x1]
        %v828 = vsel %vm257, %v656, %v827
        %829 = vst [vmem:[%s722 + $0xb0] sm:$0x1] %v828
        %v830 = vld [vmem:[%s722 + $0xb4] sm:$0xf]
        %v831 = vsel %vm724, %v663, %v830
        %832 = vst [vmem:[%s722 + $0xb4] sm:$0xf] %v831
        %833 = vst [vmem:[%s722 + $0xb8] sm:$0xf] %v672
        %v834 = vld [vmem:[%s722 + $0xbc] sm:$0x1]
        %v835 = vsel %vm257, %v673, %v834
        %836 = vst [vmem:[%s722 + $0xbc] sm:$0x1] %v835
        %v837 = vld [vmem:[#allocation2] sm:$0xf]
        %v838 = vld [vmem:[#allocation2 + $0x4] sm:$0xf]
        %v839 = vld [vmem:[#allocation2 + $0xc] sm:$0xf]
        %v840 = vld [vmem:[#allocation2 + $0x10] sm:$0xf]
        %v841 = vld [vmem:[#allocation2 + $0x18] sm:$0xf]
        %v842 = vld [vmem:[#allocation2 + $0x1c] sm:$0xf]
        %v843 = vld [vmem:[#allocation2 + $0x24] sm:$0xf]
        %v844 = vld [vmem:[#allocation2 + $0x28] sm:$0xf]
        %v845 = vld [vmem:[#allocation2 + $0x30] sm:$0xf]
        %v846 = vld [vmem:[#allocation2 + $0x34] sm:$0xf]
        %v847 = vld [vmem:[#allocation2 + $0x3c] sm:$0xf]
        %v848 = vld [vmem:[#allocation2 + $0x40] sm:$0xf]
        %v849 = vld [vmem:[#allocation2 + $0x48] sm:$0xf]
        %v850 = vld [vmem:[#allocation2 + $0x4c] sm:$0xf]
        %v851 = vld [vmem:[#allocation2 + $0x54] sm:$0xf]
        %v852 = vld [vmem:[#allocation2 + $0x58] sm:$0xf]
        %v853 = vld [vmem:[#allocation2 + $0x60] sm:$0xf]
        %v854 = vld [vmem:[#allocation2 + $0x64] sm:$0xf]
        %v855 = vld [vmem:[#allocation2 + $0x6c] sm:$0xf]
        %v856 = vld [vmem:[#allocation2 + $0x70] sm:$0xf]
        %v857 = vld [vmem:[#allocation2 + $0x78] sm:$0xf]
        %v858 = vld [vmem:[#allocation2 + $0x7c] sm:$0xf]
        %v859 = vld [vmem:[#allocation2 + $0x84] sm:$0xf]
        %v860 = vld [vmem:[#allocation2 + $0x88] sm:$0xf]
        %v861 = vld [vmem:[#allocation2 + $0x90] sm:$0xf]
        %v862 = vld [vmem:[#allocation2 + $0x94] sm:$0xf]
        %v863 = vld [vmem:[#allocation2 + $0x9c] sm:$0xf]
        %v864 = vld [vmem:[#allocation2 + $0xa0] sm:$0xf]
        %v865 = vld [vmem:[#allocation2 + $0xa8] sm:$0xf]
        %v866 = vld [vmem:[#allocation2 + $0xac] sm:$0xf]
        %v867 = vld [vmem:[#allocation2 + $0xb4] sm:$0xf]
        %v868 = vld [vmem:[#allocation2 + $0xb8] sm:$0xf]
        %v869 = vld [vmem:[#allocation2 + $0xc0] sm:$0xf]
        %v870 = vld [vmem:[#allocation2 + $0xc4] sm:$0xf]
        %v871 = vld [vmem:[#allocation2 + $0xcc] sm:$0xf]
        %v872 = vld [vmem:[#allocation2 + $0xd0] sm:$0xf]
        %v873 = vld [vmem:[#allocation2 + $0x8] sm:$0x1]
        %v874 = vld [vmem:[#allocation2 + $0x14] sm:$0x1]
        %v875 = vld [vmem:[#allocation2 + $0x20] sm:$0x1]
        %v876 = vld [vmem:[#allocation2 + $0x2c] sm:$0x1]
        %v877 = vld [vmem:[#allocation2 + $0x38] sm:$0x1]
        %v878 = vld [vmem:[#allocation2 + $0x44] sm:$0x1]
        %v879 = vld [vmem:[#allocation2 + $0x50] sm:$0x1]
        %v880 = vld [vmem:[#allocation2 + $0x5c] sm:$0x1]
        %v881 = vld [vmem:[#allocation2 + $0x68] sm:$0x1]
        %v882 = vld [vmem:[#allocation2 + $0x74] sm:$0x1]
        %v883 = vld [vmem:[#allocation2 + $0x80] sm:$0x1]
        %v884 = vld [vmem:[#allocation2 + $0x8c] sm:$0x1]
        %v885 = vld [vmem:[#allocation2 + $0x98] sm:$0x1]
        %v886 = vld [vmem:[#allocation2 + $0xa4] sm:$0x1]
        %v887 = vld [vmem:[#allocation2 + $0xb0] sm:$0x1]
        %v888 = vld [vmem:[#allocation2 + $0xbc] sm:$0x1]
        %v889 = vld [vmem:[#allocation2 + $0xc8] sm:$0x1]
        %v890 = vld [vmem:[#allocation2 + $0xd4] sm:$0x1]
        %v891 = vld [vmem:[#allocation2] sm:$0xe]
        %v892 = vld [vmem:[#allocation2 + $0xc] sm:$0xe]
        %v893 = vld [vmem:[#allocation2 + $0x18] sm:$0xe]
        %v894 = vld [vmem:[#allocation2 + $0x24] sm:$0xe]
        %v895 = vld [vmem:[#allocation2 + $0x30] sm:$0xe]
        %v896 = vld [vmem:[#allocation2 + $0x3c] sm:$0xe]
        %v897 = vld [vmem:[#allocation2 + $0x48] sm:$0xe]
        %v898 = vld [vmem:[#allocation2 + $0x54] sm:$0xe]
        %v899 = vld [vmem:[#allocation2 + $0x60] sm:$0xe]
        %v900 = vld [vmem:[#allocation2 + $0x6c] sm:$0xe]
        %v901 = vld [vmem:[#allocation2 + $0x78] sm:$0xe]
        %v902 = vld [vmem:[#allocation2 + $0x84] sm:$0xe]
        %v903 = vld [vmem:[#allocation2 + $0x90] sm:$0xe]
        %v904 = vld [vmem:[#allocation2 + $0x9c] sm:$0xe]
        %v905 = vld [vmem:[#allocation2 + $0xa8] sm:$0xe]
        %v906 = vld [vmem:[#allocation2 + $0xb4] sm:$0xe]
        %v907 = vld [vmem:[#allocation2 + $0xc0] sm:$0xe]
        %v908 = vld [vmem:[#allocation2 + $0xcc] sm:$0xe]
        %v941 = vunpack.c.l.b16 %v837
        %v942 = vunpack.c.l.b16 %v838
        %v943 = vunpack.c.l.b16 %v839
        %v944 = vunpack.c.l.b16 %v840
        %v945 = vunpack.c.l.b16 %v841
        %v946 = vunpack.c.l.b16 %v842
        %v947 = vunpack.c.l.b16 %v843
        %v948 = vunpack.c.l.b16 %v844
        %v949 = vunpack.c.l.b16 %v845
        %v950 = vunpack.c.l.b16 %v846
        %v951 = vunpack.c.l.b16 %v847
        %v952 = vunpack.c.l.b16 %v848
        %v953 = vunpack.c.l.b16 %v849
        %v954 = vunpack.c.l.b16 %v850
        %v955 = vunpack.c.l.b16 %v851
        %v956 = vunpack.c.l.b16 %v852
        %v957 = vunpack.c.l.b16 %v853
        %v958 = vunpack.c.l.b16 %v854
        %v959 = vunpack.c.l.b16 %v855
        %v960 = vunpack.c.l.b16 %v856
        %v961 = vunpack.c.l.b16 %v857
        %v962 = vunpack.c.l.b16 %v858
        %v963 = vunpack.c.l.b16 %v859
        %v964 = vunpack.c.l.b16 %v860
        %v965 = vunpack.c.l.b16 %v861
        %v966 = vunpack.c.l.b16 %v862
        %v967 = vunpack.c.l.b16 %v863
        %v968 = vunpack.c.l.b16 %v864
        %v969 = vunpack.c.l.b16 %v865
        %v970 = vunpack.c.l.b16 %v866
        %v971 = vunpack.c.l.b16 %v867
        %v972 = vunpack.c.l.b16 %v868
        %v973 = vpack.c.b16 %v942, %v941
        %v974 = vpack.c.b16 %v944, %v943
        %v975 = vpack.c.b16 %v946, %v945
        %v976 = vpack.c.b16 %v948, %v947
        %v977 = vpack.c.b16 %v950, %v949
        %v978 = vpack.c.b16 %v952, %v951
        %v979 = vpack.c.b16 %v954, %v953
        %v980 = vpack.c.b16 %v956, %v955
        %v981 = vpack.c.b16 %v958, %v957
        %v982 = vpack.c.b16 %v960, %v959
        %v983 = vpack.c.b16 %v962, %v961
        %v984 = vpack.c.b16 %v964, %v963
        %v985 = vpack.c.b16 %v966, %v965
        %v986 = vpack.c.b16 %v968, %v967
        %v987 = vpack.c.b16 %v970, %v969
        %v988 = vpack.c.b16 %v972, %v971
        %v1021 = vunpack.c.l.b16 %v873
        %v1022 = vunpack.c.l.b16 %v874
        %v1023 = vunpack.c.l.b16 %v875
        %v1024 = vunpack.c.l.b16 %v876
        %v1025 = vunpack.c.l.b16 %v877
        %v1026 = vunpack.c.l.b16 %v878
        %v1027 = vunpack.c.l.b16 %v879
        %v1028 = vunpack.c.l.b16 %v880
        %v1029 = vunpack.c.l.b16 %v881
        %v1030 = vunpack.c.l.b16 %v882
        %v1031 = vunpack.c.l.b16 %v883
        %v1032 = vunpack.c.l.b16 %v884
        %v1033 = vunpack.c.l.b16 %v885
        %v1034 = vunpack.c.l.b16 %v886
        %v1035 = vunpack.c.l.b16 %v887
        %v1036 = vunpack.c.l.b16 %v888
        %v1037 = vpack.c.b16 %v1021, %v1021
        %v1038 = vpack.c.b16 %v1022, %v1022
        %v1039 = vpack.c.b16 %v1023, %v1023
        %v1040 = vpack.c.b16 %v1024, %v1024
        %v1041 = vpack.c.b16 %v1025, %v1025
        %v1042 = vpack.c.b16 %v1026, %v1026
        %v1043 = vpack.c.b16 %v1027, %v1027
        %v1044 = vpack.c.b16 %v1028, %v1028
        %v1045 = vpack.c.b16 %v1029, %v1029
        %v1046 = vpack.c.b16 %v1030, %v1030
        %v1047 = vpack.c.b16 %v1031, %v1031
        %v1048 = vpack.c.b16 %v1032, %v1032
        %v1049 = vpack.c.b16 %v1033, %v1033
        %v1050 = vpack.c.b16 %v1034, %v1034
        %v1051 = vpack.c.b16 %v1035, %v1035
        %v1052 = vpack.c.b16 %v1036, %v1036
        %vm1053 = vsmask.f32 7424
        %v1055 = vshrl.u32 %v973, 16
        %v1057 = vshll.u32 %v973, 16
        %v1059 = vrot.slane %v1057, 1
        %v1060 = vor.u32 %v1055, %v1059
        %v1062 = vshll.u32 %v1037, 16
        %v1064 = vrot.slane %v1062, 1
        %v1065 = vsel %vm1053, %v1060, %v1064
        %v1067 = vshrl.u32 %v974, 16
        %v1069 = vshll.u32 %v974, 16
        %v1071 = vrot.slane %v1069, 1
        %v1072 = vor.u32 %v1067, %v1071
        %v1074 = vshll.u32 %v1038, 16
        %v1076 = vrot.slane %v1074, 1
        %v1077 = vsel %vm1053, %v1072, %v1076
        %v1079 = vshrl.u32 %v975, 16
        %v1081 = vshll.u32 %v975, 16
        %v1083 = vrot.slane %v1081, 1
        %v1084 = vor.u32 %v1079, %v1083
        %v1086 = vshll.u32 %v1039, 16
        %v1088 = vrot.slane %v1086, 1
        %v1089 = vsel %vm1053, %v1084, %v1088
        %v1091 = vshrl.u32 %v976, 16
        %v1093 = vshll.u32 %v976, 16
        %v1095 = vrot.slane %v1093, 1
        %v1096 = vor.u32 %v1091, %v1095
        %v1098 = vshll.u32 %v1040, 16
        %v1100 = vrot.slane %v1098, 1
        %v1101 = vsel %vm1053, %v1096, %v1100
        %v1103 = vshrl.u32 %v977, 16
        %v1105 = vshll.u32 %v977, 16
        %v1107 = vrot.slane %v1105, 1
        %v1108 = vor.u32 %v1103, %v1107
        %v1110 = vshll.u32 %v1041, 16
        %v1112 = vrot.slane %v1110, 1
        %v1113 = vsel %vm1053, %v1108, %v1112
        %v1115 = vshrl.u32 %v978, 16
        %v1117 = vshll.u32 %v978, 16
        %v1119 = vrot.slane %v1117, 1
        %v1120 = vor.u32 %v1115, %v1119
        %v1122 = vshll.u32 %v1042, 16
        %v1124 = vrot.slane %v1122, 1
        %v1125 = vsel %vm1053, %v1120, %v1124
        %v1127 = vshrl.u32 %v979, 16
        %v1129 = vshll.u32 %v979, 16
        %v1131 = vrot.slane %v1129, 1
        %v1132 = vor.u32 %v1127, %v1131
        %v1134 = vshll.u32 %v1043, 16
        %v1136 = vrot.slane %v1134, 1
        %v1137 = vsel %vm1053, %v1132, %v1136
        %v1139 = vshrl.u32 %v980, 16
        %v1141 = vshll.u32 %v980, 16
        %v1143 = vrot.slane %v1141, 1
        %v1144 = vor.u32 %v1139, %v1143
        %v1146 = vshll.u32 %v1044, 16
        %v1148 = vrot.slane %v1146, 1
        %v1149 = vsel %vm1053, %v1144, %v1148
        %v1151 = vshrl.u32 %v981, 16
        %v1153 = vshll.u32 %v981, 16
        %v1155 = vrot.slane %v1153, 1
        %v1156 = vor.u32 %v1151, %v1155
        %v1158 = vshll.u32 %v1045, 16
        %v1160 = vrot.slane %v1158, 1
        %v1161 = vsel %vm1053, %v1156, %v1160
        %v1163 = vshrl.u32 %v982, 16
        %v1165 = vshll.u32 %v982, 16
        %v1167 = vrot.slane %v1165, 1
        %v1168 = vor.u32 %v1163, %v1167
        %v1170 = vshll.u32 %v1046, 16
        %v1172 = vrot.slane %v1170, 1
        %v1173 = vsel %vm1053, %v1168, %v1172
        %v1175 = vshrl.u32 %v983, 16
        %v1177 = vshll.u32 %v983, 16
        %v1179 = vrot.slane %v1177, 1
        %v1180 = vor.u32 %v1175, %v1179
        %v1182 = vshll.u32 %v1047, 16
        %v1184 = vrot.slane %v1182, 1
        %v1185 = vsel %vm1053, %v1180, %v1184
        %v1187 = vshrl.u32 %v984, 16
        %v1189 = vshll.u32 %v984, 16
        %v1191 = vrot.slane %v1189, 1
        %v1192 = vor.u32 %v1187, %v1191
        %v1194 = vshll.u32 %v1048, 16
        %v1196 = vrot.slane %v1194, 1
        %v1197 = vsel %vm1053, %v1192, %v1196
        %v1199 = vshrl.u32 %v985, 16
        %v1201 = vshll.u32 %v985, 16
        %v1203 = vrot.slane %v1201, 1
        %v1204 = vor.u32 %v1199, %v1203
        %v1206 = vshll.u32 %v1049, 16
        %v1208 = vrot.slane %v1206, 1
        %v1209 = vsel %vm1053, %v1204, %v1208
        %v1211 = vshrl.u32 %v986, 16
        %v1213 = vshll.u32 %v986, 16
        %v1215 = vrot.slane %v1213, 1
        %v1216 = vor.u32 %v1211, %v1215
        %v1218 = vshll.u32 %v1050, 16
        %v1220 = vrot.slane %v1218, 1
        %v1221 = vsel %vm1053, %v1216, %v1220
        %v1223 = vshrl.u32 %v987, 16
        %v1225 = vshll.u32 %v987, 16
        %v1227 = vrot.slane %v1225, 1
        %v1228 = vor.u32 %v1223, %v1227
        %v1230 = vshll.u32 %v1051, 16
        %v1232 = vrot.slane %v1230, 1
        %v1233 = vsel %vm1053, %v1228, %v1232
        %v1235 = vshrl.u32 %v988, 16
        %v1237 = vshll.u32 %v988, 16
        %v1239 = vrot.slane %v1237, 1
        %v1240 = vor.u32 %v1235, %v1239
        %v1242 = vshll.u32 %v1052, 16
        %v1244 = vrot.slane %v1242, 1
        %v1245 = vsel %vm1053, %v1240, %v1244
        %v1278 = vunpack.c.l.b16 %v891
        %v1279 = vunpack.c.l.b16 %v892
        %v1280 = vunpack.c.l.b16 %v893
        %v1281 = vunpack.c.l.b16 %v894
        %v1282 = vunpack.c.l.b16 %v895
        %v1283 = vunpack.c.l.b16 %v896
        %v1284 = vunpack.c.l.b16 %v897
        %v1285 = vunpack.c.l.b16 %v898
        %v1286 = vunpack.c.l.b16 %v899
        %v1287 = vunpack.c.l.b16 %v900
        %v1288 = vunpack.c.l.b16 %v901
        %v1289 = vunpack.c.l.b16 %v902
        %v1290 = vunpack.c.l.b16 %v903
        %v1291 = vunpack.c.l.b16 %v904
        %v1292 = vunpack.c.l.b16 %v905
        %v1293 = vunpack.c.l.b16 %v906
        %v1294 = vpack.c.b16 %v942, %v1278
        %v1295 = vpack.c.b16 %v944, %v1279
        %v1296 = vpack.c.b16 %v946, %v1280
        %v1297 = vpack.c.b16 %v948, %v1281
        %v1298 = vpack.c.b16 %v950, %v1282
        %v1299 = vpack.c.b16 %v952, %v1283
        %v1300 = vpack.c.b16 %v954, %v1284
        %v1301 = vpack.c.b16 %v956, %v1285
        %v1302 = vpack.c.b16 %v958, %v1286
        %v1303 = vpack.c.b16 %v960, %v1287
        %v1304 = vpack.c.b16 %v962, %v1288
        %v1305 = vpack.c.b16 %v964, %v1289
        %v1306 = vpack.c.b16 %v966, %v1290
        %v1307 = vpack.c.b16 %v968, %v1291
        %v1308 = vpack.c.b16 %v970, %v1292
        %v1309 = vpack.c.b16 %v972, %v1293
        %vm1310 = vcmask 1046528
        %v1311 = vrot.slane %v1294, 1
        %v1312 = vrot.slane %v1037, 1
        %v1313 = vsel %vm1310, %v1311, %v1312
        %v1314 = vrot.slane %v1295, 1
        %v1315 = vrot.slane %v1038, 1
        %v1316 = vsel %vm1310, %v1314, %v1315
        %v1317 = vrot.slane %v1296, 1
        %v1318 = vrot.slane %v1039, 1
        %v1319 = vsel %vm1310, %v1317, %v1318
        %v1320 = vrot.slane %v1297, 1
        %v1321 = vrot.slane %v1040, 1
        %v1322 = vsel %vm1310, %v1320, %v1321
        %v1323 = vrot.slane %v1298, 1
        %v1324 = vrot.slane %v1041, 1
        %v1325 = vsel %vm1310, %v1323, %v1324
        %v1326 = vrot.slane %v1299, 1
        %v1327 = vrot.slane %v1042, 1
        %v1328 = vsel %vm1310, %v1326, %v1327
        %v1329 = vrot.slane %v1300, 1
        %v1330 = vrot.slane %v1043, 1
        %v1331 = vsel %vm1310, %v1329, %v1330
        %v1332 = vrot.slane %v1301, 1
        %v1333 = vrot.slane %v1044, 1
        %v1334 = vsel %vm1310, %v1332, %v1333
        %v1335 = vrot.slane %v1302, 1
        %v1336 = vrot.slane %v1045, 1
        %v1337 = vsel %vm1310, %v1335, %v1336
        %v1338 = vrot.slane %v1303, 1
        %v1339 = vrot.slane %v1046, 1
        %v1340 = vsel %vm1310, %v1338, %v1339
        %v1341 = vrot.slane %v1304, 1
        %v1342 = vrot.slane %v1047, 1
        %v1343 = vsel %vm1310, %v1341, %v1342
        %v1344 = vrot.slane %v1305, 1
        %v1345 = vrot.slane %v1048, 1
        %v1346 = vsel %vm1310, %v1344, %v1345
        %v1347 = vrot.slane %v1306, 1
        %v1348 = vrot.slane %v1049, 1
        %v1349 = vsel %vm1310, %v1347, %v1348
        %v1350 = vrot.slane %v1307, 1
        %v1351 = vrot.slane %v1050, 1
        %v1352 = vsel %vm1310, %v1350, %v1351
        %v1353 = vrot.slane %v1308, 1
        %v1354 = vrot.slane %v1051, 1
        %v1355 = vsel %vm1310, %v1353, %v1354
        %v1356 = vrot.slane %v1309, 1
        %v1357 = vrot.slane %v1052, 1
        %v1358 = vsel %vm1310, %v1356, %v1357
        %v1377 = vunpack.c.l.b16 %v869
        %v1378 = vunpack.c.l.b16 %v870
        %v1379 = vpack.c.b16 %v1378, %v1377
        %v1382 = vunpack.c.l.b16 %v889
        %v1383 = vpack.c.b16 %v1382, %v1382
        %v1385 = vshrl.u32 %v1379, 16
        %v1387 = vshll.u32 %v1379, 16
        %v1389 = vrot.slane %v1387, 1
        %v1390 = vor.u32 %v1385, %v1389
        %v1392 = vshll.u32 %v1383, 16
        %v1394 = vrot.slane %v1392, 1
        %v1395 = vsel %vm1053, %v1390, %v1394
        %v1398 = vunpack.c.l.b16 %v907
        %v1399 = vpack.c.b16 %v1378, %v1398
        %v1400 = vrot.slane %v1399, 1
        %v1401 = vrot.slane %v1383, 1
        %v1402 = vsel %vm1310, %v1400, %v1401
        %v1406 = vunpack.c.l.b16 %v871
        %v1407 = vunpack.c.l.b16 %v872
        %v1408 = vpack.c.b16 %v1407, %v1406
        %v1411 = vunpack.c.l.b16 %v890
        %v1412 = vpack.c.b16 %v1411, %v1411
        %v1414 = vshrl.u32 %v1408, 16
        %v1416 = vshll.u32 %v1408, 16
        %v1418 = vrot.slane %v1416, 1
        %v1419 = vor.u32 %v1414, %v1418
        %v1421 = vshll.u32 %v1412, 16
        %v1423 = vrot.slane %v1421, 1
        %v1424 = vsel %vm1053, %v1419, %v1423
        %v1427 = vunpack.c.l.b16 %v908
        %v1428 = vpack.c.b16 %v1407, %v1427
        %v1429 = vrot.slane %v1428, 1
        %v1430 = vrot.slane %v1412, 1
        %v1431 = vsel %vm1310, %v1429, %v1430
        %v1433 = vld [vmem:[%s1] sm:$0xff]
        %v1434 = vld [vmem:[%s1 + $0x8] sm:$0xff]
        %v1435 = vld [vmem:[%s1 + $0x10] sm:$0xff]
        %v1436 = vld [vmem:[%s1 + $0x18] sm:$0xff]
        %v1437 = vld [vmem:[%s1 + $0x20] sm:$0xff]
        %v1438 = vld [vmem:[%s1 + $0x28] sm:$0xff]
        %v1439 = vld [vmem:[%s1 + $0x30] sm:$0xff]
        %v1440 = vld [vmem:[%s1 + $0x38] sm:$0xff]
        %v1441 = vld [vmem:[%s1 + $0x40] sm:$0xff]
        %v1442 = vld [vmem:[%s1 + $0x48] sm:$0xff]
        %v1443 = vld [vmem:[%s1 + $0x50] sm:$0xff]
        %v1444 = vld [vmem:[%s1 + $0x58] sm:$0xff]
        %v1445 = vld [vmem:[%s1 + $0x60] sm:$0xff]
        %v1446 = vld [vmem:[%s1 + $0x68] sm:$0xff]
        %v1447 = vld [vmem:[%s1 + $0x70] sm:$0xff]
        %v1448 = vld [vmem:[%s1 + $0x78] sm:$0xff]
        %v1449 = vld [vmem:[%s1 + $0x80] sm:$0xff]
        %v1450 = vld [vmem:[%s1 + $0x88] sm:$0xff]
        %v1451 = vld [vmem:[%s1 + $0x90] sm:$0xff]
        %v1452 = vld [vmem:[%s1 + $0x98] sm:$0xff]
        %v1453 = vld [vmem:[%s1 + $0xa0] sm:$0xff]
        %v1454 = vld [vmem:[%s1 + $0xa8] sm:$0xff]
        %v1455 = vld [vmem:[%s1 + $0xb0] sm:$0xff]
        %v1456 = vld [vmem:[%s1 + $0xb8] sm:$0xff]
        %v1457 = vld [vmem:[%s1 + $0xc0] sm:$0xff]
        %v1458 = vld [vmem:[%s1 + $0xc8] sm:$0xff]
        %v1459 = vld [vmem:[%s1 + $0xd0] sm:$0xff]
        %v1460 = vld [vmem:[%s1 + $0xd8] sm:$0xff]
        %v1461 = vld [vmem:[%s1 + $0xe0] sm:$0xff]
        %v1462 = vld [vmem:[%s1 + $0xe8] sm:$0xff]
        %v1463 = vld [vmem:[%s1 + $0xf0] sm:$0xff]
        %v1464 = vld [vmem:[%s1 + $0xf8] sm:$0xff]
        %v1465 = vld [vmem:[%s1 + $0x100] sm:$0xff]
        %v1466 = vld [vmem:[%s1 + $0x108] sm:$0xff]
        %v1467 = vld [vmem:[%s1 + $0x110] sm:$0xff]
        %v1468 = vld [vmem:[%s1 + $0x118] sm:$0xff]
        %v1469 = vld [vmem:[%s1 + $0x120] sm:$0xff]
        %v1470 = vld [vmem:[%s1 + $0x128] sm:$0xff]
        %v1471 = vld [vmem:[%s1 + $0x130] sm:$0xff]
        %v1472 = vld [vmem:[%s1 + $0x138] sm:$0xff]
        %v1473 = vld [vmem:[%s1 + $0x140] sm:$0xff]
        %v1474 = vld [vmem:[%s1 + $0x148] sm:$0xff]
        %v1475 = vld [vmem:[%s1 + $0x150] sm:$0xff]
        %v1476 = vld [vmem:[%s1 + $0x158] sm:$0xff]
        %v1477 = vld [vmem:[%s1 + $0x160] sm:$0xff]
        %v1478 = vld [vmem:[%s1 + $0x168] sm:$0xff]
        %v1479 = vld [vmem:[%s1 + $0x170] sm:$0xff]
        %v1480 = vld [vmem:[%s1 + $0x178] sm:$0xff]
        %v1481 = vld [vmem:[%s1 + $0x180] sm:$0xff]
        %v1482 = vld [vmem:[%s1 + $0x188] sm:$0xff]
        %v1483 = vld [vmem:[%s1 + $0x190] sm:$0xff]
        %v1484 = vld [vmem:[%s1 + $0x198] sm:$0xff]
        %v1485 = vld [vmem:[%s1 + $0x1a0] sm:$0xff]
        %v1486 = vld [vmem:[%s1 + $0x1a8] sm:$0xff]
        %v1487 = vld [vmem:[%s1 + $0x1b0] sm:$0xff]
        %v1488 = vld [vmem:[%s1 + $0x1b8] sm:$0xff]
        %v1489 = vld [vmem:[%s1 + $0x1c0] sm:$0xff]
        %v1490 = vld [vmem:[%s1 + $0x1c8] sm:$0xff]
        %v1491 = vld [vmem:[%s1 + $0x1d0] sm:$0xff]
        %v1492 = vld [vmem:[%s1 + $0x1d8] sm:$0xff]
        %v1493 = vld [vmem:[%s1 + $0x1e0] sm:$0xff]
        %v1494 = vld [vmem:[%s1 + $0x1e8] sm:$0xff]
        %v1495 = vld [vmem:[%s1 + $0x1f0] sm:$0xff]
        %v1496 = vld [vmem:[%s1 + $0x1f8] sm:$0xff]
        %v1497 = vld [vmem:[%s1 + $0x200] sm:$0xff]
        %v1498 = vld [vmem:[%s1 + $0x208] sm:$0xff]
        %v1499 = vld [vmem:[%s1 + $0x210] sm:$0xff]
        %v1500 = vld [vmem:[%s1 + $0x218] sm:$0xff]
        %v1501 = vld [vmem:[%s1 + $0x220] sm:$0xff]
        %v1502 = vld [vmem:[%s1 + $0x228] sm:$0xff]
        %v1503 = vld [vmem:[%s1 + $0x230] sm:$0xff]
        %v1504 = vld [vmem:[%s1 + $0x238] sm:$0xff]
        %v1505 = vld [vmem:[%s1 + $0x240] sm:$0xff]
        %v1506 = vld [vmem:[%s1 + $0x248] sm:$0xff]
        %v1507 = vld [vmem:[%s1 + $0x250] sm:$0xff]
        %v1508 = vld [vmem:[%s1 + $0x258] sm:$0xff]
        %v1509 = vld [vmem:[%s1 + $0x260] sm:$0xff]
        %v1510 = vld [vmem:[%s1 + $0x268] sm:$0xff]
        %v1511 = vld [vmem:[%s1 + $0x270] sm:$0xff]
        %v1512 = vld [vmem:[%s1 + $0x278] sm:$0xff]
        %v1513 = vld [vmem:[%s1 + $0x280] sm:$0xff]
        %v1514 = vld [vmem:[%s1 + $0x288] sm:$0xff]
        %v1515 = vld [vmem:[%s1 + $0x290] sm:$0xff]
        %v1516 = vld [vmem:[%s1 + $0x298] sm:$0xff]
        %v1517 = vld [vmem:[%s1 + $0x2a0] sm:$0xff]
        %v1518 = vld [vmem:[%s1 + $0x2a8] sm:$0xff]
        %v1519 = vld [vmem:[%s1 + $0x2b0] sm:$0xff]
        %v1520 = vld [vmem:[%s1 + $0x2b8] sm:$0xff]
        %v1521 = vld [vmem:[%s1 + $0x2c0] sm:$0xff]
        %v1522 = vld [vmem:[%s1 + $0x2c8] sm:$0xff]
        %v1523 = vld [vmem:[%s1 + $0x2d0] sm:$0xff]
        %v1524 = vld [vmem:[%s1 + $0x2d8] sm:$0xff]
        %v1525 = vld [vmem:[%s1 + $0x2e0] sm:$0xff]
        %v1526 = vld [vmem:[%s1 + $0x2e8] sm:$0xff]
        %v1527 = vld [vmem:[%s1 + $0x2f0] sm:$0xff]
        %v1528 = vld [vmem:[%s1 + $0x2f8] sm:$0xff]
        %v1529 = vld [vmem:[%s1 + $0x300] sm:$0xff]
        %v1530 = vld [vmem:[%s1 + $0x308] sm:$0xff]
        %v1531 = vld [vmem:[%s1 + $0x310] sm:$0xff]
        %v1532 = vld [vmem:[%s1 + $0x318] sm:$0xff]
        %v1533 = vld [vmem:[%s1 + $0x320] sm:$0xff]
        %v1534 = vld [vmem:[%s1 + $0x328] sm:$0xff]
        %v1535 = vld [vmem:[%s1 + $0x330] sm:$0xff]
        %v1536 = vld [vmem:[%s1 + $0x338] sm:$0xff]
        %v1537 = vld [vmem:[%s1 + $0x340] sm:$0xff]
        %v1538 = vld [vmem:[%s1 + $0x348] sm:$0xff]
        %v1539 = vld [vmem:[%s1 + $0x350] sm:$0xff]
        %v1540 = vld [vmem:[%s1 + $0x358] sm:$0xff]
        %v1541 = vld [vmem:[%s1 + $0x360] sm:$0xff]
        %v1542 = vld [vmem:[%s1 + $0x368] sm:$0xff]
        %v1543 = vld [vmem:[%s1 + $0x370] sm:$0xff]
        %v1544 = vld [vmem:[%s1 + $0x378] sm:$0xff]
        %v1545 = vld [vmem:[%s1 + $0x380] sm:$0xff]
        %v1546 = vld [vmem:[%s1 + $0x388] sm:$0xff]
        %v1547 = vld [vmem:[%s1 + $0x390] sm:$0xff]
        %v1548 = vld [vmem:[%s1 + $0x398] sm:$0xff]
        %v1549 = vld [vmem:[%s1 + $0x3a0] sm:$0xff]
        %v1550 = vld [vmem:[%s1 + $0x3a8] sm:$0xff]
        %v1551 = vld [vmem:[%s1 + $0x3b0] sm:$0xff]
        %v1552 = vld [vmem:[%s1 + $0x3b8] sm:$0xff]
        %v1553 = vld [vmem:[%s1 + $0x3c0] sm:$0xff]
        %v1554 = vld [vmem:[%s1 + $0x3c8] sm:$0xff]
        %v1555 = vld [vmem:[%s1 + $0x3d0] sm:$0xff]
        %v1556 = vld [vmem:[%s1 + $0x3d8] sm:$0xff]
        %v1557 = vld [vmem:[%s1 + $0x3e0] sm:$0xff]
        %v1558 = vld [vmem:[%s1 + $0x3e8] sm:$0xff]
        %v1559 = vld [vmem:[%s1 + $0x3f0] sm:$0xff]
        %v1560 = vld [vmem:[%s1 + $0x3f8] sm:$0xff]
        %v1561 = vld [vmem:[%s1 + $0x400] sm:$0xff]
        %v1562 = vld [vmem:[%s1 + $0x408] sm:$0xff]
        %v1563 = vld [vmem:[%s1 + $0x410] sm:$0xff]
        %v1564 = vld [vmem:[%s1 + $0x418] sm:$0xff]
        %v1565 = vld [vmem:[%s1 + $0x420] sm:$0xff]
        %v1566 = vld [vmem:[%s1 + $0x428] sm:$0xff]
        %v1567 = vld [vmem:[%s1 + $0x430] sm:$0xff]
        %v1568 = vld [vmem:[%s1 + $0x438] sm:$0xff]
        %v1569 = vld [vmem:[%s1 + $0x440] sm:$0xff]
        %v1570 = vld [vmem:[%s1 + $0x448] sm:$0xff]
        %v1571 = vld [vmem:[%s1 + $0x450] sm:$0xff]
        %v1572 = vld [vmem:[%s1 + $0x458] sm:$0xff]
        %v1573 = vld [vmem:[%s1 + $0x460] sm:$0xff]
        %v1574 = vld [vmem:[%s1 + $0x468] sm:$0xff]
        %v1575 = vld [vmem:[%s1 + $0x470] sm:$0xff]
        %v1576 = vld [vmem:[%s1 + $0x478] sm:$0xff]
        %v1577 = vld [vmem:[%s2] sm:$0x3]
        %v1579 = vperm.slane %v1577, 0
        %v1580 = vperm.slane %v1577, 1
        %v1727 = vunpack.c.l.b16 %v1433
        %v1728 = vunpack.c.h.b16 %v1433
        %v1729 = vunpack.c.l.b16 %v1434
        %v1730 = vunpack.c.h.b16 %v1434
        %v1731 = vunpack.c.l.b16 %v1435
        %v1732 = vunpack.c.h.b16 %v1435
        %v1733 = vunpack.c.l.b16 %v1436
        %v1734 = vunpack.c.h.b16 %v1436
        %v1735 = vunpack.c.l.b16 %v1437
        %v1736 = vunpack.c.h.b16 %v1437
        %v1737 = vunpack.c.l.b16 %v1438
        %v1738 = vunpack.c.h.b16 %v1438
        %v1739 = vunpack.c.l.b16 %v1439
        %v1740 = vunpack.c.h.b16 %v1439
        %v1741 = vunpack.c.l.b16 %v1440
        %v1742 = vunpack.c.h.b16 %v1440
        %v1743 = vunpack.c.l.b16 %v1441
        %v1744 = vunpack.c.h.b16 %v1441
        %v1745 = vunpack.c.l.b16 %v1442
        %v1746 = vunpack.c.h.b16 %v1442
        %v1747 = vunpack.c.l.b16 %v1443
        %v1748 = vunpack.c.h.b16 %v1443
        %v1749 = vunpack.c.l.b16 %v1444
        %v1750 = vunpack.c.h.b16 %v1444
        %v1751 = vunpack.c.l.b16 %v1445
        %v1752 = vunpack.c.h.b16 %v1445
        %v1753 = vunpack.c.l.b16 %v1446
        %v1754 = vunpack.c.h.b16 %v1446
        %v1755 = vunpack.c.l.b16 %v1447
        %v1756 = vunpack.c.h.b16 %v1447
        %v1757 = vunpack.c.l.b16 %v1448
        %v1758 = vunpack.c.h.b16 %v1448
        %v1759 = vunpack.c.l.b16 %v1449
        %v1760 = vunpack.c.h.b16 %v1449
        %v1761 = vunpack.c.l.b16 %v1450
        %v1762 = vunpack.c.h.b16 %v1450
        %v1763 = vunpack.c.l.b16 %v1451
        %v1764 = vunpack.c.h.b16 %v1451
        %v1765 = vunpack.c.l.b16 %v1452
        %v1766 = vunpack.c.h.b16 %v1452
        %v1767 = vunpack.c.l.b16 %v1453
        %v1768 = vunpack.c.h.b16 %v1453
        %v1769 = vunpack.c.l.b16 %v1454
        %v1770 = vunpack.c.h.b16 %v1454
        %v1771 = vunpack.c.l.b16 %v1455
        %v1772 = vunpack.c.h.b16 %v1455
        %v1773 = vunpack.c.l.b16 %v1456
        %v1774 = vunpack.c.h.b16 %v1456
        %v1775 = vunpack.c.l.b16 %v1457
        %v1776 = vunpack.c.h.b16 %v1457
        %v1777 = vunpack.c.l.b16 %v1458
        %v1778 = vunpack.c.h.b16 %v1458
        %v1779 = vunpack.c.l.b16 %v1459
        %v1780 = vunpack.c.h.b16 %v1459
        %v1781 = vunpack.c.l.b16 %v1460
        %v1782 = vunpack.c.h.b16 %v1460
        %v1783 = vunpack.c.l.b16 %v1461
        %v1784 = vunpack.c.h.b16 %v1461
        %v1785 = vunpack.c.l.b16 %v1462
        %v1786 = vunpack.c.h.b16 %v1462
        %v1787 = vunpack.c.l.b16 %v1463
        %v1788 = vunpack.c.h.b16 %v1463
        %v1789 = vunpack.c.l.b16 %v1464
        %v1790 = vunpack.c.h.b16 %v1464
        %v1791 = vunpack.c.l.b16 %v1465
        %v1792 = vunpack.c.h.b16 %v1465
        %v1793 = vunpack.c.l.b16 %v1466
        %v1794 = vunpack.c.h.b16 %v1466
        %v1795 = vunpack.c.l.b16 %v1467
        %v1796 = vunpack.c.h.b16 %v1467
        %v1797 = vunpack.c.l.b16 %v1468
        %v1798 = vunpack.c.h.b16 %v1468
        %v1799 = vunpack.c.l.b16 %v1469
        %v1800 = vunpack.c.h.b16 %v1469
        %v1801 = vunpack.c.l.b16 %v1470
        %v1802 = vunpack.c.h.b16 %v1470
        %v1803 = vunpack.c.l.b16 %v1471
        %v1804 = vunpack.c.h.b16 %v1471
        %v1805 = vunpack.c.l.b16 %v1472
        %v1806 = vunpack.c.h.b16 %v1472
        %v1807 = vunpack.c.l.b16 %v1473
        %v1808 = vunpack.c.h.b16 %v1473
        %v1809 = vunpack.c.l.b16 %v1474
        %v1810 = vunpack.c.h.b16 %v1474
        %v1811 = vunpack.c.l.b16 %v1475
        %v1812 = vunpack.c.h.b16 %v1475
        %v1813 = vunpack.c.l.b16 %v1476
        %v1814 = vunpack.c.h.b16 %v1476
        %v1815 = vunpack.c.l.b16 %v1477
        %v1816 = vunpack.c.h.b16 %v1477
        %v1817 = vunpack.c.l.b16 %v1478
        %v1818 = vunpack.c.h.b16 %v1478
        %v1819 = vunpack.c.l.b16 %v1479
        %v1820 = vunpack.c.h.b16 %v1479
        %v1821 = vunpack.c.l.b16 %v1480
        %v1822 = vunpack.c.h.b16 %v1480
        %v1823 = vunpack.c.l.b16 %v1481
        %v1824 = vunpack.c.h.b16 %v1481
        %v1825 = vunpack.c.l.b16 %v1482
        %v1826 = vunpack.c.h.b16 %v1482
        %v1827 = vunpack.c.l.b16 %v1483
        %v1828 = vunpack.c.h.b16 %v1483
        %v1829 = vunpack.c.l.b16 %v1484
        %v1830 = vunpack.c.h.b16 %v1484
        %v1831 = vunpack.c.l.b16 %v1485
        %v1832 = vunpack.c.h.b16 %v1485
        %v1833 = vunpack.c.l.b16 %v1486
        %v1834 = vunpack.c.h.b16 %v1486
        %v1835 = vunpack.c.l.b16 %v1487
        %v1836 = vunpack.c.h.b16 %v1487
        %v1837 = vunpack.c.l.b16 %v1488
        %v1838 = vunpack.c.h.b16 %v1488
        %v1839 = vunpack.c.l.b16 %v1489
        %v1840 = vunpack.c.h.b16 %v1489
        %v1841 = vunpack.c.l.b16 %v1490
        %v1842 = vunpack.c.h.b16 %v1490
        %v1843 = vunpack.c.l.b16 %v1491
        %v1844 = vunpack.c.h.b16 %v1491
        %v1845 = vunpack.c.l.b16 %v1492
        %v1846 = vunpack.c.h.b16 %v1492
        %v1847 = vunpack.c.l.b16 %v1493
        %v1848 = vunpack.c.h.b16 %v1493
        %v1849 = vunpack.c.l.b16 %v1494
        %v1850 = vunpack.c.h.b16 %v1494
        %v1851 = vunpack.c.l.b16 %v1495
        %v1852 = vunpack.c.h.b16 %v1495
        %v1853 = vunpack.c.l.b16 %v1496
        %v1854 = vunpack.c.h.b16 %v1496
        %v1855 = vunpack.c.l.b16 %v1497
        %v1856 = vunpack.c.h.b16 %v1497
        %v1857 = vunpack.c.l.b16 %v1498
        %v1858 = vunpack.c.h.b16 %v1498
        %v1859 = vunpack.c.l.b16 %v1499
        %v1860 = vunpack.c.h.b16 %v1499
        %v1861 = vunpack.c.l.b16 %v1500
        %v1862 = vunpack.c.h.b16 %v1500
        %v1863 = vunpack.c.l.b16 %v1501
        %v1864 = vunpack.c.h.b16 %v1501
        %v1865 = vunpack.c.l.b16 %v1502
        %v1866 = vunpack.c.h.b16 %v1502
        %v1867 = vunpack.c.l.b16 %v1503
        %v1868 = vunpack.c.h.b16 %v1503
        %v1869 = vunpack.c.l.b16 %v1504
        %v1870 = vunpack.c.h.b16 %v1504
        %v1871 = vunpack.c.l.b16 %v1505
        %v1872 = vunpack.c.h.b16 %v1505
        %v1873 = vunpack.c.l.b16 %v1506
        %v1874 = vunpack.c.h.b16 %v1506
        %v1875 = vunpack.c.l.b16 %v1507
        %v1876 = vunpack.c.h.b16 %v1507
        %v1877 = vunpack.c.l.b16 %v1508
        %v1878 = vunpack.c.h.b16 %v1508
        %v1879 = vunpack.c.l.b16 %v1509
        %v1880 = vunpack.c.h.b16 %v1509
        %v1881 = vunpack.c.l.b16 %v1510
        %v1882 = vunpack.c.h.b16 %v1510
        %v1883 = vunpack.c.l.b16 %v1511
        %v1884 = vunpack.c.h.b16 %v1511
        %v1885 = vunpack.c.l.b16 %v1512
        %v1886 = vunpack.c.h.b16 %v1512
        %v1887 = vunpack.c.l.b16 %v1513
        %v1888 = vunpack.c.h.b16 %v1513
        %v1889 = vunpack.c.l.b16 %v1514
        %v1890 = vunpack.c.h.b16 %v1514
        %v1891 = vunpack.c.l.b16 %v1515
        %v1892 = vunpack.c.h.b16 %v1515
        %v1893 = vunpack.c.l.b16 %v1516
        %v1894 = vunpack.c.h.b16 %v1516
        %v1895 = vunpack.c.l.b16 %v1517
        %v1896 = vunpack.c.h.b16 %v1517
        %v1897 = vunpack.c.l.b16 %v1518
        %v1898 = vunpack.c.h.b16 %v1518
        %v1899 = vunpack.c.l.b16 %v1519
        %v1900 = vunpack.c.h.b16 %v1519
        %v1901 = vunpack.c.l.b16 %v1520
        %v1902 = vunpack.c.h.b16 %v1520
        %v1903 = vunpack.c.l.b16 %v1521
        %v1904 = vunpack.c.h.b16 %v1521
        %v1905 = vunpack.c.l.b16 %v1522
        %v1906 = vunpack.c.h.b16 %v1522
        %v1907 = vunpack.c.l.b16 %v1523
        %v1908 = vunpack.c.h.b16 %v1523
        %v1909 = vunpack.c.l.b16 %v1524
        %v1910 = vunpack.c.h.b16 %v1524
        %v1911 = vunpack.c.l.b16 %v1525
        %v1912 = vunpack.c.h.b16 %v1525
        %v1913 = vunpack.c.l.b16 %v1526
        %v1914 = vunpack.c.h.b16 %v1526
        %v1915 = vunpack.c.l.b16 %v1527
        %v1916 = vunpack.c.h.b16 %v1527
        %v1917 = vunpack.c.l.b16 %v1528
        %v1918 = vunpack.c.h.b16 %v1528
        %v1919 = vunpack.c.l.b16 %v1529
        %v1920 = vunpack.c.h.b16 %v1529
        %v1921 = vunpack.c.l.b16 %v1530
        %v1922 = vunpack.c.h.b16 %v1530
        %v1923 = vunpack.c.l.b16 %v1531
        %v1924 = vunpack.c.h.b16 %v1531
        %v1925 = vunpack.c.l.b16 %v1532
        %v1926 = vunpack.c.h.b16 %v1532
        %v1927 = vunpack.c.l.b16 %v1533
        %v1928 = vunpack.c.h.b16 %v1533
        %v1929 = vunpack.c.l.b16 %v1534
        %v1930 = vunpack.c.h.b16 %v1534
        %v1931 = vunpack.c.l.b16 %v1535
        %v1932 = vunpack.c.h.b16 %v1535
        %v1933 = vunpack.c.l.b16 %v1536
        %v1934 = vunpack.c.h.b16 %v1536
        %v1935 = vunpack.c.l.b16 %v1537
        %v1936 = vunpack.c.h.b16 %v1537
        %v1937 = vunpack.c.l.b16 %v1538
        %v1938 = vunpack.c.h.b16 %v1538
        %v1939 = vunpack.c.l.b16 %v1539
        %v1940 = vunpack.c.h.b16 %v1539
        %v1941 = vunpack.c.l.b16 %v1540
        %v1942 = vunpack.c.h.b16 %v1540
        %v1943 = vunpack.c.l.b16 %v1541
        %v1944 = vunpack.c.h.b16 %v1541
        %v1945 = vunpack.c.l.b16 %v1542
        %v1946 = vunpack.c.h.b16 %v1542
        %v1947 = vunpack.c.l.b16 %v1543
        %v1948 = vunpack.c.h.b16 %v1543
        %v1949 = vunpack.c.l.b16 %v1544
        %v1950 = vunpack.c.h.b16 %v1544
        %v1951 = vunpack.c.l.b16 %v1545
        %v1952 = vunpack.c.h.b16 %v1545
        %v1953 = vunpack.c.l.b16 %v1546
        %v1954 = vunpack.c.h.b16 %v1546
        %v1955 = vunpack.c.l.b16 %v1547
        %v1956 = vunpack.c.h.b16 %v1547
        %v1957 = vunpack.c.l.b16 %v1548
        %v1958 = vunpack.c.h.b16 %v1548
        %v1959 = vunpack.c.l.b16 %v1549
        %v1960 = vunpack.c.h.b16 %v1549
        %v1961 = vunpack.c.l.b16 %v1550
        %v1962 = vunpack.c.h.b16 %v1550
        %v1963 = vunpack.c.l.b16 %v1551
        %v1964 = vunpack.c.h.b16 %v1551
        %v1965 = vunpack.c.l.b16 %v1552
        %v1966 = vunpack.c.h.b16 %v1552
        %v1967 = vunpack.c.l.b16 %v1553
        %v1968 = vunpack.c.h.b16 %v1553
        %v1969 = vunpack.c.l.b16 %v1554
        %v1970 = vunpack.c.h.b16 %v1554
        %v1971 = vunpack.c.l.b16 %v1555
        %v1972 = vunpack.c.h.b16 %v1555
        %v1973 = vunpack.c.l.b16 %v1556
        %v1974 = vunpack.c.h.b16 %v1556
        %v1975 = vunpack.c.l.b16 %v1557
        %v1976 = vunpack.c.h.b16 %v1557
        %v1977 = vunpack.c.l.b16 %v1558
        %v1978 = vunpack.c.h.b16 %v1558
        %v1979 = vunpack.c.l.b16 %v1559
        %v1980 = vunpack.c.h.b16 %v1559
        %v1981 = vunpack.c.l.b16 %v1560
        %v1982 = vunpack.c.h.b16 %v1560
        %v1983 = vunpack.c.l.b16 %v1561
        %v1984 = vunpack.c.h.b16 %v1561
        %v1985 = vunpack.c.l.b16 %v1562
        %v1986 = vunpack.c.h.b16 %v1562
        %v1987 = vunpack.c.l.b16 %v1563
        %v1988 = vunpack.c.h.b16 %v1563
        %v1989 = vunpack.c.l.b16 %v1564
        %v1990 = vunpack.c.h.b16 %v1564
        %v1991 = vunpack.c.l.b16 %v1565
        %v1992 = vunpack.c.h.b16 %v1565
        %v1993 = vunpack.c.l.b16 %v1566
        %v1994 = vunpack.c.h.b16 %v1566
        %v1995 = vunpack.c.l.b16 %v1567
        %v1996 = vunpack.c.h.b16 %v1567
        %v1997 = vunpack.c.l.b16 %v1568
        %v1998 = vunpack.c.h.b16 %v1568
        %v1999 = vunpack.c.l.b16 %v1569
        %v2000 = vunpack.c.h.b16 %v1569
        %v2001 = vunpack.c.l.b16 %v1570
        %v2002 = vunpack.c.h.b16 %v1570
        %v2003 = vunpack.c.l.b16 %v1571
        %v2004 = vunpack.c.h.b16 %v1571
        %v2005 = vunpack.c.l.b16 %v1572
        %v2006 = vunpack.c.h.b16 %v1572
        %v2007 = vunpack.c.l.b16 %v1573
        %v2008 = vunpack.c.h.b16 %v1573
        %v2009 = vunpack.c.l.b16 %v1574
        %v2010 = vunpack.c.h.b16 %v1574
        %v2011 = vunpack.c.l.b16 %v1575
        %v2012 = vunpack.c.h.b16 %v1575
        %v2013 = vunpack.c.l.b16 %v1576
        %v2014 = vunpack.c.h.b16 %v1576
        %v2015 = vpack.c.b16 %v1729, %v1727
        %v2016 = vpack.c.b16 %v1730, %v1728
        %v2017 = vpack.c.b16 %v1733, %v1731
        %v2018 = vpack.c.b16 %v1734, %v1732
        %v2019 = vpack.c.b16 %v1737, %v1735
        %v2020 = vpack.c.b16 %v1738, %v1736
        %v2021 = vpack.c.b16 %v1741, %v1739
        %v2022 = vpack.c.b16 %v1742, %v1740
        %v2023 = vpack.c.b16 %v1745, %v1743
        %v2024 = vpack.c.b16 %v1746, %v1744
        %v2025 = vpack.c.b16 %v1749, %v1747
        %v2026 = vpack.c.b16 %v1750, %v1748
        %v2027 = vpack.c.b16 %v1753, %v1751
        %v2028 = vpack.c.b16 %v1754, %v1752
        %v2029 = vpack.c.b16 %v1757, %v1755
        %v2030 = vpack.c.b16 %v1758, %v1756
        %v2031 = vpack.c.b16 %v1761, %v1759
        %v2032 = vpack.c.b16 %v1762, %v1760
        %v2033 = vpack.c.b16 %v1765, %v1763
        %v2034 = vpack.c.b16 %v1766, %v1764
        %v2035 = vpack.c.b16 %v1769, %v1767
        %v2036 = vpack.c.b16 %v1770, %v1768
        %v2037 = vpack.c.b16 %v1773, %v1771
        %v2038 = vpack.c.b16 %v1774, %v1772
        %v2039 = vpack.c.b16 %v1777, %v1775
        %v2040 = vpack.c.b16 %v1778, %v1776
        %v2041 = vpack.c.b16 %v1781, %v1779
        %v2042 = vpack.c.b16 %v1782, %v1780
        %v2043 = vpack.c.b16 %v1785, %v1783
        %v2044 = vpack.c.b16 %v1786, %v1784
        %v2045 = vpack.c.b16 %v1789, %v1787
        %v2046 = vpack.c.b16 %v1790, %v1788
        %v2047 = vpack.c.b16 %v1793, %v1791
        %v2048 = vpack.c.b16 %v1794, %v1792
        %v2049 = vpack.c.b16 %v1797, %v1795
        %v2050 = vpack.c.b16 %v1798, %v1796
        %v2051 = vpack.c.b16 %v1801, %v1799
        %v2052 = vpack.c.b16 %v1802, %v1800
        %v2053 = vpack.c.b16 %v1805, %v1803
        %v2054 = vpack.c.b16 %v1806, %v1804
        %v2055 = vpack.c.b16 %v1809, %v1807
        %v2056 = vpack.c.b16 %v1810, %v1808
        %v2057 = vpack.c.b16 %v1813, %v1811
        %v2058 = vpack.c.b16 %v1814, %v1812
        %v2059 = vpack.c.b16 %v1817, %v1815
        %v2060 = vpack.c.b16 %v1818, %v1816
        %v2061 = vpack.c.b16 %v1821, %v1819
        %v2062 = vpack.c.b16 %v1822, %v1820
        %v2063 = vpack.c.b16 %v1825, %v1823
        %v2064 = vpack.c.b16 %v1826, %v1824
        %v2065 = vpack.c.b16 %v1829, %v1827
        %v2066 = vpack.c.b16 %v1830, %v1828
        %v2067 = vpack.c.b16 %v1833, %v1831
        %v2068 = vpack.c.b16 %v1834, %v1832
        %v2069 = vpack.c.b16 %v1837, %v1835
        %v2070 = vpack.c.b16 %v1838, %v1836
        %v2071 = vpack.c.b16 %v1841, %v1839
        %v2072 = vpack.c.b16 %v1842, %v1840
        %v2073 = vpack.c.b16 %v1845, %v1843
        %v2074 = vpack.c.b16 %v1846, %v1844
        %v2075 = vpack.c.b16 %v1849, %v1847
        %v2076 = vpack.c.b16 %v1850, %v1848
        %v2077 = vpack.c.b16 %v1853, %v1851
        %v2078 = vpack.c.b16 %v1854, %v1852
        %v2079 = vpack.c.b16 %v1857, %v1855
        %v2080 = vpack.c.b16 %v1858, %v1856
        %v2081 = vpack.c.b16 %v1861, %v1859
        %v2082 = vpack.c.b16 %v1862, %v1860
        %v2083 = vpack.c.b16 %v1865, %v1863
        %v2084 = vpack.c.b16 %v1866, %v1864
        %v2085 = vpack.c.b16 %v1869, %v1867
        %v2086 = vpack.c.b16 %v1870, %v1868
        %v2087 = vpack.c.b16 %v1873, %v1871
        %v2088 = vpack.c.b16 %v1874, %v1872
        %v2089 = vpack.c.b16 %v1877, %v1875
        %v2090 = vpack.c.b16 %v1878, %v1876
        %v2091 = vpack.c.b16 %v1881, %v1879
        %v2092 = vpack.c.b16 %v1882, %v1880
        %v2093 = vpack.c.b16 %v1885, %v1883
        %v2094 = vpack.c.b16 %v1886, %v1884
        %v2095 = vpack.c.b16 %v1889, %v1887
        %v2096 = vpack.c.b16 %v1890, %v1888
        %v2097 = vpack.c.b16 %v1893, %v1891
        %v2098 = vpack.c.b16 %v1894, %v1892
        %v2099 = vpack.c.b16 %v1897, %v1895
        %v2100 = vpack.c.b16 %v1898, %v1896
        %v2101 = vpack.c.b16 %v1901, %v1899
        %v2102 = vpack.c.b16 %v1902, %v1900
        %v2103 = vpack.c.b16 %v1905, %v1903
        %v2104 = vpack.c.b16 %v1906, %v1904
        %v2105 = vpack.c.b16 %v1909, %v1907
        %v2106 = vpack.c.b16 %v1910, %v1908
        %v2107 = vpack.c.b16 %v1913, %v1911
        %v2108 = vpack.c.b16 %v1914, %v1912
        %v2109 = vpack.c.b16 %v1917, %v1915
        %v2110 = vpack.c.b16 %v1918, %v1916
        %v2111 = vpack.c.b16 %v1921, %v1919
        %v2112 = vpack.c.b16 %v1922, %v1920
        %v2113 = vpack.c.b16 %v1925, %v1923
        %v2114 = vpack.c.b16 %v1926, %v1924
        %v2115 = vpack.c.b16 %v1929, %v1927
        %v2116 = vpack.c.b16 %v1930, %v1928
        %v2117 = vpack.c.b16 %v1933, %v1931
        %v2118 = vpack.c.b16 %v1934, %v1932
        %v2119 = vpack.c.b16 %v1937, %v1935
        %v2120 = vpack.c.b16 %v1938, %v1936
        %v2121 = vpack.c.b16 %v1941, %v1939
        %v2122 = vpack.c.b16 %v1942, %v1940
        %v2123 = vpack.c.b16 %v1945, %v1943
        %v2124 = vpack.c.b16 %v1946, %v1944
        %v2125 = vpack.c.b16 %v1949, %v1947
        %v2126 = vpack.c.b16 %v1950, %v1948
        %v2127 = vpack.c.b16 %v1953, %v1951
        %v2128 = vpack.c.b16 %v1954, %v1952
        %v2129 = vpack.c.b16 %v1957, %v1955
        %v2130 = vpack.c.b16 %v1958, %v1956
        %v2131 = vpack.c.b16 %v1961, %v1959
        %v2132 = vpack.c.b16 %v1962, %v1960
        %v2133 = vpack.c.b16 %v1965, %v1963
        %v2134 = vpack.c.b16 %v1966, %v1964
        %v2135 = vpack.c.b16 %v1969, %v1967
        %v2136 = vpack.c.b16 %v1970, %v1968
        %v2137 = vpack.c.b16 %v1973, %v1971
        %v2138 = vpack.c.b16 %v1974, %v1972
        %v2139 = vpack.c.b16 %v1977, %v1975
        %v2140 = vpack.c.b16 %v1978, %v1976
        %v2141 = vpack.c.b16 %v1981, %v1979
        %v2142 = vpack.c.b16 %v1982, %v1980
        %v2143 = vpack.c.b16 %v1985, %v1983
        %v2144 = vpack.c.b16 %v1986, %v1984
        %v2145 = vpack.c.b16 %v1989, %v1987
        %v2146 = vpack.c.b16 %v1990, %v1988
        %v2147 = vpack.c.b16 %v1993, %v1991
        %v2148 = vpack.c.b16 %v1994, %v1992
        %v2149 = vpack.c.b16 %v1997, %v1995
        %v2150 = vpack.c.b16 %v1998, %v1996
        %v2151 = vpack.c.b16 %v2001, %v1999
        %v2152 = vpack.c.b16 %v2002, %v2000
        %v2153 = vpack.c.b16 %v2005, %v2003
        %v2154 = vpack.c.b16 %v2006, %v2004
        %v2155 = vpack.c.b16 %v2009, %v2007
        %v2156 = vpack.c.b16 %v2010, %v2008
        %v2157 = vpack.c.b16 %v2013, %v2011
        %v2158 = vpack.c.b16 %v2014, %v2012
        %2303 = vmatpush.bf16.msra.mxu0 %v2029
        %2304 = vmatpush.bf16.msra.mxu0 %v2027
        %2305 = vmatpush.bf16.msra.mxu0 %v2025
        %2306 = vmatpush.bf16.msra.mxu0 %v2023
        %2307 = vmatpush.bf16.msra.mxu0 %v2021
        %2308 = vmatpush.bf16.msra.mxu0 %v2019
        %2309 = vmatpush.bf16.msra.mxu0 %v2017
        %2310 = vmatpush.bf16.msra.mxu0 %v2015
        %2311 = vmatmul.bf16.gmra.mxu0 %v973
        %v2312 = vpop.f32.mrf.mxu0
        %v2313 = vadd.f32 %v1579, %v2312
        %v2314 = vpop.f32.mrf.mxu0
        %v2315 = vadd.f32 %v1579, %v2314
        %2316 = vmatmul.bf16.gmra.mxu0 %v974
        %v2317 = vpop.f32.mrf.mxu0
        %v2318 = vadd.f32 %v1579, %v2317
        %v2319 = vpop.f32.mrf.mxu0
        %v2320 = vadd.f32 %v1579, %v2319
        %2321 = vmatmul.bf16.gmra.mxu0 %v975
        %v2322 = vpop.f32.mrf.mxu0
        %v2323 = vadd.f32 %v1579, %v2322
        %v2324 = vpop.f32.mrf.mxu0
        %v2325 = vadd.f32 %v1579, %v2324
        %2326 = vmatmul.bf16.gmra.mxu0 %v976
        %v2327 = vpop.f32.mrf.mxu0
        %v2328 = vadd.f32 %v1579, %v2327
        %v2329 = vpop.f32.mrf.mxu0
        %v2330 = vadd.f32 %v1579, %v2329
        %2331 = vmatmul.bf16.gmra.mxu0 %v977
        %v2332 = vpop.f32.mrf.mxu0
        %v2333 = vadd.f32 %v1579, %v2332
        %v2334 = vpop.f32.mrf.mxu0
        %v2335 = vadd.f32 %v1579, %v2334
        %2336 = vmatmul.bf16.gmra.mxu0 %v978
        %v2337 = vpop.f32.mrf.mxu0
        %v2338 = vadd.f32 %v1579, %v2337
        %v2339 = vpop.f32.mrf.mxu0
        %v2340 = vadd.f32 %v1579, %v2339
        %2341 = vmatmul.bf16.gmra.mxu0 %v979
        %v2342 = vpop.f32.mrf.mxu0
        %v2343 = vadd.f32 %v1579, %v2342
        %v2344 = vpop.f32.mrf.mxu0
        %v2345 = vadd.f32 %v1579, %v2344
        %2346 = vmatmul.bf16.gmra.mxu0 %v980
        %v2347 = vpop.f32.mrf.mxu0
        %v2348 = vadd.f32 %v1579, %v2347
        %v2349 = vpop.f32.mrf.mxu0
        %v2350 = vadd.f32 %v1579, %v2349
        %2351 = vmatmul.bf16.gmra.mxu0 %v981
        %v2352 = vpop.f32.mrf.mxu0
        %v2353 = vadd.f32 %v1579, %v2352
        %v2354 = vpop.f32.mrf.mxu0
        %v2355 = vadd.f32 %v1579, %v2354
        %2356 = vmatmul.bf16.gmra.mxu0 %v982
        %v2357 = vpop.f32.mrf.mxu0
        %v2358 = vadd.f32 %v1579, %v2357
        %v2359 = vpop.f32.mrf.mxu0
        %v2360 = vadd.f32 %v1579, %v2359
        %2361 = vmatmul.bf16.gmra.mxu0 %v983
        %v2362 = vpop.f32.mrf.mxu0
        %v2363 = vadd.f32 %v1579, %v2362
        %v2364 = vpop.f32.mrf.mxu0
        %v2365 = vadd.f32 %v1579, %v2364
        %2366 = vmatmul.bf16.gmra.mxu0 %v984
        %v2367 = vpop.f32.mrf.mxu0
        %v2368 = vadd.f32 %v1579, %v2367
        %v2369 = vpop.f32.mrf.mxu0
        %v2370 = vadd.f32 %v1579, %v2369
        %2371 = vmatmul.bf16.gmra.mxu0 %v985
        %v2372 = vpop.f32.mrf.mxu0
        %v2373 = vadd.f32 %v1579, %v2372
        %v2374 = vpop.f32.mrf.mxu0
        %v2375 = vadd.f32 %v1579, %v2374
        %2376 = vmatmul.bf16.gmra.mxu0 %v986
        %v2377 = vpop.f32.mrf.mxu0
        %v2378 = vadd.f32 %v1579, %v2377
        %v2379 = vpop.f32.mrf.mxu0
        %v2380 = vadd.f32 %v1579, %v2379
        %2381 = vmatmul.bf16.gmra.mxu0 %v987
        %v2382 = vpop.f32.mrf.mxu0
        %v2383 = vadd.f32 %v1579, %v2382
        %v2384 = vpop.f32.mrf.mxu0
        %v2385 = vadd.f32 %v1579, %v2384
        %2386 = vmatmul.bf16.gmra.mxu0 %v988
        %v2387 = vpop.f32.mrf.mxu0
        %v2388 = vadd.f32 %v1579, %v2387
        %v2389 = vpop.f32.mrf.mxu0
        %v2390 = vadd.f32 %v1579, %v2389
        %2391 = vdwg.mxu0
        %2392 = vmatpush.bf16.msra.mxu0 %v2045
        %2393 = vmatpush.bf16.msra.mxu0 %v2043
        %2394 = vmatpush.bf16.msra.mxu0 %v2041
        %2395 = vmatpush.bf16.msra.mxu0 %v2039
        %2396 = vmatpush.bf16.msra.mxu0 %v2037
        %2397 = vmatpush.bf16.msra.mxu0 %v2035
        %2398 = vmatpush.bf16.msra.mxu0 %v2033
        %2399 = vmatpush.bf16.msra.mxu0 %v2031
        %2400 = vmatmul.bf16.gmra.mxu0 %v1065
        %v2401 = vpop.f32.mrf.mxu0
        %v2402 = vadd.f32 %v2313, %v2401
        %v2403 = vpop.f32.mrf.mxu0
        %v2404 = vadd.f32 %v2315, %v2403
        %2405 = vmatmul.bf16.gmra.mxu0 %v1077
        %v2406 = vpop.f32.mrf.mxu0
        %v2407 = vadd.f32 %v2318, %v2406
        %v2408 = vpop.f32.mrf.mxu0
        %v2409 = vadd.f32 %v2320, %v2408
        %2410 = vmatmul.bf16.gmra.mxu0 %v1089
        %v2411 = vpop.f32.mrf.mxu0
        %v2412 = vadd.f32 %v2323, %v2411
        %v2413 = vpop.f32.mrf.mxu0
        %v2414 = vadd.f32 %v2325, %v2413
        %2415 = vmatmul.bf16.gmra.mxu0 %v1101
        %v2416 = vpop.f32.mrf.mxu0
        %v2417 = vadd.f32 %v2328, %v2416
        %v2418 = vpop.f32.mrf.mxu0
        %v2419 = vadd.f32 %v2330, %v2418
        %2420 = vmatmul.bf16.gmra.mxu0 %v1113
        %v2421 = vpop.f32.mrf.mxu0
        %v2422 = vadd.f32 %v2333, %v2421
        %v2423 = vpop.f32.mrf.mxu0
        %v2424 = vadd.f32 %v2335, %v2423
        %2425 = vmatmul.bf16.gmra.mxu0 %v1125
        %v2426 = vpop.f32.mrf.mxu0
        %v2427 = vadd.f32 %v2338, %v2426
        %v2428 = vpop.f32.mrf.mxu0
        %v2429 = vadd.f32 %v2340, %v2428
        %2430 = vmatmul.bf16.gmra.mxu0 %v1137
        %v2431 = vpop.f32.mrf.mxu0
        %v2432 = vadd.f32 %v2343, %v2431
        %v2433 = vpop.f32.mrf.mxu0
        %v2434 = vadd.f32 %v2345, %v2433
        %2435 = vmatmul.bf16.gmra.mxu0 %v1149
        %v2436 = vpop.f32.mrf.mxu0
        %v2437 = vadd.f32 %v2348, %v2436
        %v2438 = vpop.f32.mrf.mxu0
        %v2439 = vadd.f32 %v2350, %v2438
        %2440 = vmatmul.bf16.gmra.mxu0 %v1161
        %v2441 = vpop.f32.mrf.mxu0
        %v2442 = vadd.f32 %v2353, %v2441
        %v2443 = vpop.f32.mrf.mxu0
        %v2444 = vadd.f32 %v2355, %v2443
        %2445 = vmatmul.bf16.gmra.mxu0 %v1173
        %v2446 = vpop.f32.mrf.mxu0
        %v2447 = vadd.f32 %v2358, %v2446
        %v2448 = vpop.f32.mrf.mxu0
        %v2449 = vadd.f32 %v2360, %v2448
        %2450 = vmatmul.bf16.gmra.mxu0 %v1185
        %v2451 = vpop.f32.mrf.mxu0
        %v2452 = vadd.f32 %v2363, %v2451
        %v2453 = vpop.f32.mrf.mxu0
        %v2454 = vadd.f32 %v2365, %v2453
        %2455 = vmatmul.bf16.gmra.mxu0 %v1197
        %v2456 = vpop.f32.mrf.mxu0
        %v2457 = vadd.f32 %v2368, %v2456
        %v2458 = vpop.f32.mrf.mxu0
        %v2459 = vadd.f32 %v2370, %v2458
        %2460 = vmatmul.bf16.gmra.mxu0 %v1209
        %v2461 = vpop.f32.mrf.mxu0
        %v2462 = vadd.f32 %v2373, %v2461
        %v2463 = vpop.f32.mrf.mxu0
        %v2464 = vadd.f32 %v2375, %v2463
        %2465 = vmatmul.bf16.gmra.mxu0 %v1221
        %v2466 = vpop.f32.mrf.mxu0
        %v2467 = vadd.f32 %v2378, %v2466
        %v2468 = vpop.f32.mrf.mxu0
        %v2469 = vadd.f32 %v2380, %v2468
        %2470 = vmatmul.bf16.gmra.mxu0 %v1233
        %v2471 = vpop.f32.mrf.mxu0
        %v2472 = vadd.f32 %v2383, %v2471
        %v2473 = vpop.f32.mrf.mxu0
        %v2474 = vadd.f32 %v2385, %v2473
        %2475 = vmatmul.bf16.gmra.mxu0 %v1245
        %v2476 = vpop.f32.mrf.mxu0
        %v2477 = vadd.f32 %v2388, %v2476
        %v2478 = vpop.f32.mrf.mxu0
        %v2479 = vadd.f32 %v2390, %v2478
        %2480 = vdwg.mxu0
        %2481 = vmatpush.bf16.msra.mxu0 %v2061
        %2482 = vmatpush.bf16.msra.mxu0 %v2059
        %2483 = vmatpush.bf16.msra.mxu0 %v2057
        %2484 = vmatpush.bf16.msra.mxu0 %v2055
        %2485 = vmatpush.bf16.msra.mxu0 %v2053
        %2486 = vmatpush.bf16.msra.mxu0 %v2051
        %2487 = vmatpush.bf16.msra.mxu0 %v2049
        %2488 = vmatpush.bf16.msra.mxu0 %v2047
        %2489 = vmatmul.bf16.gmra.mxu0 %v1313
        %v2490 = vpop.f32.mrf.mxu0
        %v2491 = vadd.f32 %v2402, %v2490
        %v2492 = vpop.f32.mrf.mxu0
        %v2493 = vadd.f32 %v2404, %v2492
        %2494 = vmatmul.bf16.gmra.mxu0 %v1316
        %v2495 = vpop.f32.mrf.mxu0
        %v2496 = vadd.f32 %v2407, %v2495
        %v2497 = vpop.f32.mrf.mxu0
        %v2498 = vadd.f32 %v2409, %v2497
        %2499 = vmatmul.bf16.gmra.mxu0 %v1319
        %v2500 = vpop.f32.mrf.mxu0
        %v2501 = vadd.f32 %v2412, %v2500
        %v2502 = vpop.f32.mrf.mxu0
        %v2503 = vadd.f32 %v2414, %v2502
        %2504 = vmatmul.bf16.gmra.mxu0 %v1322
        %v2505 = vpop.f32.mrf.mxu0
        %v2506 = vadd.f32 %v2417, %v2505
        %v2507 = vpop.f32.mrf.mxu0
        %v2508 = vadd.f32 %v2419, %v2507
        %2509 = vmatmul.bf16.gmra.mxu0 %v1325
        %v2510 = vpop.f32.mrf.mxu0
        %v2511 = vadd.f32 %v2422, %v2510
        %v2512 = vpop.f32.mrf.mxu0
        %v2513 = vadd.f32 %v2424, %v2512
        %2514 = vmatmul.bf16.gmra.mxu0 %v1328
        %v2515 = vpop.f32.mrf.mxu0
        %v2516 = vadd.f32 %v2427, %v2515
        %v2517 = vpop.f32.mrf.mxu0
        %v2518 = vadd.f32 %v2429, %v2517
        %2519 = vmatmul.bf16.gmra.mxu0 %v1331
        %v2520 = vpop.f32.mrf.mxu0
        %v2521 = vadd.f32 %v2432, %v2520
        %v2522 = vpop.f32.mrf.mxu0
        %v2523 = vadd.f32 %v2434, %v2522
        %2524 = vmatmul.bf16.gmra.mxu0 %v1334
        %v2525 = vpop.f32.mrf.mxu0
        %v2526 = vadd.f32 %v2437, %v2525
        %v2527 = vpop.f32.mrf.mxu0
        %v2528 = vadd.f32 %v2439, %v2527
        %2529 = vmatmul.bf16.gmra.mxu0 %v1337
        %v2530 = vpop.f32.mrf.mxu0
        %v2531 = vadd.f32 %v2442, %v2530
        %v2532 = vpop.f32.mrf.mxu0
        %v2533 = vadd.f32 %v2444, %v2532
        %2534 = vmatmul.bf16.gmra.mxu0 %v1340
        %v2535 = vpop.f32.mrf.mxu0
        %v2536 = vadd.f32 %v2447, %v2535
        %v2537 = vpop.f32.mrf.mxu0
        %v2538 = vadd.f32 %v2449, %v2537
        %2539 = vmatmul.bf16.gmra.mxu0 %v1343
        %v2540 = vpop.f32.mrf.mxu0
        %v2541 = vadd.f32 %v2452, %v2540
        %v2542 = vpop.f32.mrf.mxu0
        %v2543 = vadd.f32 %v2454, %v2542
        %2544 = vmatmul.bf16.gmra.mxu0 %v1346
        %v2545 = vpop.f32.mrf.mxu0
        %v2546 = vadd.f32 %v2457, %v2545
        %v2547 = vpop.f32.mrf.mxu0
        %v2548 = vadd.f32 %v2459, %v2547
        %2549 = vmatmul.bf16.gmra.mxu0 %v1349
        %v2550 = vpop.f32.mrf.mxu0
        %v2551 = vadd.f32 %v2462, %v2550
        %v2552 = vpop.f32.mrf.mxu0
        %v2553 = vadd.f32 %v2464, %v2552
        %2554 = vmatmul.bf16.gmra.mxu0 %v1352
        %v2555 = vpop.f32.mrf.mxu0
        %v2556 = vadd.f32 %v2467, %v2555
        %v2557 = vpop.f32.mrf.mxu0
        %v2558 = vadd.f32 %v2469, %v2557
        %2559 = vmatmul.bf16.gmra.mxu0 %v1355
        %v2560 = vpop.f32.mrf.mxu0
        %v2561 = vadd.f32 %v2472, %v2560
        %v2562 = vpop.f32.mrf.mxu0
        %v2563 = vadd.f32 %v2474, %v2562
        %2564 = vmatmul.bf16.gmra.mxu0 %v1358
        %v2565 = vpop.f32.mrf.mxu0
        %v2566 = vadd.f32 %v2477, %v2565
        %v2567 = vpop.f32.mrf.mxu0
        %v2568 = vadd.f32 %v2479, %v2567
        %2569 = vdwg.mxu0
        %2570 = vmatpush.bf16.msra.mxu0 %v2077
        %2571 = vmatpush.bf16.msra.mxu0 %v2075
        %2572 = vmatpush.bf16.msra.mxu0 %v2073
        %2573 = vmatpush.bf16.msra.mxu0 %v2071
        %2574 = vmatpush.bf16.msra.mxu0 %v2069
        %2575 = vmatpush.bf16.msra.mxu0 %v2067
        %2576 = vmatpush.bf16.msra.mxu0 %v2065
        %2577 = vmatpush.bf16.msra.mxu0 %v2063
        %2578 = vmatmul.bf16.gmra.mxu0 %v974
        %v2579 = vpop.f32.mrf.mxu0
        %v2580 = vadd.f32 %v2491, %v2579
        %v2581 = vpop.f32.mrf.mxu0
        %v2582 = vadd.f32 %v2493, %v2581
        %2583 = vmatmul.bf16.gmra.mxu0 %v975
        %v2584 = vpop.f32.mrf.mxu0
        %v2585 = vadd.f32 %v2496, %v2584
        %v2586 = vpop.f32.mrf.mxu0
        %v2587 = vadd.f32 %v2498, %v2586
        %2588 = vmatmul.bf16.gmra.mxu0 %v976
        %v2589 = vpop.f32.mrf.mxu0
        %v2590 = vadd.f32 %v2501, %v2589
        %v2591 = vpop.f32.mrf.mxu0
        %v2592 = vadd.f32 %v2503, %v2591
        %2593 = vmatmul.bf16.gmra.mxu0 %v977
        %v2594 = vpop.f32.mrf.mxu0
        %v2595 = vadd.f32 %v2506, %v2594
        %v2596 = vpop.f32.mrf.mxu0
        %v2597 = vadd.f32 %v2508, %v2596
        %2598 = vmatmul.bf16.gmra.mxu0 %v978
        %v2599 = vpop.f32.mrf.mxu0
        %v2600 = vadd.f32 %v2511, %v2599
        %v2601 = vpop.f32.mrf.mxu0
        %v2602 = vadd.f32 %v2513, %v2601
        %2603 = vmatmul.bf16.gmra.mxu0 %v979
        %v2604 = vpop.f32.mrf.mxu0
        %v2605 = vadd.f32 %v2516, %v2604
        %v2606 = vpop.f32.mrf.mxu0
        %v2607 = vadd.f32 %v2518, %v2606
        %2608 = vmatmul.bf16.gmra.mxu0 %v980
        %v2609 = vpop.f32.mrf.mxu0
        %v2610 = vadd.f32 %v2521, %v2609
        %v2611 = vpop.f32.mrf.mxu0
        %v2612 = vadd.f32 %v2523, %v2611
        %2613 = vmatmul.bf16.gmra.mxu0 %v981
        %v2614 = vpop.f32.mrf.mxu0
        %v2615 = vadd.f32 %v2526, %v2614
        %v2616 = vpop.f32.mrf.mxu0
        %v2617 = vadd.f32 %v2528, %v2616
        %2618 = vmatmul.bf16.gmra.mxu0 %v982
        %v2619 = vpop.f32.mrf.mxu0
        %v2620 = vadd.f32 %v2531, %v2619
        %v2621 = vpop.f32.mrf.mxu0
        %v2622 = vadd.f32 %v2533, %v2621
        %2623 = vmatmul.bf16.gmra.mxu0 %v983
        %v2624 = vpop.f32.mrf.mxu0
        %v2625 = vadd.f32 %v2536, %v2624
        %v2626 = vpop.f32.mrf.mxu0
        %v2627 = vadd.f32 %v2538, %v2626
        %2628 = vmatmul.bf16.gmra.mxu0 %v984
        %v2629 = vpop.f32.mrf.mxu0
        %v2630 = vadd.f32 %v2541, %v2629
        %v2631 = vpop.f32.mrf.mxu0
        %v2632 = vadd.f32 %v2543, %v2631
        %2633 = vmatmul.bf16.gmra.mxu0 %v985
        %v2634 = vpop.f32.mrf.mxu0
        %v2635 = vadd.f32 %v2546, %v2634
        %v2636 = vpop.f32.mrf.mxu0
        %v2637 = vadd.f32 %v2548, %v2636
        %2638 = vmatmul.bf16.gmra.mxu0 %v986
        %v2639 = vpop.f32.mrf.mxu0
        %v2640 = vadd.f32 %v2551, %v2639
        %v2641 = vpop.f32.mrf.mxu0
        %v2642 = vadd.f32 %v2553, %v2641
        %2643 = vmatmul.bf16.gmra.mxu0 %v987
        %v2644 = vpop.f32.mrf.mxu0
        %v2645 = vadd.f32 %v2556, %v2644
        %v2646 = vpop.f32.mrf.mxu0
        %v2647 = vadd.f32 %v2558, %v2646
        %2648 = vmatmul.bf16.gmra.mxu0 %v988
        %v2649 = vpop.f32.mrf.mxu0
        %v2650 = vadd.f32 %v2561, %v2649
        %v2651 = vpop.f32.mrf.mxu0
        %v2652 = vadd.f32 %v2563, %v2651
        %2653 = vmatmul.bf16.gmra.mxu0 %v1379
        %v2654 = vpop.f32.mrf.mxu0
        %v2655 = vadd.f32 %v2566, %v2654
        %v2656 = vpop.f32.mrf.mxu0
        %v2657 = vadd.f32 %v2568, %v2656
        %2658 = vdwg.mxu0
        %2659 = vmatpush.bf16.msra.mxu0 %v2093
        %2660 = vmatpush.bf16.msra.mxu0 %v2091
        %2661 = vmatpush.bf16.msra.mxu0 %v2089
        %2662 = vmatpush.bf16.msra.mxu0 %v2087
        %2663 = vmatpush.bf16.msra.mxu0 %v2085
        %2664 = vmatpush.bf16.msra.mxu0 %v2083
        %2665 = vmatpush.bf16.msra.mxu0 %v2081
        %2666 = vmatpush.bf16.msra.mxu0 %v2079
        %2667 = vmatmul.bf16.gmra.mxu0 %v1077
        %v2668 = vpop.f32.mrf.mxu0
        %v2669 = vadd.f32 %v2580, %v2668
        %v2670 = vpop.f32.mrf.mxu0
        %v2671 = vadd.f32 %v2582, %v2670
        %2672 = vmatmul.bf16.gmra.mxu0 %v1089
        %v2673 = vpop.f32.mrf.mxu0
        %v2674 = vadd.f32 %v2585, %v2673
        %v2675 = vpop.f32.mrf.mxu0
        %v2676 = vadd.f32 %v2587, %v2675
        %2677 = vmatmul.bf16.gmra.mxu0 %v1101
        %v2678 = vpop.f32.mrf.mxu0
        %v2679 = vadd.f32 %v2590, %v2678
        %v2680 = vpop.f32.mrf.mxu0
        %v2681 = vadd.f32 %v2592, %v2680
        %2682 = vmatmul.bf16.gmra.mxu0 %v1113
        %v2683 = vpop.f32.mrf.mxu0
        %v2684 = vadd.f32 %v2595, %v2683
        %v2685 = vpop.f32.mrf.mxu0
        %v2686 = vadd.f32 %v2597, %v2685
        %2687 = vmatmul.bf16.gmra.mxu0 %v1125
        %v2688 = vpop.f32.mrf.mxu0
        %v2689 = vadd.f32 %v2600, %v2688
        %v2690 = vpop.f32.mrf.mxu0
        %v2691 = vadd.f32 %v2602, %v2690
        %2692 = vmatmul.bf16.gmra.mxu0 %v1137
        %v2693 = vpop.f32.mrf.mxu0
        %v2694 = vadd.f32 %v2605, %v2693
        %v2695 = vpop.f32.mrf.mxu0
        %v2696 = vadd.f32 %v2607, %v2695
        %2697 = vmatmul.bf16.gmra.mxu0 %v1149
        %v2698 = vpop.f32.mrf.mxu0
        %v2699 = vadd.f32 %v2610, %v2698
        %v2700 = vpop.f32.mrf.mxu0
        %v2701 = vadd.f32 %v2612, %v2700
        %2702 = vmatmul.bf16.gmra.mxu0 %v1161
        %v2703 = vpop.f32.mrf.mxu0
        %v2704 = vadd.f32 %v2615, %v2703
        %v2705 = vpop.f32.mrf.mxu0
        %v2706 = vadd.f32 %v2617, %v2705
        %2707 = vmatmul.bf16.gmra.mxu0 %v1173
        %v2708 = vpop.f32.mrf.mxu0
        %v2709 = vadd.f32 %v2620, %v2708
        %v2710 = vpop.f32.mrf.mxu0
        %v2711 = vadd.f32 %v2622, %v2710
        %2712 = vmatmul.bf16.gmra.mxu0 %v1185
        %v2713 = vpop.f32.mrf.mxu0
        %v2714 = vadd.f32 %v2625, %v2713
        %v2715 = vpop.f32.mrf.mxu0
        %v2716 = vadd.f32 %v2627, %v2715
        %2717 = vmatmul.bf16.gmra.mxu0 %v1197
        %v2718 = vpop.f32.mrf.mxu0
        %v2719 = vadd.f32 %v2630, %v2718
        %v2720 = vpop.f32.mrf.mxu0
        %v2721 = vadd.f32 %v2632, %v2720
        %2722 = vmatmul.bf16.gmra.mxu0 %v1209
        %v2723 = vpop.f32.mrf.mxu0
        %v2724 = vadd.f32 %v2635, %v2723
        %v2725 = vpop.f32.mrf.mxu0
        %v2726 = vadd.f32 %v2637, %v2725
        %2727 = vmatmul.bf16.gmra.mxu0 %v1221
        %v2728 = vpop.f32.mrf.mxu0
        %v2729 = vadd.f32 %v2640, %v2728
        %v2730 = vpop.f32.mrf.mxu0
        %v2731 = vadd.f32 %v2642, %v2730
        %2732 = vmatmul.bf16.gmra.mxu0 %v1233
        %v2733 = vpop.f32.mrf.mxu0
        %v2734 = vadd.f32 %v2645, %v2733
        %v2735 = vpop.f32.mrf.mxu0
        %v2736 = vadd.f32 %v2647, %v2735
        %2737 = vmatmul.bf16.gmra.mxu0 %v1245
        %v2738 = vpop.f32.mrf.mxu0
        %v2739 = vadd.f32 %v2650, %v2738
        %v2740 = vpop.f32.mrf.mxu0
        %v2741 = vadd.f32 %v2652, %v2740
        %2742 = vmatmul.bf16.gmra.mxu0 %v1395
        %v2743 = vpop.f32.mrf.mxu0
        %v2744 = vadd.f32 %v2655, %v2743
        %v2745 = vpop.f32.mrf.mxu0
        %v2746 = vadd.f32 %v2657, %v2745
        %2747 = vdwg.mxu0
        %2748 = vmatpush.bf16.msra.mxu0 %v2109
        %2749 = vmatpush.bf16.msra.mxu0 %v2107
        %2750 = vmatpush.bf16.msra.mxu0 %v2105
        %2751 = vmatpush.bf16.msra.mxu0 %v2103
        %2752 = vmatpush.bf16.msra.mxu0 %v2101
        %2753 = vmatpush.bf16.msra.mxu0 %v2099
        %2754 = vmatpush.bf16.msra.mxu0 %v2097
        %2755 = vmatpush.bf16.msra.mxu0 %v2095
        %2756 = vmatmul.bf16.gmra.mxu0 %v1316
        %v2757 = vpop.f32.mrf.mxu0
        %v2758 = vadd.f32 %v2669, %v2757
        %v2759 = vpop.f32.mrf.mxu0
        %v2760 = vadd.f32 %v2671, %v2759
        %2761 = vmatmul.bf16.gmra.mxu0 %v1319
        %v2762 = vpop.f32.mrf.mxu0
        %v2763 = vadd.f32 %v2674, %v2762
        %v2764 = vpop.f32.mrf.mxu0
        %v2765 = vadd.f32 %v2676, %v2764
        %2766 = vmatmul.bf16.gmra.mxu0 %v1322
        %v2767 = vpop.f32.mrf.mxu0
        %v2768 = vadd.f32 %v2679, %v2767
        %v2769 = vpop.f32.mrf.mxu0
        %v2770 = vadd.f32 %v2681, %v2769
        %2771 = vmatmul.bf16.gmra.mxu0 %v1325
        %v2772 = vpop.f32.mrf.mxu0
        %v2773 = vadd.f32 %v2684, %v2772
        %v2774 = vpop.f32.mrf.mxu0
        %v2775 = vadd.f32 %v2686, %v2774
        %2776 = vmatmul.bf16.gmra.mxu0 %v1328
        %v2777 = vpop.f32.mrf.mxu0
        %v2778 = vadd.f32 %v2689, %v2777
        %v2779 = vpop.f32.mrf.mxu0
        %v2780 = vadd.f32 %v2691, %v2779
        %2781 = vmatmul.bf16.gmra.mxu0 %v1331
        %v2782 = vpop.f32.mrf.mxu0
        %v2783 = vadd.f32 %v2694, %v2782
        %v2784 = vpop.f32.mrf.mxu0
        %v2785 = vadd.f32 %v2696, %v2784
        %2786 = vmatmul.bf16.gmra.mxu0 %v1334
        %v2787 = vpop.f32.mrf.mxu0
        %v2788 = vadd.f32 %v2699, %v2787
        %v2789 = vpop.f32.mrf.mxu0
        %v2790 = vadd.f32 %v2701, %v2789
        %2791 = vmatmul.bf16.gmra.mxu0 %v1337
        %v2792 = vpop.f32.mrf.mxu0
        %v2793 = vadd.f32 %v2704, %v2792
        %v2794 = vpop.f32.mrf.mxu0
        %v2795 = vadd.f32 %v2706, %v2794
        %2796 = vmatmul.bf16.gmra.mxu0 %v1340
        %v2797 = vpop.f32.mrf.mxu0
        %v2798 = vadd.f32 %v2709, %v2797
        %v2799 = vpop.f32.mrf.mxu0
        %v2800 = vadd.f32 %v2711, %v2799
        %2801 = vmatmul.bf16.gmra.mxu0 %v1343
        %v2802 = vpop.f32.mrf.mxu0
        %v2803 = vadd.f32 %v2714, %v2802
        %v2804 = vpop.f32.mrf.mxu0
        %v2805 = vadd.f32 %v2716, %v2804
        %2806 = vmatmul.bf16.gmra.mxu0 %v1346
        %v2807 = vpop.f32.mrf.mxu0
        %v2808 = vadd.f32 %v2719, %v2807
        %v2809 = vpop.f32.mrf.mxu0
        %v2810 = vadd.f32 %v2721, %v2809
        %2811 = vmatmul.bf16.gmra.mxu0 %v1349
        %v2812 = vpop.f32.mrf.mxu0
        %v2813 = vadd.f32 %v2724, %v2812
        %v2814 = vpop.f32.mrf.mxu0
        %v2815 = vadd.f32 %v2726, %v2814
        %2816 = vmatmul.bf16.gmra.mxu0 %v1352
        %v2817 = vpop.f32.mrf.mxu0
        %v2818 = vadd.f32 %v2729, %v2817
        %v2819 = vpop.f32.mrf.mxu0
        %v2820 = vadd.f32 %v2731, %v2819
        %2821 = vmatmul.bf16.gmra.mxu0 %v1355
        %v2822 = vpop.f32.mrf.mxu0
        %v2823 = vadd.f32 %v2734, %v2822
        %v2824 = vpop.f32.mrf.mxu0
        %v2825 = vadd.f32 %v2736, %v2824
        %2826 = vmatmul.bf16.gmra.mxu0 %v1358
        %v2827 = vpop.f32.mrf.mxu0
        %v2828 = vadd.f32 %v2739, %v2827
        %v2829 = vpop.f32.mrf.mxu0
        %v2830 = vadd.f32 %v2741, %v2829
        %2831 = vmatmul.bf16.gmra.mxu0 %v1402
        %v2832 = vpop.f32.mrf.mxu0
        %v2833 = vadd.f32 %v2744, %v2832
        %v2834 = vpop.f32.mrf.mxu0
        %v2835 = vadd.f32 %v2746, %v2834
        %2836 = vdwg.mxu0
        %2837 = vmatpush.bf16.msra.mxu0 %v2125
        %2838 = vmatpush.bf16.msra.mxu0 %v2123
        %2839 = vmatpush.bf16.msra.mxu0 %v2121
        %2840 = vmatpush.bf16.msra.mxu0 %v2119
        %2841 = vmatpush.bf16.msra.mxu0 %v2117
        %2842 = vmatpush.bf16.msra.mxu0 %v2115
        %2843 = vmatpush.bf16.msra.mxu0 %v2113
        %2844 = vmatpush.bf16.msra.mxu0 %v2111
        %2845 = vmatmul.bf16.gmra.mxu0 %v975
        %v2846 = vpop.f32.mrf.mxu0
        %v2847 = vadd.f32 %v2758, %v2846
        %v2848 = vpop.f32.mrf.mxu0
        %v2849 = vadd.f32 %v2760, %v2848
        %2850 = vmatmul.bf16.gmra.mxu0 %v976
        %v2851 = vpop.f32.mrf.mxu0
        %v2852 = vadd.f32 %v2763, %v2851
        %v2853 = vpop.f32.mrf.mxu0
        %v2854 = vadd.f32 %v2765, %v2853
        %2855 = vmatmul.bf16.gmra.mxu0 %v977
        %v2856 = vpop.f32.mrf.mxu0
        %v2857 = vadd.f32 %v2768, %v2856
        %v2858 = vpop.f32.mrf.mxu0
        %v2859 = vadd.f32 %v2770, %v2858
        %2860 = vmatmul.bf16.gmra.mxu0 %v978
        %v2861 = vpop.f32.mrf.mxu0
        %v2862 = vadd.f32 %v2773, %v2861
        %v2863 = vpop.f32.mrf.mxu0
        %v2864 = vadd.f32 %v2775, %v2863
        %2865 = vmatmul.bf16.gmra.mxu0 %v979
        %v2866 = vpop.f32.mrf.mxu0
        %v2867 = vadd.f32 %v2778, %v2866
        %v2868 = vpop.f32.mrf.mxu0
        %v2869 = vadd.f32 %v2780, %v2868
        %2870 = vmatmul.bf16.gmra.mxu0 %v980
        %v2871 = vpop.f32.mrf.mxu0
        %v2872 = vadd.f32 %v2783, %v2871
        %v2873 = vpop.f32.mrf.mxu0
        %v2874 = vadd.f32 %v2785, %v2873
        %2875 = vmatmul.bf16.gmra.mxu0 %v981
        %v2876 = vpop.f32.mrf.mxu0
        %v2877 = vadd.f32 %v2788, %v2876
        %v2878 = vpop.f32.mrf.mxu0
        %v2879 = vadd.f32 %v2790, %v2878
        %2880 = vmatmul.bf16.gmra.mxu0 %v982
        %v2881 = vpop.f32.mrf.mxu0
        %v2882 = vadd.f32 %v2793, %v2881
        %v2883 = vpop.f32.mrf.mxu0
        %v2884 = vadd.f32 %v2795, %v2883
        %2885 = vmatmul.bf16.gmra.mxu0 %v983
        %v2886 = vpop.f32.mrf.mxu0
        %v2887 = vadd.f32 %v2798, %v2886
        %v2888 = vpop.f32.mrf.mxu0
        %v2889 = vadd.f32 %v2800, %v2888
        %2890 = vmatmul.bf16.gmra.mxu0 %v984
        %v2891 = vpop.f32.mrf.mxu0
        %v2892 = vadd.f32 %v2803, %v2891
        %v2893 = vpop.f32.mrf.mxu0
        %v2894 = vadd.f32 %v2805, %v2893
        %2895 = vmatmul.bf16.gmra.mxu0 %v985
        %v2896 = vpop.f32.mrf.mxu0
        %v2897 = vadd.f32 %v2808, %v2896
        %v2898 = vpop.f32.mrf.mxu0
        %v2899 = vadd.f32 %v2810, %v2898
        %2900 = vmatmul.bf16.gmra.mxu0 %v986
        %v2901 = vpop.f32.mrf.mxu0
        %v2902 = vadd.f32 %v2813, %v2901
        %v2903 = vpop.f32.mrf.mxu0
        %v2904 = vadd.f32 %v2815, %v2903
        %2905 = vmatmul.bf16.gmra.mxu0 %v987
        %v2906 = vpop.f32.mrf.mxu0
        %v2907 = vadd.f32 %v2818, %v2906
        %v2908 = vpop.f32.mrf.mxu0
        %v2909 = vadd.f32 %v2820, %v2908
        %2910 = vmatmul.bf16.gmra.mxu0 %v988
        %v2911 = vpop.f32.mrf.mxu0
        %v2912 = vadd.f32 %v2823, %v2911
        %v2913 = vpop.f32.mrf.mxu0
        %v2914 = vadd.f32 %v2825, %v2913
        %2915 = vmatmul.bf16.gmra.mxu0 %v1379
        %v2916 = vpop.f32.mrf.mxu0
        %v2917 = vadd.f32 %v2828, %v2916
        %v2918 = vpop.f32.mrf.mxu0
        %v2919 = vadd.f32 %v2830, %v2918
        %2920 = vmatmul.bf16.gmra.mxu0 %v1408
        %v2921 = vpop.f32.mrf.mxu0
        %v2922 = vadd.f32 %v2833, %v2921
        %v2923 = vpop.f32.mrf.mxu0
        %v2924 = vadd.f32 %v2835, %v2923
        %2925 = vdwg.mxu0
        %2926 = vmatpush.bf16.msra.mxu0 %v2141
        %2927 = vmatpush.bf16.msra.mxu0 %v2139
        %2928 = vmatpush.bf16.msra.mxu0 %v2137
        %2929 = vmatpush.bf16.msra.mxu0 %v2135
        %2930 = vmatpush.bf16.msra.mxu0 %v2133
        %2931 = vmatpush.bf16.msra.mxu0 %v2131
        %2932 = vmatpush.bf16.msra.mxu0 %v2129
        %2933 = vmatpush.bf16.msra.mxu0 %v2127
        %2934 = vmatmul.bf16.gmra.mxu0 %v1089
        %v2935 = vpop.f32.mrf.mxu0
        %v2936 = vadd.f32 %v2847, %v2935
        %v2937 = vpop.f32.mrf.mxu0
        %v2938 = vadd.f32 %v2849, %v2937
        %2939 = vmatmul.bf16.gmra.mxu0 %v1101
        %v2940 = vpop.f32.mrf.mxu0
        %v2941 = vadd.f32 %v2852, %v2940
        %v2942 = vpop.f32.mrf.mxu0
        %v2943 = vadd.f32 %v2854, %v2942
        %2944 = vmatmul.bf16.gmra.mxu0 %v1113
        %v2945 = vpop.f32.mrf.mxu0
        %v2946 = vadd.f32 %v2857, %v2945
        %v2947 = vpop.f32.mrf.mxu0
        %v2948 = vadd.f32 %v2859, %v2947
        %2949 = vmatmul.bf16.gmra.mxu0 %v1125
        %v2950 = vpop.f32.mrf.mxu0
        %v2951 = vadd.f32 %v2862, %v2950
        %v2952 = vpop.f32.mrf.mxu0
        %v2953 = vadd.f32 %v2864, %v2952
        %2954 = vmatmul.bf16.gmra.mxu0 %v1137
        %v2955 = vpop.f32.mrf.mxu0
        %v2956 = vadd.f32 %v2867, %v2955
        %v2957 = vpop.f32.mrf.mxu0
        %v2958 = vadd.f32 %v2869, %v2957
        %2959 = vmatmul.bf16.gmra.mxu0 %v1149
        %v2960 = vpop.f32.mrf.mxu0
        %v2961 = vadd.f32 %v2872, %v2960
        %v2962 = vpop.f32.mrf.mxu0
        %v2963 = vadd.f32 %v2874, %v2962
        %2964 = vmatmul.bf16.gmra.mxu0 %v1161
        %v2965 = vpop.f32.mrf.mxu0
        %v2966 = vadd.f32 %v2877, %v2965
        %v2967 = vpop.f32.mrf.mxu0
        %v2968 = vadd.f32 %v2879, %v2967
        %2969 = vmatmul.bf16.gmra.mxu0 %v1173
        %v2970 = vpop.f32.mrf.mxu0
        %v2971 = vadd.f32 %v2882, %v2970
        %v2972 = vpop.f32.mrf.mxu0
        %v2973 = vadd.f32 %v2884, %v2972
        %2974 = vmatmul.bf16.gmra.mxu0 %v1185
        %v2975 = vpop.f32.mrf.mxu0
        %v2976 = vadd.f32 %v2887, %v2975
        %v2977 = vpop.f32.mrf.mxu0
        %v2978 = vadd.f32 %v2889, %v2977
        %2979 = vmatmul.bf16.gmra.mxu0 %v1197
        %v2980 = vpop.f32.mrf.mxu0
        %v2981 = vadd.f32 %v2892, %v2980
        %v2982 = vpop.f32.mrf.mxu0
        %v2983 = vadd.f32 %v2894, %v2982
        %2984 = vmatmul.bf16.gmra.mxu0 %v1209
        %v2985 = vpop.f32.mrf.mxu0
        %v2986 = vadd.f32 %v2897, %v2985
        %v2987 = vpop.f32.mrf.mxu0
        %v2988 = vadd.f32 %v2899, %v2987
        %2989 = vmatmul.bf16.gmra.mxu0 %v1221
        %v2990 = vpop.f32.mrf.mxu0
        %v2991 = vadd.f32 %v2902, %v2990
        %v2992 = vpop.f32.mrf.mxu0
        %v2993 = vadd.f32 %v2904, %v2992
        %2994 = vmatmul.bf16.gmra.mxu0 %v1233
        %v2995 = vpop.f32.mrf.mxu0
        %v2996 = vadd.f32 %v2907, %v2995
        %v2997 = vpop.f32.mrf.mxu0
        %v2998 = vadd.f32 %v2909, %v2997
        %2999 = vmatmul.bf16.gmra.mxu0 %v1245
        %v3000 = vpop.f32.mrf.mxu0
        %v3001 = vadd.f32 %v2912, %v3000
        %v3002 = vpop.f32.mrf.mxu0
        %v3003 = vadd.f32 %v2914, %v3002
        %3004 = vmatmul.bf16.gmra.mxu0 %v1395
        %v3005 = vpop.f32.mrf.mxu0
        %v3006 = vadd.f32 %v2917, %v3005
        %v3007 = vpop.f32.mrf.mxu0
        %v3008 = vadd.f32 %v2919, %v3007
        %3009 = vmatmul.bf16.gmra.mxu0 %v1424
        %v3010 = vpop.f32.mrf.mxu0
        %v3011 = vadd.f32 %v2922, %v3010
        %v3012 = vpop.f32.mrf.mxu0
        %v3013 = vadd.f32 %v2924, %v3012
        %3014 = vdwg.mxu0
        %3015 = vmatpush.bf16.msra.mxu0 %v2157
        %3016 = vmatpush.bf16.msra.mxu0 %v2155
        %3017 = vmatpush.bf16.msra.mxu0 %v2153
        %3018 = vmatpush.bf16.msra.mxu0 %v2151
        %3019 = vmatpush.bf16.msra.mxu0 %v2149
        %3020 = vmatpush.bf16.msra.mxu0 %v2147
        %3021 = vmatpush.bf16.msra.mxu0 %v2145
        %3022 = vmatpush.bf16.msra.mxu0 %v2143
        %3023 = vmatmul.bf16.gmra.mxu0 %v1319
        %v3024 = vpop.f32.mrf.mxu0
        %v3025 = vadd.f32 %v2936, %v3024
        %v3026 = vpop.f32.mrf.mxu0
        %v3027 = vadd.f32 %v2938, %v3026
        %3028 = vmatmul.bf16.gmra.mxu0 %v1322
        %v3029 = vpop.f32.mrf.mxu0
        %v3030 = vadd.f32 %v2941, %v3029
        %v3031 = vpop.f32.mrf.mxu0
        %v3032 = vadd.f32 %v2943, %v3031
        %3033 = vmatmul.bf16.gmra.mxu0 %v1325
        %v3034 = vpop.f32.mrf.mxu0
        %v3035 = vadd.f32 %v2946, %v3034
        %v3036 = vpop.f32.mrf.mxu0
        %v3037 = vadd.f32 %v2948, %v3036
        %3038 = vmatmul.bf16.gmra.mxu0 %v1328
        %v3039 = vpop.f32.mrf.mxu0
        %v3040 = vadd.f32 %v2951, %v3039
        %v3041 = vpop.f32.mrf.mxu0
        %v3042 = vadd.f32 %v2953, %v3041
        %3043 = vmatmul.bf16.gmra.mxu0 %v1331
        %v3044 = vpop.f32.mrf.mxu0
        %v3045 = vadd.f32 %v2956, %v3044
        %v3046 = vpop.f32.mrf.mxu0
        %v3047 = vadd.f32 %v2958, %v3046
        %3048 = vmatmul.bf16.gmra.mxu0 %v1334
        %v3049 = vpop.f32.mrf.mxu0
        %v3050 = vadd.f32 %v2961, %v3049
        %v3051 = vpop.f32.mrf.mxu0
        %v3052 = vadd.f32 %v2963, %v3051
        %3053 = vmatmul.bf16.gmra.mxu0 %v1337
        %v3054 = vpop.f32.mrf.mxu0
        %v3055 = vadd.f32 %v2966, %v3054
        %v3056 = vpop.f32.mrf.mxu0
        %v3057 = vadd.f32 %v2968, %v3056
        %3058 = vmatmul.bf16.gmra.mxu0 %v1340
        %v3059 = vpop.f32.mrf.mxu0
        %v3060 = vadd.f32 %v2971, %v3059
        %v3061 = vpop.f32.mrf.mxu0
        %v3062 = vadd.f32 %v2973, %v3061
        %3063 = vmatmul.bf16.gmra.mxu0 %v1343
        %v3064 = vpop.f32.mrf.mxu0
        %v3065 = vadd.f32 %v2976, %v3064
        %v3066 = vpop.f32.mrf.mxu0
        %v3067 = vadd.f32 %v2978, %v3066
        %3068 = vmatmul.bf16.gmra.mxu0 %v1346
        %v3069 = vpop.f32.mrf.mxu0
        %v3070 = vadd.f32 %v2981, %v3069
        %v3071 = vpop.f32.mrf.mxu0
        %v3072 = vadd.f32 %v2983, %v3071
        %3073 = vmatmul.bf16.gmra.mxu0 %v1349
        %v3074 = vpop.f32.mrf.mxu0
        %v3075 = vadd.f32 %v2986, %v3074
        %v3076 = vpop.f32.mrf.mxu0
        %v3077 = vadd.f32 %v2988, %v3076
        %3078 = vmatmul.bf16.gmra.mxu0 %v1352
        %v3079 = vpop.f32.mrf.mxu0
        %v3080 = vadd.f32 %v2991, %v3079
        %v3081 = vpop.f32.mrf.mxu0
        %v3082 = vadd.f32 %v2993, %v3081
        %3083 = vmatmul.bf16.gmra.mxu0 %v1355
        %v3084 = vpop.f32.mrf.mxu0
        %v3085 = vadd.f32 %v2996, %v3084
        %v3086 = vpop.f32.mrf.mxu0
        %v3087 = vadd.f32 %v2998, %v3086
        %3088 = vmatmul.bf16.gmra.mxu0 %v1358
        %v3089 = vpop.f32.mrf.mxu0
        %v3090 = vadd.f32 %v3001, %v3089
        %v3091 = vpop.f32.mrf.mxu0
        %v3092 = vadd.f32 %v3003, %v3091
        %3093 = vmatmul.bf16.gmra.mxu0 %v1402
        %v3094 = vpop.f32.mrf.mxu0
        %v3095 = vadd.f32 %v3006, %v3094
        %v3096 = vpop.f32.mrf.mxu0
        %v3097 = vadd.f32 %v3008, %v3096
        %3098 = vmatmul.bf16.gmra.mxu0 %v1431
        %v3099 = vpop.f32.mrf.mxu0
        %v3100 = vadd.f32 %v3011, %v3099
        %v3101 = vpop.f32.mrf.mxu0
        %v3102 = vadd.f32 %v3013, %v3101
        %3103 = vdwg.mxu0
        %3104 = vmatpush.bf16.msra.mxu0 %v2030
        %3105 = vmatpush.bf16.msra.mxu0 %v2028
        %3106 = vmatpush.bf16.msra.mxu0 %v2026
        %3107 = vmatpush.bf16.msra.mxu0 %v2024
        %3108 = vmatpush.bf16.msra.mxu0 %v2022
        %3109 = vmatpush.bf16.msra.mxu0 %v2020
        %3110 = vmatpush.bf16.msra.mxu0 %v2018
        %3111 = vmatpush.bf16.msra.mxu0 %v2016
        %3112 = vmatmul.bf16.gmra.mxu0 %v973
        %v3113 = vpop.f32.mrf.mxu0
        %v3114 = vadd.f32 %v1580, %v3113
        %v3115 = vpop.f32.mrf.mxu0
        %v3116 = vadd.f32 %v1580, %v3115
        %3117 = vmatmul.bf16.gmra.mxu0 %v974
        %v3118 = vpop.f32.mrf.mxu0
        %v3119 = vadd.f32 %v1580, %v3118
        %v3120 = vpop.f32.mrf.mxu0
        %v3121 = vadd.f32 %v1580, %v3120
        %3122 = vmatmul.bf16.gmra.mxu0 %v975
        %v3123 = vpop.f32.mrf.mxu0
        %v3124 = vadd.f32 %v1580, %v3123
        %v3125 = vpop.f32.mrf.mxu0
        %v3126 = vadd.f32 %v1580, %v3125
        %3127 = vmatmul.bf16.gmra.mxu0 %v976
        %v3128 = vpop.f32.mrf.mxu0
        %v3129 = vadd.f32 %v1580, %v3128
        %v3130 = vpop.f32.mrf.mxu0
        %v3131 = vadd.f32 %v1580, %v3130
        %3132 = vmatmul.bf16.gmra.mxu0 %v977
        %v3133 = vpop.f32.mrf.mxu0
        %v3134 = vadd.f32 %v1580, %v3133
        %v3135 = vpop.f32.mrf.mxu0
        %v3136 = vadd.f32 %v1580, %v3135
        %3137 = vmatmul.bf16.gmra.mxu0 %v978
        %v3138 = vpop.f32.mrf.mxu0
        %v3139 = vadd.f32 %v1580, %v3138
        %v3140 = vpop.f32.mrf.mxu0
        %v3141 = vadd.f32 %v1580, %v3140
        %3142 = vmatmul.bf16.gmra.mxu0 %v979
        %v3143 = vpop.f32.mrf.mxu0
        %v3144 = vadd.f32 %v1580, %v3143
        %v3145 = vpop.f32.mrf.mxu0
        %v3146 = vadd.f32 %v1580, %v3145
        %3147 = vmatmul.bf16.gmra.mxu0 %v980
        %v3148 = vpop.f32.mrf.mxu0
        %v3149 = vadd.f32 %v1580, %v3148
        %v3150 = vpop.f32.mrf.mxu0
        %v3151 = vadd.f32 %v1580, %v3150
        %3152 = vmatmul.bf16.gmra.mxu0 %v981
        %v3153 = vpop.f32.mrf.mxu0
        %v3154 = vadd.f32 %v1580, %v3153
        %v3155 = vpop.f32.mrf.mxu0
        %v3156 = vadd.f32 %v1580, %v3155
        %3157 = vmatmul.bf16.gmra.mxu0 %v982
        %v3158 = vpop.f32.mrf.mxu0
        %v3159 = vadd.f32 %v1580, %v3158
        %v3160 = vpop.f32.mrf.mxu0
        %v3161 = vadd.f32 %v1580, %v3160
        %3162 = vmatmul.bf16.gmra.mxu0 %v983
        %v3163 = vpop.f32.mrf.mxu0
        %v3164 = vadd.f32 %v1580, %v3163
        %v3165 = vpop.f32.mrf.mxu0
        %v3166 = vadd.f32 %v1580, %v3165
        %3167 = vmatmul.bf16.gmra.mxu0 %v984
        %v3168 = vpop.f32.mrf.mxu0
        %v3169 = vadd.f32 %v1580, %v3168
        %v3170 = vpop.f32.mrf.mxu0
        %v3171 = vadd.f32 %v1580, %v3170
        %3172 = vmatmul.bf16.gmra.mxu0 %v985
        %v3173 = vpop.f32.mrf.mxu0
        %v3174 = vadd.f32 %v1580, %v3173
        %v3175 = vpop.f32.mrf.mxu0
        %v3176 = vadd.f32 %v1580, %v3175
        %3177 = vmatmul.bf16.gmra.mxu0 %v986
        %v3178 = vpop.f32.mrf.mxu0
        %v3179 = vadd.f32 %v1580, %v3178
        %v3180 = vpop.f32.mrf.mxu0
        %v3181 = vadd.f32 %v1580, %v3180
        %3182 = vmatmul.bf16.gmra.mxu0 %v987
        %v3183 = vpop.f32.mrf.mxu0
        %v3184 = vadd.f32 %v1580, %v3183
        %v3185 = vpop.f32.mrf.mxu0
        %v3186 = vadd.f32 %v1580, %v3185
        %3187 = vmatmul.bf16.gmra.mxu0 %v988
        %v3188 = vpop.f32.mrf.mxu0
        %v3189 = vadd.f32 %v1580, %v3188
        %v3190 = vpop.f32.mrf.mxu0
        %v3191 = vadd.f32 %v1580, %v3190
        %3192 = vdwg.mxu0
        %3193 = vmatpush.bf16.msra.mxu0 %v2046
        %3194 = vmatpush.bf16.msra.mxu0 %v2044
        %3195 = vmatpush.bf16.msra.mxu0 %v2042
        %3196 = vmatpush.bf16.msra.mxu0 %v2040
        %3197 = vmatpush.bf16.msra.mxu0 %v2038
        %3198 = vmatpush.bf16.msra.mxu0 %v2036
        %3199 = vmatpush.bf16.msra.mxu0 %v2034
        %3200 = vmatpush.bf16.msra.mxu0 %v2032
        %3201 = vmatmul.bf16.gmra.mxu0 %v1065
        %v3202 = vpop.f32.mrf.mxu0
        %v3203 = vadd.f32 %v3114, %v3202
        %v3204 = vpop.f32.mrf.mxu0
        %v3205 = vadd.f32 %v3116, %v3204
        %3206 = vmatmul.bf16.gmra.mxu0 %v1077
        %v3207 = vpop.f32.mrf.mxu0
        %v3208 = vadd.f32 %v3119, %v3207
        %v3209 = vpop.f32.mrf.mxu0
        %v3210 = vadd.f32 %v3121, %v3209
        %3211 = vmatmul.bf16.gmra.mxu0 %v1089
        %v3212 = vpop.f32.mrf.mxu0
        %v3213 = vadd.f32 %v3124, %v3212
        %v3214 = vpop.f32.mrf.mxu0
        %v3215 = vadd.f32 %v3126, %v3214
        %3216 = vmatmul.bf16.gmra.mxu0 %v1101
        %v3217 = vpop.f32.mrf.mxu0
        %v3218 = vadd.f32 %v3129, %v3217
        %v3219 = vpop.f32.mrf.mxu0
        %v3220 = vadd.f32 %v3131, %v3219
        %3221 = vmatmul.bf16.gmra.mxu0 %v1113
        %v3222 = vpop.f32.mrf.mxu0
        %v3223 = vadd.f32 %v3134, %v3222
        %v3224 = vpop.f32.mrf.mxu0
        %v3225 = vadd.f32 %v3136, %v3224
        %3226 = vmatmul.bf16.gmra.mxu0 %v1125
        %v3227 = vpop.f32.mrf.mxu0
        %v3228 = vadd.f32 %v3139, %v3227
        %v3229 = vpop.f32.mrf.mxu0
        %v3230 = vadd.f32 %v3141, %v3229
        %3231 = vmatmul.bf16.gmra.mxu0 %v1137
        %v3232 = vpop.f32.mrf.mxu0
        %v3233 = vadd.f32 %v3144, %v3232
        %v3234 = vpop.f32.mrf.mxu0
        %v3235 = vadd.f32 %v3146, %v3234
        %3236 = vmatmul.bf16.gmra.mxu0 %v1149
        %v3237 = vpop.f32.mrf.mxu0
        %v3238 = vadd.f32 %v3149, %v3237
        %v3239 = vpop.f32.mrf.mxu0
        %v3240 = vadd.f32 %v3151, %v3239
        %3241 = vmatmul.bf16.gmra.mxu0 %v1161
        %v3242 = vpop.f32.mrf.mxu0
        %v3243 = vadd.f32 %v3154, %v3242
        %v3244 = vpop.f32.mrf.mxu0
        %v3245 = vadd.f32 %v3156, %v3244
        %3246 = vmatmul.bf16.gmra.mxu0 %v1173
        %v3247 = vpop.f32.mrf.mxu0
        %v3248 = vadd.f32 %v3159, %v3247
        %v3249 = vpop.f32.mrf.mxu0
        %v3250 = vadd.f32 %v3161, %v3249
        %3251 = vmatmul.bf16.gmra.mxu0 %v1185
        %v3252 = vpop.f32.mrf.mxu0
        %v3253 = vadd.f32 %v3164, %v3252
        %v3254 = vpop.f32.mrf.mxu0
        %v3255 = vadd.f32 %v3166, %v3254
        %3256 = vmatmul.bf16.gmra.mxu0 %v1197
        %v3257 = vpop.f32.mrf.mxu0
        %v3258 = vadd.f32 %v3169, %v3257
        %v3259 = vpop.f32.mrf.mxu0
        %v3260 = vadd.f32 %v3171, %v3259
        %3261 = vmatmul.bf16.gmra.mxu0 %v1209
        %v3262 = vpop.f32.mrf.mxu0
        %v3263 = vadd.f32 %v3174, %v3262
        %v3264 = vpop.f32.mrf.mxu0
        %v3265 = vadd.f32 %v3176, %v3264
        %3266 = vmatmul.bf16.gmra.mxu0 %v1221
        %v3267 = vpop.f32.mrf.mxu0
        %v3268 = vadd.f32 %v3179, %v3267
        %v3269 = vpop.f32.mrf.mxu0
        %v3270 = vadd.f32 %v3181, %v3269
        %3271 = vmatmul.bf16.gmra.mxu0 %v1233
        %v3272 = vpop.f32.mrf.mxu0
        %v3273 = vadd.f32 %v3184, %v3272
        %v3274 = vpop.f32.mrf.mxu0
        %v3275 = vadd.f32 %v3186, %v3274
        %3276 = vmatmul.bf16.gmra.mxu0 %v1245
        %v3277 = vpop.f32.mrf.mxu0
        %v3278 = vadd.f32 %v3189, %v3277
        %v3279 = vpop.f32.mrf.mxu0
        %v3280 = vadd.f32 %v3191, %v3279
        %3281 = vdwg.mxu0
        %3282 = vmatpush.bf16.msra.mxu0 %v2062
        %3283 = vmatpush.bf16.msra.mxu0 %v2060
        %3284 = vmatpush.bf16.msra.mxu0 %v2058
        %3285 = vmatpush.bf16.msra.mxu0 %v2056
        %3286 = vmatpush.bf16.msra.mxu0 %v2054
        %3287 = vmatpush.bf16.msra.mxu0 %v2052
        %3288 = vmatpush.bf16.msra.mxu0 %v2050
        %3289 = vmatpush.bf16.msra.mxu0 %v2048
        %3290 = vmatmul.bf16.gmra.mxu0 %v1313
        %v3291 = vpop.f32.mrf.mxu0
        %v3292 = vadd.f32 %v3203, %v3291
        %v3293 = vpop.f32.mrf.mxu0
        %v3294 = vadd.f32 %v3205, %v3293
        %3295 = vmatmul.bf16.gmra.mxu0 %v1316
        %v3296 = vpop.f32.mrf.mxu0
        %v3297 = vadd.f32 %v3208, %v3296
        %v3298 = vpop.f32.mrf.mxu0
        %v3299 = vadd.f32 %v3210, %v3298
        %3300 = vmatmul.bf16.gmra.mxu0 %v1319
        %v3301 = vpop.f32.mrf.mxu0
        %v3302 = vadd.f32 %v3213, %v3301
        %v3303 = vpop.f32.mrf.mxu0
        %v3304 = vadd.f32 %v3215, %v3303
        %3305 = vmatmul.bf16.gmra.mxu0 %v1322
        %v3306 = vpop.f32.mrf.mxu0
        %v3307 = vadd.f32 %v3218, %v3306
        %v3308 = vpop.f32.mrf.mxu0
        %v3309 = vadd.f32 %v3220, %v3308
        %3310 = vmatmul.bf16.gmra.mxu0 %v1325
        %v3311 = vpop.f32.mrf.mxu0
        %v3312 = vadd.f32 %v3223, %v3311
        %v3313 = vpop.f32.mrf.mxu0
        %v3314 = vadd.f32 %v3225, %v3313
        %3315 = vmatmul.bf16.gmra.mxu0 %v1328
        %v3316 = vpop.f32.mrf.mxu0
        %v3317 = vadd.f32 %v3228, %v3316
        %v3318 = vpop.f32.mrf.mxu0
        %v3319 = vadd.f32 %v3230, %v3318
        %3320 = vmatmul.bf16.gmra.mxu0 %v1331
        %v3321 = vpop.f32.mrf.mxu0
        %v3322 = vadd.f32 %v3233, %v3321
        %v3323 = vpop.f32.mrf.mxu0
        %v3324 = vadd.f32 %v3235, %v3323
        %3325 = vmatmul.bf16.gmra.mxu0 %v1334
        %v3326 = vpop.f32.mrf.mxu0
        %v3327 = vadd.f32 %v3238, %v3326
        %v3328 = vpop.f32.mrf.mxu0
        %v3329 = vadd.f32 %v3240, %v3328
        %3330 = vmatmul.bf16.gmra.mxu0 %v1337
        %v3331 = vpop.f32.mrf.mxu0
        %v3332 = vadd.f32 %v3243, %v3331
        %v3333 = vpop.f32.mrf.mxu0
        %v3334 = vadd.f32 %v3245, %v3333
        %3335 = vmatmul.bf16.gmra.mxu0 %v1340
        %v3336 = vpop.f32.mrf.mxu0
        %v3337 = vadd.f32 %v3248, %v3336
        %v3338 = vpop.f32.mrf.mxu0
        %v3339 = vadd.f32 %v3250, %v3338
        %3340 = vmatmul.bf16.gmra.mxu0 %v1343
        %v3341 = vpop.f32.mrf.mxu0
        %v3342 = vadd.f32 %v3253, %v3341
        %v3343 = vpop.f32.mrf.mxu0
        %v3344 = vadd.f32 %v3255, %v3343
        %3345 = vmatmul.bf16.gmra.mxu0 %v1346
        %v3346 = vpop.f32.mrf.mxu0
        %v3347 = vadd.f32 %v3258, %v3346
        %v3348 = vpop.f32.mrf.mxu0
        %v3349 = vadd.f32 %v3260, %v3348
        %3350 = vmatmul.bf16.gmra.mxu0 %v1349
        %v3351 = vpop.f32.mrf.mxu0
        %v3352 = vadd.f32 %v3263, %v3351
        %v3353 = vpop.f32.mrf.mxu0
        %v3354 = vadd.f32 %v3265, %v3353
        %3355 = vmatmul.bf16.gmra.mxu0 %v1352
        %v3356 = vpop.f32.mrf.mxu0
        %v3357 = vadd.f32 %v3268, %v3356
        %v3358 = vpop.f32.mrf.mxu0
        %v3359 = vadd.f32 %v3270, %v3358
        %3360 = vmatmul.bf16.gmra.mxu0 %v1355
        %v3361 = vpop.f32.mrf.mxu0
        %v3362 = vadd.f32 %v3273, %v3361
        %v3363 = vpop.f32.mrf.mxu0
        %v3364 = vadd.f32 %v3275, %v3363
        %3365 = vmatmul.bf16.gmra.mxu0 %v1358
        %v3366 = vpop.f32.mrf.mxu0
        %v3367 = vadd.f32 %v3278, %v3366
        %v3368 = vpop.f32.mrf.mxu0
        %v3369 = vadd.f32 %v3280, %v3368
        %3370 = vdwg.mxu0
        %3371 = vmatpush.bf16.msra.mxu0 %v2078
        %3372 = vmatpush.bf16.msra.mxu0 %v2076
        %3373 = vmatpush.bf16.msra.mxu0 %v2074
        %3374 = vmatpush.bf16.msra.mxu0 %v2072
        %3375 = vmatpush.bf16.msra.mxu0 %v2070
        %3376 = vmatpush.bf16.msra.mxu0 %v2068
        %3377 = vmatpush.bf16.msra.mxu0 %v2066
        %3378 = vmatpush.bf16.msra.mxu0 %v2064
        %3379 = vmatmul.bf16.gmra.mxu0 %v974
        %v3380 = vpop.f32.mrf.mxu0
        %v3381 = vadd.f32 %v3292, %v3380
        %v3382 = vpop.f32.mrf.mxu0
        %v3383 = vadd.f32 %v3294, %v3382
        %3384 = vmatmul.bf16.gmra.mxu0 %v975
        %v3385 = vpop.f32.mrf.mxu0
        %v3386 = vadd.f32 %v3297, %v3385
        %v3387 = vpop.f32.mrf.mxu0
        %v3388 = vadd.f32 %v3299, %v3387
        %3389 = vmatmul.bf16.gmra.mxu0 %v976
        %v3390 = vpop.f32.mrf.mxu0
        %v3391 = vadd.f32 %v3302, %v3390
        %v3392 = vpop.f32.mrf.mxu0
        %v3393 = vadd.f32 %v3304, %v3392
        %3394 = vmatmul.bf16.gmra.mxu0 %v977
        %v3395 = vpop.f32.mrf.mxu0
        %v3396 = vadd.f32 %v3307, %v3395
        %v3397 = vpop.f32.mrf.mxu0
        %v3398 = vadd.f32 %v3309, %v3397
        %3399 = vmatmul.bf16.gmra.mxu0 %v978
        %v3400 = vpop.f32.mrf.mxu0
        %v3401 = vadd.f32 %v3312, %v3400
        %v3402 = vpop.f32.mrf.mxu0
        %v3403 = vadd.f32 %v3314, %v3402
        %3404 = vmatmul.bf16.gmra.mxu0 %v979
        %v3405 = vpop.f32.mrf.mxu0
        %v3406 = vadd.f32 %v3317, %v3405
        %v3407 = vpop.f32.mrf.mxu0
        %v3408 = vadd.f32 %v3319, %v3407
        %3409 = vmatmul.bf16.gmra.mxu0 %v980
        %v3410 = vpop.f32.mrf.mxu0
        %v3411 = vadd.f32 %v3322, %v3410
        %v3412 = vpop.f32.mrf.mxu0
        %v3413 = vadd.f32 %v3324, %v3412
        %3414 = vmatmul.bf16.gmra.mxu0 %v981
        %v3415 = vpop.f32.mrf.mxu0
        %v3416 = vadd.f32 %v3327, %v3415
        %v3417 = vpop.f32.mrf.mxu0
        %v3418 = vadd.f32 %v3329, %v3417
        %3419 = vmatmul.bf16.gmra.mxu0 %v982
        %v3420 = vpop.f32.mrf.mxu0
        %v3421 = vadd.f32 %v3332, %v3420
        %v3422 = vpop.f32.mrf.mxu0
        %v3423 = vadd.f32 %v3334, %v3422
        %3424 = vmatmul.bf16.gmra.mxu0 %v983
        %v3425 = vpop.f32.mrf.mxu0
        %v3426 = vadd.f32 %v3337, %v3425
        %v3427 = vpop.f32.mrf.mxu0
        %v3428 = vadd.f32 %v3339, %v3427
        %3429 = vmatmul.bf16.gmra.mxu0 %v984
        %v3430 = vpop.f32.mrf.mxu0
        %v3431 = vadd.f32 %v3342, %v3430
        %v3432 = vpop.f32.mrf.mxu0
        %v3433 = vadd.f32 %v3344, %v3432
        %3434 = vmatmul.bf16.gmra.mxu0 %v985
        %v3435 = vpop.f32.mrf.mxu0
        %v3436 = vadd.f32 %v3347, %v3435
        %v3437 = vpop.f32.mrf.mxu0
        %v3438 = vadd.f32 %v3349, %v3437
        %3439 = vmatmul.bf16.gmra.mxu0 %v986
        %v3440 = vpop.f32.mrf.mxu0
        %v3441 = vadd.f32 %v3352, %v3440
        %v3442 = vpop.f32.mrf.mxu0
        %v3443 = vadd.f32 %v3354, %v3442
        %3444 = vmatmul.bf16.gmra.mxu0 %v987
        %v3445 = vpop.f32.mrf.mxu0
        %v3446 = vadd.f32 %v3357, %v3445
        %v3447 = vpop.f32.mrf.mxu0
        %v3448 = vadd.f32 %v3359, %v3447
        %3449 = vmatmul.bf16.gmra.mxu0 %v988
        %v3450 = vpop.f32.mrf.mxu0
        %v3451 = vadd.f32 %v3362, %v3450
        %v3452 = vpop.f32.mrf.mxu0
        %v3453 = vadd.f32 %v3364, %v3452
        %3454 = vmatmul.bf16.gmra.mxu0 %v1379
        %v3455 = vpop.f32.mrf.mxu0
        %v3456 = vadd.f32 %v3367, %v3455
        %v3457 = vpop.f32.mrf.mxu0
        %v3458 = vadd.f32 %v3369, %v3457
        %3459 = vdwg.mxu0
        %3460 = vmatpush.bf16.msra.mxu0 %v2094
        %3461 = vmatpush.bf16.msra.mxu0 %v2092
        %3462 = vmatpush.bf16.msra.mxu0 %v2090
        %3463 = vmatpush.bf16.msra.mxu0 %v2088
        %3464 = vmatpush.bf16.msra.mxu0 %v2086
        %3465 = vmatpush.bf16.msra.mxu0 %v2084
        %3466 = vmatpush.bf16.msra.mxu0 %v2082
        %3467 = vmatpush.bf16.msra.mxu0 %v2080
        %3468 = vmatmul.bf16.gmra.mxu0 %v1077
        %v3469 = vpop.f32.mrf.mxu0
        %v3470 = vadd.f32 %v3381, %v3469
        %v3471 = vpop.f32.mrf.mxu0
        %v3472 = vadd.f32 %v3383, %v3471
        %3473 = vmatmul.bf16.gmra.mxu0 %v1089
        %v3474 = vpop.f32.mrf.mxu0
        %v3475 = vadd.f32 %v3386, %v3474
        %v3476 = vpop.f32.mrf.mxu0
        %v3477 = vadd.f32 %v3388, %v3476
        %3478 = vmatmul.bf16.gmra.mxu0 %v1101
        %v3479 = vpop.f32.mrf.mxu0
        %v3480 = vadd.f32 %v3391, %v3479
        %v3481 = vpop.f32.mrf.mxu0
        %v3482 = vadd.f32 %v3393, %v3481
        %3483 = vmatmul.bf16.gmra.mxu0 %v1113
        %v3484 = vpop.f32.mrf.mxu0
        %v3485 = vadd.f32 %v3396, %v3484
        %v3486 = vpop.f32.mrf.mxu0
        %v3487 = vadd.f32 %v3398, %v3486
        %3488 = vmatmul.bf16.gmra.mxu0 %v1125
        %v3489 = vpop.f32.mrf.mxu0
        %v3490 = vadd.f32 %v3401, %v3489
        %v3491 = vpop.f32.mrf.mxu0
        %v3492 = vadd.f32 %v3403, %v3491
        %3493 = vmatmul.bf16.gmra.mxu0 %v1137
        %v3494 = vpop.f32.mrf.mxu0
        %v3495 = vadd.f32 %v3406, %v3494
        %v3496 = vpop.f32.mrf.mxu0
        %v3497 = vadd.f32 %v3408, %v3496
        %3498 = vmatmul.bf16.gmra.mxu0 %v1149
        %v3499 = vpop.f32.mrf.mxu0
        %v3500 = vadd.f32 %v3411, %v3499
        %v3501 = vpop.f32.mrf.mxu0
        %v3502 = vadd.f32 %v3413, %v3501
        %3503 = vmatmul.bf16.gmra.mxu0 %v1161
        %v3504 = vpop.f32.mrf.mxu0
        %v3505 = vadd.f32 %v3416, %v3504
        %v3506 = vpop.f32.mrf.mxu0
        %v3507 = vadd.f32 %v3418, %v3506
        %3508 = vmatmul.bf16.gmra.mxu0 %v1173
        %v3509 = vpop.f32.mrf.mxu0
        %v3510 = vadd.f32 %v3421, %v3509
        %v3511 = vpop.f32.mrf.mxu0
        %v3512 = vadd.f32 %v3423, %v3511
        %3513 = vmatmul.bf16.gmra.mxu0 %v1185
        %v3514 = vpop.f32.mrf.mxu0
        %v3515 = vadd.f32 %v3426, %v3514
        %v3516 = vpop.f32.mrf.mxu0
        %v3517 = vadd.f32 %v3428, %v3516
        %3518 = vmatmul.bf16.gmra.mxu0 %v1197
        %v3519 = vpop.f32.mrf.mxu0
        %v3520 = vadd.f32 %v3431, %v3519
        %v3521 = vpop.f32.mrf.mxu0
        %v3522 = vadd.f32 %v3433, %v3521
        %3523 = vmatmul.bf16.gmra.mxu0 %v1209
        %v3524 = vpop.f32.mrf.mxu0
        %v3525 = vadd.f32 %v3436, %v3524
        %v3526 = vpop.f32.mrf.mxu0
        %v3527 = vadd.f32 %v3438, %v3526
        %3528 = vmatmul.bf16.gmra.mxu0 %v1221
        %v3529 = vpop.f32.mrf.mxu0
        %v3530 = vadd.f32 %v3441, %v3529
        %v3531 = vpop.f32.mrf.mxu0
        %v3532 = vadd.f32 %v3443, %v3531
        %3533 = vmatmul.bf16.gmra.mxu0 %v1233
        %v3534 = vpop.f32.mrf.mxu0
        %v3535 = vadd.f32 %v3446, %v3534
        %v3536 = vpop.f32.mrf.mxu0
        %v3537 = vadd.f32 %v3448, %v3536
        %3538 = vmatmul.bf16.gmra.mxu0 %v1245
        %v3539 = vpop.f32.mrf.mxu0
        %v3540 = vadd.f32 %v3451, %v3539
        %v3541 = vpop.f32.mrf.mxu0
        %v3542 = vadd.f32 %v3453, %v3541
        %3543 = vmatmul.bf16.gmra.mxu0 %v1395
        %v3544 = vpop.f32.mrf.mxu0
        %v3545 = vadd.f32 %v3456, %v3544
        %v3546 = vpop.f32.mrf.mxu0
        %v3547 = vadd.f32 %v3458, %v3546
        %3548 = vdwg.mxu0
        %3549 = vmatpush.bf16.msra.mxu0 %v2110
        %3550 = vmatpush.bf16.msra.mxu0 %v2108
        %3551 = vmatpush.bf16.msra.mxu0 %v2106
        %3552 = vmatpush.bf16.msra.mxu0 %v2104
        %3553 = vmatpush.bf16.msra.mxu0 %v2102
        %3554 = vmatpush.bf16.msra.mxu0 %v2100
        %3555 = vmatpush.bf16.msra.mxu0 %v2098
        %3556 = vmatpush.bf16.msra.mxu0 %v2096
        %3557 = vmatmul.bf16.gmra.mxu0 %v1316
        %v3558 = vpop.f32.mrf.mxu0
        %v3559 = vadd.f32 %v3470, %v3558
        %v3560 = vpop.f32.mrf.mxu0
        %v3561 = vadd.f32 %v3472, %v3560
        %3562 = vmatmul.bf16.gmra.mxu0 %v1319
        %v3563 = vpop.f32.mrf.mxu0
        %v3564 = vadd.f32 %v3475, %v3563
        %v3565 = vpop.f32.mrf.mxu0
        %v3566 = vadd.f32 %v3477, %v3565
        %3567 = vmatmul.bf16.gmra.mxu0 %v1322
        %v3568 = vpop.f32.mrf.mxu0
        %v3569 = vadd.f32 %v3480, %v3568
        %v3570 = vpop.f32.mrf.mxu0
        %v3571 = vadd.f32 %v3482, %v3570
        %3572 = vmatmul.bf16.gmra.mxu0 %v1325
        %v3573 = vpop.f32.mrf.mxu0
        %v3574 = vadd.f32 %v3485, %v3573
        %v3575 = vpop.f32.mrf.mxu0
        %v3576 = vadd.f32 %v3487, %v3575
        %3577 = vmatmul.bf16.gmra.mxu0 %v1328
        %v3578 = vpop.f32.mrf.mxu0
        %v3579 = vadd.f32 %v3490, %v3578
        %v3580 = vpop.f32.mrf.mxu0
        %v3581 = vadd.f32 %v3492, %v3580
        %3582 = vmatmul.bf16.gmra.mxu0 %v1331
        %v3583 = vpop.f32.mrf.mxu0
        %v3584 = vadd.f32 %v3495, %v3583
        %v3585 = vpop.f32.mrf.mxu0
        %v3586 = vadd.f32 %v3497, %v3585
        %3587 = vmatmul.bf16.gmra.mxu0 %v1334
        %v3588 = vpop.f32.mrf.mxu0
        %v3589 = vadd.f32 %v3500, %v3588
        %v3590 = vpop.f32.mrf.mxu0
        %v3591 = vadd.f32 %v3502, %v3590
        %3592 = vmatmul.bf16.gmra.mxu0 %v1337
        %v3593 = vpop.f32.mrf.mxu0
        %v3594 = vadd.f32 %v3505, %v3593
        %v3595 = vpop.f32.mrf.mxu0
        %v3596 = vadd.f32 %v3507, %v3595
        %3597 = vmatmul.bf16.gmra.mxu0 %v1340
        %v3598 = vpop.f32.mrf.mxu0
        %v3599 = vadd.f32 %v3510, %v3598
        %v3600 = vpop.f32.mrf.mxu0
        %v3601 = vadd.f32 %v3512, %v3600
        %3602 = vmatmul.bf16.gmra.mxu0 %v1343
        %v3603 = vpop.f32.mrf.mxu0
        %v3604 = vadd.f32 %v3515, %v3603
        %v3605 = vpop.f32.mrf.mxu0
        %v3606 = vadd.f32 %v3517, %v3605
        %3607 = vmatmul.bf16.gmra.mxu0 %v1346
        %v3608 = vpop.f32.mrf.mxu0
        %v3609 = vadd.f32 %v3520, %v3608
        %v3610 = vpop.f32.mrf.mxu0
        %v3611 = vadd.f32 %v3522, %v3610
        %3612 = vmatmul.bf16.gmra.mxu0 %v1349
        %v3613 = vpop.f32.mrf.mxu0
        %v3614 = vadd.f32 %v3525, %v3613
        %v3615 = vpop.f32.mrf.mxu0
        %v3616 = vadd.f32 %v3527, %v3615
        %3617 = vmatmul.bf16.gmra.mxu0 %v1352
        %v3618 = vpop.f32.mrf.mxu0
        %v3619 = vadd.f32 %v3530, %v3618
        %v3620 = vpop.f32.mrf.mxu0
        %v3621 = vadd.f32 %v3532, %v3620
        %3622 = vmatmul.bf16.gmra.mxu0 %v1355
        %v3623 = vpop.f32.mrf.mxu0
        %v3624 = vadd.f32 %v3535, %v3623
        %v3625 = vpop.f32.mrf.mxu0
        %v3626 = vadd.f32 %v3537, %v3625
        %3627 = vmatmul.bf16.gmra.mxu0 %v1358
        %v3628 = vpop.f32.mrf.mxu0
        %v3629 = vadd.f32 %v3540, %v3628
        %v3630 = vpop.f32.mrf.mxu0
        %v3631 = vadd.f32 %v3542, %v3630
        %3632 = vmatmul.bf16.gmra.mxu0 %v1402
        %v3633 = vpop.f32.mrf.mxu0
        %v3634 = vadd.f32 %v3545, %v3633
        %v3635 = vpop.f32.mrf.mxu0
        %v3636 = vadd.f32 %v3547, %v3635
        %3637 = vdwg.mxu0
        %3638 = vmatpush.bf16.msra.mxu0 %v2126
        %3639 = vmatpush.bf16.msra.mxu0 %v2124
        %3640 = vmatpush.bf16.msra.mxu0 %v2122
        %3641 = vmatpush.bf16.msra.mxu0 %v2120
        %3642 = vmatpush.bf16.msra.mxu0 %v2118
        %3643 = vmatpush.bf16.msra.mxu0 %v2116
        %3644 = vmatpush.bf16.msra.mxu0 %v2114
        %3645 = vmatpush.bf16.msra.mxu0 %v2112
        %3646 = vmatmul.bf16.gmra.mxu0 %v975
        %v3647 = vpop.f32.mrf.mxu0
        %v3648 = vadd.f32 %v3559, %v3647
        %v3649 = vpop.f32.mrf.mxu0
        %v3650 = vadd.f32 %v3561, %v3649
        %3651 = vmatmul.bf16.gmra.mxu0 %v976
        %v3652 = vpop.f32.mrf.mxu0
        %v3653 = vadd.f32 %v3564, %v3652
        %v3654 = vpop.f32.mrf.mxu0
        %v3655 = vadd.f32 %v3566, %v3654
        %3656 = vmatmul.bf16.gmra.mxu0 %v977
        %v3657 = vpop.f32.mrf.mxu0
        %v3658 = vadd.f32 %v3569, %v3657
        %v3659 = vpop.f32.mrf.mxu0
        %v3660 = vadd.f32 %v3571, %v3659
        %3661 = vmatmul.bf16.gmra.mxu0 %v978
        %v3662 = vpop.f32.mrf.mxu0
        %v3663 = vadd.f32 %v3574, %v3662
        %v3664 = vpop.f32.mrf.mxu0
        %v3665 = vadd.f32 %v3576, %v3664
        %3666 = vmatmul.bf16.gmra.mxu0 %v979
        %v3667 = vpop.f32.mrf.mxu0
        %v3668 = vadd.f32 %v3579, %v3667
        %v3669 = vpop.f32.mrf.mxu0
        %v3670 = vadd.f32 %v3581, %v3669
        %3671 = vmatmul.bf16.gmra.mxu0 %v980
        %v3672 = vpop.f32.mrf.mxu0
        %v3673 = vadd.f32 %v3584, %v3672
        %v3674 = vpop.f32.mrf.mxu0
        %v3675 = vadd.f32 %v3586, %v3674
        %3676 = vmatmul.bf16.gmra.mxu0 %v981
        %v3677 = vpop.f32.mrf.mxu0
        %v3678 = vadd.f32 %v3589, %v3677
        %v3679 = vpop.f32.mrf.mxu0
        %v3680 = vadd.f32 %v3591, %v3679
        %3681 = vmatmul.bf16.gmra.mxu0 %v982
        %v3682 = vpop.f32.mrf.mxu0
        %v3683 = vadd.f32 %v3594, %v3682
        %v3684 = vpop.f32.mrf.mxu0
        %v3685 = vadd.f32 %v3596, %v3684
        %3686 = vmatmul.bf16.gmra.mxu0 %v983
        %v3687 = vpop.f32.mrf.mxu0
        %v3688 = vadd.f32 %v3599, %v3687
        %v3689 = vpop.f32.mrf.mxu0
        %v3690 = vadd.f32 %v3601, %v3689
        %3691 = vmatmul.bf16.gmra.mxu0 %v984
        %v3692 = vpop.f32.mrf.mxu0
        %v3693 = vadd.f32 %v3604, %v3692
        %v3694 = vpop.f32.mrf.mxu0
        %v3695 = vadd.f32 %v3606, %v3694
        %3696 = vmatmul.bf16.gmra.mxu0 %v985
        %v3697 = vpop.f32.mrf.mxu0
        %v3698 = vadd.f32 %v3609, %v3697
        %v3699 = vpop.f32.mrf.mxu0
        %v3700 = vadd.f32 %v3611, %v3699
        %3701 = vmatmul.bf16.gmra.mxu0 %v986
        %v3702 = vpop.f32.mrf.mxu0
        %v3703 = vadd.f32 %v3614, %v3702
        %v3704 = vpop.f32.mrf.mxu0
        %v3705 = vadd.f32 %v3616, %v3704
        %3706 = vmatmul.bf16.gmra.mxu0 %v987
        %v3707 = vpop.f32.mrf.mxu0
        %v3708 = vadd.f32 %v3619, %v3707
        %v3709 = vpop.f32.mrf.mxu0
        %v3710 = vadd.f32 %v3621, %v3709
        %3711 = vmatmul.bf16.gmra.mxu0 %v988
        %v3712 = vpop.f32.mrf.mxu0
        %v3713 = vadd.f32 %v3624, %v3712
        %v3714 = vpop.f32.mrf.mxu0
        %v3715 = vadd.f32 %v3626, %v3714
        %3716 = vmatmul.bf16.gmra.mxu0 %v1379
        %v3717 = vpop.f32.mrf.mxu0
        %v3718 = vadd.f32 %v3629, %v3717
        %v3719 = vpop.f32.mrf.mxu0
        %v3720 = vadd.f32 %v3631, %v3719
        %3721 = vmatmul.bf16.gmra.mxu0 %v1408
        %v3722 = vpop.f32.mrf.mxu0
        %v3723 = vadd.f32 %v3634, %v3722
        %v3724 = vpop.f32.mrf.mxu0
        %v3725 = vadd.f32 %v3636, %v3724
        %3726 = vdwg.mxu0
        %3727 = vmatpush.bf16.msra.mxu0 %v2142
        %3728 = vmatpush.bf16.msra.mxu0 %v2140
        %3729 = vmatpush.bf16.msra.mxu0 %v2138
        %3730 = vmatpush.bf16.msra.mxu0 %v2136
        %3731 = vmatpush.bf16.msra.mxu0 %v2134
        %3732 = vmatpush.bf16.msra.mxu0 %v2132
        %3733 = vmatpush.bf16.msra.mxu0 %v2130
        %3734 = vmatpush.bf16.msra.mxu0 %v2128
        %3735 = vmatmul.bf16.gmra.mxu0 %v1089
        %v3736 = vpop.f32.mrf.mxu0
        %v3737 = vadd.f32 %v3648, %v3736
        %v3738 = vpop.f32.mrf.mxu0
        %v3739 = vadd.f32 %v3650, %v3738
        %3740 = vmatmul.bf16.gmra.mxu0 %v1101
        %v3741 = vpop.f32.mrf.mxu0
        %v3742 = vadd.f32 %v3653, %v3741
        %v3743 = vpop.f32.mrf.mxu0
        %v3744 = vadd.f32 %v3655, %v3743
        %3745 = vmatmul.bf16.gmra.mxu0 %v1113
        %v3746 = vpop.f32.mrf.mxu0
        %v3747 = vadd.f32 %v3658, %v3746
        %v3748 = vpop.f32.mrf.mxu0
        %v3749 = vadd.f32 %v3660, %v3748
        %3750 = vmatmul.bf16.gmra.mxu0 %v1125
        %v3751 = vpop.f32.mrf.mxu0
        %v3752 = vadd.f32 %v3663, %v3751
        %v3753 = vpop.f32.mrf.mxu0
        %v3754 = vadd.f32 %v3665, %v3753
        %3755 = vmatmul.bf16.gmra.mxu0 %v1137
        %v3756 = vpop.f32.mrf.mxu0
        %v3757 = vadd.f32 %v3668, %v3756
        %v3758 = vpop.f32.mrf.mxu0
        %v3759 = vadd.f32 %v3670, %v3758
        %3760 = vmatmul.bf16.gmra.mxu0 %v1149
        %v3761 = vpop.f32.mrf.mxu0
        %v3762 = vadd.f32 %v3673, %v3761
        %v3763 = vpop.f32.mrf.mxu0
        %v3764 = vadd.f32 %v3675, %v3763
        %3765 = vmatmul.bf16.gmra.mxu0 %v1161
        %v3766 = vpop.f32.mrf.mxu0
        %v3767 = vadd.f32 %v3678, %v3766
        %v3768 = vpop.f32.mrf.mxu0
        %v3769 = vadd.f32 %v3680, %v3768
        %3770 = vmatmul.bf16.gmra.mxu0 %v1173
        %v3771 = vpop.f32.mrf.mxu0
        %v3772 = vadd.f32 %v3683, %v3771
        %v3773 = vpop.f32.mrf.mxu0
        %v3774 = vadd.f32 %v3685, %v3773
        %3775 = vmatmul.bf16.gmra.mxu0 %v1185
        %v3776 = vpop.f32.mrf.mxu0
        %v3777 = vadd.f32 %v3688, %v3776
        %v3778 = vpop.f32.mrf.mxu0
        %v3779 = vadd.f32 %v3690, %v3778
        %3780 = vmatmul.bf16.gmra.mxu0 %v1197
        %v3781 = vpop.f32.mrf.mxu0
        %v3782 = vadd.f32 %v3693, %v3781
        %v3783 = vpop.f32.mrf.mxu0
        %v3784 = vadd.f32 %v3695, %v3783
        %3785 = vmatmul.bf16.gmra.mxu0 %v1209
        %v3786 = vpop.f32.mrf.mxu0
        %v3787 = vadd.f32 %v3698, %v3786
        %v3788 = vpop.f32.mrf.mxu0
        %v3789 = vadd.f32 %v3700, %v3788
        %3790 = vmatmul.bf16.gmra.mxu0 %v1221
        %v3791 = vpop.f32.mrf.mxu0
        %v3792 = vadd.f32 %v3703, %v3791
        %v3793 = vpop.f32.mrf.mxu0
        %v3794 = vadd.f32 %v3705, %v3793
        %3795 = vmatmul.bf16.gmra.mxu0 %v1233
        %v3796 = vpop.f32.mrf.mxu0
        %v3797 = vadd.f32 %v3708, %v3796
        %v3798 = vpop.f32.mrf.mxu0
        %v3799 = vadd.f32 %v3710, %v3798
        %3800 = vmatmul.bf16.gmra.mxu0 %v1245
        %v3801 = vpop.f32.mrf.mxu0
        %v3802 = vadd.f32 %v3713, %v3801
        %v3803 = vpop.f32.mrf.mxu0
        %v3804 = vadd.f32 %v3715, %v3803
        %3805 = vmatmul.bf16.gmra.mxu0 %v1395
        %v3806 = vpop.f32.mrf.mxu0
        %v3807 = vadd.f32 %v3718, %v3806
        %v3808 = vpop.f32.mrf.mxu0
        %v3809 = vadd.f32 %v3720, %v3808
        %3810 = vmatmul.bf16.gmra.mxu0 %v1424
        %v3811 = vpop.f32.mrf.mxu0
        %v3812 = vadd.f32 %v3723, %v3811
        %v3813 = vpop.f32.mrf.mxu0
        %v3814 = vadd.f32 %v3725, %v3813
        %3815 = vdwg.mxu0
        %3816 = vmatpush.bf16.msra.mxu0 %v2158
        %3817 = vmatpush.bf16.msra.mxu0 %v2156
        %3818 = vmatpush.bf16.msra.mxu0 %v2154
        %3819 = vmatpush.bf16.msra.mxu0 %v2152
        %3820 = vmatpush.bf16.msra.mxu0 %v2150
        %3821 = vmatpush.bf16.msra.mxu0 %v2148
        %3822 = vmatpush.bf16.msra.mxu0 %v2146
        %3823 = vmatpush.bf16.msra.mxu0 %v2144
        %3824 = vmatmul.bf16.gmra.mxu0 %v1319
        %v3825 = vpop.f32.mrf.mxu0
        %v3826 = vadd.f32 %v3737, %v3825
        %v3827 = vpop.f32.mrf.mxu0
        %v3828 = vadd.f32 %v3739, %v3827
        %3829 = vmatmul.bf16.gmra.mxu0 %v1322
        %v3830 = vpop.f32.mrf.mxu0
        %v3831 = vadd.f32 %v3742, %v3830
        %v3832 = vpop.f32.mrf.mxu0
        %v3833 = vadd.f32 %v3744, %v3832
        %3834 = vmatmul.bf16.gmra.mxu0 %v1325
        %v3835 = vpop.f32.mrf.mxu0
        %v3836 = vadd.f32 %v3747, %v3835
        %v3837 = vpop.f32.mrf.mxu0
        %v3838 = vadd.f32 %v3749, %v3837
        %3839 = vmatmul.bf16.gmra.mxu0 %v1328
        %v3840 = vpop.f32.mrf.mxu0
        %v3841 = vadd.f32 %v3752, %v3840
        %v3842 = vpop.f32.mrf.mxu0
        %v3843 = vadd.f32 %v3754, %v3842
        %3844 = vmatmul.bf16.gmra.mxu0 %v1331
        %v3845 = vpop.f32.mrf.mxu0
        %v3846 = vadd.f32 %v3757, %v3845
        %v3847 = vpop.f32.mrf.mxu0
        %v3848 = vadd.f32 %v3759, %v3847
        %3849 = vmatmul.bf16.gmra.mxu0 %v1334
        %v3850 = vpop.f32.mrf.mxu0
        %v3851 = vadd.f32 %v3762, %v3850
        %v3852 = vpop.f32.mrf.mxu0
        %v3853 = vadd.f32 %v3764, %v3852
        %3854 = vmatmul.bf16.gmra.mxu0 %v1337
        %v3855 = vpop.f32.mrf.mxu0
        %v3856 = vadd.f32 %v3767, %v3855
        %v3857 = vpop.f32.mrf.mxu0
        %v3858 = vadd.f32 %v3769, %v3857
        %3859 = vmatmul.bf16.gmra.mxu0 %v1340
        %v3860 = vpop.f32.mrf.mxu0
        %v3861 = vadd.f32 %v3772, %v3860
        %v3862 = vpop.f32.mrf.mxu0
        %v3863 = vadd.f32 %v3774, %v3862
        %3864 = vmatmul.bf16.gmra.mxu0 %v1343
        %v3865 = vpop.f32.mrf.mxu0
        %v3866 = vadd.f32 %v3777, %v3865
        %v3867 = vpop.f32.mrf.mxu0
        %v3868 = vadd.f32 %v3779, %v3867
        %3869 = vmatmul.bf16.gmra.mxu0 %v1346
        %v3870 = vpop.f32.mrf.mxu0
        %v3871 = vadd.f32 %v3782, %v3870
        %v3872 = vpop.f32.mrf.mxu0
        %v3873 = vadd.f32 %v3784, %v3872
        %3874 = vmatmul.bf16.gmra.mxu0 %v1349
        %v3875 = vpop.f32.mrf.mxu0
        %v3876 = vadd.f32 %v3787, %v3875
        %v3877 = vpop.f32.mrf.mxu0
        %v3878 = vadd.f32 %v3789, %v3877
        %3879 = vmatmul.bf16.gmra.mxu0 %v1352
        %v3880 = vpop.f32.mrf.mxu0
        %v3881 = vadd.f32 %v3792, %v3880
        %v3882 = vpop.f32.mrf.mxu0
        %v3883 = vadd.f32 %v3794, %v3882
        %3884 = vmatmul.bf16.gmra.mxu0 %v1355
        %v3885 = vpop.f32.mrf.mxu0
        %v3886 = vadd.f32 %v3797, %v3885
        %v3887 = vpop.f32.mrf.mxu0
        %v3888 = vadd.f32 %v3799, %v3887
        %3889 = vmatmul.bf16.gmra.mxu0 %v1358
        %v3890 = vpop.f32.mrf.mxu0
        %v3891 = vadd.f32 %v3802, %v3890
        %v3892 = vpop.f32.mrf.mxu0
        %v3893 = vadd.f32 %v3804, %v3892
        %3894 = vmatmul.bf16.gmra.mxu0 %v1402
        %v3895 = vpop.f32.mrf.mxu0
        %v3896 = vadd.f32 %v3807, %v3895
        %v3897 = vpop.f32.mrf.mxu0
        %v3898 = vadd.f32 %v3809, %v3897
        %3899 = vmatmul.bf16.gmra.mxu0 %v1431
        %v3900 = vpop.f32.mrf.mxu0
        %v3901 = vadd.f32 %v3812, %v3900
        %v3902 = vpop.f32.mrf.mxu0
        %v3903 = vadd.f32 %v3814, %v3902
        %3904 = vdwg.mxu0
        %v3905 = vmax.f32 %v3025, 0.0
        %v3906 = vmax.f32 %v3826, 0.0
        %v3907 = vmax.f32 %v3027, 0.0
        %v3908 = vmax.f32 %v3828, 0.0
        %v3909 = vmax.f32 %v3030, 0.0
        %v3910 = vmax.f32 %v3831, 0.0
        %v3911 = vmax.f32 %v3032, 0.0
        %v3912 = vmax.f32 %v3833, 0.0
        %v3913 = vmax.f32 %v3035, 0.0
        %v3914 = vmax.f32 %v3836, 0.0
        %v3915 = vmax.f32 %v3037, 0.0
        %v3916 = vmax.f32 %v3838, 0.0
        %v3917 = vmax.f32 %v3040, 0.0
        %v3918 = vmax.f32 %v3841, 0.0
        %v3919 = vmax.f32 %v3042, 0.0
        %v3920 = vmax.f32 %v3843, 0.0
        %v3921 = vmax.f32 %v3045, 0.0
        %v3922 = vmax.f32 %v3846, 0.0
        %v3923 = vmax.f32 %v3047, 0.0
        %v3924 = vmax.f32 %v3848, 0.0
        %v3925 = vmax.f32 %v3050, 0.0
        %v3926 = vmax.f32 %v3851, 0.0
        %v3927 = vmax.f32 %v3052, 0.0
        %v3928 = vmax.f32 %v3853, 0.0
        %v3929 = vmax.f32 %v3055, 0.0
        %v3930 = vmax.f32 %v3856, 0.0
        %v3931 = vmax.f32 %v3057, 0.0
        %v3932 = vmax.f32 %v3858, 0.0
        %v3933 = vmax.f32 %v3060, 0.0
        %v3934 = vmax.f32 %v3861, 0.0
        %v3935 = vmax.f32 %v3062, 0.0
        %v3936 = vmax.f32 %v3863, 0.0
        %v3937 = vmax.f32 %v3065, 0.0
        %v3938 = vmax.f32 %v3866, 0.0
        %v3939 = vmax.f32 %v3067, 0.0
        %v3940 = vmax.f32 %v3868, 0.0
        %v3941 = vmax.f32 %v3070, 0.0
        %v3942 = vmax.f32 %v3871, 0.0
        %v3943 = vmax.f32 %v3072, 0.0
        %v3944 = vmax.f32 %v3873, 0.0
        %v3945 = vmax.f32 %v3075, 0.0
        %v3946 = vmax.f32 %v3876, 0.0
        %v3947 = vmax.f32 %v3077, 0.0
        %v3948 = vmax.f32 %v3878, 0.0
        %v3949 = vmax.f32 %v3080, 0.0
        %v3950 = vmax.f32 %v3881, 0.0
        %v3951 = vmax.f32 %v3082, 0.0
        %v3952 = vmax.f32 %v3883, 0.0
        %v3953 = vmax.f32 %v3085, 0.0
        %v3954 = vmax.f32 %v3886, 0.0
        %v3955 = vmax.f32 %v3087, 0.0
        %v3956 = vmax.f32 %v3888, 0.0
        %v3957 = vmax.f32 %v3090, 0.0
        %v3958 = vmax.f32 %v3891, 0.0
        %v3959 = vmax.f32 %v3092, 0.0
        %v3960 = vmax.f32 %v3893, 0.0
        %v3961 = vmax.f32 %v3095, 0.0
        %v3962 = vmax.f32 %v3896, 0.0
        %v3963 = vmax.f32 %v3097, 0.0
        %v3964 = vmax.f32 %v3898, 0.0
        %v3965 = vmax.f32 %v3100, 0.0
        %v3966 = vmax.f32 %v3901, 0.0
        %v3967 = vmax.f32 %v3102, 0.0
        %v3968 = vmax.f32 %v3903, 0.0
        %v3969 = vpack.c.bf16 %v3906, %v3905
        %v3970 = vpack.c.bf16 %v3908, %v3907
        %v3971 = vpack.c.bf16 %v3910, %v3909
        %v3972 = vpack.c.bf16 %v3912, %v3911
        %v3973 = vpack.c.bf16 %v3914, %v3913
        %v3974 = vpack.c.bf16 %v3916, %v3915
        %v3975 = vpack.c.bf16 %v3918, %v3917
        %v3976 = vpack.c.bf16 %v3920, %v3919
        %v3977 = vpack.c.bf16 %v3922, %v3921
        %v3978 = vpack.c.bf16 %v3924, %v3923
        %v3979 = vpack.c.bf16 %v3926, %v3925
        %v3980 = vpack.c.bf16 %v3928, %v3927
        %v3981 = vpack.c.bf16 %v3930, %v3929
        %v3982 = vpack.c.bf16 %v3932, %v3931
        %v3983 = vpack.c.bf16 %v3934, %v3933
        %v3984 = vpack.c.bf16 %v3936, %v3935
        %v3985 = vpack.c.bf16 %v3938, %v3937
        %v3986 = vpack.c.bf16 %v3940, %v3939
        %v3987 = vpack.c.bf16 %v3942, %v3941
        %v3988 = vpack.c.bf16 %v3944, %v3943
        %v3989 = vpack.c.bf16 %v3946, %v3945
        %v3990 = vpack.c.bf16 %v3948, %v3947
        %v3991 = vpack.c.bf16 %v3950, %v3949
        %v3992 = vpack.c.bf16 %v3952, %v3951
        %v3993 = vpack.c.bf16 %v3954, %v3953
        %v3994 = vpack.c.bf16 %v3956, %v3955
        %v3995 = vpack.c.bf16 %v3958, %v3957
        %v3996 = vpack.c.bf16 %v3960, %v3959
        %v3997 = vpack.c.bf16 %v3962, %v3961
        %v3998 = vpack.c.bf16 %v3964, %v3963
        %v3999 = vpack.c.bf16 %v3966, %v3965
        %v4000 = vpack.c.bf16 %v3968, %v3967
        %4001 = vst [vmem:[#allocation3] sm:$0xff] 0
        %4002 = vst [vmem:[#allocation3 + $0x8] sm:$0xff] 0
        %4003 = vst [vmem:[#allocation3 + $0x10] sm:$0x11] 0
        %s4004 = scalar_lea.vmem [#allocation3], 408
        %4005 = vst [vmem:[%s4004] sm:$0xff] 0
        %4006 = vst [vmem:[%s4004 + $0x8] sm:$0xff] 0
        %4007 = vst [vmem:[%s4004 + $0x10] sm:$0x11] 0
        %vm4008 = vcmask 1044484
        %vm4009 = vsmask.f32 4352
        %vm4010 = vmand %vm4008, %vm4009
        %vm4011 = vmor %vm4010, %vm257
        %v4012 = vld [vmem:[#allocation3] sm:$0x11]
        %v4013 = vsel %vm4011, 0, %v4012
        %4014 = vst [vmem:[#allocation3] sm:$0x11] %v4013
        %v4015 = vld [vmem:[#allocation3 + $0x18] sm:$0x11]
        %v4016 = vsel %vm4011, 0, %v4015
        %4017 = vst [vmem:[#allocation3 + $0x18] sm:$0x11] %v4016
        %v4018 = vld [vmem:[#allocation3 + $0x30] sm:$0x11]
        %v4019 = vsel %vm4011, 0, %v4018
        %4020 = vst [vmem:[#allocation3 + $0x30] sm:$0x11] %v4019
        %v4021 = vld [vmem:[#allocation3 + $0x48] sm:$0x11]
        %v4022 = vsel %vm4011, 0, %v4021
        %4023 = vst [vmem:[#allocation3 + $0x48] sm:$0x11] %v4022
        %v4024 = vld [vmem:[#allocation3 + $0x60] sm:$0x11]
        %v4025 = vsel %vm4011, 0, %v4024
        %4026 = vst [vmem:[#allocation3 + $0x60] sm:$0x11] %v4025
        %v4027 = vld [vmem:[#allocation3 + $0x78] sm:$0x11]
        %v4028 = vsel %vm4011, 0, %v4027
        %4029 = vst [vmem:[#allocation3 + $0x78] sm:$0x11] %v4028
        %v4030 = vld [vmem:[#allocation3 + $0x90] sm:$0x11]
        %v4031 = vsel %vm4011, 0, %v4030
        %4032 = vst [vmem:[#allocation3 + $0x90] sm:$0x11] %v4031
        %v4033 = vld [vmem:[#allocation3 + $0xa8] sm:$0x11]
        %v4034 = vsel %vm4011, 0, %v4033
        %4035 = vst [vmem:[#allocation3 + $0xa8] sm:$0x11] %v4034
        %v4036 = vld [vmem:[#allocation3 + $0xc0] sm:$0x11]
        %v4037 = vsel %vm4011, 0, %v4036
        %4038 = vst [vmem:[#allocation3 + $0xc0] sm:$0x11] %v4037
        %v4039 = vld [vmem:[#allocation3 + $0xd8] sm:$0x11]
        %v4040 = vsel %vm4011, 0, %v4039
        %4041 = vst [vmem:[#allocation3 + $0xd8] sm:$0x11] %v4040
        %v4042 = vld [vmem:[#allocation3 + $0xf0] sm:$0x11]
        %v4043 = vsel %vm4011, 0, %v4042
        %4044 = vst [vmem:[#allocation3 + $0xf0] sm:$0x11] %v4043
        %v4045 = vld [vmem:[#allocation3 + $0x108] sm:$0x11]
        %v4046 = vsel %vm4011, 0, %v4045
        %4047 = vst [vmem:[#allocation3 + $0x108] sm:$0x11] %v4046
        %v4048 = vld [vmem:[#allocation3 + $0x120] sm:$0x11]
        %v4049 = vsel %vm4011, 0, %v4048
        %4050 = vst [vmem:[#allocation3 + $0x120] sm:$0x11] %v4049
        %v4051 = vld [vmem:[#allocation3 + $0x138] sm:$0x11]
        %v4052 = vsel %vm4011, 0, %v4051
        %4053 = vst [vmem:[#allocation3 + $0x138] sm:$0x11] %v4052
        %v4054 = vld [vmem:[#allocation3 + $0x150] sm:$0x11]
        %v4055 = vsel %vm4011, 0, %v4054
        %4056 = vst [vmem:[#allocation3 + $0x150] sm:$0x11] %v4055
        %v4057 = vld [vmem:[#allocation3 + $0x168] sm:$0x11]
        %v4058 = vsel %vm4011, 0, %v4057
        %4059 = vst [vmem:[#allocation3 + $0x168] sm:$0x11] %v4058
        %v4060 = vld [vmem:[#allocation3 + $0x180] sm:$0x11]
        %v4061 = vsel %vm4011, 0, %v4060
        %4062 = vst [vmem:[#allocation3 + $0x180] sm:$0x11] %v4061
        %v4063 = vld [vmem:[#allocation3 + $0x198] sm:$0x11]
        %v4064 = vsel %vm4011, 0, %v4063
        %4065 = vst [vmem:[#allocation3 + $0x198] sm:$0x11] %v4064
        %vm4066 = vsmask.f32 7954
        %vm4067 = vmand %vm4008, %vm4066
        %vm4068 = vmor %vm4067, %vm313
        %v4069 = vld [vmem:[#allocation3 + $0x10] sm:$0x11]
        %v4070 = vsel %vm4068, 0, %v4069
        %4071 = vst [vmem:[#allocation3 + $0x10] sm:$0x11] %v4070
        %v4072 = vld [vmem:[#allocation3 + $0x28] sm:$0x11]
        %v4073 = vsel %vm4068, 0, %v4072
        %4074 = vst [vmem:[#allocation3 + $0x28] sm:$0x11] %v4073
        %v4075 = vld [vmem:[#allocation3 + $0x40] sm:$0x11]
        %v4076 = vsel %vm4068, 0, %v4075
        %4077 = vst [vmem:[#allocation3 + $0x40] sm:$0x11] %v4076
        %v4078 = vld [vmem:[#allocation3 + $0x58] sm:$0x11]
        %v4079 = vsel %vm4068, 0, %v4078
        %4080 = vst [vmem:[#allocation3 + $0x58] sm:$0x11] %v4079
        %v4081 = vld [vmem:[#allocation3 + $0x70] sm:$0x11]
        %v4082 = vsel %vm4068, 0, %v4081
        %4083 = vst [vmem:[#allocation3 + $0x70] sm:$0x11] %v4082
        %v4084 = vld [vmem:[#allocation3 + $0x88] sm:$0x11]
        %v4085 = vsel %vm4068, 0, %v4084
        %4086 = vst [vmem:[#allocation3 + $0x88] sm:$0x11] %v4085
        %v4087 = vld [vmem:[#allocation3 + $0xa0] sm:$0x11]
        %v4088 = vsel %vm4068, 0, %v4087
        %4089 = vst [vmem:[#allocation3 + $0xa0] sm:$0x11] %v4088
        %v4090 = vld [vmem:[#allocation3 + $0xb8] sm:$0x11]
        %v4091 = vsel %vm4068, 0, %v4090
        %4092 = vst [vmem:[#allocation3 + $0xb8] sm:$0x11] %v4091
        %v4093 = vld [vmem:[#allocation3 + $0xd0] sm:$0x11]
        %v4094 = vsel %vm4068, 0, %v4093
        %4095 = vst [vmem:[#allocation3 + $0xd0] sm:$0x11] %v4094
        %v4096 = vld [vmem:[#allocation3 + $0xe8] sm:$0x11]
        %v4097 = vsel %vm4068, 0, %v4096
        %4098 = vst [vmem:[#allocation3 + $0xe8] sm:$0x11] %v4097
        %v4099 = vld [vmem:[#allocation3 + $0x100] sm:$0x11]
        %v4100 = vsel %vm4068, 0, %v4099
        %4101 = vst [vmem:[#allocation3 + $0x100] sm:$0x11] %v4100
        %v4102 = vld [vmem:[#allocation3 + $0x118] sm:$0x11]
        %v4103 = vsel %vm4068, 0, %v4102
        %4104 = vst [vmem:[#allocation3 + $0x118] sm:$0x11] %v4103
        %v4105 = vld [vmem:[#allocation3 + $0x130] sm:$0x11]
        %v4106 = vsel %vm4068, 0, %v4105
        %4107 = vst [vmem:[#allocation3 + $0x130] sm:$0x11] %v4106
        %v4108 = vld [vmem:[#allocation3 + $0x148] sm:$0x11]
        %v4109 = vsel %vm4068, 0, %v4108
        %4110 = vst [vmem:[#allocation3 + $0x148] sm:$0x11] %v4109
        %v4111 = vld [vmem:[#allocation3 + $0x160] sm:$0x11]
        %v4112 = vsel %vm4068, 0, %v4111
        %4113 = vst [vmem:[#allocation3 + $0x160] sm:$0x11] %v4112
        %v4114 = vld [vmem:[#allocation3 + $0x178] sm:$0x11]
        %v4115 = vsel %vm4068, 0, %v4114
        %4116 = vst [vmem:[#allocation3 + $0x178] sm:$0x11] %v4115
        %v4117 = vld [vmem:[#allocation3 + $0x190] sm:$0x11]
        %v4118 = vsel %vm4068, 0, %v4117
        %4119 = vst [vmem:[#allocation3 + $0x190] sm:$0x11] %v4118
        %v4120 = vld [vmem:[#allocation3 + $0x1a8] sm:$0x11]
        %v4121 = vsel %vm4068, 0, %v4120
        %4122 = vst [vmem:[#allocation3 + $0x1a8] sm:$0x11] %v4121
        %v4124 = vshrl.u32 %v3969, 16
        %v4126 = vrot.slane %v4124, 7
        %v4127 = vshll.u32 %v3969, 16
        %v4129 = vor.u32 %v4126, %v4127
        %v4130 = vrot.slane %v4126, 4
        %v4132 = vshrl.u32 %v3970, 16
        %v4134 = vrot.slane %v4132, 7
        %v4135 = vshll.u32 %v3970, 16
        %v4137 = vor.u32 %v4134, %v4135
        %v4138 = vsel %vm401, %v4130, %v4137
        %v4139 = vrot.slane %v4134, 4
        %v4141 = vshrl.u32 %v3971, 16
        %v4143 = vrot.slane %v4141, 7
        %v4144 = vshll.u32 %v3971, 16
        %v4146 = vor.u32 %v4143, %v4144
        %v4147 = vrot.slane %v4143, 4
        %v4149 = vshrl.u32 %v3972, 16
        %v4151 = vrot.slane %v4149, 7
        %v4152 = vshll.u32 %v3972, 16
        %v4154 = vor.u32 %v4151, %v4152
        %v4155 = vsel %vm401, %v4147, %v4154
        %v4156 = vrot.slane %v4151, 4
        %v4158 = vshrl.u32 %v3973, 16
        %v4160 = vrot.slane %v4158, 7
        %v4161 = vshll.u32 %v3973, 16
        %v4163 = vor.u32 %v4160, %v4161
        %v4164 = vrot.slane %v4160, 4
        %v4166 = vshrl.u32 %v3974, 16
        %v4168 = vrot.slane %v4166, 7
        %v4169 = vshll.u32 %v3974, 16
        %v4171 = vor.u32 %v4168, %v4169
        %v4172 = vsel %vm401, %v4164, %v4171
        %v4173 = vrot.slane %v4168, 4
        %v4175 = vshrl.u32 %v3975, 16
        %v4177 = vrot.slane %v4175, 7
        %v4178 = vshll.u32 %v3975, 16
        %v4180 = vor.u32 %v4177, %v4178
        %v4181 = vrot.slane %v4177, 4
        %v4183 = vshrl.u32 %v3976, 16
        %v4185 = vrot.slane %v4183, 7
        %v4186 = vshll.u32 %v3976, 16
        %v4188 = vor.u32 %v4185, %v4186
        %v4189 = vsel %vm401, %v4181, %v4188
        %v4190 = vrot.slane %v4185, 4
        %v4192 = vshrl.u32 %v3977, 16
        %v4194 = vrot.slane %v4192, 7
        %v4195 = vshll.u32 %v3977, 16
        %v4197 = vor.u32 %v4194, %v4195
        %v4198 = vrot.slane %v4194, 4
        %v4200 = vshrl.u32 %v3978, 16
        %v4202 = vrot.slane %v4200, 7
        %v4203 = vshll.u32 %v3978, 16
        %v4205 = vor.u32 %v4202, %v4203
        %v4206 = vsel %vm401, %v4198, %v4205
        %v4207 = vrot.slane %v4202, 4
        %v4209 = vshrl.u32 %v3979, 16
        %v4211 = vrot.slane %v4209, 7
        %v4212 = vshll.u32 %v3979, 16
        %v4214 = vor.u32 %v4211, %v4212
        %v4215 = vrot.slane %v4211, 4
        %v4217 = vshrl.u32 %v3980, 16
        %v4219 = vrot.slane %v4217, 7
        %v4220 = vshll.u32 %v3980, 16
        %v4222 = vor.u32 %v4219, %v4220
        %v4223 = vsel %vm401, %v4215, %v4222
        %v4224 = vrot.slane %v4219, 4
        %v4226 = vshrl.u32 %v3981, 16
        %v4228 = vrot.slane %v4226, 7
        %v4229 = vshll.u32 %v3981, 16
        %v4231 = vor.u32 %v4228, %v4229
        %v4232 = vrot.slane %v4228, 4
        %v4234 = vshrl.u32 %v3982, 16
        %v4236 = vrot.slane %v4234, 7
        %v4237 = vshll.u32 %v3982, 16
        %v4239 = vor.u32 %v4236, %v4237
        %v4240 = vsel %vm401, %v4232, %v4239
        %v4241 = vrot.slane %v4236, 4
        %v4243 = vshrl.u32 %v3983, 16
        %v4245 = vrot.slane %v4243, 7
        %v4246 = vshll.u32 %v3983, 16
        %v4248 = vor.u32 %v4245, %v4246
        %v4249 = vrot.slane %v4245, 4
        %v4251 = vshrl.u32 %v3984, 16
        %v4253 = vrot.slane %v4251, 7
        %v4254 = vshll.u32 %v3984, 16
        %v4256 = vor.u32 %v4253, %v4254
        %v4257 = vsel %vm401, %v4249, %v4256
        %v4258 = vrot.slane %v4253, 4
        %v4260 = vshrl.u32 %v3985, 16
        %v4262 = vrot.slane %v4260, 7
        %v4263 = vshll.u32 %v3985, 16
        %v4265 = vor.u32 %v4262, %v4263
        %v4266 = vrot.slane %v4262, 4
        %v4268 = vshrl.u32 %v3986, 16
        %v4270 = vrot.slane %v4268, 7
        %v4271 = vshll.u32 %v3986, 16
        %v4273 = vor.u32 %v4270, %v4271
        %v4274 = vsel %vm401, %v4266, %v4273
        %v4275 = vrot.slane %v4270, 4
        %v4277 = vshrl.u32 %v3987, 16
        %v4279 = vrot.slane %v4277, 7
        %v4280 = vshll.u32 %v3987, 16
        %v4282 = vor.u32 %v4279, %v4280
        %v4283 = vrot.slane %v4279, 4
        %v4285 = vshrl.u32 %v3988, 16
        %v4287 = vrot.slane %v4285, 7
        %v4288 = vshll.u32 %v3988, 16
        %v4290 = vor.u32 %v4287, %v4288
        %v4291 = vsel %vm401, %v4283, %v4290
        %v4292 = vrot.slane %v4287, 4
        %v4294 = vshrl.u32 %v3989, 16
        %v4296 = vrot.slane %v4294, 7
        %v4297 = vshll.u32 %v3989, 16
        %v4299 = vor.u32 %v4296, %v4297
        %v4300 = vrot.slane %v4296, 4
        %v4302 = vshrl.u32 %v3990, 16
        %v4304 = vrot.slane %v4302, 7
        %v4305 = vshll.u32 %v3990, 16
        %v4307 = vor.u32 %v4304, %v4305
        %v4308 = vsel %vm401, %v4300, %v4307
        %v4309 = vrot.slane %v4304, 4
        %v4311 = vshrl.u32 %v3991, 16
        %v4313 = vrot.slane %v4311, 7
        %v4314 = vshll.u32 %v3991, 16
        %v4316 = vor.u32 %v4313, %v4314
        %v4317 = vrot.slane %v4313, 4
        %v4319 = vshrl.u32 %v3992, 16
        %v4321 = vrot.slane %v4319, 7
        %v4322 = vshll.u32 %v3992, 16
        %v4324 = vor.u32 %v4321, %v4322
        %v4325 = vsel %vm401, %v4317, %v4324
        %v4326 = vrot.slane %v4321, 4
        %v4328 = vshrl.u32 %v3993, 16
        %v4330 = vrot.slane %v4328, 7
        %v4331 = vshll.u32 %v3993, 16
        %v4333 = vor.u32 %v4330, %v4331
        %v4334 = vrot.slane %v4330, 4
        %v4336 = vshrl.u32 %v3994, 16
        %v4338 = vrot.slane %v4336, 7
        %v4339 = vshll.u32 %v3994, 16
        %v4341 = vor.u32 %v4338, %v4339
        %v4342 = vsel %vm401, %v4334, %v4341
        %v4343 = vrot.slane %v4338, 4
        %v4345 = vshrl.u32 %v3995, 16
        %v4347 = vrot.slane %v4345, 7
        %v4348 = vshll.u32 %v3995, 16
        %v4350 = vor.u32 %v4347, %v4348
        %v4351 = vrot.slane %v4347, 4
        %v4353 = vshrl.u32 %v3996, 16
        %v4355 = vrot.slane %v4353, 7
        %v4356 = vshll.u32 %v3996, 16
        %v4358 = vor.u32 %v4355, %v4356
        %v4359 = vsel %vm401, %v4351, %v4358
        %v4360 = vrot.slane %v4355, 4
        %v4362 = vshrl.u32 %v3997, 16
        %v4364 = vrot.slane %v4362, 7
        %v4365 = vshll.u32 %v3997, 16
        %v4367 = vor.u32 %v4364, %v4365
        %v4368 = vrot.slane %v4364, 4
        %v4370 = vshrl.u32 %v3998, 16
        %v4372 = vrot.slane %v4370, 7
        %v4373 = vshll.u32 %v3998, 16
        %v4375 = vor.u32 %v4372, %v4373
        %v4376 = vsel %vm401, %v4368, %v4375
        %v4377 = vrot.slane %v4372, 4
        %v4379 = vshrl.u32 %v3999, 16
        %v4381 = vrot.slane %v4379, 7
        %v4382 = vshll.u32 %v3999, 16
        %v4384 = vor.u32 %v4381, %v4382
        %v4385 = vrot.slane %v4381, 4
        %v4387 = vshrl.u32 %v4000, 16
        %v4389 = vrot.slane %v4387, 7
        %v4390 = vshll.u32 %v4000, 16
        %v4392 = vor.u32 %v4389, %v4390
        %v4393 = vsel %vm401, %v4385, %v4392
        %v4394 = vrot.slane %v4389, 4
        %s4443 = scalar_lea.vmem [#allocation3], 24
        %vm4444 = vcmask 1047556
        %vm4445 = vmand %vm4444, %vm4066
        %vm4446 = vmor %vm4445, %vm724
        %v4447 = vld [vmem:[%s4443] sm:$0xff]
        %v4448 = vsel %vm4446, %v4129, %v4447
        %4449 = vst [vmem:[%s4443] sm:$0xff] %v4448
        %4450 = vst [vmem:[%s4443 + $0x8] sm:$0xff] %v4138
        %v4451 = vld [vmem:[%s4443 + $0x10] sm:$0x11]
        %v4452 = vsel %vm4011, %v4139, %v4451
        %4453 = vst [vmem:[%s4443 + $0x10] sm:$0x11] %v4452
        %v4454 = vld [vmem:[%s4443 + $0x18] sm:$0xff]
        %v4455 = vsel %vm4446, %v4146, %v4454
        %4456 = vst [vmem:[%s4443 + $0x18] sm:$0xff] %v4455
        %4457 = vst [vmem:[%s4443 + $0x20] sm:$0xff] %v4155
        %v4458 = vld [vmem:[%s4443 + $0x28] sm:$0x11]
        %v4459 = vsel %vm4011, %v4156, %v4458
        %4460 = vst [vmem:[%s4443 + $0x28] sm:$0x11] %v4459
        %v4461 = vld [vmem:[%s4443 + $0x30] sm:$0xff]
        %v4462 = vsel %vm4446, %v4163, %v4461
        %4463 = vst [vmem:[%s4443 + $0x30] sm:$0xff] %v4462
        %4464 = vst [vmem:[%s4443 + $0x38] sm:$0xff] %v4172
        %v4465 = vld [vmem:[%s4443 + $0x40] sm:$0x11]
        %v4466 = vsel %vm4011, %v4173, %v4465
        %4467 = vst [vmem:[%s4443 + $0x40] sm:$0x11] %v4466
        %v4468 = vld [vmem:[%s4443 + $0x48] sm:$0xff]
        %v4469 = vsel %vm4446, %v4180, %v4468
        %4470 = vst [vmem:[%s4443 + $0x48] sm:$0xff] %v4469
        %4471 = vst [vmem:[%s4443 + $0x50] sm:$0xff] %v4189
        %v4472 = vld [vmem:[%s4443 + $0x58] sm:$0x11]
        %v4473 = vsel %vm4011, %v4190, %v4472
        %4474 = vst [vmem:[%s4443 + $0x58] sm:$0x11] %v4473
        %v4475 = vld [vmem:[%s4443 + $0x60] sm:$0xff]
        %v4476 = vsel %vm4446, %v4197, %v4475
        %4477 = vst [vmem:[%s4443 + $0x60] sm:$0xff] %v4476
        %4478 = vst [vmem:[%s4443 + $0x68] sm:$0xff] %v4206
        %v4479 = vld [vmem:[%s4443 + $0x70] sm:$0x11]
        %v4480 = vsel %vm4011, %v4207, %v4479
        %4481 = vst [vmem:[%s4443 + $0x70] sm:$0x11] %v4480
        %v4482 = vld [vmem:[%s4443 + $0x78] sm:$0xff]
        %v4483 = vsel %vm4446, %v4214, %v4482
        %4484 = vst [vmem:[%s4443 + $0x78] sm:$0xff] %v4483
        %4485 = vst [vmem:[%s4443 + $0x80] sm:$0xff] %v4223
        %v4486 = vld [vmem:[%s4443 + $0x88] sm:$0x11]
        %v4487 = vsel %vm4011, %v4224, %v4486
        %4488 = vst [vmem:[%s4443 + $0x88] sm:$0x11] %v4487
        %v4489 = vld [vmem:[%s4443 + $0x90] sm:$0xff]
        %v4490 = vsel %vm4446, %v4231, %v4489
        %4491 = vst [vmem:[%s4443 + $0x90] sm:$0xff] %v4490
        %4492 = vst [vmem:[%s4443 + $0x98] sm:$0xff] %v4240
        %v4493 = vld [vmem:[%s4443 + $0xa0] sm:$0x11]
        %v4494 = vsel %vm4011, %v4241, %v4493
        %4495 = vst [vmem:[%s4443 + $0xa0] sm:$0x11] %v4494
        %v4496 = vld [vmem:[%s4443 + $0xa8] sm:$0xff]
        %v4497 = vsel %vm4446, %v4248, %v4496
        %4498 = vst [vmem:[%s4443 + $0xa8] sm:$0xff] %v4497
        %4499 = vst [vmem:[%s4443 + $0xb0] sm:$0xff] %v4257
        %v4500 = vld [vmem:[%s4443 + $0xb8] sm:$0x11]
        %v4501 = vsel %vm4011, %v4258, %v4500
        %4502 = vst [vmem:[%s4443 + $0xb8] sm:$0x11] %v4501
        %v4503 = vld [vmem:[%s4443 + $0xc0] sm:$0xff]
        %v4504 = vsel %vm4446, %v4265, %v4503
        %4505 = vst [vmem:[%s4443 + $0xc0] sm:$0xff] %v4504
        %4506 = vst [vmem:[%s4443 + $0xc8] sm:$0xff] %v4274
        %v4507 = vld [vmem:[%s4443 + $0xd0] sm:$0x11]
        %v4508 = vsel %vm4011, %v4275, %v4507
        %4509 = vst [vmem:[%s4443 + $0xd0] sm:$0x11] %v4508
        %v4510 = vld [vmem:[%s4443 + $0xd8] sm:$0xff]
        %v4511 = vsel %vm4446, %v4282, %v4510
        %4512 = vst [vmem:[%s4443 + $0xd8] sm:$0xff] %v4511
        %4513 = vst [vmem:[%s4443 + $0xe0] sm:$0xff] %v4291
        %v4514 = vld [vmem:[%s4443 + $0xe8] sm:$0x11]
        %v4515 = vsel %vm4011, %v4292, %v4514
        %4516 = vst [vmem:[%s4443 + $0xe8] sm:$0x11] %v4515
        %v4517 = vld [vmem:[%s4443 + $0xf0] sm:$0xff]
        %v4518 = vsel %vm4446, %v4299, %v4517
        %4519 = vst [vmem:[%s4443 + $0xf0] sm:$0xff] %v4518
        %4520 = vst [vmem:[%s4443 + $0xf8] sm:$0xff] %v4308
        %v4521 = vld [vmem:[%s4443 + $0x100] sm:$0x11]
        %v4522 = vsel %vm4011, %v4309, %v4521
        %4523 = vst [vmem:[%s4443 + $0x100] sm:$0x11] %v4522
        %v4524 = vld [vmem:[%s4443 + $0x108] sm:$0xff]
        %v4525 = vsel %vm4446, %v4316, %v4524
        %4526 = vst [vmem:[%s4443 + $0x108] sm:$0xff] %v4525
        %4527 = vst [vmem:[%s4443 + $0x110] sm:$0xff] %v4325
        %v4528 = vld [vmem:[%s4443 + $0x118] sm:$0x11]
        %v4529 = vsel %vm4011, %v4326, %v4528
        %4530 = vst [vmem:[%s4443 + $0x118] sm:$0x11] %v4529
        %v4531 = vld [vmem:[%s4443 + $0x120] sm:$0xff]
        %v4532 = vsel %vm4446, %v4333, %v4531
        %4533 = vst [vmem:[%s4443 + $0x120] sm:$0xff] %v4532
        %4534 = vst [vmem:[%s4443 + $0x128] sm:$0xff] %v4342
        %v4535 = vld [vmem:[%s4443 + $0x130] sm:$0x11]
        %v4536 = vsel %vm4011, %v4343, %v4535
        %4537 = vst [vmem:[%s4443 + $0x130] sm:$0x11] %v4536
        %v4538 = vld [vmem:[%s4443 + $0x138] sm:$0xff]
        %v4539 = vsel %vm4446, %v4350, %v4538
        %4540 = vst [vmem:[%s4443 + $0x138] sm:$0xff] %v4539
        %4541 = vst [vmem:[%s4443 + $0x140] sm:$0xff] %v4359
        %v4542 = vld [vmem:[%s4443 + $0x148] sm:$0x11]
        %v4543 = vsel %vm4011, %v4360, %v4542
        %4544 = vst [vmem:[%s4443 + $0x148] sm:$0x11] %v4543
        %v4545 = vld [vmem:[%s4443 + $0x150] sm:$0xff]
        %v4546 = vsel %vm4446, %v4367, %v4545
        %4547 = vst [vmem:[%s4443 + $0x150] sm:$0xff] %v4546
        %4548 = vst [vmem:[%s4443 + $0x158] sm:$0xff] %v4376
        %v4549 = vld [vmem:[%s4443 + $0x160] sm:$0x11]
        %v4550 = vsel %vm4011, %v4377, %v4549
        %4551 = vst [vmem:[%s4443 + $0x160] sm:$0x11] %v4550
        %v4552 = vld [vmem:[%s4443 + $0x168] sm:$0xff]
        %v4553 = vsel %vm4446, %v4384, %v4552
        %4554 = vst [vmem:[%s4443 + $0x168] sm:$0xff] %v4553
        %4555 = vst [vmem:[%s4443 + $0x170] sm:$0xff] %v4393
        %v4556 = vld [vmem:[%s4443 + $0x178] sm:$0x11]
        %v4557 = vsel %vm4011, %v4394, %v4556
        %4558 = vst [vmem:[%s4443 + $0x178] sm:$0x11] %v4557
        %v4559 = vld [vmem:[#allocation3] sm:$0xff]
        %v4560 = vld [vmem:[#allocation3 + $0x8] sm:$0xff]
        %v4561 = vld [vmem:[#allocation3 + $0x18] sm:$0xff]
        %v4562 = vld [vmem:[#allocation3 + $0x20] sm:$0xff]
        %v4563 = vld [vmem:[#allocation3 + $0x30] sm:$0xff]
        %v4564 = vld [vmem:[#allocation3 + $0x38] sm:$0xff]
        %v4565 = vld [vmem:[#allocation3 + $0x48] sm:$0xff]
        %v4566 = vld [vmem:[#allocation3 + $0x50] sm:$0xff]
        %v4567 = vld [vmem:[#allocation3 + $0x60] sm:$0xff]
        %v4568 = vld [vmem:[#allocation3 + $0x68] sm:$0xff]
        %v4569 = vld [vmem:[#allocation3 + $0x78] sm:$0xff]
        %v4570 = vld [vmem:[#allocation3 + $0x80] sm:$0xff]
        %v4571 = vld [vmem:[#allocation3 + $0x90] sm:$0xff]
        %v4572 = vld [vmem:[#allocation3 + $0x98] sm:$0xff]
        %v4573 = vld [vmem:[#allocation3 + $0xa8] sm:$0xff]
        %v4574 = vld [vmem:[#allocation3 + $0xb0] sm:$0xff]
        %v4575 = vld [vmem:[#allocation3 + $0xc0] sm:$0xff]
        %v4576 = vld [vmem:[#allocation3 + $0xc8] sm:$0xff]
        %v4577 = vld [vmem:[#allocation3 + $0xd8] sm:$0xff]
        %v4578 = vld [vmem:[#allocation3 + $0xe0] sm:$0xff]
        %v4579 = vld [vmem:[#allocation3 + $0xf0] sm:$0xff]
        %v4580 = vld [vmem:[#allocation3 + $0xf8] sm:$0xff]
        %v4581 = vld [vmem:[#allocation3 + $0x108] sm:$0xff]
        %v4582 = vld [vmem:[#allocation3 + $0x110] sm:$0xff]
        %v4583 = vld [vmem:[#allocation3 + $0x120] sm:$0xff]
        %v4584 = vld [vmem:[#allocation3 + $0x128] sm:$0xff]
        %v4585 = vld [vmem:[#allocation3 + $0x138] sm:$0xff]
        %v4586 = vld [vmem:[#allocation3 + $0x140] sm:$0xff]
        %v4587 = vld [vmem:[#allocation3 + $0x150] sm:$0xff]
        %v4588 = vld [vmem:[#allocation3 + $0x158] sm:$0xff]
        %v4589 = vld [vmem:[#allocation3 + $0x168] sm:$0xff]
        %v4590 = vld [vmem:[#allocation3 + $0x170] sm:$0xff]
        %v4591 = vld [vmem:[#allocation3 + $0x180] sm:$0xff]
        %v4592 = vld [vmem:[#allocation3 + $0x188] sm:$0xff]
        %v4593 = vld [vmem:[#allocation3 + $0x198] sm:$0xff]
        %v4594 = vld [vmem:[#allocation3 + $0x1a0] sm:$0xff]
        %v4595 = vld [vmem:[#allocation3 + $0x10] sm:$0x11]
        %v4596 = vld [vmem:[#allocation3 + $0x28] sm:$0x11]
        %v4597 = vld [vmem:[#allocation3 + $0x40] sm:$0x11]
        %v4598 = vld [vmem:[#allocation3 + $0x58] sm:$0x11]
        %v4599 = vld [vmem:[#allocation3 + $0x70] sm:$0x11]
        %v4600 = vld [vmem:[#allocation3 + $0x88] sm:$0x11]
        %v4601 = vld [vmem:[#allocation3 + $0xa0] sm:$0x11]
        %v4602 = vld [vmem:[#allocation3 + $0xb8] sm:$0x11]
        %v4603 = vld [vmem:[#allocation3 + $0xd0] sm:$0x11]
        %v4604 = vld [vmem:[#allocation3 + $0xe8] sm:$0x11]
        %v4605 = vld [vmem:[#allocation3 + $0x100] sm:$0x11]
        %v4606 = vld [vmem:[#allocation3 + $0x118] sm:$0x11]
        %v4607 = vld [vmem:[#allocation3 + $0x130] sm:$0x11]
        %v4608 = vld [vmem:[#allocation3 + $0x148] sm:$0x11]
        %v4609 = vld [vmem:[#allocation3 + $0x160] sm:$0x11]
        %v4610 = vld [vmem:[#allocation3 + $0x178] sm:$0x11]
        %v4611 = vld [vmem:[#allocation3 + $0x190] sm:$0x11]
        %v4612 = vld [vmem:[#allocation3 + $0x1a8] sm:$0x11]
        %v4613 = vld [vmem:[#allocation3] sm:$0xee]
        %v4614 = vld [vmem:[#allocation3 + $0x18] sm:$0xee]
        %v4615 = vld [vmem:[#allocation3 + $0x30] sm:$0xee]
        %v4616 = vld [vmem:[#allocation3 + $0x48] sm:$0xee]
        %v4617 = vld [vmem:[#allocation3 + $0x60] sm:$0xee]
        %v4618 = vld [vmem:[#allocation3 + $0x78] sm:$0xee]
        %v4619 = vld [vmem:[#allocation3 + $0x90] sm:$0xee]
        %v4620 = vld [vmem:[#allocation3 + $0xa8] sm:$0xee]
        %v4621 = vld [vmem:[#allocation3 + $0xc0] sm:$0xee]
        %v4622 = vld [vmem:[#allocation3 + $0xd8] sm:$0xee]
        %v4623 = vld [vmem:[#allocation3 + $0xf0] sm:$0xee]
        %v4624 = vld [vmem:[#allocation3 + $0x108] sm:$0xee]
        %v4625 = vld [vmem:[#allocation3 + $0x120] sm:$0xee]
        %v4626 = vld [vmem:[#allocation3 + $0x138] sm:$0xee]
        %v4627 = vld [vmem:[#allocation3 + $0x150] sm:$0xee]
        %v4628 = vld [vmem:[#allocation3 + $0x168] sm:$0xee]
        %v4629 = vld [vmem:[#allocation3 + $0x180] sm:$0xee]
        %v4630 = vld [vmem:[#allocation3 + $0x198] sm:$0xee]
        %v4663 = vunpack.c.l.b16 %v4559
        %v4664 = vunpack.c.h.b16 %v4559
        %v4665 = vunpack.c.l.b16 %v4560
        %v4666 = vunpack.c.h.b16 %v4560
        %v4667 = vunpack.c.l.b16 %v4561
        %v4668 = vunpack.c.h.b16 %v4561
        %v4669 = vunpack.c.l.b16 %v4562
        %v4670 = vunpack.c.h.b16 %v4562
        %v4671 = vunpack.c.l.b16 %v4563
        %v4672 = vunpack.c.h.b16 %v4563
        %v4673 = vunpack.c.l.b16 %v4564
        %v4674 = vunpack.c.h.b16 %v4564
        %v4675 = vunpack.c.l.b16 %v4565
        %v4676 = vunpack.c.h.b16 %v4565
        %v4677 = vunpack.c.l.b16 %v4566
        %v4678 = vunpack.c.h.b16 %v4566
        %v4679 = vunpack.c.l.b16 %v4567
        %v4680 = vunpack.c.h.b16 %v4567
        %v4681 = vunpack.c.l.b16 %v4568
        %v4682 = vunpack.c.h.b16 %v4568
        %v4683 = vunpack.c.l.b16 %v4569
        %v4684 = vunpack.c.h.b16 %v4569
        %v4685 = vunpack.c.l.b16 %v4570
        %v4686 = vunpack.c.h.b16 %v4570
        %v4687 = vunpack.c.l.b16 %v4571
        %v4688 = vunpack.c.h.b16 %v4571
        %v4689 = vunpack.c.l.b16 %v4572
        %v4690 = vunpack.c.h.b16 %v4572
        %v4691 = vunpack.c.l.b16 %v4573
        %v4692 = vunpack.c.h.b16 %v4573
        %v4693 = vunpack.c.l.b16 %v4574
        %v4694 = vunpack.c.h.b16 %v4574
        %v4695 = vunpack.c.l.b16 %v4575
        %v4696 = vunpack.c.h.b16 %v4575
        %v4697 = vunpack.c.l.b16 %v4576
        %v4698 = vunpack.c.h.b16 %v4576
        %v4699 = vunpack.c.l.b16 %v4577
        %v4700 = vunpack.c.h.b16 %v4577
        %v4701 = vunpack.c.l.b16 %v4578
        %v4702 = vunpack.c.h.b16 %v4578
        %v4703 = vunpack.c.l.b16 %v4579
        %v4704 = vunpack.c.h.b16 %v4579
        %v4705 = vunpack.c.l.b16 %v4580
        %v4706 = vunpack.c.h.b16 %v4580
        %v4707 = vunpack.c.l.b16 %v4581
        %v4708 = vunpack.c.h.b16 %v4581
        %v4709 = vunpack.c.l.b16 %v4582
        %v4710 = vunpack.c.h.b16 %v4582
        %v4711 = vunpack.c.l.b16 %v4583
        %v4712 = vunpack.c.h.b16 %v4583
        %v4713 = vunpack.c.l.b16 %v4584
        %v4714 = vunpack.c.h.b16 %v4584
        %v4715 = vunpack.c.l.b16 %v4585
        %v4716 = vunpack.c.h.b16 %v4585
        %v4717 = vunpack.c.l.b16 %v4586
        %v4718 = vunpack.c.h.b16 %v4586
        %v4719 = vunpack.c.l.b16 %v4587
        %v4720 = vunpack.c.h.b16 %v4587
        %v4721 = vunpack.c.l.b16 %v4588
        %v4722 = vunpack.c.h.b16 %v4588
        %v4723 = vunpack.c.l.b16 %v4589
        %v4724 = vunpack.c.h.b16 %v4589
        %v4725 = vunpack.c.l.b16 %v4590
        %v4726 = vunpack.c.h.b16 %v4590
        %v4727 = vpack.c.b16 %v4665, %v4663
        %v4728 = vpack.c.b16 %v4666, %v4664
        %v4729 = vpack.c.b16 %v4669, %v4667
        %v4730 = vpack.c.b16 %v4670, %v4668
        %v4731 = vpack.c.b16 %v4673, %v4671
        %v4732 = vpack.c.b16 %v4674, %v4672
        %v4733 = vpack.c.b16 %v4677, %v4675
        %v4734 = vpack.c.b16 %v4678, %v4676
        %v4735 = vpack.c.b16 %v4681, %v4679
        %v4736 = vpack.c.b16 %v4682, %v4680
        %v4737 = vpack.c.b16 %v4685, %v4683
        %v4738 = vpack.c.b16 %v4686, %v4684
        %v4739 = vpack.c.b16 %v4689, %v4687
        %v4740 = vpack.c.b16 %v4690, %v4688
        %v4741 = vpack.c.b16 %v4693, %v4691
        %v4742 = vpack.c.b16 %v4694, %v4692
        %v4743 = vpack.c.b16 %v4697, %v4695
        %v4744 = vpack.c.b16 %v4698, %v4696
        %v4745 = vpack.c.b16 %v4701, %v4699
        %v4746 = vpack.c.b16 %v4702, %v4700
        %v4747 = vpack.c.b16 %v4705, %v4703
        %v4748 = vpack.c.b16 %v4706, %v4704
        %v4749 = vpack.c.b16 %v4709, %v4707
        %v4750 = vpack.c.b16 %v4710, %v4708
        %v4751 = vpack.c.b16 %v4713, %v4711
        %v4752 = vpack.c.b16 %v4714, %v4712
        %v4753 = vpack.c.b16 %v4717, %v4715
        %v4754 = vpack.c.b16 %v4718, %v4716
        %v4755 = vpack.c.b16 %v4721, %v4719
        %v4756 = vpack.c.b16 %v4722, %v4720
        %v4757 = vpack.c.b16 %v4725, %v4723
        %v4758 = vpack.c.b16 %v4726, %v4724
        %v4807 = vunpack.c.l.b16 %v4595
        %v4808 = vunpack.c.h.b16 %v4595
        %v4809 = vunpack.c.l.b16 %v4596
        %v4810 = vunpack.c.h.b16 %v4596
        %v4811 = vunpack.c.l.b16 %v4597
        %v4812 = vunpack.c.h.b16 %v4597
        %v4813 = vunpack.c.l.b16 %v4598
        %v4814 = vunpack.c.h.b16 %v4598
        %v4815 = vunpack.c.l.b16 %v4599
        %v4816 = vunpack.c.h.b16 %v4599
        %v4817 = vunpack.c.l.b16 %v4600
        %v4818 = vunpack.c.h.b16 %v4600
        %v4819 = vunpack.c.l.b16 %v4601
        %v4820 = vunpack.c.h.b16 %v4601
        %v4821 = vunpack.c.l.b16 %v4602
        %v4822 = vunpack.c.h.b16 %v4602
        %v4823 = vunpack.c.l.b16 %v4603
        %v4824 = vunpack.c.h.b16 %v4603
        %v4825 = vunpack.c.l.b16 %v4604
        %v4826 = vunpack.c.h.b16 %v4604
        %v4827 = vunpack.c.l.b16 %v4605
        %v4828 = vunpack.c.h.b16 %v4605
        %v4829 = vunpack.c.l.b16 %v4606
        %v4830 = vunpack.c.h.b16 %v4606
        %v4831 = vunpack.c.l.b16 %v4607
        %v4832 = vunpack.c.h.b16 %v4607
        %v4833 = vunpack.c.l.b16 %v4608
        %v4834 = vunpack.c.h.b16 %v4608
        %v4835 = vunpack.c.l.b16 %v4609
        %v4836 = vunpack.c.h.b16 %v4609
        %v4837 = vunpack.c.l.b16 %v4610
        %v4838 = vunpack.c.h.b16 %v4610
        %v4839 = vpack.c.b16 %v4807, %v4807
        %v4840 = vpack.c.b16 %v4808, %v4808
        %v4841 = vpack.c.b16 %v4809, %v4809
        %v4842 = vpack.c.b16 %v4810, %v4810
        %v4843 = vpack.c.b16 %v4811, %v4811
        %v4844 = vpack.c.b16 %v4812, %v4812
        %v4845 = vpack.c.b16 %v4813, %v4813
        %v4846 = vpack.c.b16 %v4814, %v4814
        %v4847 = vpack.c.b16 %v4815, %v4815
        %v4848 = vpack.c.b16 %v4816, %v4816
        %v4849 = vpack.c.b16 %v4817, %v4817
        %v4850 = vpack.c.b16 %v4818, %v4818
        %v4851 = vpack.c.b16 %v4819, %v4819
        %v4852 = vpack.c.b16 %v4820, %v4820
        %v4853 = vpack.c.b16 %v4821, %v4821
        %v4854 = vpack.c.b16 %v4822, %v4822
        %v4855 = vpack.c.b16 %v4823, %v4823
        %v4856 = vpack.c.b16 %v4824, %v4824
        %v4857 = vpack.c.b16 %v4825, %v4825
        %v4858 = vpack.c.b16 %v4826, %v4826
        %v4859 = vpack.c.b16 %v4827, %v4827
        %v4860 = vpack.c.b16 %v4828, %v4828
        %v4861 = vpack.c.b16 %v4829, %v4829
        %v4862 = vpack.c.b16 %v4830, %v4830
        %v4863 = vpack.c.b16 %v4831, %v4831
        %v4864 = vpack.c.b16 %v4832, %v4832
        %v4865 = vpack.c.b16 %v4833, %v4833
        %v4866 = vpack.c.b16 %v4834, %v4834
        %v4867 = vpack.c.b16 %v4835, %v4835
        %v4868 = vpack.c.b16 %v4836, %v4836
        %v4869 = vpack.c.b16 %v4837, %v4837
        %v4870 = vpack.c.b16 %v4838, %v4838
        %v4872 = vshrl.u32 %v4727, 16
        %v4874 = vshll.u32 %v4727, 16
        %v4876 = vrot.slane %v4874, 1
        %v4877 = vor.u32 %v4872, %v4876
        %v4879 = vshll.u32 %v4839, 16
        %v4881 = vrot.slane %v4879, 1
        %v4882 = vsel %vm1053, %v4877, %v4881
        %v4884 = vshrl.u32 %v4728, 16
        %v4886 = vshll.u32 %v4728, 16
        %v4888 = vrot.slane %v4886, 1
        %v4889 = vor.u32 %v4884, %v4888
        %v4891 = vshll.u32 %v4840, 16
        %v4893 = vrot.slane %v4891, 1
        %v4894 = vsel %vm1053, %v4889, %v4893
        %v4896 = vshrl.u32 %v4729, 16
        %v4898 = vshll.u32 %v4729, 16
        %v4900 = vrot.slane %v4898, 1
        %v4901 = vor.u32 %v4896, %v4900
        %v4903 = vshll.u32 %v4841, 16
        %v4905 = vrot.slane %v4903, 1
        %v4906 = vsel %vm1053, %v4901, %v4905
        %v4908 = vshrl.u32 %v4730, 16
        %v4910 = vshll.u32 %v4730, 16
        %v4912 = vrot.slane %v4910, 1
        %v4913 = vor.u32 %v4908, %v4912
        %v4915 = vshll.u32 %v4842, 16
        %v4917 = vrot.slane %v4915, 1
        %v4918 = vsel %vm1053, %v4913, %v4917
        %v4920 = vshrl.u32 %v4731, 16
        %v4922 = vshll.u32 %v4731, 16
        %v4924 = vrot.slane %v4922, 1
        %v4925 = vor.u32 %v4920, %v4924
        %v4927 = vshll.u32 %v4843, 16
        %v4929 = vrot.slane %v4927, 1
        %v4930 = vsel %vm1053, %v4925, %v4929
        %v4932 = vshrl.u32 %v4732, 16
        %v4934 = vshll.u32 %v4732, 16
        %v4936 = vrot.slane %v4934, 1
        %v4937 = vor.u32 %v4932, %v4936
        %v4939 = vshll.u32 %v4844, 16
        %v4941 = vrot.slane %v4939, 1
        %v4942 = vsel %vm1053, %v4937, %v4941
        %v4944 = vshrl.u32 %v4733, 16
        %v4946 = vshll.u32 %v4733, 16
        %v4948 = vrot.slane %v4946, 1
        %v4949 = vor.u32 %v4944, %v4948
        %v4951 = vshll.u32 %v4845, 16
        %v4953 = vrot.slane %v4951, 1
        %v4954 = vsel %vm1053, %v4949, %v4953
        %v4956 = vshrl.u32 %v4734, 16
        %v4958 = vshll.u32 %v4734, 16
        %v4960 = vrot.slane %v4958, 1
        %v4961 = vor.u32 %v4956, %v4960
        %v4963 = vshll.u32 %v4846, 16
        %v4965 = vrot.slane %v4963, 1
        %v4966 = vsel %vm1053, %v4961, %v4965
        %v4968 = vshrl.u32 %v4735, 16
        %v4970 = vshll.u32 %v4735, 16
        %v4972 = vrot.slane %v4970, 1
        %v4973 = vor.u32 %v4968, %v4972
        %v4975 = vshll.u32 %v4847, 16
        %v4977 = vrot.slane %v4975, 1
        %v4978 = vsel %vm1053, %v4973, %v4977
        %v4980 = vshrl.u32 %v4736, 16
        %v4982 = vshll.u32 %v4736, 16
        %v4984 = vrot.slane %v4982, 1
        %v4985 = vor.u32 %v4980, %v4984
        %v4987 = vshll.u32 %v4848, 16
        %v4989 = vrot.slane %v4987, 1
        %v4990 = vsel %vm1053, %v4985, %v4989
        %v4992 = vshrl.u32 %v4737, 16
        %v4994 = vshll.u32 %v4737, 16
        %v4996 = vrot.slane %v4994, 1
        %v4997 = vor.u32 %v4992, %v4996
        %v4999 = vshll.u32 %v4849, 16
        %v5001 = vrot.slane %v4999, 1
        %v5002 = vsel %vm1053, %v4997, %v5001
        %v5004 = vshrl.u32 %v4738, 16
        %v5006 = vshll.u32 %v4738, 16
        %v5008 = vrot.slane %v5006, 1
        %v5009 = vor.u32 %v5004, %v5008
        %v5011 = vshll.u32 %v4850, 16
        %v5013 = vrot.slane %v5011, 1
        %v5014 = vsel %vm1053, %v5009, %v5013
        %v5016 = vshrl.u32 %v4739, 16
        %v5018 = vshll.u32 %v4739, 16
        %v5020 = vrot.slane %v5018, 1
        %v5021 = vor.u32 %v5016, %v5020
        %v5023 = vshll.u32 %v4851, 16
        %v5025 = vrot.slane %v5023, 1
        %v5026 = vsel %vm1053, %v5021, %v5025
        %v5028 = vshrl.u32 %v4740, 16
        %v5030 = vshll.u32 %v4740, 16
        %v5032 = vrot.slane %v5030, 1
        %v5033 = vor.u32 %v5028, %v5032
        %v5035 = vshll.u32 %v4852, 16
        %v5037 = vrot.slane %v5035, 1
        %v5038 = vsel %vm1053, %v5033, %v5037
        %v5040 = vshrl.u32 %v4741, 16
        %v5042 = vshll.u32 %v4741, 16
        %v5044 = vrot.slane %v5042, 1
        %v5045 = vor.u32 %v5040, %v5044
        %v5047 = vshll.u32 %v4853, 16
        %v5049 = vrot.slane %v5047, 1
        %v5050 = vsel %vm1053, %v5045, %v5049
        %v5052 = vshrl.u32 %v4742, 16
        %v5054 = vshll.u32 %v4742, 16
        %v5056 = vrot.slane %v5054, 1
        %v5057 = vor.u32 %v5052, %v5056
        %v5059 = vshll.u32 %v4854, 16
        %v5061 = vrot.slane %v5059, 1
        %v5062 = vsel %vm1053, %v5057, %v5061
        %v5064 = vshrl.u32 %v4743, 16
        %v5066 = vshll.u32 %v4743, 16
        %v5068 = vrot.slane %v5066, 1
        %v5069 = vor.u32 %v5064, %v5068
        %v5071 = vshll.u32 %v4855, 16
        %v5073 = vrot.slane %v5071, 1
        %v5074 = vsel %vm1053, %v5069, %v5073
        %v5076 = vshrl.u32 %v4744, 16
        %v5078 = vshll.u32 %v4744, 16
        %v5080 = vrot.slane %v5078, 1
        %v5081 = vor.u32 %v5076, %v5080
        %v5083 = vshll.u32 %v4856, 16
        %v5085 = vrot.slane %v5083, 1
        %v5086 = vsel %vm1053, %v5081, %v5085
        %v5088 = vshrl.u32 %v4745, 16
        %v5090 = vshll.u32 %v4745, 16
        %v5092 = vrot.slane %v5090, 1
        %v5093 = vor.u32 %v5088, %v5092
        %v5095 = vshll.u32 %v4857, 16
        %v5097 = vrot.slane %v5095, 1
        %v5098 = vsel %vm1053, %v5093, %v5097
        %v5100 = vshrl.u32 %v4746, 16
        %v5102 = vshll.u32 %v4746, 16
        %v5104 = vrot.slane %v5102, 1
        %v5105 = vor.u32 %v5100, %v5104
        %v5107 = vshll.u32 %v4858, 16
        %v5109 = vrot.slane %v5107, 1
        %v5110 = vsel %vm1053, %v5105, %v5109
        %v5112 = vshrl.u32 %v4747, 16
        %v5114 = vshll.u32 %v4747, 16
        %v5116 = vrot.slane %v5114, 1
        %v5117 = vor.u32 %v5112, %v5116
        %v5119 = vshll.u32 %v4859, 16
        %v5121 = vrot.slane %v5119, 1
        %v5122 = vsel %vm1053, %v5117, %v5121
        %v5124 = vshrl.u32 %v4748, 16
        %v5126 = vshll.u32 %v4748, 16
        %v5128 = vrot.slane %v5126, 1
        %v5129 = vor.u32 %v5124, %v5128
        %v5131 = vshll.u32 %v4860, 16
        %v5133 = vrot.slane %v5131, 1
        %v5134 = vsel %vm1053, %v5129, %v5133
        %v5136 = vshrl.u32 %v4749, 16
        %v5138 = vshll.u32 %v4749, 16
        %v5140 = vrot.slane %v5138, 1
        %v5141 = vor.u32 %v5136, %v5140
        %v5143 = vshll.u32 %v4861, 16
        %v5145 = vrot.slane %v5143, 1
        %v5146 = vsel %vm1053, %v5141, %v5145
        %v5148 = vshrl.u32 %v4750, 16
        %v5150 = vshll.u32 %v4750, 16
        %v5152 = vrot.slane %v5150, 1
        %v5153 = vor.u32 %v5148, %v5152
        %v5155 = vshll.u32 %v4862, 16
        %v5157 = vrot.slane %v5155, 1
        %v5158 = vsel %vm1053, %v5153, %v5157
        %v5160 = vshrl.u32 %v4751, 16
        %v5162 = vshll.u32 %v4751, 16
        %v5164 = vrot.slane %v5162, 1
        %v5165 = vor.u32 %v5160, %v5164
        %v5167 = vshll.u32 %v4863, 16
        %v5169 = vrot.slane %v5167, 1
        %v5170 = vsel %vm1053, %v5165, %v5169
        %v5172 = vshrl.u32 %v4752, 16
        %v5174 = vshll.u32 %v4752, 16
        %v5176 = vrot.slane %v5174, 1
        %v5177 = vor.u32 %v5172, %v5176
        %v5179 = vshll.u32 %v4864, 16
        %v5181 = vrot.slane %v5179, 1
        %v5182 = vsel %vm1053, %v5177, %v5181
        %v5184 = vshrl.u32 %v4753, 16
        %v5186 = vshll.u32 %v4753, 16
        %v5188 = vrot.slane %v5186, 1
        %v5189 = vor.u32 %v5184, %v5188
        %v5191 = vshll.u32 %v4865, 16
        %v5193 = vrot.slane %v5191, 1
        %v5194 = vsel %vm1053, %v5189, %v5193
        %v5196 = vshrl.u32 %v4754, 16
        %v5198 = vshll.u32 %v4754, 16
        %v5200 = vrot.slane %v5198, 1
        %v5201 = vor.u32 %v5196, %v5200
        %v5203 = vshll.u32 %v4866, 16
        %v5205 = vrot.slane %v5203, 1
        %v5206 = vsel %vm1053, %v5201, %v5205
        %v5208 = vshrl.u32 %v4755, 16
        %v5210 = vshll.u32 %v4755, 16
        %v5212 = vrot.slane %v5210, 1
        %v5213 = vor.u32 %v5208, %v5212
        %v5215 = vshll.u32 %v4867, 16
        %v5217 = vrot.slane %v5215, 1
        %v5218 = vsel %vm1053, %v5213, %v5217
        %v5220 = vshrl.u32 %v4756, 16
        %v5222 = vshll.u32 %v4756, 16
        %v5224 = vrot.slane %v5222, 1
        %v5225 = vor.u32 %v5220, %v5224
        %v5227 = vshll.u32 %v4868, 16
        %v5229 = vrot.slane %v5227, 1
        %v5230 = vsel %vm1053, %v5225, %v5229
        %v5232 = vshrl.u32 %v4757, 16
        %v5234 = vshll.u32 %v4757, 16
        %v5236 = vrot.slane %v5234, 1
        %v5237 = vor.u32 %v5232, %v5236
        %v5239 = vshll.u32 %v4869, 16
        %v5241 = vrot.slane %v5239, 1
        %v5242 = vsel %vm1053, %v5237, %v5241
        %v5244 = vshrl.u32 %v4758, 16
        %v5246 = vshll.u32 %v4758, 16
        %v5248 = vrot.slane %v5246, 1
        %v5249 = vor.u32 %v5244, %v5248
        %v5251 = vshll.u32 %v4870, 16
        %v5253 = vrot.slane %v5251, 1
        %v5254 = vsel %vm1053, %v5249, %v5253
        %v5303 = vunpack.c.l.b16 %v4613
        %v5304 = vunpack.c.h.b16 %v4613
        %v5305 = vunpack.c.l.b16 %v4614
        %v5306 = vunpack.c.h.b16 %v4614
        %v5307 = vunpack.c.l.b16 %v4615
        %v5308 = vunpack.c.h.b16 %v4615
        %v5309 = vunpack.c.l.b16 %v4616
        %v5310 = vunpack.c.h.b16 %v4616
        %v5311 = vunpack.c.l.b16 %v4617
        %v5312 = vunpack.c.h.b16 %v4617
        %v5313 = vunpack.c.l.b16 %v4618
        %v5314 = vunpack.c.h.b16 %v4618
        %v5315 = vunpack.c.l.b16 %v4619
        %v5316 = vunpack.c.h.b16 %v4619
        %v5317 = vunpack.c.l.b16 %v4620
        %v5318 = vunpack.c.h.b16 %v4620
        %v5319 = vunpack.c.l.b16 %v4621
        %v5320 = vunpack.c.h.b16 %v4621
        %v5321 = vunpack.c.l.b16 %v4622
        %v5322 = vunpack.c.h.b16 %v4622
        %v5323 = vunpack.c.l.b16 %v4623
        %v5324 = vunpack.c.h.b16 %v4623
        %v5325 = vunpack.c.l.b16 %v4624
        %v5326 = vunpack.c.h.b16 %v4624
        %v5327 = vunpack.c.l.b16 %v4625
        %v5328 = vunpack.c.h.b16 %v4625
        %v5329 = vunpack.c.l.b16 %v4626
        %v5330 = vunpack.c.h.b16 %v4626
        %v5331 = vunpack.c.l.b16 %v4627
        %v5332 = vunpack.c.h.b16 %v4627
        %v5333 = vunpack.c.l.b16 %v4628
        %v5334 = vunpack.c.h.b16 %v4628
        %v5335 = vpack.c.b16 %v4665, %v5303
        %v5336 = vpack.c.b16 %v4666, %v5304
        %v5337 = vpack.c.b16 %v4669, %v5305
        %v5338 = vpack.c.b16 %v4670, %v5306
        %v5339 = vpack.c.b16 %v4673, %v5307
        %v5340 = vpack.c.b16 %v4674, %v5308
        %v5341 = vpack.c.b16 %v4677, %v5309
        %v5342 = vpack.c.b16 %v4678, %v5310
        %v5343 = vpack.c.b16 %v4681, %v5311
        %v5344 = vpack.c.b16 %v4682, %v5312
        %v5345 = vpack.c.b16 %v4685, %v5313
        %v5346 = vpack.c.b16 %v4686, %v5314
        %v5347 = vpack.c.b16 %v4689, %v5315
        %v5348 = vpack.c.b16 %v4690, %v5316
        %v5349 = vpack.c.b16 %v4693, %v5317
        %v5350 = vpack.c.b16 %v4694, %v5318
        %v5351 = vpack.c.b16 %v4697, %v5319
        %v5352 = vpack.c.b16 %v4698, %v5320
        %v5353 = vpack.c.b16 %v4701, %v5321
        %v5354 = vpack.c.b16 %v4702, %v5322
        %v5355 = vpack.c.b16 %v4705, %v5323
        %v5356 = vpack.c.b16 %v4706, %v5324
        %v5357 = vpack.c.b16 %v4709, %v5325
        %v5358 = vpack.c.b16 %v4710, %v5326
        %v5359 = vpack.c.b16 %v4713, %v5327
        %v5360 = vpack.c.b16 %v4714, %v5328
        %v5361 = vpack.c.b16 %v4717, %v5329
        %v5362 = vpack.c.b16 %v4718, %v5330
        %v5363 = vpack.c.b16 %v4721, %v5331
        %v5364 = vpack.c.b16 %v4722, %v5332
        %v5365 = vpack.c.b16 %v4725, %v5333
        %v5366 = vpack.c.b16 %v4726, %v5334
        %v5367 = vrot.slane %v5335, 1
        %v5368 = vrot.slane %v4839, 1
        %v5369 = vsel %vm1310, %v5367, %v5368
        %v5370 = vrot.slane %v5336, 1
        %v5371 = vrot.slane %v4840, 1
        %v5372 = vsel %vm1310, %v5370, %v5371
        %v5373 = vrot.slane %v5337, 1
        %v5374 = vrot.slane %v4841, 1
        %v5375 = vsel %vm1310, %v5373, %v5374
        %v5376 = vrot.slane %v5338, 1
        %v5377 = vrot.slane %v4842, 1
        %v5378 = vsel %vm1310, %v5376, %v5377
        %v5379 = vrot.slane %v5339, 1
        %v5380 = vrot.slane %v4843, 1
        %v5381 = vsel %vm1310, %v5379, %v5380
        %v5382 = vrot.slane %v5340, 1
        %v5383 = vrot.slane %v4844, 1
        %v5384 = vsel %vm1310, %v5382, %v5383
        %v5385 = vrot.slane %v5341, 1
        %v5386 = vrot.slane %v4845, 1
        %v5387 = vsel %vm1310, %v5385, %v5386
        %v5388 = vrot.slane %v5342, 1
        %v5389 = vrot.slane %v4846, 1
        %v5390 = vsel %vm1310, %v5388, %v5389
        %v5391 = vrot.slane %v5343, 1
        %v5392 = vrot.slane %v4847, 1
        %v5393 = vsel %vm1310, %v5391, %v5392
        %v5394 = vrot.slane %v5344, 1
        %v5395 = vrot.slane %v4848, 1
        %v5396 = vsel %vm1310, %v5394, %v5395
        %v5397 = vrot.slane %v5345, 1
        %v5398 = vrot.slane %v4849, 1
        %v5399 = vsel %vm1310, %v5397, %v5398
        %v5400 = vrot.slane %v5346, 1
        %v5401 = vrot.slane %v4850, 1
        %v5402 = vsel %vm1310, %v5400, %v5401
        %v5403 = vrot.slane %v5347, 1
        %v5404 = vrot.slane %v4851, 1
        %v5405 = vsel %vm1310, %v5403, %v5404
        %v5406 = vrot.slane %v5348, 1
        %v5407 = vrot.slane %v4852, 1
        %v5408 = vsel %vm1310, %v5406, %v5407
        %v5409 = vrot.slane %v5349, 1
        %v5410 = vrot.slane %v4853, 1
        %v5411 = vsel %vm1310, %v5409, %v5410
        %v5412 = vrot.slane %v5350, 1
        %v5413 = vrot.slane %v4854, 1
        %v5414 = vsel %vm1310, %v5412, %v5413
        %v5415 = vrot.slane %v5351, 1
        %v5416 = vrot.slane %v4855, 1
        %v5417 = vsel %vm1310, %v5415, %v5416
        %v5418 = vrot.slane %v5352, 1
        %v5419 = vrot.slane %v4856, 1
        %v5420 = vsel %vm1310, %v5418, %v5419
        %v5421 = vrot.slane %v5353, 1
        %v5422 = vrot.slane %v4857, 1
        %v5423 = vsel %vm1310, %v5421, %v5422
        %v5424 = vrot.slane %v5354, 1
        %v5425 = vrot.slane %v4858, 1
        %v5426 = vsel %vm1310, %v5424, %v5425
        %v5427 = vrot.slane %v5355, 1
        %v5428 = vrot.slane %v4859, 1
        %v5429 = vsel %vm1310, %v5427, %v5428
        %v5430 = vrot.slane %v5356, 1
        %v5431 = vrot.slane %v4860, 1
        %v5432 = vsel %vm1310, %v5430, %v5431
        %v5433 = vrot.slane %v5357, 1
        %v5434 = vrot.slane %v4861, 1
        %v5435 = vsel %vm1310, %v5433, %v5434
        %v5436 = vrot.slane %v5358, 1
        %v5437 = vrot.slane %v4862, 1
        %v5438 = vsel %vm1310, %v5436, %v5437
        %v5439 = vrot.slane %v5359, 1
        %v5440 = vrot.slane %v4863, 1
        %v5441 = vsel %vm1310, %v5439, %v5440
        %v5442 = vrot.slane %v5360, 1
        %v5443 = vrot.slane %v4864, 1
        %v5444 = vsel %vm1310, %v5442, %v5443
        %v5445 = vrot.slane %v5361, 1
        %v5446 = vrot.slane %v4865, 1
        %v5447 = vsel %vm1310, %v5445, %v5446
        %v5448 = vrot.slane %v5362, 1
        %v5449 = vrot.slane %v4866, 1
        %v5450 = vsel %vm1310, %v5448, %v5449
        %v5451 = vrot.slane %v5363, 1
        %v5452 = vrot.slane %v4867, 1
        %v5453 = vsel %vm1310, %v5451, %v5452
        %v5454 = vrot.slane %v5364, 1
        %v5455 = vrot.slane %v4868, 1
        %v5456 = vsel %vm1310, %v5454, %v5455
        %v5457 = vrot.slane %v5365, 1
        %v5458 = vrot.slane %v4869, 1
        %v5459 = vsel %vm1310, %v5457, %v5458
        %v5460 = vrot.slane %v5366, 1
        %v5461 = vrot.slane %v4870, 1
        %v5462 = vsel %vm1310, %v5460, %v5461
        %v5497 = vunpack.c.l.b16 %v4591
        %v5498 = vunpack.c.h.b16 %v4591
        %v5499 = vunpack.c.l.b16 %v4592
        %v5500 = vunpack.c.h.b16 %v4592
        %v5501 = vpack.c.b16 %v5499, %v5497
        %v5502 = vpack.c.b16 %v5500, %v5498
        %v5506 = vunpack.c.l.b16 %v4611
        %v5507 = vunpack.c.h.b16 %v4611
        %v5508 = vpack.c.b16 %v5506, %v5506
        %v5509 = vpack.c.b16 %v5507, %v5507
        %v5511 = vshrl.u32 %v5501, 16
        %v5513 = vshll.u32 %v5501, 16
        %v5515 = vrot.slane %v5513, 1
        %v5516 = vor.u32 %v5511, %v5515
        %v5518 = vshll.u32 %v5508, 16
        %v5520 = vrot.slane %v5518, 1
        %v5521 = vsel %vm1053, %v5516, %v5520
        %v5523 = vshrl.u32 %v5502, 16
        %v5525 = vshll.u32 %v5502, 16
        %v5527 = vrot.slane %v5525, 1
        %v5528 = vor.u32 %v5523, %v5527
        %v5530 = vshll.u32 %v5509, 16
        %v5532 = vrot.slane %v5530, 1
        %v5533 = vsel %vm1053, %v5528, %v5532
        %v5537 = vunpack.c.l.b16 %v4629
        %v5538 = vunpack.c.h.b16 %v4629
        %v5539 = vpack.c.b16 %v5499, %v5537
        %v5540 = vpack.c.b16 %v5500, %v5538
        %v5541 = vrot.slane %v5539, 1
        %v5542 = vrot.slane %v5508, 1
        %v5543 = vsel %vm1310, %v5541, %v5542
        %v5544 = vrot.slane %v5540, 1
        %v5545 = vrot.slane %v5509, 1
        %v5546 = vsel %vm1310, %v5544, %v5545
        %v5551 = vunpack.c.l.b16 %v4593
        %v5552 = vunpack.c.h.b16 %v4593
        %v5553 = vunpack.c.l.b16 %v4594
        %v5554 = vunpack.c.h.b16 %v4594
        %v5555 = vpack.c.b16 %v5553, %v5551
        %v5556 = vpack.c.b16 %v5554, %v5552
        %v5560 = vunpack.c.l.b16 %v4612
        %v5561 = vunpack.c.h.b16 %v4612
        %v5562 = vpack.c.b16 %v5560, %v5560
        %v5563 = vpack.c.b16 %v5561, %v5561
        %v5565 = vshrl.u32 %v5555, 16
        %v5567 = vshll.u32 %v5555, 16
        %v5569 = vrot.slane %v5567, 1
        %v5570 = vor.u32 %v5565, %v5569
        %v5572 = vshll.u32 %v5562, 16
        %v5574 = vrot.slane %v5572, 1
        %v5575 = vsel %vm1053, %v5570, %v5574
        %v5577 = vshrl.u32 %v5556, 16
        %v5579 = vshll.u32 %v5556, 16
        %v5581 = vrot.slane %v5579, 1
        %v5582 = vor.u32 %v5577, %v5581
        %v5584 = vshll.u32 %v5563, 16
        %v5586 = vrot.slane %v5584, 1
        %v5587 = vsel %vm1053, %v5582, %v5586
        %v5591 = vunpack.c.l.b16 %v4630
        %v5592 = vunpack.c.h.b16 %v4630
        %v5593 = vpack.c.b16 %v5553, %v5591
        %v5594 = vpack.c.b16 %v5554, %v5592
        %v5595 = vrot.slane %v5593, 1
        %v5596 = vrot.slane %v5562, 1
        %v5597 = vsel %vm1310, %v5595, %v5596
        %v5598 = vrot.slane %v5594, 1
        %v5599 = vrot.slane %v5563, 1
        %v5600 = vsel %vm1310, %v5598, %v5599
        %v5603 = vld [vmem:[%s3] sm:$0xf]
        %v5604 = vld [vmem:[%s3 + $0x4] sm:$0xf]
        %v5605 = vld [vmem:[%s3 + $0x8] sm:$0xf]
        %v5606 = vld [vmem:[%s3 + $0xc] sm:$0xf]
        %v5607 = vld [vmem:[%s3 + $0x10] sm:$0xf]
        %v5608 = vld [vmem:[%s3 + $0x14] sm:$0xf]
        %v5609 = vld [vmem:[%s3 + $0x18] sm:$0xf]
        %v5610 = vld [vmem:[%s3 + $0x1c] sm:$0xf]
        %v5611 = vld [vmem:[%s3 + $0x20] sm:$0xf]
        %v5612 = vld [vmem:[%s3 + $0x24] sm:$0xf]
        %v5613 = vld [vmem:[%s3 + $0x28] sm:$0xf]
        %v5614 = vld [vmem:[%s3 + $0x2c] sm:$0xf]
        %v5615 = vld [vmem:[%s3 + $0x30] sm:$0xf]
        %v5616 = vld [vmem:[%s3 + $0x34] sm:$0xf]
        %v5617 = vld [vmem:[%s3 + $0x38] sm:$0xf]
        %v5618 = vld [vmem:[%s3 + $0x3c] sm:$0xf]
        %v5619 = vld [vmem:[%s3 + $0x40] sm:$0xf]
        %v5620 = vld [vmem:[%s3 + $0x44] sm:$0xf]
        %v5621 = vld [vmem:[%s3 + $0x48] sm:$0xf]
        %v5622 = vld [vmem:[%s3 + $0x4c] sm:$0xf]
        %v5623 = vld [vmem:[%s3 + $0x50] sm:$0xf]
        %v5624 = vld [vmem:[%s3 + $0x54] sm:$0xf]
        %v5625 = vld [vmem:[%s3 + $0x58] sm:$0xf]
        %v5626 = vld [vmem:[%s3 + $0x5c] sm:$0xf]
        %v5627 = vld [vmem:[%s3 + $0x60] sm:$0xf]
        %v5628 = vld [vmem:[%s3 + $0x64] sm:$0xf]
        %v5629 = vld [vmem:[%s3 + $0x68] sm:$0xf]
        %v5630 = vld [vmem:[%s3 + $0x6c] sm:$0xf]
        %v5631 = vld [vmem:[%s3 + $0x70] sm:$0xf]
        %v5632 = vld [vmem:[%s3 + $0x74] sm:$0xf]
        %v5633 = vld [vmem:[%s3 + $0x78] sm:$0xf]
        %v5634 = vld [vmem:[%s3 + $0x7c] sm:$0xf]
        %v5635 = vld [vmem:[%s3 + $0x80] sm:$0xf]
        %v5636 = vld [vmem:[%s3 + $0x84] sm:$0xf]
        %v5637 = vld [vmem:[%s3 + $0x88] sm:$0xf]
        %v5638 = vld [vmem:[%s3 + $0x8c] sm:$0xf]
        %v5639 = vld [vmem:[%s3 + $0x90] sm:$0xf]
        %v5640 = vld [vmem:[%s3 + $0x94] sm:$0xf]
        %v5641 = vld [vmem:[%s3 + $0x98] sm:$0xf]
        %v5642 = vld [vmem:[%s3 + $0x9c] sm:$0xf]
        %v5643 = vld [vmem:[%s3 + $0xa0] sm:$0xf]
        %v5644 = vld [vmem:[%s3 + $0xa4] sm:$0xf]
        %v5645 = vld [vmem:[%s3 + $0xa8] sm:$0xf]
        %v5646 = vld [vmem:[%s3 + $0xac] sm:$0xf]
        %v5647 = vld [vmem:[%s3 + $0xb0] sm:$0xf]
        %v5648 = vld [vmem:[%s3 + $0xb4] sm:$0xf]
        %v5649 = vld [vmem:[%s3 + $0xb8] sm:$0xf]
        %v5650 = vld [vmem:[%s3 + $0xbc] sm:$0xf]
        %v5651 = vld [vmem:[%s3 + $0xc0] sm:$0xf]
        %v5652 = vld [vmem:[%s3 + $0xc4] sm:$0xf]
        %v5653 = vld [vmem:[%s3 + $0xc8] sm:$0xf]
        %v5654 = vld [vmem:[%s3 + $0xcc] sm:$0xf]
        %v5655 = vld [vmem:[%s3 + $0xd0] sm:$0xf]
        %v5656 = vld [vmem:[%s3 + $0xd4] sm:$0xf]
        %v5657 = vld [vmem:[%s3 + $0xd8] sm:$0xf]
        %v5658 = vld [vmem:[%s3 + $0xdc] sm:$0xf]
        %v5659 = vld [vmem:[%s3 + $0xe0] sm:$0xf]
        %v5660 = vld [vmem:[%s3 + $0xe4] sm:$0xf]
        %v5661 = vld [vmem:[%s3 + $0xe8] sm:$0xf]
        %v5662 = vld [vmem:[%s3 + $0xec] sm:$0xf]
        %v5663 = vld [vmem:[%s3 + $0xf0] sm:$0xf]
        %v5664 = vld [vmem:[%s3 + $0xf4] sm:$0xf]
        %v5665 = vld [vmem:[%s3 + $0xf8] sm:$0xf]
        %v5666 = vld [vmem:[%s3 + $0xfc] sm:$0xf]
        %v5667 = vld [vmem:[%s3 + $0x100] sm:$0xf]
        %v5668 = vld [vmem:[%s3 + $0x104] sm:$0xf]
        %v5669 = vld [vmem:[%s3 + $0x108] sm:$0xf]
        %v5670 = vld [vmem:[%s3 + $0x10c] sm:$0xf]
        %v5671 = vld [vmem:[%s3 + $0x110] sm:$0xf]
        %v5672 = vld [vmem:[%s3 + $0x114] sm:$0xf]
        %v5673 = vld [vmem:[%s3 + $0x118] sm:$0xf]
        %v5674 = vld [vmem:[%s3 + $0x11c] sm:$0xf]
        %v5675 = vld [vmem:[%s3 + $0x120] sm:$0xf]
        %v5676 = vld [vmem:[%s3 + $0x124] sm:$0xf]
        %v5677 = vld [vmem:[%s3 + $0x128] sm:$0xf]
        %v5678 = vld [vmem:[%s3 + $0x12c] sm:$0xf]
        %v5679 = vld [vmem:[%s3 + $0x130] sm:$0xf]
        %v5680 = vld [vmem:[%s3 + $0x134] sm:$0xf]
        %v5681 = vld [vmem:[%s3 + $0x138] sm:$0xf]
        %v5682 = vld [vmem:[%s3 + $0x13c] sm:$0xf]
        %v5683 = vld [vmem:[%s3 + $0x140] sm:$0xf]
        %v5684 = vld [vmem:[%s3 + $0x144] sm:$0xf]
        %v5685 = vld [vmem:[%s3 + $0x148] sm:$0xf]
        %v5686 = vld [vmem:[%s3 + $0x14c] sm:$0xf]
        %v5687 = vld [vmem:[%s3 + $0x150] sm:$0xf]
        %v5688 = vld [vmem:[%s3 + $0x154] sm:$0xf]
        %v5689 = vld [vmem:[%s3 + $0x158] sm:$0xf]
        %v5690 = vld [vmem:[%s3 + $0x15c] sm:$0xf]
        %v5691 = vld [vmem:[%s3 + $0x160] sm:$0xf]
        %v5692 = vld [vmem:[%s3 + $0x164] sm:$0xf]
        %v5693 = vld [vmem:[%s3 + $0x168] sm:$0xf]
        %v5694 = vld [vmem:[%s3 + $0x16c] sm:$0xf]
        %v5695 = vld [vmem:[%s3 + $0x170] sm:$0xf]
        %v5696 = vld [vmem:[%s3 + $0x174] sm:$0xf]
        %v5697 = vld [vmem:[%s3 + $0x178] sm:$0xf]
        %v5698 = vld [vmem:[%s3 + $0x17c] sm:$0xf]
        %v5699 = vld [vmem:[%s3 + $0x180] sm:$0xf]
        %v5700 = vld [vmem:[%s3 + $0x184] sm:$0xf]
        %v5701 = vld [vmem:[%s3 + $0x188] sm:$0xf]
        %v5702 = vld [vmem:[%s3 + $0x18c] sm:$0xf]
        %v5703 = vld [vmem:[%s3 + $0x190] sm:$0xf]
        %v5704 = vld [vmem:[%s3 + $0x194] sm:$0xf]
        %v5705 = vld [vmem:[%s3 + $0x198] sm:$0xf]
        %v5706 = vld [vmem:[%s3 + $0x19c] sm:$0xf]
        %v5707 = vld [vmem:[%s3 + $0x1a0] sm:$0xf]
        %v5708 = vld [vmem:[%s3 + $0x1a4] sm:$0xf]
        %v5709 = vld [vmem:[%s3 + $0x1a8] sm:$0xf]
        %v5710 = vld [vmem:[%s3 + $0x1ac] sm:$0xf]
        %v5711 = vld [vmem:[%s3 + $0x1b0] sm:$0xf]
        %v5712 = vld [vmem:[%s3 + $0x1b4] sm:$0xf]
        %v5713 = vld [vmem:[%s3 + $0x1b8] sm:$0xf]
        %v5714 = vld [vmem:[%s3 + $0x1bc] sm:$0xf]
        %v5715 = vld [vmem:[%s3 + $0x1c0] sm:$0xf]
        %v5716 = vld [vmem:[%s3 + $0x1c4] sm:$0xf]
        %v5717 = vld [vmem:[%s3 + $0x1c8] sm:$0xf]
        %v5718 = vld [vmem:[%s3 + $0x1cc] sm:$0xf]
        %v5719 = vld [vmem:[%s3 + $0x1d0] sm:$0xf]
        %v5720 = vld [vmem:[%s3 + $0x1d4] sm:$0xf]
        %v5721 = vld [vmem:[%s3 + $0x1d8] sm:$0xf]
        %v5722 = vld [vmem:[%s3 + $0x1dc] sm:$0xf]
        %v5723 = vld [vmem:[%s3 + $0x1e0] sm:$0xf]
        %v5724 = vld [vmem:[%s3 + $0x1e4] sm:$0xf]
        %v5725 = vld [vmem:[%s3 + $0x1e8] sm:$0xf]
        %v5726 = vld [vmem:[%s3 + $0x1ec] sm:$0xf]
        %v5727 = vld [vmem:[%s3 + $0x1f0] sm:$0xf]
        %v5728 = vld [vmem:[%s3 + $0x1f4] sm:$0xf]
        %v5729 = vld [vmem:[%s3 + $0x1f8] sm:$0xf]
        %v5730 = vld [vmem:[%s3 + $0x1fc] sm:$0xf]
        %v5731 = vld [vmem:[%s3 + $0x200] sm:$0xf]
        %v5732 = vld [vmem:[%s3 + $0x204] sm:$0xf]
        %v5733 = vld [vmem:[%s3 + $0x208] sm:$0xf]
        %v5734 = vld [vmem:[%s3 + $0x20c] sm:$0xf]
        %v5735 = vld [vmem:[%s3 + $0x210] sm:$0xf]
        %v5736 = vld [vmem:[%s3 + $0x214] sm:$0xf]
        %v5737 = vld [vmem:[%s3 + $0x218] sm:$0xf]
        %v5738 = vld [vmem:[%s3 + $0x21c] sm:$0xf]
        %v5739 = vld [vmem:[%s3 + $0x220] sm:$0xf]
        %v5740 = vld [vmem:[%s3 + $0x224] sm:$0xf]
        %v5741 = vld [vmem:[%s3 + $0x228] sm:$0xf]
        %v5742 = vld [vmem:[%s3 + $0x22c] sm:$0xf]
        %v5743 = vld [vmem:[%s3 + $0x230] sm:$0xf]
        %v5744 = vld [vmem:[%s3 + $0x234] sm:$0xf]
        %v5745 = vld [vmem:[%s3 + $0x238] sm:$0xf]
        %v5746 = vld [vmem:[%s3 + $0x23c] sm:$0xf]
        %v5747 = vld [vmem:[%s3 + $0x240] sm:$0xf]
        %v5748 = vld [vmem:[%s3 + $0x244] sm:$0xf]
        %v5749 = vld [vmem:[%s3 + $0x248] sm:$0xf]
        %v5750 = vld [vmem:[%s3 + $0x24c] sm:$0xf]
        %v5751 = vld [vmem:[%s3 + $0x250] sm:$0xf]
        %v5752 = vld [vmem:[%s3 + $0x254] sm:$0xf]
        %v5753 = vld [vmem:[%s3 + $0x258] sm:$0xf]
        %v5754 = vld [vmem:[%s3 + $0x25c] sm:$0xf]
        %v5755 = vld [vmem:[%s3 + $0x260] sm:$0xf]
        %v5756 = vld [vmem:[%s3 + $0x264] sm:$0xf]
        %v5757 = vld [vmem:[%s3 + $0x268] sm:$0xf]
        %v5758 = vld [vmem:[%s3 + $0x26c] sm:$0xf]
        %v5759 = vld [vmem:[%s3 + $0x270] sm:$0xf]
        %v5760 = vld [vmem:[%s3 + $0x274] sm:$0xf]
        %v5761 = vld [vmem:[%s3 + $0x278] sm:$0xf]
        %v5762 = vld [vmem:[%s3 + $0x27c] sm:$0xf]
        %v5763 = vld [vmem:[%s3 + $0x280] sm:$0xf]
        %v5764 = vld [vmem:[%s3 + $0x284] sm:$0xf]
        %v5765 = vld [vmem:[%s3 + $0x288] sm:$0xf]
        %v5766 = vld [vmem:[%s3 + $0x28c] sm:$0xf]
        %v5767 = vld [vmem:[%s3 + $0x290] sm:$0xf]
        %v5768 = vld [vmem:[%s3 + $0x294] sm:$0xf]
        %v5769 = vld [vmem:[%s3 + $0x298] sm:$0xf]
        %v5770 = vld [vmem:[%s3 + $0x29c] sm:$0xf]
        %v5771 = vld [vmem:[%s3 + $0x2a0] sm:$0xf]
        %v5772 = vld [vmem:[%s3 + $0x2a4] sm:$0xf]
        %v5773 = vld [vmem:[%s3 + $0x2a8] sm:$0xf]
        %v5774 = vld [vmem:[%s3 + $0x2ac] sm:$0xf]
        %v5775 = vld [vmem:[%s3 + $0x2b0] sm:$0xf]
        %v5776 = vld [vmem:[%s3 + $0x2b4] sm:$0xf]
        %v5777 = vld [vmem:[%s3 + $0x2b8] sm:$0xf]
        %v5778 = vld [vmem:[%s3 + $0x2bc] sm:$0xf]
        %v5779 = vld [vmem:[%s3 + $0x2c0] sm:$0xf]
        %v5780 = vld [vmem:[%s3 + $0x2c4] sm:$0xf]
        %v5781 = vld [vmem:[%s3 + $0x2c8] sm:$0xf]
        %v5782 = vld [vmem:[%s3 + $0x2cc] sm:$0xf]
        %v5783 = vld [vmem:[%s3 + $0x2d0] sm:$0xf]
        %v5784 = vld [vmem:[%s3 + $0x2d4] sm:$0xf]
        %v5785 = vld [vmem:[%s3 + $0x2d8] sm:$0xf]
        %v5786 = vld [vmem:[%s3 + $0x2dc] sm:$0xf]
        %v5787 = vld [vmem:[%s3 + $0x2e0] sm:$0xf]
        %v5788 = vld [vmem:[%s3 + $0x2e4] sm:$0xf]
        %v5789 = vld [vmem:[%s3 + $0x2e8] sm:$0xf]
        %v5790 = vld [vmem:[%s3 + $0x2ec] sm:$0xf]
        %v5791 = vld [vmem:[%s3 + $0x2f0] sm:$0xf]
        %v5792 = vld [vmem:[%s3 + $0x2f4] sm:$0xf]
        %v5793 = vld [vmem:[%s3 + $0x2f8] sm:$0xf]
        %v5794 = vld [vmem:[%s3 + $0x2fc] sm:$0xf]
        %v5795 = vld [vmem:[%s3 + $0x300] sm:$0xf]
        %v5796 = vld [vmem:[%s3 + $0x304] sm:$0xf]
        %v5797 = vld [vmem:[%s3 + $0x308] sm:$0xf]
        %v5798 = vld [vmem:[%s3 + $0x30c] sm:$0xf]
        %v5799 = vld [vmem:[%s3 + $0x310] sm:$0xf]
        %v5800 = vld [vmem:[%s3 + $0x314] sm:$0xf]
        %v5801 = vld [vmem:[%s3 + $0x318] sm:$0xf]
        %v5802 = vld [vmem:[%s3 + $0x31c] sm:$0xf]
        %v5803 = vld [vmem:[%s3 + $0x320] sm:$0xf]
        %v5804 = vld [vmem:[%s3 + $0x324] sm:$0xf]
        %v5805 = vld [vmem:[%s3 + $0x328] sm:$0xf]
        %v5806 = vld [vmem:[%s3 + $0x32c] sm:$0xf]
        %v5807 = vld [vmem:[%s3 + $0x330] sm:$0xf]
        %v5808 = vld [vmem:[%s3 + $0x334] sm:$0xf]
        %v5809 = vld [vmem:[%s3 + $0x338] sm:$0xf]
        %v5810 = vld [vmem:[%s3 + $0x33c] sm:$0xf]
        %v5811 = vld [vmem:[%s3 + $0x340] sm:$0xf]
        %v5812 = vld [vmem:[%s3 + $0x344] sm:$0xf]
        %v5813 = vld [vmem:[%s3 + $0x348] sm:$0xf]
        %v5814 = vld [vmem:[%s3 + $0x34c] sm:$0xf]
        %v5815 = vld [vmem:[%s3 + $0x350] sm:$0xf]
        %v5816 = vld [vmem:[%s3 + $0x354] sm:$0xf]
        %v5817 = vld [vmem:[%s3 + $0x358] sm:$0xf]
        %v5818 = vld [vmem:[%s3 + $0x35c] sm:$0xf]
        %v5819 = vld [vmem:[%s3 + $0x360] sm:$0xf]
        %v5820 = vld [vmem:[%s3 + $0x364] sm:$0xf]
        %v5821 = vld [vmem:[%s3 + $0x368] sm:$0xf]
        %v5822 = vld [vmem:[%s3 + $0x36c] sm:$0xf]
        %v5823 = vld [vmem:[%s3 + $0x370] sm:$0xf]
        %v5824 = vld [vmem:[%s3 + $0x374] sm:$0xf]
        %v5825 = vld [vmem:[%s3 + $0x378] sm:$0xf]
        %v5826 = vld [vmem:[%s3 + $0x37c] sm:$0xf]
        %v5827 = vld [vmem:[%s3 + $0x380] sm:$0xf]
        %v5828 = vld [vmem:[%s3 + $0x384] sm:$0xf]
        %v5829 = vld [vmem:[%s3 + $0x388] sm:$0xf]
        %v5830 = vld [vmem:[%s3 + $0x38c] sm:$0xf]
        %v5831 = vld [vmem:[%s3 + $0x390] sm:$0xf]
        %v5832 = vld [vmem:[%s3 + $0x394] sm:$0xf]
        %v5833 = vld [vmem:[%s3 + $0x398] sm:$0xf]
        %v5834 = vld [vmem:[%s3 + $0x39c] sm:$0xf]
        %v5835 = vld [vmem:[%s3 + $0x3a0] sm:$0xf]
        %v5836 = vld [vmem:[%s3 + $0x3a4] sm:$0xf]
        %v5837 = vld [vmem:[%s3 + $0x3a8] sm:$0xf]
        %v5838 = vld [vmem:[%s3 + $0x3ac] sm:$0xf]
        %v5839 = vld [vmem:[%s3 + $0x3b0] sm:$0xf]
        %v5840 = vld [vmem:[%s3 + $0x3b4] sm:$0xf]
        %v5841 = vld [vmem:[%s3 + $0x3b8] sm:$0xf]
        %v5842 = vld [vmem:[%s3 + $0x3bc] sm:$0xf]
        %v5843 = vld [vmem:[%s3 + $0x3c0] sm:$0xf]
        %v5844 = vld [vmem:[%s3 + $0x3c4] sm:$0xf]
        %v5845 = vld [vmem:[%s3 + $0x3c8] sm:$0xf]
        %v5846 = vld [vmem:[%s3 + $0x3cc] sm:$0xf]
        %v5847 = vld [vmem:[%s3 + $0x3d0] sm:$0xf]
        %v5848 = vld [vmem:[%s3 + $0x3d4] sm:$0xf]
        %v5849 = vld [vmem:[%s3 + $0x3d8] sm:$0xf]
        %v5850 = vld [vmem:[%s3 + $0x3dc] sm:$0xf]
        %v5851 = vld [vmem:[%s3 + $0x3e0] sm:$0xf]
        %v5852 = vld [vmem:[%s3 + $0x3e4] sm:$0xf]
        %v5853 = vld [vmem:[%s3 + $0x3e8] sm:$0xf]
        %v5854 = vld [vmem:[%s3 + $0x3ec] sm:$0xf]
        %v5855 = vld [vmem:[%s3 + $0x3f0] sm:$0xf]
        %v5856 = vld [vmem:[%s3 + $0x3f4] sm:$0xf]
        %v5857 = vld [vmem:[%s3 + $0x3f8] sm:$0xf]
        %v5858 = vld [vmem:[%s3 + $0x3fc] sm:$0xf]
        %v5859 = vld [vmem:[%s3 + $0x400] sm:$0xf]
        %v5860 = vld [vmem:[%s3 + $0x404] sm:$0xf]
        %v5861 = vld [vmem:[%s3 + $0x408] sm:$0xf]
        %v5862 = vld [vmem:[%s3 + $0x40c] sm:$0xf]
        %v5863 = vld [vmem:[%s3 + $0x410] sm:$0xf]
        %v5864 = vld [vmem:[%s3 + $0x414] sm:$0xf]
        %v5865 = vld [vmem:[%s3 + $0x418] sm:$0xf]
        %v5866 = vld [vmem:[%s3 + $0x41c] sm:$0xf]
        %v5867 = vld [vmem:[%s3 + $0x420] sm:$0xf]
        %v5868 = vld [vmem:[%s3 + $0x424] sm:$0xf]
        %v5869 = vld [vmem:[%s3 + $0x428] sm:$0xf]
        %v5870 = vld [vmem:[%s3 + $0x42c] sm:$0xf]
        %v5871 = vld [vmem:[%s3 + $0x430] sm:$0xf]
        %v5872 = vld [vmem:[%s3 + $0x434] sm:$0xf]
        %v5873 = vld [vmem:[%s3 + $0x438] sm:$0xf]
        %v5874 = vld [vmem:[%s3 + $0x43c] sm:$0xf]
        %v5875 = vld [vmem:[%s3 + $0x440] sm:$0xf]
        %v5876 = vld [vmem:[%s3 + $0x444] sm:$0xf]
        %v5877 = vld [vmem:[%s3 + $0x448] sm:$0xf]
        %v5878 = vld [vmem:[%s3 + $0x44c] sm:$0xf]
        %v5879 = vld [vmem:[%s3 + $0x450] sm:$0xf]
        %v5880 = vld [vmem:[%s3 + $0x454] sm:$0xf]
        %v5881 = vld [vmem:[%s3 + $0x458] sm:$0xf]
        %v5882 = vld [vmem:[%s3 + $0x45c] sm:$0xf]
        %v5883 = vld [vmem:[%s3 + $0x460] sm:$0xf]
        %v5884 = vld [vmem:[%s3 + $0x464] sm:$0xf]
        %v5885 = vld [vmem:[%s3 + $0x468] sm:$0xf]
        %v5886 = vld [vmem:[%s3 + $0x46c] sm:$0xf]
        %v5887 = vld [vmem:[%s3 + $0x470] sm:$0xf]
        %v5888 = vld [vmem:[%s3 + $0x474] sm:$0xf]
        %v5889 = vld [vmem:[%s3 + $0x478] sm:$0xf]
        %v5890 = vld [vmem:[%s3 + $0x47c] sm:$0xf]
        %v5891 = vld [vmem:[%s4] sm:$0x1]
        %v5893 = vperm.slane %v5891, 0
        %v6183 = vunpack.c.l.b16 %v5603
        %v6184 = vunpack.c.l.b16 %v5604
        %v6185 = vunpack.c.l.b16 %v5605
        %v6186 = vunpack.c.l.b16 %v5606
        %v6187 = vunpack.c.l.b16 %v5607
        %v6188 = vunpack.c.l.b16 %v5608
        %v6189 = vunpack.c.l.b16 %v5609
        %v6190 = vunpack.c.l.b16 %v5610
        %v6191 = vunpack.c.l.b16 %v5611
        %v6192 = vunpack.c.l.b16 %v5612
        %v6193 = vunpack.c.l.b16 %v5613
        %v6194 = vunpack.c.l.b16 %v5614
        %v6195 = vunpack.c.l.b16 %v5615
        %v6196 = vunpack.c.l.b16 %v5616
        %v6197 = vunpack.c.l.b16 %v5617
        %v6198 = vunpack.c.l.b16 %v5618
        %v6199 = vunpack.c.l.b16 %v5619
        %v6200 = vunpack.c.l.b16 %v5620
        %v6201 = vunpack.c.l.b16 %v5621
        %v6202 = vunpack.c.l.b16 %v5622
        %v6203 = vunpack.c.l.b16 %v5623
        %v6204 = vunpack.c.l.b16 %v5624
        %v6205 = vunpack.c.l.b16 %v5625
        %v6206 = vunpack.c.l.b16 %v5626
        %v6207 = vunpack.c.l.b16 %v5627
        %v6208 = vunpack.c.l.b16 %v5628
        %v6209 = vunpack.c.l.b16 %v5629
        %v6210 = vunpack.c.l.b16 %v5630
        %v6211 = vunpack.c.l.b16 %v5631
        %v6212 = vunpack.c.l.b16 %v5632
        %v6213 = vunpack.c.l.b16 %v5633
        %v6214 = vunpack.c.l.b16 %v5634
        %v6215 = vunpack.c.l.b16 %v5635
        %v6216 = vunpack.c.l.b16 %v5636
        %v6217 = vunpack.c.l.b16 %v5637
        %v6218 = vunpack.c.l.b16 %v5638
        %v6219 = vunpack.c.l.b16 %v5639
        %v6220 = vunpack.c.l.b16 %v5640
        %v6221 = vunpack.c.l.b16 %v5641
        %v6222 = vunpack.c.l.b16 %v5642
        %v6223 = vunpack.c.l.b16 %v5643
        %v6224 = vunpack.c.l.b16 %v5644
        %v6225 = vunpack.c.l.b16 %v5645
        %v6226 = vunpack.c.l.b16 %v5646
        %v6227 = vunpack.c.l.b16 %v5647
        %v6228 = vunpack.c.l.b16 %v5648
        %v6229 = vunpack.c.l.b16 %v5649
        %v6230 = vunpack.c.l.b16 %v5650
        %v6231 = vunpack.c.l.b16 %v5651
        %v6232 = vunpack.c.l.b16 %v5652
        %v6233 = vunpack.c.l.b16 %v5653
        %v6234 = vunpack.c.l.b16 %v5654
        %v6235 = vunpack.c.l.b16 %v5655
        %v6236 = vunpack.c.l.b16 %v5656
        %v6237 = vunpack.c.l.b16 %v5657
        %v6238 = vunpack.c.l.b16 %v5658
        %v6239 = vunpack.c.l.b16 %v5659
        %v6240 = vunpack.c.l.b16 %v5660
        %v6241 = vunpack.c.l.b16 %v5661
        %v6242 = vunpack.c.l.b16 %v5662
        %v6243 = vunpack.c.l.b16 %v5663
        %v6244 = vunpack.c.l.b16 %v5664
        %v6245 = vunpack.c.l.b16 %v5665
        %v6246 = vunpack.c.l.b16 %v5666
        %v6247 = vunpack.c.l.b16 %v5667
        %v6248 = vunpack.c.l.b16 %v5668
        %v6249 = vunpack.c.l.b16 %v5669
        %v6250 = vunpack.c.l.b16 %v5670
        %v6251 = vunpack.c.l.b16 %v5671
        %v6252 = vunpack.c.l.b16 %v5672
        %v6253 = vunpack.c.l.b16 %v5673
        %v6254 = vunpack.c.l.b16 %v5674
        %v6255 = vunpack.c.l.b16 %v5675
        %v6256 = vunpack.c.l.b16 %v5676
        %v6257 = vunpack.c.l.b16 %v5677
        %v6258 = vunpack.c.l.b16 %v5678
        %v6259 = vunpack.c.l.b16 %v5679
        %v6260 = vunpack.c.l.b16 %v5680
        %v6261 = vunpack.c.l.b16 %v5681
        %v6262 = vunpack.c.l.b16 %v5682
        %v6263 = vunpack.c.l.b16 %v5683
        %v6264 = vunpack.c.l.b16 %v5684
        %v6265 = vunpack.c.l.b16 %v5685
        %v6266 = vunpack.c.l.b16 %v5686
        %v6267 = vunpack.c.l.b16 %v5687
        %v6268 = vunpack.c.l.b16 %v5688
        %v6269 = vunpack.c.l.b16 %v5689
        %v6270 = vunpack.c.l.b16 %v5690
        %v6271 = vunpack.c.l.b16 %v5691
        %v6272 = vunpack.c.l.b16 %v5692
        %v6273 = vunpack.c.l.b16 %v5693
        %v6274 = vunpack.c.l.b16 %v5694
        %v6275 = vunpack.c.l.b16 %v5695
        %v6276 = vunpack.c.l.b16 %v5696
        %v6277 = vunpack.c.l.b16 %v5697
        %v6278 = vunpack.c.l.b16 %v5698
        %v6279 = vunpack.c.l.b16 %v5699
        %v6280 = vunpack.c.l.b16 %v5700
        %v6281 = vunpack.c.l.b16 %v5701
        %v6282 = vunpack.c.l.b16 %v5702
        %v6283 = vunpack.c.l.b16 %v5703
        %v6284 = vunpack.c.l.b16 %v5704
        %v6285 = vunpack.c.l.b16 %v5705
        %v6286 = vunpack.c.l.b16 %v5706
        %v6287 = vunpack.c.l.b16 %v5707
        %v6288 = vunpack.c.l.b16 %v5708
        %v6289 = vunpack.c.l.b16 %v5709
        %v6290 = vunpack.c.l.b16 %v5710
        %v6291 = vunpack.c.l.b16 %v5711
        %v6292 = vunpack.c.l.b16 %v5712
        %v6293 = vunpack.c.l.b16 %v5713
        %v6294 = vunpack.c.l.b16 %v5714
        %v6295 = vunpack.c.l.b16 %v5715
        %v6296 = vunpack.c.l.b16 %v5716
        %v6297 = vunpack.c.l.b16 %v5717
        %v6298 = vunpack.c.l.b16 %v5718
        %v6299 = vunpack.c.l.b16 %v5719
        %v6300 = vunpack.c.l.b16 %v5720
        %v6301 = vunpack.c.l.b16 %v5721
        %v6302 = vunpack.c.l.b16 %v5722
        %v6303 = vunpack.c.l.b16 %v5723
        %v6304 = vunpack.c.l.b16 %v5724
        %v6305 = vunpack.c.l.b16 %v5725
        %v6306 = vunpack.c.l.b16 %v5726
        %v6307 = vunpack.c.l.b16 %v5727
        %v6308 = vunpack.c.l.b16 %v5728
        %v6309 = vunpack.c.l.b16 %v5729
        %v6310 = vunpack.c.l.b16 %v5730
        %v6311 = vunpack.c.l.b16 %v5731
        %v6312 = vunpack.c.l.b16 %v5732
        %v6313 = vunpack.c.l.b16 %v5733
        %v6314 = vunpack.c.l.b16 %v5734
        %v6315 = vunpack.c.l.b16 %v5735
        %v6316 = vunpack.c.l.b16 %v5736
        %v6317 = vunpack.c.l.b16 %v5737
        %v6318 = vunpack.c.l.b16 %v5738
        %v6319 = vunpack.c.l.b16 %v5739
        %v6320 = vunpack.c.l.b16 %v5740
        %v6321 = vunpack.c.l.b16 %v5741
        %v6322 = vunpack.c.l.b16 %v5742
        %v6323 = vunpack.c.l.b16 %v5743
        %v6324 = vunpack.c.l.b16 %v5744
        %v6325 = vunpack.c.l.b16 %v5745
        %v6326 = vunpack.c.l.b16 %v5746
        %v6327 = vunpack.c.l.b16 %v5747
        %v6328 = vunpack.c.l.b16 %v5748
        %v6329 = vunpack.c.l.b16 %v5749
        %v6330 = vunpack.c.l.b16 %v5750
        %v6331 = vunpack.c.l.b16 %v5751
        %v6332 = vunpack.c.l.b16 %v5752
        %v6333 = vunpack.c.l.b16 %v5753
        %v6334 = vunpack.c.l.b16 %v5754
        %v6335 = vunpack.c.l.b16 %v5755
        %v6336 = vunpack.c.l.b16 %v5756
        %v6337 = vunpack.c.l.b16 %v5757
        %v6338 = vunpack.c.l.b16 %v5758
        %v6339 = vunpack.c.l.b16 %v5759
        %v6340 = vunpack.c.l.b16 %v5760
        %v6341 = vunpack.c.l.b16 %v5761
        %v6342 = vunpack.c.l.b16 %v5762
        %v6343 = vunpack.c.l.b16 %v5763
        %v6344 = vunpack.c.l.b16 %v5764
        %v6345 = vunpack.c.l.b16 %v5765
        %v6346 = vunpack.c.l.b16 %v5766
        %v6347 = vunpack.c.l.b16 %v5767
        %v6348 = vunpack.c.l.b16 %v5768
        %v6349 = vunpack.c.l.b16 %v5769
        %v6350 = vunpack.c.l.b16 %v5770
        %v6351 = vunpack.c.l.b16 %v5771
        %v6352 = vunpack.c.l.b16 %v5772
        %v6353 = vunpack.c.l.b16 %v5773
        %v6354 = vunpack.c.l.b16 %v5774
        %v6355 = vunpack.c.l.b16 %v5775
        %v6356 = vunpack.c.l.b16 %v5776
        %v6357 = vunpack.c.l.b16 %v5777
        %v6358 = vunpack.c.l.b16 %v5778
        %v6359 = vunpack.c.l.b16 %v5779
        %v6360 = vunpack.c.l.b16 %v5780
        %v6361 = vunpack.c.l.b16 %v5781
        %v6362 = vunpack.c.l.b16 %v5782
        %v6363 = vunpack.c.l.b16 %v5783
        %v6364 = vunpack.c.l.b16 %v5784
        %v6365 = vunpack.c.l.b16 %v5785
        %v6366 = vunpack.c.l.b16 %v5786
        %v6367 = vunpack.c.l.b16 %v5787
        %v6368 = vunpack.c.l.b16 %v5788
        %v6369 = vunpack.c.l.b16 %v5789
        %v6370 = vunpack.c.l.b16 %v5790
        %v6371 = vunpack.c.l.b16 %v5791
        %v6372 = vunpack.c.l.b16 %v5792
        %v6373 = vunpack.c.l.b16 %v5793
        %v6374 = vunpack.c.l.b16 %v5794
        %v6375 = vunpack.c.l.b16 %v5795
        %v6376 = vunpack.c.l.b16 %v5796
        %v6377 = vunpack.c.l.b16 %v5797
        %v6378 = vunpack.c.l.b16 %v5798
        %v6379 = vunpack.c.l.b16 %v5799
        %v6380 = vunpack.c.l.b16 %v5800
        %v6381 = vunpack.c.l.b16 %v5801
        %v6382 = vunpack.c.l.b16 %v5802
        %v6383 = vunpack.c.l.b16 %v5803
        %v6384 = vunpack.c.l.b16 %v5804
        %v6385 = vunpack.c.l.b16 %v5805
        %v6386 = vunpack.c.l.b16 %v5806
        %v6387 = vunpack.c.l.b16 %v5807
        %v6388 = vunpack.c.l.b16 %v5808
        %v6389 = vunpack.c.l.b16 %v5809
        %v6390 = vunpack.c.l.b16 %v5810
        %v6391 = vunpack.c.l.b16 %v5811
        %v6392 = vunpack.c.l.b16 %v5812
        %v6393 = vunpack.c.l.b16 %v5813
        %v6394 = vunpack.c.l.b16 %v5814
        %v6395 = vunpack.c.l.b16 %v5815
        %v6396 = vunpack.c.l.b16 %v5816
        %v6397 = vunpack.c.l.b16 %v5817
        %v6398 = vunpack.c.l.b16 %v5818
        %v6399 = vunpack.c.l.b16 %v5819
        %v6400 = vunpack.c.l.b16 %v5820
        %v6401 = vunpack.c.l.b16 %v5821
        %v6402 = vunpack.c.l.b16 %v5822
        %v6403 = vunpack.c.l.b16 %v5823
        %v6404 = vunpack.c.l.b16 %v5824
        %v6405 = vunpack.c.l.b16 %v5825
        %v6406 = vunpack.c.l.b16 %v5826
        %v6407 = vunpack.c.l.b16 %v5827
        %v6408 = vunpack.c.l.b16 %v5828
        %v6409 = vunpack.c.l.b16 %v5829
        %v6410 = vunpack.c.l.b16 %v5830
        %v6411 = vunpack.c.l.b16 %v5831
        %v6412 = vunpack.c.l.b16 %v5832
        %v6413 = vunpack.c.l.b16 %v5833
        %v6414 = vunpack.c.l.b16 %v5834
        %v6415 = vunpack.c.l.b16 %v5835
        %v6416 = vunpack.c.l.b16 %v5836
        %v6417 = vunpack.c.l.b16 %v5837
        %v6418 = vunpack.c.l.b16 %v5838
        %v6419 = vunpack.c.l.b16 %v5839
        %v6420 = vunpack.c.l.b16 %v5840
        %v6421 = vunpack.c.l.b16 %v5841
        %v6422 = vunpack.c.l.b16 %v5842
        %v6423 = vunpack.c.l.b16 %v5843
        %v6424 = vunpack.c.l.b16 %v5844
        %v6425 = vunpack.c.l.b16 %v5845
        %v6426 = vunpack.c.l.b16 %v5846
        %v6427 = vunpack.c.l.b16 %v5847
        %v6428 = vunpack.c.l.b16 %v5848
        %v6429 = vunpack.c.l.b16 %v5849
        %v6430 = vunpack.c.l.b16 %v5850
        %v6431 = vunpack.c.l.b16 %v5851
        %v6432 = vunpack.c.l.b16 %v5852
        %v6433 = vunpack.c.l.b16 %v5853
        %v6434 = vunpack.c.l.b16 %v5854
        %v6435 = vunpack.c.l.b16 %v5855
        %v6436 = vunpack.c.l.b16 %v5856
        %v6437 = vunpack.c.l.b16 %v5857
        %v6438 = vunpack.c.l.b16 %v5858
        %v6439 = vunpack.c.l.b16 %v5859
        %v6440 = vunpack.c.l.b16 %v5860
        %v6441 = vunpack.c.l.b16 %v5861
        %v6442 = vunpack.c.l.b16 %v5862
        %v6443 = vunpack.c.l.b16 %v5863
        %v6444 = vunpack.c.l.b16 %v5864
        %v6445 = vunpack.c.l.b16 %v5865
        %v6446 = vunpack.c.l.b16 %v5866
        %v6447 = vunpack.c.l.b16 %v5867
        %v6448 = vunpack.c.l.b16 %v5868
        %v6449 = vunpack.c.l.b16 %v5869
        %v6450 = vunpack.c.l.b16 %v5870
        %v6451 = vunpack.c.l.b16 %v5871
        %v6452 = vunpack.c.l.b16 %v5872
        %v6453 = vunpack.c.l.b16 %v5873
        %v6454 = vunpack.c.l.b16 %v5874
        %v6455 = vunpack.c.l.b16 %v5875
        %v6456 = vunpack.c.l.b16 %v5876
        %v6457 = vunpack.c.l.b16 %v5877
        %v6458 = vunpack.c.l.b16 %v5878
        %v6459 = vunpack.c.l.b16 %v5879
        %v6460 = vunpack.c.l.b16 %v5880
        %v6461 = vunpack.c.l.b16 %v5881
        %v6462 = vunpack.c.l.b16 %v5882
        %v6463 = vunpack.c.l.b16 %v5883
        %v6464 = vunpack.c.l.b16 %v5884
        %v6465 = vunpack.c.l.b16 %v5885
        %v6466 = vunpack.c.l.b16 %v5886
        %v6467 = vunpack.c.l.b16 %v5887
        %v6468 = vunpack.c.l.b16 %v5888
        %v6469 = vunpack.c.l.b16 %v5889
        %v6470 = vunpack.c.l.b16 %v5890
        %v6471 = vpack.c.b16 %v6184, %v6183
        %v6472 = vpack.c.b16 %v6186, %v6185
        %v6473 = vpack.c.b16 %v6188, %v6187
        %v6474 = vpack.c.b16 %v6190, %v6189
        %v6475 = vpack.c.b16 %v6192, %v6191
        %v6476 = vpack.c.b16 %v6194, %v6193
        %v6477 = vpack.c.b16 %v6196, %v6195
        %v6478 = vpack.c.b16 %v6198, %v6197
        %v6479 = vpack.c.b16 %v6200, %v6199
        %v6480 = vpack.c.b16 %v6202, %v6201
        %v6481 = vpack.c.b16 %v6204, %v6203
        %v6482 = vpack.c.b16 %v6206, %v6205
        %v6483 = vpack.c.b16 %v6208, %v6207
        %v6484 = vpack.c.b16 %v6210, %v6209
        %v6485 = vpack.c.b16 %v6212, %v6211
        %v6486 = vpack.c.b16 %v6214, %v6213
        %v6487 = vpack.c.b16 %v6216, %v6215
        %v6488 = vpack.c.b16 %v6218, %v6217
        %v6489 = vpack.c.b16 %v6220, %v6219
        %v6490 = vpack.c.b16 %v6222, %v6221
        %v6491 = vpack.c.b16 %v6224, %v6223
        %v6492 = vpack.c.b16 %v6226, %v6225
        %v6493 = vpack.c.b16 %v6228, %v6227
        %v6494 = vpack.c.b16 %v6230, %v6229
        %v6495 = vpack.c.b16 %v6232, %v6231
        %v6496 = vpack.c.b16 %v6234, %v6233
        %v6497 = vpack.c.b16 %v6236, %v6235
        %v6498 = vpack.c.b16 %v6238, %v6237
        %v6499 = vpack.c.b16 %v6240, %v6239
        %v6500 = vpack.c.b16 %v6242, %v6241
        %v6501 = vpack.c.b16 %v6244, %v6243
        %v6502 = vpack.c.b16 %v6246, %v6245
        %v6503 = vpack.c.b16 %v6248, %v6247
        %v6504 = vpack.c.b16 %v6250, %v6249
        %v6505 = vpack.c.b16 %v6252, %v6251
        %v6506 = vpack.c.b16 %v6254, %v6253
        %v6507 = vpack.c.b16 %v6256, %v6255
        %v6508 = vpack.c.b16 %v6258, %v6257
        %v6509 = vpack.c.b16 %v6260, %v6259
        %v6510 = vpack.c.b16 %v6262, %v6261
        %v6511 = vpack.c.b16 %v6264, %v6263
        %v6512 = vpack.c.b16 %v6266, %v6265
        %v6513 = vpack.c.b16 %v6268, %v6267
        %v6514 = vpack.c.b16 %v6270, %v6269
        %v6515 = vpack.c.b16 %v6272, %v6271
        %v6516 = vpack.c.b16 %v6274, %v6273
        %v6517 = vpack.c.b16 %v6276, %v6275
        %v6518 = vpack.c.b16 %v6278, %v6277
        %v6519 = vpack.c.b16 %v6280, %v6279
        %v6520 = vpack.c.b16 %v6282, %v6281
        %v6521 = vpack.c.b16 %v6284, %v6283
        %v6522 = vpack.c.b16 %v6286, %v6285
        %v6523 = vpack.c.b16 %v6288, %v6287
        %v6524 = vpack.c.b16 %v6290, %v6289
        %v6525 = vpack.c.b16 %v6292, %v6291
        %v6526 = vpack.c.b16 %v6294, %v6293
        %v6527 = vpack.c.b16 %v6296, %v6295
        %v6528 = vpack.c.b16 %v6298, %v6297
        %v6529 = vpack.c.b16 %v6300, %v6299
        %v6530 = vpack.c.b16 %v6302, %v6301
        %v6531 = vpack.c.b16 %v6304, %v6303
        %v6532 = vpack.c.b16 %v6306, %v6305
        %v6533 = vpack.c.b16 %v6308, %v6307
        %v6534 = vpack.c.b16 %v6310, %v6309
        %v6535 = vpack.c.b16 %v6312, %v6311
        %v6536 = vpack.c.b16 %v6314, %v6313
        %v6537 = vpack.c.b16 %v6316, %v6315
        %v6538 = vpack.c.b16 %v6318, %v6317
        %v6539 = vpack.c.b16 %v6320, %v6319
        %v6540 = vpack.c.b16 %v6322, %v6321
        %v6541 = vpack.c.b16 %v6324, %v6323
        %v6542 = vpack.c.b16 %v6326, %v6325
        %v6543 = vpack.c.b16 %v6328, %v6327
        %v6544 = vpack.c.b16 %v6330, %v6329
        %v6545 = vpack.c.b16 %v6332, %v6331
        %v6546 = vpack.c.b16 %v6334, %v6333
        %v6547 = vpack.c.b16 %v6336, %v6335
        %v6548 = vpack.c.b16 %v6338, %v6337
        %v6549 = vpack.c.b16 %v6340, %v6339
        %v6550 = vpack.c.b16 %v6342, %v6341
        %v6551 = vpack.c.b16 %v6344, %v6343
        %v6552 = vpack.c.b16 %v6346, %v6345
        %v6553 = vpack.c.b16 %v6348, %v6347
        %v6554 = vpack.c.b16 %v6350, %v6349
        %v6555 = vpack.c.b16 %v6352, %v6351
        %v6556 = vpack.c.b16 %v6354, %v6353
        %v6557 = vpack.c.b16 %v6356, %v6355
        %v6558 = vpack.c.b16 %v6358, %v6357
        %v6559 = vpack.c.b16 %v6360, %v6359
        %v6560 = vpack.c.b16 %v6362, %v6361
        %v6561 = vpack.c.b16 %v6364, %v6363
        %v6562 = vpack.c.b16 %v6366, %v6365
        %v6563 = vpack.c.b16 %v6368, %v6367
        %v6564 = vpack.c.b16 %v6370, %v6369
        %v6565 = vpack.c.b16 %v6372, %v6371
        %v6566 = vpack.c.b16 %v6374, %v6373
        %v6567 = vpack.c.b16 %v6376, %v6375
        %v6568 = vpack.c.b16 %v6378, %v6377
        %v6569 = vpack.c.b16 %v6380, %v6379
        %v6570 = vpack.c.b16 %v6382, %v6381
        %v6571 = vpack.c.b16 %v6384, %v6383
        %v6572 = vpack.c.b16 %v6386, %v6385
        %v6573 = vpack.c.b16 %v6388, %v6387
        %v6574 = vpack.c.b16 %v6390, %v6389
        %v6575 = vpack.c.b16 %v6392, %v6391
        %v6576 = vpack.c.b16 %v6394, %v6393
        %v6577 = vpack.c.b16 %v6396, %v6395
        %v6578 = vpack.c.b16 %v6398, %v6397
        %v6579 = vpack.c.b16 %v6400, %v6399
        %v6580 = vpack.c.b16 %v6402, %v6401
        %v6581 = vpack.c.b16 %v6404, %v6403
        %v6582 = vpack.c.b16 %v6406, %v6405
        %v6583 = vpack.c.b16 %v6408, %v6407
        %v6584 = vpack.c.b16 %v6410, %v6409
        %v6585 = vpack.c.b16 %v6412, %v6411
        %v6586 = vpack.c.b16 %v6414, %v6413
        %v6587 = vpack.c.b16 %v6416, %v6415
        %v6588 = vpack.c.b16 %v6418, %v6417
        %v6589 = vpack.c.b16 %v6420, %v6419
        %v6590 = vpack.c.b16 %v6422, %v6421
        %v6591 = vpack.c.b16 %v6424, %v6423
        %v6592 = vpack.c.b16 %v6426, %v6425
        %v6593 = vpack.c.b16 %v6428, %v6427
        %v6594 = vpack.c.b16 %v6430, %v6429
        %v6595 = vpack.c.b16 %v6432, %v6431
        %v6596 = vpack.c.b16 %v6434, %v6433
        %v6597 = vpack.c.b16 %v6436, %v6435
        %v6598 = vpack.c.b16 %v6438, %v6437
        %v6599 = vpack.c.b16 %v6440, %v6439
        %v6600 = vpack.c.b16 %v6442, %v6441
        %v6601 = vpack.c.b16 %v6444, %v6443
        %v6602 = vpack.c.b16 %v6446, %v6445
        %v6603 = vpack.c.b16 %v6448, %v6447
        %v6604 = vpack.c.b16 %v6450, %v6449
        %v6605 = vpack.c.b16 %v6452, %v6451
        %v6606 = vpack.c.b16 %v6454, %v6453
        %v6607 = vpack.c.b16 %v6456, %v6455
        %v6608 = vpack.c.b16 %v6458, %v6457
        %v6609 = vpack.c.b16 %v6460, %v6459
        %v6610 = vpack.c.b16 %v6462, %v6461
        %v6611 = vpack.c.b16 %v6464, %v6463
        %v6612 = vpack.c.b16 %v6466, %v6465
        %v6613 = vpack.c.b16 %v6468, %v6467
        %v6614 = vpack.c.b16 %v6470, %v6469
        %6759 = vmatpush.bf16.msra.mxu0 %v6478
        %6760 = vmatpush.bf16.msra.mxu0 %v6477
        %6761 = vmatpush.bf16.msra.mxu0 %v6476
        %6762 = vmatpush.bf16.msra.mxu0 %v6475
        %6763 = vmatpush.bf16.msra.mxu0 %v6474
        %6764 = vmatpush.bf16.msra.mxu0 %v6473
        %6765 = vmatpush.bf16.msra.mxu0 %v6472
        %6766 = vmatpush.bf16.msra.mxu0 %v6471
        %6767 = vmatmul.bf16.gmra.mxu0 %v4727
        %v6768 = vpop.f32.mrf.mxu0
        %v6769 = vadd.f32 %v5893, %v6768
        %v6770 = vpop.f32.mrf.mxu0
        %v6771 = vadd.f32 %v5893, %v6770
        %6772 = vmatmul.bf16.gmra.mxu0 %v4729
        %v6773 = vpop.f32.mrf.mxu0
        %v6774 = vadd.f32 %v5893, %v6773
        %v6775 = vpop.f32.mrf.mxu0
        %v6776 = vadd.f32 %v5893, %v6775
        %6777 = vmatmul.bf16.gmra.mxu0 %v4731
        %v6778 = vpop.f32.mrf.mxu0
        %v6779 = vadd.f32 %v5893, %v6778
        %v6780 = vpop.f32.mrf.mxu0
        %v6781 = vadd.f32 %v5893, %v6780
        %6782 = vmatmul.bf16.gmra.mxu0 %v4733
        %v6783 = vpop.f32.mrf.mxu0
        %v6784 = vadd.f32 %v5893, %v6783
        %v6785 = vpop.f32.mrf.mxu0
        %v6786 = vadd.f32 %v5893, %v6785
        %6787 = vmatmul.bf16.gmra.mxu0 %v4735
        %v6788 = vpop.f32.mrf.mxu0
        %v6789 = vadd.f32 %v5893, %v6788
        %v6790 = vpop.f32.mrf.mxu0
        %v6791 = vadd.f32 %v5893, %v6790
        %6792 = vmatmul.bf16.gmra.mxu0 %v4737
        %v6793 = vpop.f32.mrf.mxu0
        %v6794 = vadd.f32 %v5893, %v6793
        %v6795 = vpop.f32.mrf.mxu0
        %v6796 = vadd.f32 %v5893, %v6795
        %6797 = vmatmul.bf16.gmra.mxu0 %v4739
        %v6798 = vpop.f32.mrf.mxu0
        %v6799 = vadd.f32 %v5893, %v6798
        %v6800 = vpop.f32.mrf.mxu0
        %v6801 = vadd.f32 %v5893, %v6800
        %6802 = vmatmul.bf16.gmra.mxu0 %v4741
        %v6803 = vpop.f32.mrf.mxu0
        %v6804 = vadd.f32 %v5893, %v6803
        %v6805 = vpop.f32.mrf.mxu0
        %v6806 = vadd.f32 %v5893, %v6805
        %6807 = vmatmul.bf16.gmra.mxu0 %v4743
        %v6808 = vpop.f32.mrf.mxu0
        %v6809 = vadd.f32 %v5893, %v6808
        %v6810 = vpop.f32.mrf.mxu0
        %v6811 = vadd.f32 %v5893, %v6810
        %6812 = vmatmul.bf16.gmra.mxu0 %v4745
        %v6813 = vpop.f32.mrf.mxu0
        %v6814 = vadd.f32 %v5893, %v6813
        %v6815 = vpop.f32.mrf.mxu0
        %v6816 = vadd.f32 %v5893, %v6815
        %6817 = vmatmul.bf16.gmra.mxu0 %v4747
        %v6818 = vpop.f32.mrf.mxu0
        %v6819 = vadd.f32 %v5893, %v6818
        %v6820 = vpop.f32.mrf.mxu0
        %v6821 = vadd.f32 %v5893, %v6820
        %6822 = vmatmul.bf16.gmra.mxu0 %v4749
        %v6823 = vpop.f32.mrf.mxu0
        %v6824 = vadd.f32 %v5893, %v6823
        %v6825 = vpop.f32.mrf.mxu0
        %v6826 = vadd.f32 %v5893, %v6825
        %6827 = vmatmul.bf16.gmra.mxu0 %v4751
        %v6828 = vpop.f32.mrf.mxu0
        %v6829 = vadd.f32 %v5893, %v6828
        %v6830 = vpop.f32.mrf.mxu0
        %v6831 = vadd.f32 %v5893, %v6830
        %6832 = vmatmul.bf16.gmra.mxu0 %v4753
        %v6833 = vpop.f32.mrf.mxu0
        %v6834 = vadd.f32 %v5893, %v6833
        %v6835 = vpop.f32.mrf.mxu0
        %v6836 = vadd.f32 %v5893, %v6835
        %6837 = vmatmul.bf16.gmra.mxu0 %v4755
        %v6838 = vpop.f32.mrf.mxu0
        %v6839 = vadd.f32 %v5893, %v6838
        %v6840 = vpop.f32.mrf.mxu0
        %v6841 = vadd.f32 %v5893, %v6840
        %6842 = vmatmul.bf16.gmra.mxu0 %v4757
        %v6843 = vpop.f32.mrf.mxu0
        %v6844 = vadd.f32 %v5893, %v6843
        %v6845 = vpop.f32.mrf.mxu0
        %v6846 = vadd.f32 %v5893, %v6845
        %6847 = vdwg.mxu0
        %6848 = vmatpush.bf16.msra.mxu0 %v6486
        %6849 = vmatpush.bf16.msra.mxu0 %v6485
        %6850 = vmatpush.bf16.msra.mxu0 %v6484
        %6851 = vmatpush.bf16.msra.mxu0 %v6483
        %6852 = vmatpush.bf16.msra.mxu0 %v6482
        %6853 = vmatpush.bf16.msra.mxu0 %v6481
        %6854 = vmatpush.bf16.msra.mxu0 %v6480
        %6855 = vmatpush.bf16.msra.mxu0 %v6479
        %6856 = vmatmul.bf16.gmra.mxu0 %v4728
        %v6857 = vpop.f32.mrf.mxu0
        %v6858 = vadd.f32 %v6769, %v6857
        %v6859 = vpop.f32.mrf.mxu0
        %v6860 = vadd.f32 %v6771, %v6859
        %6861 = vmatmul.bf16.gmra.mxu0 %v4730
        %v6862 = vpop.f32.mrf.mxu0
        %v6863 = vadd.f32 %v6774, %v6862
        %v6864 = vpop.f32.mrf.mxu0
        %v6865 = vadd.f32 %v6776, %v6864
        %6866 = vmatmul.bf16.gmra.mxu0 %v4732
        %v6867 = vpop.f32.mrf.mxu0
        %v6868 = vadd.f32 %v6779, %v6867
        %v6869 = vpop.f32.mrf.mxu0
        %v6870 = vadd.f32 %v6781, %v6869
        %6871 = vmatmul.bf16.gmra.mxu0 %v4734
        %v6872 = vpop.f32.mrf.mxu0
        %v6873 = vadd.f32 %v6784, %v6872
        %v6874 = vpop.f32.mrf.mxu0
        %v6875 = vadd.f32 %v6786, %v6874
        %6876 = vmatmul.bf16.gmra.mxu0 %v4736
        %v6877 = vpop.f32.mrf.mxu0
        %v6878 = vadd.f32 %v6789, %v6877
        %v6879 = vpop.f32.mrf.mxu0
        %v6880 = vadd.f32 %v6791, %v6879
        %6881 = vmatmul.bf16.gmra.mxu0 %v4738
        %v6882 = vpop.f32.mrf.mxu0
        %v6883 = vadd.f32 %v6794, %v6882
        %v6884 = vpop.f32.mrf.mxu0
        %v6885 = vadd.f32 %v6796, %v6884
        %6886 = vmatmul.bf16.gmra.mxu0 %v4740
        %v6887 = vpop.f32.mrf.mxu0
        %v6888 = vadd.f32 %v6799, %v6887
        %v6889 = vpop.f32.mrf.mxu0
        %v6890 = vadd.f32 %v6801, %v6889
        %6891 = vmatmul.bf16.gmra.mxu0 %v4742
        %v6892 = vpop.f32.mrf.mxu0
        %v6893 = vadd.f32 %v6804, %v6892
        %v6894 = vpop.f32.mrf.mxu0
        %v6895 = vadd.f32 %v6806, %v6894
        %6896 = vmatmul.bf16.gmra.mxu0 %v4744
        %v6897 = vpop.f32.mrf.mxu0
        %v6898 = vadd.f32 %v6809, %v6897
        %v6899 = vpop.f32.mrf.mxu0
        %v6900 = vadd.f32 %v6811, %v6899
        %6901 = vmatmul.bf16.gmra.mxu0 %v4746
        %v6902 = vpop.f32.mrf.mxu0
        %v6903 = vadd.f32 %v6814, %v6902
        %v6904 = vpop.f32.mrf.mxu0
        %v6905 = vadd.f32 %v6816, %v6904
        %6906 = vmatmul.bf16.gmra.mxu0 %v4748
        %v6907 = vpop.f32.mrf.mxu0
        %v6908 = vadd.f32 %v6819, %v6907
        %v6909 = vpop.f32.mrf.mxu0
        %v6910 = vadd.f32 %v6821, %v6909
        %6911 = vmatmul.bf16.gmra.mxu0 %v4750
        %v6912 = vpop.f32.mrf.mxu0
        %v6913 = vadd.f32 %v6824, %v6912
        %v6914 = vpop.f32.mrf.mxu0
        %v6915 = vadd.f32 %v6826, %v6914
        %6916 = vmatmul.bf16.gmra.mxu0 %v4752
        %v6917 = vpop.f32.mrf.mxu0
        %v6918 = vadd.f32 %v6829, %v6917
        %v6919 = vpop.f32.mrf.mxu0
        %v6920 = vadd.f32 %v6831, %v6919
        %6921 = vmatmul.bf16.gmra.mxu0 %v4754
        %v6922 = vpop.f32.mrf.mxu0
        %v6923 = vadd.f32 %v6834, %v6922
        %v6924 = vpop.f32.mrf.mxu0
        %v6925 = vadd.f32 %v6836, %v6924
        %6926 = vmatmul.bf16.gmra.mxu0 %v4756
        %v6927 = vpop.f32.mrf.mxu0
        %v6928 = vadd.f32 %v6839, %v6927
        %v6929 = vpop.f32.mrf.mxu0
        %v6930 = vadd.f32 %v6841, %v6929
        %6931 = vmatmul.bf16.gmra.mxu0 %v4758
        %v6932 = vpop.f32.mrf.mxu0
        %v6933 = vadd.f32 %v6844, %v6932
        %v6934 = vpop.f32.mrf.mxu0
        %v6935 = vadd.f32 %v6846, %v6934
        %6936 = vdwg.mxu0
        %6937 = vmatpush.bf16.msra.mxu0 %v6494
        %6938 = vmatpush.bf16.msra.mxu0 %v6493
        %6939 = vmatpush.bf16.msra.mxu0 %v6492
        %6940 = vmatpush.bf16.msra.mxu0 %v6491
        %6941 = vmatpush.bf16.msra.mxu0 %v6490
        %6942 = vmatpush.bf16.msra.mxu0 %v6489
        %6943 = vmatpush.bf16.msra.mxu0 %v6488
        %6944 = vmatpush.bf16.msra.mxu0 %v6487
        %6945 = vmatmul.bf16.gmra.mxu0 %v4882
        %v6946 = vpop.f32.mrf.mxu0
        %v6947 = vadd.f32 %v6858, %v6946
        %v6948 = vpop.f32.mrf.mxu0
        %v6949 = vadd.f32 %v6860, %v6948
        %6950 = vmatmul.bf16.gmra.mxu0 %v4906
        %v6951 = vpop.f32.mrf.mxu0
        %v6952 = vadd.f32 %v6863, %v6951
        %v6953 = vpop.f32.mrf.mxu0
        %v6954 = vadd.f32 %v6865, %v6953
        %6955 = vmatmul.bf16.gmra.mxu0 %v4930
        %v6956 = vpop.f32.mrf.mxu0
        %v6957 = vadd.f32 %v6868, %v6956
        %v6958 = vpop.f32.mrf.mxu0
        %v6959 = vadd.f32 %v6870, %v6958
        %6960 = vmatmul.bf16.gmra.mxu0 %v4954
        %v6961 = vpop.f32.mrf.mxu0
        %v6962 = vadd.f32 %v6873, %v6961
        %v6963 = vpop.f32.mrf.mxu0
        %v6964 = vadd.f32 %v6875, %v6963
        %6965 = vmatmul.bf16.gmra.mxu0 %v4978
        %v6966 = vpop.f32.mrf.mxu0
        %v6967 = vadd.f32 %v6878, %v6966
        %v6968 = vpop.f32.mrf.mxu0
        %v6969 = vadd.f32 %v6880, %v6968
        %6970 = vmatmul.bf16.gmra.mxu0 %v5002
        %v6971 = vpop.f32.mrf.mxu0
        %v6972 = vadd.f32 %v6883, %v6971
        %v6973 = vpop.f32.mrf.mxu0
        %v6974 = vadd.f32 %v6885, %v6973
        %6975 = vmatmul.bf16.gmra.mxu0 %v5026
        %v6976 = vpop.f32.mrf.mxu0
        %v6977 = vadd.f32 %v6888, %v6976
        %v6978 = vpop.f32.mrf.mxu0
        %v6979 = vadd.f32 %v6890, %v6978
        %6980 = vmatmul.bf16.gmra.mxu0 %v5050
        %v6981 = vpop.f32.mrf.mxu0
        %v6982 = vadd.f32 %v6893, %v6981
        %v6983 = vpop.f32.mrf.mxu0
        %v6984 = vadd.f32 %v6895, %v6983
        %6985 = vmatmul.bf16.gmra.mxu0 %v5074
        %v6986 = vpop.f32.mrf.mxu0
        %v6987 = vadd.f32 %v6898, %v6986
        %v6988 = vpop.f32.mrf.mxu0
        %v6989 = vadd.f32 %v6900, %v6988
        %6990 = vmatmul.bf16.gmra.mxu0 %v5098
        %v6991 = vpop.f32.mrf.mxu0
        %v6992 = vadd.f32 %v6903, %v6991
        %v6993 = vpop.f32.mrf.mxu0
        %v6994 = vadd.f32 %v6905, %v6993
        %6995 = vmatmul.bf16.gmra.mxu0 %v5122
        %v6996 = vpop.f32.mrf.mxu0
        %v6997 = vadd.f32 %v6908, %v6996
        %v6998 = vpop.f32.mrf.mxu0
        %v6999 = vadd.f32 %v6910, %v6998
        %7000 = vmatmul.bf16.gmra.mxu0 %v5146
        %v7001 = vpop.f32.mrf.mxu0
        %v7002 = vadd.f32 %v6913, %v7001
        %v7003 = vpop.f32.mrf.mxu0
        %v7004 = vadd.f32 %v6915, %v7003
        %7005 = vmatmul.bf16.gmra.mxu0 %v5170
        %v7006 = vpop.f32.mrf.mxu0
        %v7007 = vadd.f32 %v6918, %v7006
        %v7008 = vpop.f32.mrf.mxu0
        %v7009 = vadd.f32 %v6920, %v7008
        %7010 = vmatmul.bf16.gmra.mxu0 %v5194
        %v7011 = vpop.f32.mrf.mxu0
        %v7012 = vadd.f32 %v6923, %v7011
        %v7013 = vpop.f32.mrf.mxu0
        %v7014 = vadd.f32 %v6925, %v7013
        %7015 = vmatmul.bf16.gmra.mxu0 %v5218
        %v7016 = vpop.f32.mrf.mxu0
        %v7017 = vadd.f32 %v6928, %v7016
        %v7018 = vpop.f32.mrf.mxu0
        %v7019 = vadd.f32 %v6930, %v7018
        %7020 = vmatmul.bf16.gmra.mxu0 %v5242
        %v7021 = vpop.f32.mrf.mxu0
        %v7022 = vadd.f32 %v6933, %v7021
        %v7023 = vpop.f32.mrf.mxu0
        %v7024 = vadd.f32 %v6935, %v7023
        %7025 = vdwg.mxu0
        %7026 = vmatpush.bf16.msra.mxu0 %v6502
        %7027 = vmatpush.bf16.msra.mxu0 %v6501
        %7028 = vmatpush.bf16.msra.mxu0 %v6500
        %7029 = vmatpush.bf16.msra.mxu0 %v6499
        %7030 = vmatpush.bf16.msra.mxu0 %v6498
        %7031 = vmatpush.bf16.msra.mxu0 %v6497
        %7032 = vmatpush.bf16.msra.mxu0 %v6496
        %7033 = vmatpush.bf16.msra.mxu0 %v6495
        %7034 = vmatmul.bf16.gmra.mxu0 %v4894
        %v7035 = vpop.f32.mrf.mxu0
        %v7036 = vadd.f32 %v6947, %v7035
        %v7037 = vpop.f32.mrf.mxu0
        %v7038 = vadd.f32 %v6949, %v7037
        %7039 = vmatmul.bf16.gmra.mxu0 %v4918
        %v7040 = vpop.f32.mrf.mxu0
        %v7041 = vadd.f32 %v6952, %v7040
        %v7042 = vpop.f32.mrf.mxu0
        %v7043 = vadd.f32 %v6954, %v7042
        %7044 = vmatmul.bf16.gmra.mxu0 %v4942
        %v7045 = vpop.f32.mrf.mxu0
        %v7046 = vadd.f32 %v6957, %v7045
        %v7047 = vpop.f32.mrf.mxu0
        %v7048 = vadd.f32 %v6959, %v7047
        %7049 = vmatmul.bf16.gmra.mxu0 %v4966
        %v7050 = vpop.f32.mrf.mxu0
        %v7051 = vadd.f32 %v6962, %v7050
        %v7052 = vpop.f32.mrf.mxu0
        %v7053 = vadd.f32 %v6964, %v7052
        %7054 = vmatmul.bf16.gmra.mxu0 %v4990
        %v7055 = vpop.f32.mrf.mxu0
        %v7056 = vadd.f32 %v6967, %v7055
        %v7057 = vpop.f32.mrf.mxu0
        %v7058 = vadd.f32 %v6969, %v7057
        %7059 = vmatmul.bf16.gmra.mxu0 %v5014
        %v7060 = vpop.f32.mrf.mxu0
        %v7061 = vadd.f32 %v6972, %v7060
        %v7062 = vpop.f32.mrf.mxu0
        %v7063 = vadd.f32 %v6974, %v7062
        %7064 = vmatmul.bf16.gmra.mxu0 %v5038
        %v7065 = vpop.f32.mrf.mxu0
        %v7066 = vadd.f32 %v6977, %v7065
        %v7067 = vpop.f32.mrf.mxu0
        %v7068 = vadd.f32 %v6979, %v7067
        %7069 = vmatmul.bf16.gmra.mxu0 %v5062
        %v7070 = vpop.f32.mrf.mxu0
        %v7071 = vadd.f32 %v6982, %v7070
        %v7072 = vpop.f32.mrf.mxu0
        %v7073 = vadd.f32 %v6984, %v7072
        %7074 = vmatmul.bf16.gmra.mxu0 %v5086
        %v7075 = vpop.f32.mrf.mxu0
        %v7076 = vadd.f32 %v6987, %v7075
        %v7077 = vpop.f32.mrf.mxu0
        %v7078 = vadd.f32 %v6989, %v7077
        %7079 = vmatmul.bf16.gmra.mxu0 %v5110
        %v7080 = vpop.f32.mrf.mxu0
        %v7081 = vadd.f32 %v6992, %v7080
        %v7082 = vpop.f32.mrf.mxu0
        %v7083 = vadd.f32 %v6994, %v7082
        %7084 = vmatmul.bf16.gmra.mxu0 %v5134
        %v7085 = vpop.f32.mrf.mxu0
        %v7086 = vadd.f32 %v6997, %v7085
        %v7087 = vpop.f32.mrf.mxu0
        %v7088 = vadd.f32 %v6999, %v7087
        %7089 = vmatmul.bf16.gmra.mxu0 %v5158
        %v7090 = vpop.f32.mrf.mxu0
        %v7091 = vadd.f32 %v7002, %v7090
        %v7092 = vpop.f32.mrf.mxu0
        %v7093 = vadd.f32 %v7004, %v7092
        %7094 = vmatmul.bf16.gmra.mxu0 %v5182
        %v7095 = vpop.f32.mrf.mxu0
        %v7096 = vadd.f32 %v7007, %v7095
        %v7097 = vpop.f32.mrf.mxu0
        %v7098 = vadd.f32 %v7009, %v7097
        %7099 = vmatmul.bf16.gmra.mxu0 %v5206
        %v7100 = vpop.f32.mrf.mxu0
        %v7101 = vadd.f32 %v7012, %v7100
        %v7102 = vpop.f32.mrf.mxu0
        %v7103 = vadd.f32 %v7014, %v7102
        %7104 = vmatmul.bf16.gmra.mxu0 %v5230
        %v7105 = vpop.f32.mrf.mxu0
        %v7106 = vadd.f32 %v7017, %v7105
        %v7107 = vpop.f32.mrf.mxu0
        %v7108 = vadd.f32 %v7019, %v7107
        %7109 = vmatmul.bf16.gmra.mxu0 %v5254
        %v7110 = vpop.f32.mrf.mxu0
        %v7111 = vadd.f32 %v7022, %v7110
        %v7112 = vpop.f32.mrf.mxu0
        %v7113 = vadd.f32 %v7024, %v7112
        %7114 = vdwg.mxu0
        %7115 = vmatpush.bf16.msra.mxu0 %v6510
        %7116 = vmatpush.bf16.msra.mxu0 %v6509
        %7117 = vmatpush.bf16.msra.mxu0 %v6508
        %7118 = vmatpush.bf16.msra.mxu0 %v6507
        %7119 = vmatpush.bf16.msra.mxu0 %v6506
        %7120 = vmatpush.bf16.msra.mxu0 %v6505
        %7121 = vmatpush.bf16.msra.mxu0 %v6504
        %7122 = vmatpush.bf16.msra.mxu0 %v6503
        %7123 = vmatmul.bf16.gmra.mxu0 %v5369
        %v7124 = vpop.f32.mrf.mxu0
        %v7125 = vadd.f32 %v7036, %v7124
        %v7126 = vpop.f32.mrf.mxu0
        %v7127 = vadd.f32 %v7038, %v7126
        %7128 = vmatmul.bf16.gmra.mxu0 %v5375
        %v7129 = vpop.f32.mrf.mxu0
        %v7130 = vadd.f32 %v7041, %v7129
        %v7131 = vpop.f32.mrf.mxu0
        %v7132 = vadd.f32 %v7043, %v7131
        %7133 = vmatmul.bf16.gmra.mxu0 %v5381
        %v7134 = vpop.f32.mrf.mxu0
        %v7135 = vadd.f32 %v7046, %v7134
        %v7136 = vpop.f32.mrf.mxu0
        %v7137 = vadd.f32 %v7048, %v7136
        %7138 = vmatmul.bf16.gmra.mxu0 %v5387
        %v7139 = vpop.f32.mrf.mxu0
        %v7140 = vadd.f32 %v7051, %v7139
        %v7141 = vpop.f32.mrf.mxu0
        %v7142 = vadd.f32 %v7053, %v7141
        %7143 = vmatmul.bf16.gmra.mxu0 %v5393
        %v7144 = vpop.f32.mrf.mxu0
        %v7145 = vadd.f32 %v7056, %v7144
        %v7146 = vpop.f32.mrf.mxu0
        %v7147 = vadd.f32 %v7058, %v7146
        %7148 = vmatmul.bf16.gmra.mxu0 %v5399
        %v7149 = vpop.f32.mrf.mxu0
        %v7150 = vadd.f32 %v7061, %v7149
        %v7151 = vpop.f32.mrf.mxu0
        %v7152 = vadd.f32 %v7063, %v7151
        %7153 = vmatmul.bf16.gmra.mxu0 %v5405
        %v7154 = vpop.f32.mrf.mxu0
        %v7155 = vadd.f32 %v7066, %v7154
        %v7156 = vpop.f32.mrf.mxu0
        %v7157 = vadd.f32 %v7068, %v7156
        %7158 = vmatmul.bf16.gmra.mxu0 %v5411
        %v7159 = vpop.f32.mrf.mxu0
        %v7160 = vadd.f32 %v7071, %v7159
        %v7161 = vpop.f32.mrf.mxu0
        %v7162 = vadd.f32 %v7073, %v7161
        %7163 = vmatmul.bf16.gmra.mxu0 %v5417
        %v7164 = vpop.f32.mrf.mxu0
        %v7165 = vadd.f32 %v7076, %v7164
        %v7166 = vpop.f32.mrf.mxu0
        %v7167 = vadd.f32 %v7078, %v7166
        %7168 = vmatmul.bf16.gmra.mxu0 %v5423
        %v7169 = vpop.f32.mrf.mxu0
        %v7170 = vadd.f32 %v7081, %v7169
        %v7171 = vpop.f32.mrf.mxu0
        %v7172 = vadd.f32 %v7083, %v7171
        %7173 = vmatmul.bf16.gmra.mxu0 %v5429
        %v7174 = vpop.f32.mrf.mxu0
        %v7175 = vadd.f32 %v7086, %v7174
        %v7176 = vpop.f32.mrf.mxu0
        %v7177 = vadd.f32 %v7088, %v7176
        %7178 = vmatmul.bf16.gmra.mxu0 %v5435
        %v7179 = vpop.f32.mrf.mxu0
        %v7180 = vadd.f32 %v7091, %v7179
        %v7181 = vpop.f32.mrf.mxu0
        %v7182 = vadd.f32 %v7093, %v7181
        %7183 = vmatmul.bf16.gmra.mxu0 %v5441
        %v7184 = vpop.f32.mrf.mxu0
        %v7185 = vadd.f32 %v7096, %v7184
        %v7186 = vpop.f32.mrf.mxu0
        %v7187 = vadd.f32 %v7098, %v7186
        %7188 = vmatmul.bf16.gmra.mxu0 %v5447
        %v7189 = vpop.f32.mrf.mxu0
        %v7190 = vadd.f32 %v7101, %v7189
        %v7191 = vpop.f32.mrf.mxu0
        %v7192 = vadd.f32 %v7103, %v7191
        %7193 = vmatmul.bf16.gmra.mxu0 %v5453
        %v7194 = vpop.f32.mrf.mxu0
        %v7195 = vadd.f32 %v7106, %v7194
        %v7196 = vpop.f32.mrf.mxu0
        %v7197 = vadd.f32 %v7108, %v7196
        %7198 = vmatmul.bf16.gmra.mxu0 %v5459
        %v7199 = vpop.f32.mrf.mxu0
        %v7200 = vadd.f32 %v7111, %v7199
        %v7201 = vpop.f32.mrf.mxu0
        %v7202 = vadd.f32 %v7113, %v7201
        %7203 = vdwg.mxu0
        %7204 = vmatpush.bf16.msra.mxu0 %v6518
        %7205 = vmatpush.bf16.msra.mxu0 %v6517
        %7206 = vmatpush.bf16.msra.mxu0 %v6516
        %7207 = vmatpush.bf16.msra.mxu0 %v6515
        %7208 = vmatpush.bf16.msra.mxu0 %v6514
        %7209 = vmatpush.bf16.msra.mxu0 %v6513
        %7210 = vmatpush.bf16.msra.mxu0 %v6512
        %7211 = vmatpush.bf16.msra.mxu0 %v6511
        %7212 = vmatmul.bf16.gmra.mxu0 %v5372
        %v7213 = vpop.f32.mrf.mxu0
        %v7214 = vadd.f32 %v7125, %v7213
        %v7215 = vpop.f32.mrf.mxu0
        %v7216 = vadd.f32 %v7127, %v7215
        %7217 = vmatmul.bf16.gmra.mxu0 %v5378
        %v7218 = vpop.f32.mrf.mxu0
        %v7219 = vadd.f32 %v7130, %v7218
        %v7220 = vpop.f32.mrf.mxu0
        %v7221 = vadd.f32 %v7132, %v7220
        %7222 = vmatmul.bf16.gmra.mxu0 %v5384
        %v7223 = vpop.f32.mrf.mxu0
        %v7224 = vadd.f32 %v7135, %v7223
        %v7225 = vpop.f32.mrf.mxu0
        %v7226 = vadd.f32 %v7137, %v7225
        %7227 = vmatmul.bf16.gmra.mxu0 %v5390
        %v7228 = vpop.f32.mrf.mxu0
        %v7229 = vadd.f32 %v7140, %v7228
        %v7230 = vpop.f32.mrf.mxu0
        %v7231 = vadd.f32 %v7142, %v7230
        %7232 = vmatmul.bf16.gmra.mxu0 %v5396
        %v7233 = vpop.f32.mrf.mxu0
        %v7234 = vadd.f32 %v7145, %v7233
        %v7235 = vpop.f32.mrf.mxu0
        %v7236 = vadd.f32 %v7147, %v7235
        %7237 = vmatmul.bf16.gmra.mxu0 %v5402
        %v7238 = vpop.f32.mrf.mxu0
        %v7239 = vadd.f32 %v7150, %v7238
        %v7240 = vpop.f32.mrf.mxu0
        %v7241 = vadd.f32 %v7152, %v7240
        %7242 = vmatmul.bf16.gmra.mxu0 %v5408
        %v7243 = vpop.f32.mrf.mxu0
        %v7244 = vadd.f32 %v7155, %v7243
        %v7245 = vpop.f32.mrf.mxu0
        %v7246 = vadd.f32 %v7157, %v7245
        %7247 = vmatmul.bf16.gmra.mxu0 %v5414
        %v7248 = vpop.f32.mrf.mxu0
        %v7249 = vadd.f32 %v7160, %v7248
        %v7250 = vpop.f32.mrf.mxu0
        %v7251 = vadd.f32 %v7162, %v7250
        %7252 = vmatmul.bf16.gmra.mxu0 %v5420
        %v7253 = vpop.f32.mrf.mxu0
        %v7254 = vadd.f32 %v7165, %v7253
        %v7255 = vpop.f32.mrf.mxu0
        %v7256 = vadd.f32 %v7167, %v7255
        %7257 = vmatmul.bf16.gmra.mxu0 %v5426
        %v7258 = vpop.f32.mrf.mxu0
        %v7259 = vadd.f32 %v7170, %v7258
        %v7260 = vpop.f32.mrf.mxu0
        %v7261 = vadd.f32 %v7172, %v7260
        %7262 = vmatmul.bf16.gmra.mxu0 %v5432
        %v7263 = vpop.f32.mrf.mxu0
        %v7264 = vadd.f32 %v7175, %v7263
        %v7265 = vpop.f32.mrf.mxu0
        %v7266 = vadd.f32 %v7177, %v7265
        %7267 = vmatmul.bf16.gmra.mxu0 %v5438
        %v7268 = vpop.f32.mrf.mxu0
        %v7269 = vadd.f32 %v7180, %v7268
        %v7270 = vpop.f32.mrf.mxu0
        %v7271 = vadd.f32 %v7182, %v7270
        %7272 = vmatmul.bf16.gmra.mxu0 %v5444
        %v7273 = vpop.f32.mrf.mxu0
        %v7274 = vadd.f32 %v7185, %v7273
        %v7275 = vpop.f32.mrf.mxu0
        %v7276 = vadd.f32 %v7187, %v7275
        %7277 = vmatmul.bf16.gmra.mxu0 %v5450
        %v7278 = vpop.f32.mrf.mxu0
        %v7279 = vadd.f32 %v7190, %v7278
        %v7280 = vpop.f32.mrf.mxu0
        %v7281 = vadd.f32 %v7192, %v7280
        %7282 = vmatmul.bf16.gmra.mxu0 %v5456
        %v7283 = vpop.f32.mrf.mxu0
        %v7284 = vadd.f32 %v7195, %v7283
        %v7285 = vpop.f32.mrf.mxu0
        %v7286 = vadd.f32 %v7197, %v7285
        %7287 = vmatmul.bf16.gmra.mxu0 %v5462
        %v7288 = vpop.f32.mrf.mxu0
        %v7289 = vadd.f32 %v7200, %v7288
        %v7290 = vpop.f32.mrf.mxu0
        %v7291 = vadd.f32 %v7202, %v7290
        %7292 = vdwg.mxu0
        %7293 = vmatpush.bf16.msra.mxu0 %v6526
        %7294 = vmatpush.bf16.msra.mxu0 %v6525
        %7295 = vmatpush.bf16.msra.mxu0 %v6524
        %7296 = vmatpush.bf16.msra.mxu0 %v6523
        %7297 = vmatpush.bf16.msra.mxu0 %v6522
        %7298 = vmatpush.bf16.msra.mxu0 %v6521
        %7299 = vmatpush.bf16.msra.mxu0 %v6520
        %7300 = vmatpush.bf16.msra.mxu0 %v6519
        %7301 = vmatmul.bf16.gmra.mxu0 %v4729
        %v7302 = vpop.f32.mrf.mxu0
        %v7303 = vadd.f32 %v7214, %v7302
        %v7304 = vpop.f32.mrf.mxu0
        %v7305 = vadd.f32 %v7216, %v7304
        %7306 = vmatmul.bf16.gmra.mxu0 %v4731
        %v7307 = vpop.f32.mrf.mxu0
        %v7308 = vadd.f32 %v7219, %v7307
        %v7309 = vpop.f32.mrf.mxu0
        %v7310 = vadd.f32 %v7221, %v7309
        %7311 = vmatmul.bf16.gmra.mxu0 %v4733
        %v7312 = vpop.f32.mrf.mxu0
        %v7313 = vadd.f32 %v7224, %v7312
        %v7314 = vpop.f32.mrf.mxu0
        %v7315 = vadd.f32 %v7226, %v7314
        %7316 = vmatmul.bf16.gmra.mxu0 %v4735
        %v7317 = vpop.f32.mrf.mxu0
        %v7318 = vadd.f32 %v7229, %v7317
        %v7319 = vpop.f32.mrf.mxu0
        %v7320 = vadd.f32 %v7231, %v7319
        %7321 = vmatmul.bf16.gmra.mxu0 %v4737
        %v7322 = vpop.f32.mrf.mxu0
        %v7323 = vadd.f32 %v7234, %v7322
        %v7324 = vpop.f32.mrf.mxu0
        %v7325 = vadd.f32 %v7236, %v7324
        %7326 = vmatmul.bf16.gmra.mxu0 %v4739
        %v7327 = vpop.f32.mrf.mxu0
        %v7328 = vadd.f32 %v7239, %v7327
        %v7329 = vpop.f32.mrf.mxu0
        %v7330 = vadd.f32 %v7241, %v7329
        %7331 = vmatmul.bf16.gmra.mxu0 %v4741
        %v7332 = vpop.f32.mrf.mxu0
        %v7333 = vadd.f32 %v7244, %v7332
        %v7334 = vpop.f32.mrf.mxu0
        %v7335 = vadd.f32 %v7246, %v7334
        %7336 = vmatmul.bf16.gmra.mxu0 %v4743
        %v7337 = vpop.f32.mrf.mxu0
        %v7338 = vadd.f32 %v7249, %v7337
        %v7339 = vpop.f32.mrf.mxu0
        %v7340 = vadd.f32 %v7251, %v7339
        %7341 = vmatmul.bf16.gmra.mxu0 %v4745
        %v7342 = vpop.f32.mrf.mxu0
        %v7343 = vadd.f32 %v7254, %v7342
        %v7344 = vpop.f32.mrf.mxu0
        %v7345 = vadd.f32 %v7256, %v7344
        %7346 = vmatmul.bf16.gmra.mxu0 %v4747
        %v7347 = vpop.f32.mrf.mxu0
        %v7348 = vadd.f32 %v7259, %v7347
        %v7349 = vpop.f32.mrf.mxu0
        %v7350 = vadd.f32 %v7261, %v7349
        %7351 = vmatmul.bf16.gmra.mxu0 %v4749
        %v7352 = vpop.f32.mrf.mxu0
        %v7353 = vadd.f32 %v7264, %v7352
        %v7354 = vpop.f32.mrf.mxu0
        %v7355 = vadd.f32 %v7266, %v7354
        %7356 = vmatmul.bf16.gmra.mxu0 %v4751
        %v7357 = vpop.f32.mrf.mxu0
        %v7358 = vadd.f32 %v7269, %v7357
        %v7359 = vpop.f32.mrf.mxu0
        %v7360 = vadd.f32 %v7271, %v7359
        %7361 = vmatmul.bf16.gmra.mxu0 %v4753
        %v7362 = vpop.f32.mrf.mxu0
        %v7363 = vadd.f32 %v7274, %v7362
        %v7364 = vpop.f32.mrf.mxu0
        %v7365 = vadd.f32 %v7276, %v7364
        %7366 = vmatmul.bf16.gmra.mxu0 %v4755
        %v7367 = vpop.f32.mrf.mxu0
        %v7368 = vadd.f32 %v7279, %v7367
        %v7369 = vpop.f32.mrf.mxu0
        %v7370 = vadd.f32 %v7281, %v7369
        %7371 = vmatmul.bf16.gmra.mxu0 %v4757
        %v7372 = vpop.f32.mrf.mxu0
        %v7373 = vadd.f32 %v7284, %v7372
        %v7374 = vpop.f32.mrf.mxu0
        %v7375 = vadd.f32 %v7286, %v7374
        %7376 = vmatmul.bf16.gmra.mxu0 %v5501
        %v7377 = vpop.f32.mrf.mxu0
        %v7378 = vadd.f32 %v7289, %v7377
        %v7379 = vpop.f32.mrf.mxu0
        %v7380 = vadd.f32 %v7291, %v7379
        %7381 = vdwg.mxu0
        %7382 = vmatpush.bf16.msra.mxu0 %v6534
        %7383 = vmatpush.bf16.msra.mxu0 %v6533
        %7384 = vmatpush.bf16.msra.mxu0 %v6532
        %7385 = vmatpush.bf16.msra.mxu0 %v6531
        %7386 = vmatpush.bf16.msra.mxu0 %v6530
        %7387 = vmatpush.bf16.msra.mxu0 %v6529
        %7388 = vmatpush.bf16.msra.mxu0 %v6528
        %7389 = vmatpush.bf16.msra.mxu0 %v6527
        %7390 = vmatmul.bf16.gmra.mxu0 %v4730
        %v7391 = vpop.f32.mrf.mxu0
        %v7392 = vadd.f32 %v7303, %v7391
        %v7393 = vpop.f32.mrf.mxu0
        %v7394 = vadd.f32 %v7305, %v7393
        %7395 = vmatmul.bf16.gmra.mxu0 %v4732
        %v7396 = vpop.f32.mrf.mxu0
        %v7397 = vadd.f32 %v7308, %v7396
        %v7398 = vpop.f32.mrf.mxu0
        %v7399 = vadd.f32 %v7310, %v7398
        %7400 = vmatmul.bf16.gmra.mxu0 %v4734
        %v7401 = vpop.f32.mrf.mxu0
        %v7402 = vadd.f32 %v7313, %v7401
        %v7403 = vpop.f32.mrf.mxu0
        %v7404 = vadd.f32 %v7315, %v7403
        %7405 = vmatmul.bf16.gmra.mxu0 %v4736
        %v7406 = vpop.f32.mrf.mxu0
        %v7407 = vadd.f32 %v7318, %v7406
        %v7408 = vpop.f32.mrf.mxu0
        %v7409 = vadd.f32 %v7320, %v7408
        %7410 = vmatmul.bf16.gmra.mxu0 %v4738
        %v7411 = vpop.f32.mrf.mxu0
        %v7412 = vadd.f32 %v7323, %v7411
        %v7413 = vpop.f32.mrf.mxu0
        %v7414 = vadd.f32 %v7325, %v7413
        %7415 = vmatmul.bf16.gmra.mxu0 %v4740
        %v7416 = vpop.f32.mrf.mxu0
        %v7417 = vadd.f32 %v7328, %v7416
        %v7418 = vpop.f32.mrf.mxu0
        %v7419 = vadd.f32 %v7330, %v7418
        %7420 = vmatmul.bf16.gmra.mxu0 %v4742
        %v7421 = vpop.f32.mrf.mxu0
        %v7422 = vadd.f32 %v7333, %v7421
        %v7423 = vpop.f32.mrf.mxu0
        %v7424 = vadd.f32 %v7335, %v7423
        %7425 = vmatmul.bf16.gmra.mxu0 %v4744
        %v7426 = vpop.f32.mrf.mxu0
        %v7427 = vadd.f32 %v7338, %v7426
        %v7428 = vpop.f32.mrf.mxu0
        %v7429 = vadd.f32 %v7340, %v7428
        %7430 = vmatmul.bf16.gmra.mxu0 %v4746
        %v7431 = vpop.f32.mrf.mxu0
        %v7432 = vadd.f32 %v7343, %v7431
        %v7433 = vpop.f32.mrf.mxu0
        %v7434 = vadd.f32 %v7345, %v7433
        %7435 = vmatmul.bf16.gmra.mxu0 %v4748
        %v7436 = vpop.f32.mrf.mxu0
        %v7437 = vadd.f32 %v7348, %v7436
        %v7438 = vpop.f32.mrf.mxu0
        %v7439 = vadd.f32 %v7350, %v7438
        %7440 = vmatmul.bf16.gmra.mxu0 %v4750
        %v7441 = vpop.f32.mrf.mxu0
        %v7442 = vadd.f32 %v7353, %v7441
        %v7443 = vpop.f32.mrf.mxu0
        %v7444 = vadd.f32 %v7355, %v7443
        %7445 = vmatmul.bf16.gmra.mxu0 %v4752
        %v7446 = vpop.f32.mrf.mxu0
        %v7447 = vadd.f32 %v7358, %v7446
        %v7448 = vpop.f32.mrf.mxu0
        %v7449 = vadd.f32 %v7360, %v7448
        %7450 = vmatmul.bf16.gmra.mxu0 %v4754
        %v7451 = vpop.f32.mrf.mxu0
        %v7452 = vadd.f32 %v7363, %v7451
        %v7453 = vpop.f32.mrf.mxu0
        %v7454 = vadd.f32 %v7365, %v7453
        %7455 = vmatmul.bf16.gmra.mxu0 %v4756
        %v7456 = vpop.f32.mrf.mxu0
        %v7457 = vadd.f32 %v7368, %v7456
        %v7458 = vpop.f32.mrf.mxu0
        %v7459 = vadd.f32 %v7370, %v7458
        %7460 = vmatmul.bf16.gmra.mxu0 %v4758
        %v7461 = vpop.f32.mrf.mxu0
        %v7462 = vadd.f32 %v7373, %v7461
        %v7463 = vpop.f32.mrf.mxu0
        %v7464 = vadd.f32 %v7375, %v7463
        %7465 = vmatmul.bf16.gmra.mxu0 %v5502
        %v7466 = vpop.f32.mrf.mxu0
        %v7467 = vadd.f32 %v7378, %v7466
        %v7468 = vpop.f32.mrf.mxu0
        %v7469 = vadd.f32 %v7380, %v7468
        %7470 = vdwg.mxu0
        %7471 = vmatpush.bf16.msra.mxu0 %v6542
        %7472 = vmatpush.bf16.msra.mxu0 %v6541
        %7473 = vmatpush.bf16.msra.mxu0 %v6540
        %7474 = vmatpush.bf16.msra.mxu0 %v6539
        %7475 = vmatpush.bf16.msra.mxu0 %v6538
        %7476 = vmatpush.bf16.msra.mxu0 %v6537
        %7477 = vmatpush.bf16.msra.mxu0 %v6536
        %7478 = vmatpush.bf16.msra.mxu0 %v6535
        %7479 = vmatmul.bf16.gmra.mxu0 %v4906
        %v7480 = vpop.f32.mrf.mxu0
        %v7481 = vadd.f32 %v7392, %v7480
        %v7482 = vpop.f32.mrf.mxu0
        %v7483 = vadd.f32 %v7394, %v7482
        %7484 = vmatmul.bf16.gmra.mxu0 %v4930
        %v7485 = vpop.f32.mrf.mxu0
        %v7486 = vadd.f32 %v7397, %v7485
        %v7487 = vpop.f32.mrf.mxu0
        %v7488 = vadd.f32 %v7399, %v7487
        %7489 = vmatmul.bf16.gmra.mxu0 %v4954
        %v7490 = vpop.f32.mrf.mxu0
        %v7491 = vadd.f32 %v7402, %v7490
        %v7492 = vpop.f32.mrf.mxu0
        %v7493 = vadd.f32 %v7404, %v7492
        %7494 = vmatmul.bf16.gmra.mxu0 %v4978
        %v7495 = vpop.f32.mrf.mxu0
        %v7496 = vadd.f32 %v7407, %v7495
        %v7497 = vpop.f32.mrf.mxu0
        %v7498 = vadd.f32 %v7409, %v7497
        %7499 = vmatmul.bf16.gmra.mxu0 %v5002
        %v7500 = vpop.f32.mrf.mxu0
        %v7501 = vadd.f32 %v7412, %v7500
        %v7502 = vpop.f32.mrf.mxu0
        %v7503 = vadd.f32 %v7414, %v7502
        %7504 = vmatmul.bf16.gmra.mxu0 %v5026
        %v7505 = vpop.f32.mrf.mxu0
        %v7506 = vadd.f32 %v7417, %v7505
        %v7507 = vpop.f32.mrf.mxu0
        %v7508 = vadd.f32 %v7419, %v7507
        %7509 = vmatmul.bf16.gmra.mxu0 %v5050
        %v7510 = vpop.f32.mrf.mxu0
        %v7511 = vadd.f32 %v7422, %v7510
        %v7512 = vpop.f32.mrf.mxu0
        %v7513 = vadd.f32 %v7424, %v7512
        %7514 = vmatmul.bf16.gmra.mxu0 %v5074
        %v7515 = vpop.f32.mrf.mxu0
        %v7516 = vadd.f32 %v7427, %v7515
        %v7517 = vpop.f32.mrf.mxu0
        %v7518 = vadd.f32 %v7429, %v7517
        %7519 = vmatmul.bf16.gmra.mxu0 %v5098
        %v7520 = vpop.f32.mrf.mxu0
        %v7521 = vadd.f32 %v7432, %v7520
        %v7522 = vpop.f32.mrf.mxu0
        %v7523 = vadd.f32 %v7434, %v7522
        %7524 = vmatmul.bf16.gmra.mxu0 %v5122
        %v7525 = vpop.f32.mrf.mxu0
        %v7526 = vadd.f32 %v7437, %v7525
        %v7527 = vpop.f32.mrf.mxu0
        %v7528 = vadd.f32 %v7439, %v7527
        %7529 = vmatmul.bf16.gmra.mxu0 %v5146
        %v7530 = vpop.f32.mrf.mxu0
        %v7531 = vadd.f32 %v7442, %v7530
        %v7532 = vpop.f32.mrf.mxu0
        %v7533 = vadd.f32 %v7444, %v7532
        %7534 = vmatmul.bf16.gmra.mxu0 %v5170
        %v7535 = vpop.f32.mrf.mxu0
        %v7536 = vadd.f32 %v7447, %v7535
        %v7537 = vpop.f32.mrf.mxu0
        %v7538 = vadd.f32 %v7449, %v7537
        %7539 = vmatmul.bf16.gmra.mxu0 %v5194
        %v7540 = vpop.f32.mrf.mxu0
        %v7541 = vadd.f32 %v7452, %v7540
        %v7542 = vpop.f32.mrf.mxu0
        %v7543 = vadd.f32 %v7454, %v7542
        %7544 = vmatmul.bf16.gmra.mxu0 %v5218
        %v7545 = vpop.f32.mrf.mxu0
        %v7546 = vadd.f32 %v7457, %v7545
        %v7547 = vpop.f32.mrf.mxu0
        %v7548 = vadd.f32 %v7459, %v7547
        %7549 = vmatmul.bf16.gmra.mxu0 %v5242
        %v7550 = vpop.f32.mrf.mxu0
        %v7551 = vadd.f32 %v7462, %v7550
        %v7552 = vpop.f32.mrf.mxu0
        %v7553 = vadd.f32 %v7464, %v7552
        %7554 = vmatmul.bf16.gmra.mxu0 %v5521
        %v7555 = vpop.f32.mrf.mxu0
        %v7556 = vadd.f32 %v7467, %v7555
        %v7557 = vpop.f32.mrf.mxu0
        %v7558 = vadd.f32 %v7469, %v7557
        %7559 = vdwg.mxu0
        %7560 = vmatpush.bf16.msra.mxu0 %v6550
        %7561 = vmatpush.bf16.msra.mxu0 %v6549
        %7562 = vmatpush.bf16.msra.mxu0 %v6548
        %7563 = vmatpush.bf16.msra.mxu0 %v6547
        %7564 = vmatpush.bf16.msra.mxu0 %v6546
        %7565 = vmatpush.bf16.msra.mxu0 %v6545
        %7566 = vmatpush.bf16.msra.mxu0 %v6544
        %7567 = vmatpush.bf16.msra.mxu0 %v6543
        %7568 = vmatmul.bf16.gmra.mxu0 %v4918
        %v7569 = vpop.f32.mrf.mxu0
        %v7570 = vadd.f32 %v7481, %v7569
        %v7571 = vpop.f32.mrf.mxu0
        %v7572 = vadd.f32 %v7483, %v7571
        %7573 = vmatmul.bf16.gmra.mxu0 %v4942
        %v7574 = vpop.f32.mrf.mxu0
        %v7575 = vadd.f32 %v7486, %v7574
        %v7576 = vpop.f32.mrf.mxu0
        %v7577 = vadd.f32 %v7488, %v7576
        %7578 = vmatmul.bf16.gmra.mxu0 %v4966
        %v7579 = vpop.f32.mrf.mxu0
        %v7580 = vadd.f32 %v7491, %v7579
        %v7581 = vpop.f32.mrf.mxu0
        %v7582 = vadd.f32 %v7493, %v7581
        %7583 = vmatmul.bf16.gmra.mxu0 %v4990
        %v7584 = vpop.f32.mrf.mxu0
        %v7585 = vadd.f32 %v7496, %v7584
        %v7586 = vpop.f32.mrf.mxu0
        %v7587 = vadd.f32 %v7498, %v7586
        %7588 = vmatmul.bf16.gmra.mxu0 %v5014
        %v7589 = vpop.f32.mrf.mxu0
        %v7590 = vadd.f32 %v7501, %v7589
        %v7591 = vpop.f32.mrf.mxu0
        %v7592 = vadd.f32 %v7503, %v7591
        %7593 = vmatmul.bf16.gmra.mxu0 %v5038
        %v7594 = vpop.f32.mrf.mxu0
        %v7595 = vadd.f32 %v7506, %v7594
        %v7596 = vpop.f32.mrf.mxu0
        %v7597 = vadd.f32 %v7508, %v7596
        %7598 = vmatmul.bf16.gmra.mxu0 %v5062
        %v7599 = vpop.f32.mrf.mxu0
        %v7600 = vadd.f32 %v7511, %v7599
        %v7601 = vpop.f32.mrf.mxu0
        %v7602 = vadd.f32 %v7513, %v7601
        %7603 = vmatmul.bf16.gmra.mxu0 %v5086
        %v7604 = vpop.f32.mrf.mxu0
        %v7605 = vadd.f32 %v7516, %v7604
        %v7606 = vpop.f32.mrf.mxu0
        %v7607 = vadd.f32 %v7518, %v7606
        %7608 = vmatmul.bf16.gmra.mxu0 %v5110
        %v7609 = vpop.f32.mrf.mxu0
        %v7610 = vadd.f32 %v7521, %v7609
        %v7611 = vpop.f32.mrf.mxu0
        %v7612 = vadd.f32 %v7523, %v7611
        %7613 = vmatmul.bf16.gmra.mxu0 %v5134
        %v7614 = vpop.f32.mrf.mxu0
        %v7615 = vadd.f32 %v7526, %v7614
        %v7616 = vpop.f32.mrf.mxu0
        %v7617 = vadd.f32 %v7528, %v7616
        %7618 = vmatmul.bf16.gmra.mxu0 %v5158
        %v7619 = vpop.f32.mrf.mxu0
        %v7620 = vadd.f32 %v7531, %v7619
        %v7621 = vpop.f32.mrf.mxu0
        %v7622 = vadd.f32 %v7533, %v7621
        %7623 = vmatmul.bf16.gmra.mxu0 %v5182
        %v7624 = vpop.f32.mrf.mxu0
        %v7625 = vadd.f32 %v7536, %v7624
        %v7626 = vpop.f32.mrf.mxu0
        %v7627 = vadd.f32 %v7538, %v7626
        %7628 = vmatmul.bf16.gmra.mxu0 %v5206
        %v7629 = vpop.f32.mrf.mxu0
        %v7630 = vadd.f32 %v7541, %v7629
        %v7631 = vpop.f32.mrf.mxu0
        %v7632 = vadd.f32 %v7543, %v7631
        %7633 = vmatmul.bf16.gmra.mxu0 %v5230
        %v7634 = vpop.f32.mrf.mxu0
        %v7635 = vadd.f32 %v7546, %v7634
        %v7636 = vpop.f32.mrf.mxu0
        %v7637 = vadd.f32 %v7548, %v7636
        %7638 = vmatmul.bf16.gmra.mxu0 %v5254
        %v7639 = vpop.f32.mrf.mxu0
        %v7640 = vadd.f32 %v7551, %v7639
        %v7641 = vpop.f32.mrf.mxu0
        %v7642 = vadd.f32 %v7553, %v7641
        %7643 = vmatmul.bf16.gmra.mxu0 %v5533
        %v7644 = vpop.f32.mrf.mxu0
        %v7645 = vadd.f32 %v7556, %v7644
        %v7646 = vpop.f32.mrf.mxu0
        %v7647 = vadd.f32 %v7558, %v7646
        %7648 = vdwg.mxu0
        %7649 = vmatpush.bf16.msra.mxu0 %v6558
        %7650 = vmatpush.bf16.msra.mxu0 %v6557
        %7651 = vmatpush.bf16.msra.mxu0 %v6556
        %7652 = vmatpush.bf16.msra.mxu0 %v6555
        %7653 = vmatpush.bf16.msra.mxu0 %v6554
        %7654 = vmatpush.bf16.msra.mxu0 %v6553
        %7655 = vmatpush.bf16.msra.mxu0 %v6552
        %7656 = vmatpush.bf16.msra.mxu0 %v6551
        %7657 = vmatmul.bf16.gmra.mxu0 %v5375
        %v7658 = vpop.f32.mrf.mxu0
        %v7659 = vadd.f32 %v7570, %v7658
        %v7660 = vpop.f32.mrf.mxu0
        %v7661 = vadd.f32 %v7572, %v7660
        %7662 = vmatmul.bf16.gmra.mxu0 %v5381
        %v7663 = vpop.f32.mrf.mxu0
        %v7664 = vadd.f32 %v7575, %v7663
        %v7665 = vpop.f32.mrf.mxu0
        %v7666 = vadd.f32 %v7577, %v7665
        %7667 = vmatmul.bf16.gmra.mxu0 %v5387
        %v7668 = vpop.f32.mrf.mxu0
        %v7669 = vadd.f32 %v7580, %v7668
        %v7670 = vpop.f32.mrf.mxu0
        %v7671 = vadd.f32 %v7582, %v7670
        %7672 = vmatmul.bf16.gmra.mxu0 %v5393
        %v7673 = vpop.f32.mrf.mxu0
        %v7674 = vadd.f32 %v7585, %v7673
        %v7675 = vpop.f32.mrf.mxu0
        %v7676 = vadd.f32 %v7587, %v7675
        %7677 = vmatmul.bf16.gmra.mxu0 %v5399
        %v7678 = vpop.f32.mrf.mxu0
        %v7679 = vadd.f32 %v7590, %v7678
        %v7680 = vpop.f32.mrf.mxu0
        %v7681 = vadd.f32 %v7592, %v7680
        %7682 = vmatmul.bf16.gmra.mxu0 %v5405
        %v7683 = vpop.f32.mrf.mxu0
        %v7684 = vadd.f32 %v7595, %v7683
        %v7685 = vpop.f32.mrf.mxu0
        %v7686 = vadd.f32 %v7597, %v7685
        %7687 = vmatmul.bf16.gmra.mxu0 %v5411
        %v7688 = vpop.f32.mrf.mxu0
        %v7689 = vadd.f32 %v7600, %v7688
        %v7690 = vpop.f32.mrf.mxu0
        %v7691 = vadd.f32 %v7602, %v7690
        %7692 = vmatmul.bf16.gmra.mxu0 %v5417
        %v7693 = vpop.f32.mrf.mxu0
        %v7694 = vadd.f32 %v7605, %v7693
        %v7695 = vpop.f32.mrf.mxu0
        %v7696 = vadd.f32 %v7607, %v7695
        %7697 = vmatmul.bf16.gmra.mxu0 %v5423
        %v7698 = vpop.f32.mrf.mxu0
        %v7699 = vadd.f32 %v7610, %v7698
        %v7700 = vpop.f32.mrf.mxu0
        %v7701 = vadd.f32 %v7612, %v7700
        %7702 = vmatmul.bf16.gmra.mxu0 %v5429
        %v7703 = vpop.f32.mrf.mxu0
        %v7704 = vadd.f32 %v7615, %v7703
        %v7705 = vpop.f32.mrf.mxu0
        %v7706 = vadd.f32 %v7617, %v7705
        %7707 = vmatmul.bf16.gmra.mxu0 %v5435
        %v7708 = vpop.f32.mrf.mxu0
        %v7709 = vadd.f32 %v7620, %v7708
        %v7710 = vpop.f32.mrf.mxu0
        %v7711 = vadd.f32 %v7622, %v7710
        %7712 = vmatmul.bf16.gmra.mxu0 %v5441
        %v7713 = vpop.f32.mrf.mxu0
        %v7714 = vadd.f32 %v7625, %v7713
        %v7715 = vpop.f32.mrf.mxu0
        %v7716 = vadd.f32 %v7627, %v7715
        %7717 = vmatmul.bf16.gmra.mxu0 %v5447
        %v7718 = vpop.f32.mrf.mxu0
        %v7719 = vadd.f32 %v7630, %v7718
        %v7720 = vpop.f32.mrf.mxu0
        %v7721 = vadd.f32 %v7632, %v7720
        %7722 = vmatmul.bf16.gmra.mxu0 %v5453
        %v7723 = vpop.f32.mrf.mxu0
        %v7724 = vadd.f32 %v7635, %v7723
        %v7725 = vpop.f32.mrf.mxu0
        %v7726 = vadd.f32 %v7637, %v7725
        %7727 = vmatmul.bf16.gmra.mxu0 %v5459
        %v7728 = vpop.f32.mrf.mxu0
        %v7729 = vadd.f32 %v7640, %v7728
        %v7730 = vpop.f32.mrf.mxu0
        %v7731 = vadd.f32 %v7642, %v7730
        %7732 = vmatmul.bf16.gmra.mxu0 %v5543
        %v7733 = vpop.f32.mrf.mxu0
        %v7734 = vadd.f32 %v7645, %v7733
        %v7735 = vpop.f32.mrf.mxu0
        %v7736 = vadd.f32 %v7647, %v7735
        %7737 = vdwg.mxu0
        %7738 = vmatpush.bf16.msra.mxu0 %v6566
        %7739 = vmatpush.bf16.msra.mxu0 %v6565
        %7740 = vmatpush.bf16.msra.mxu0 %v6564
        %7741 = vmatpush.bf16.msra.mxu0 %v6563
        %7742 = vmatpush.bf16.msra.mxu0 %v6562
        %7743 = vmatpush.bf16.msra.mxu0 %v6561
        %7744 = vmatpush.bf16.msra.mxu0 %v6560
        %7745 = vmatpush.bf16.msra.mxu0 %v6559
        %7746 = vmatmul.bf16.gmra.mxu0 %v5378
        %v7747 = vpop.f32.mrf.mxu0
        %v7748 = vadd.f32 %v7659, %v7747
        %v7749 = vpop.f32.mrf.mxu0
        %v7750 = vadd.f32 %v7661, %v7749
        %7751 = vmatmul.bf16.gmra.mxu0 %v5384
        %v7752 = vpop.f32.mrf.mxu0
        %v7753 = vadd.f32 %v7664, %v7752
        %v7754 = vpop.f32.mrf.mxu0
        %v7755 = vadd.f32 %v7666, %v7754
        %7756 = vmatmul.bf16.gmra.mxu0 %v5390
        %v7757 = vpop.f32.mrf.mxu0
        %v7758 = vadd.f32 %v7669, %v7757
        %v7759 = vpop.f32.mrf.mxu0
        %v7760 = vadd.f32 %v7671, %v7759
        %7761 = vmatmul.bf16.gmra.mxu0 %v5396
        %v7762 = vpop.f32.mrf.mxu0
        %v7763 = vadd.f32 %v7674, %v7762
        %v7764 = vpop.f32.mrf.mxu0
        %v7765 = vadd.f32 %v7676, %v7764
        %7766 = vmatmul.bf16.gmra.mxu0 %v5402
        %v7767 = vpop.f32.mrf.mxu0
        %v7768 = vadd.f32 %v7679, %v7767
        %v7769 = vpop.f32.mrf.mxu0
        %v7770 = vadd.f32 %v7681, %v7769
        %7771 = vmatmul.bf16.gmra.mxu0 %v5408
        %v7772 = vpop.f32.mrf.mxu0
        %v7773 = vadd.f32 %v7684, %v7772
        %v7774 = vpop.f32.mrf.mxu0
        %v7775 = vadd.f32 %v7686, %v7774
        %7776 = vmatmul.bf16.gmra.mxu0 %v5414
        %v7777 = vpop.f32.mrf.mxu0
        %v7778 = vadd.f32 %v7689, %v7777
        %v7779 = vpop.f32.mrf.mxu0
        %v7780 = vadd.f32 %v7691, %v7779
        %7781 = vmatmul.bf16.gmra.mxu0 %v5420
        %v7782 = vpop.f32.mrf.mxu0
        %v7783 = vadd.f32 %v7694, %v7782
        %v7784 = vpop.f32.mrf.mxu0
        %v7785 = vadd.f32 %v7696, %v7784
        %7786 = vmatmul.bf16.gmra.mxu0 %v5426
        %v7787 = vpop.f32.mrf.mxu0
        %v7788 = vadd.f32 %v7699, %v7787
        %v7789 = vpop.f32.mrf.mxu0
        %v7790 = vadd.f32 %v7701, %v7789
        %7791 = vmatmul.bf16.gmra.mxu0 %v5432
        %v7792 = vpop.f32.mrf.mxu0
        %v7793 = vadd.f32 %v7704, %v7792
        %v7794 = vpop.f32.mrf.mxu0
        %v7795 = vadd.f32 %v7706, %v7794
        %7796 = vmatmul.bf16.gmra.mxu0 %v5438
        %v7797 = vpop.f32.mrf.mxu0
        %v7798 = vadd.f32 %v7709, %v7797
        %v7799 = vpop.f32.mrf.mxu0
        %v7800 = vadd.f32 %v7711, %v7799
        %7801 = vmatmul.bf16.gmra.mxu0 %v5444
        %v7802 = vpop.f32.mrf.mxu0
        %v7803 = vadd.f32 %v7714, %v7802
        %v7804 = vpop.f32.mrf.mxu0
        %v7805 = vadd.f32 %v7716, %v7804
        %7806 = vmatmul.bf16.gmra.mxu0 %v5450
        %v7807 = vpop.f32.mrf.mxu0
        %v7808 = vadd.f32 %v7719, %v7807
        %v7809 = vpop.f32.mrf.mxu0
        %v7810 = vadd.f32 %v7721, %v7809
        %7811 = vmatmul.bf16.gmra.mxu0 %v5456
        %v7812 = vpop.f32.mrf.mxu0
        %v7813 = vadd.f32 %v7724, %v7812
        %v7814 = vpop.f32.mrf.mxu0
        %v7815 = vadd.f32 %v7726, %v7814
        %7816 = vmatmul.bf16.gmra.mxu0 %v5462
        %v7817 = vpop.f32.mrf.mxu0
        %v7818 = vadd.f32 %v7729, %v7817
        %v7819 = vpop.f32.mrf.mxu0
        %v7820 = vadd.f32 %v7731, %v7819
        %7821 = vmatmul.bf16.gmra.mxu0 %v5546
        %v7822 = vpop.f32.mrf.mxu0
        %v7823 = vadd.f32 %v7734, %v7822
        %v7824 = vpop.f32.mrf.mxu0
        %v7825 = vadd.f32 %v7736, %v7824
        %7826 = vdwg.mxu0
        %7827 = vmatpush.bf16.msra.mxu0 %v6574
        %7828 = vmatpush.bf16.msra.mxu0 %v6573
        %7829 = vmatpush.bf16.msra.mxu0 %v6572
        %7830 = vmatpush.bf16.msra.mxu0 %v6571
        %7831 = vmatpush.bf16.msra.mxu0 %v6570
        %7832 = vmatpush.bf16.msra.mxu0 %v6569
        %7833 = vmatpush.bf16.msra.mxu0 %v6568
        %7834 = vmatpush.bf16.msra.mxu0 %v6567
        %7835 = vmatmul.bf16.gmra.mxu0 %v4731
        %v7836 = vpop.f32.mrf.mxu0
        %v7837 = vadd.f32 %v7748, %v7836
        %v7838 = vpop.f32.mrf.mxu0
        %v7839 = vadd.f32 %v7750, %v7838
        %7840 = vmatmul.bf16.gmra.mxu0 %v4733
        %v7841 = vpop.f32.mrf.mxu0
        %v7842 = vadd.f32 %v7753, %v7841
        %v7843 = vpop.f32.mrf.mxu0
        %v7844 = vadd.f32 %v7755, %v7843
        %7845 = vmatmul.bf16.gmra.mxu0 %v4735
        %v7846 = vpop.f32.mrf.mxu0
        %v7847 = vadd.f32 %v7758, %v7846
        %v7848 = vpop.f32.mrf.mxu0
        %v7849 = vadd.f32 %v7760, %v7848
        %7850 = vmatmul.bf16.gmra.mxu0 %v4737
        %v7851 = vpop.f32.mrf.mxu0
        %v7852 = vadd.f32 %v7763, %v7851
        %v7853 = vpop.f32.mrf.mxu0
        %v7854 = vadd.f32 %v7765, %v7853
        %7855 = vmatmul.bf16.gmra.mxu0 %v4739
        %v7856 = vpop.f32.mrf.mxu0
        %v7857 = vadd.f32 %v7768, %v7856
        %v7858 = vpop.f32.mrf.mxu0
        %v7859 = vadd.f32 %v7770, %v7858
        %7860 = vmatmul.bf16.gmra.mxu0 %v4741
        %v7861 = vpop.f32.mrf.mxu0
        %v7862 = vadd.f32 %v7773, %v7861
        %v7863 = vpop.f32.mrf.mxu0
        %v7864 = vadd.f32 %v7775, %v7863
        %7865 = vmatmul.bf16.gmra.mxu0 %v4743
        %v7866 = vpop.f32.mrf.mxu0
        %v7867 = vadd.f32 %v7778, %v7866
        %v7868 = vpop.f32.mrf.mxu0
        %v7869 = vadd.f32 %v7780, %v7868
        %7870 = vmatmul.bf16.gmra.mxu0 %v4745
        %v7871 = vpop.f32.mrf.mxu0
        %v7872 = vadd.f32 %v7783, %v7871
        %v7873 = vpop.f32.mrf.mxu0
        %v7874 = vadd.f32 %v7785, %v7873
        %7875 = vmatmul.bf16.gmra.mxu0 %v4747
        %v7876 = vpop.f32.mrf.mxu0
        %v7877 = vadd.f32 %v7788, %v7876
        %v7878 = vpop.f32.mrf.mxu0
        %v7879 = vadd.f32 %v7790, %v7878
        %7880 = vmatmul.bf16.gmra.mxu0 %v4749
        %v7881 = vpop.f32.mrf.mxu0
        %v7882 = vadd.f32 %v7793, %v7881
        %v7883 = vpop.f32.mrf.mxu0
        %v7884 = vadd.f32 %v7795, %v7883
        %7885 = vmatmul.bf16.gmra.mxu0 %v4751
        %v7886 = vpop.f32.mrf.mxu0
        %v7887 = vadd.f32 %v7798, %v7886
        %v7888 = vpop.f32.mrf.mxu0
        %v7889 = vadd.f32 %v7800, %v7888
        %7890 = vmatmul.bf16.gmra.mxu0 %v4753
        %v7891 = vpop.f32.mrf.mxu0
        %v7892 = vadd.f32 %v7803, %v7891
        %v7893 = vpop.f32.mrf.mxu0
        %v7894 = vadd.f32 %v7805, %v7893
        %7895 = vmatmul.bf16.gmra.mxu0 %v4755
        %v7896 = vpop.f32.mrf.mxu0
        %v7897 = vadd.f32 %v7808, %v7896
        %v7898 = vpop.f32.mrf.mxu0
        %v7899 = vadd.f32 %v7810, %v7898
        %7900 = vmatmul.bf16.gmra.mxu0 %v4757
        %v7901 = vpop.f32.mrf.mxu0
        %v7902 = vadd.f32 %v7813, %v7901
        %v7903 = vpop.f32.mrf.mxu0
        %v7904 = vadd.f32 %v7815, %v7903
        %7905 = vmatmul.bf16.gmra.mxu0 %v5501
        %v7906 = vpop.f32.mrf.mxu0
        %v7907 = vadd.f32 %v7818, %v7906
        %v7908 = vpop.f32.mrf.mxu0
        %v7909 = vadd.f32 %v7820, %v7908
        %7910 = vmatmul.bf16.gmra.mxu0 %v5555
        %v7911 = vpop.f32.mrf.mxu0
        %v7912 = vadd.f32 %v7823, %v7911
        %v7913 = vpop.f32.mrf.mxu0
        %v7914 = vadd.f32 %v7825, %v7913
        %7915 = vdwg.mxu0
        %7916 = vmatpush.bf16.msra.mxu0 %v6582
        %7917 = vmatpush.bf16.msra.mxu0 %v6581
        %7918 = vmatpush.bf16.msra.mxu0 %v6580
        %7919 = vmatpush.bf16.msra.mxu0 %v6579
        %7920 = vmatpush.bf16.msra.mxu0 %v6578
        %7921 = vmatpush.bf16.msra.mxu0 %v6577
        %7922 = vmatpush.bf16.msra.mxu0 %v6576
        %7923 = vmatpush.bf16.msra.mxu0 %v6575
        %7924 = vmatmul.bf16.gmra.mxu0 %v4732
        %v7925 = vpop.f32.mrf.mxu0
        %v7926 = vadd.f32 %v7837, %v7925
        %v7927 = vpop.f32.mrf.mxu0
        %v7928 = vadd.f32 %v7839, %v7927
        %7929 = vmatmul.bf16.gmra.mxu0 %v4734
        %v7930 = vpop.f32.mrf.mxu0
        %v7931 = vadd.f32 %v7842, %v7930
        %v7932 = vpop.f32.mrf.mxu0
        %v7933 = vadd.f32 %v7844, %v7932
        %7934 = vmatmul.bf16.gmra.mxu0 %v4736
        %v7935 = vpop.f32.mrf.mxu0
        %v7936 = vadd.f32 %v7847, %v7935
        %v7937 = vpop.f32.mrf.mxu0
        %v7938 = vadd.f32 %v7849, %v7937
        %7939 = vmatmul.bf16.gmra.mxu0 %v4738
        %v7940 = vpop.f32.mrf.mxu0
        %v7941 = vadd.f32 %v7852, %v7940
        %v7942 = vpop.f32.mrf.mxu0
        %v7943 = vadd.f32 %v7854, %v7942
        %7944 = vmatmul.bf16.gmra.mxu0 %v4740
        %v7945 = vpop.f32.mrf.mxu0
        %v7946 = vadd.f32 %v7857, %v7945
        %v7947 = vpop.f32.mrf.mxu0
        %v7948 = vadd.f32 %v7859, %v7947
        %7949 = vmatmul.bf16.gmra.mxu0 %v4742
        %v7950 = vpop.f32.mrf.mxu0
        %v7951 = vadd.f32 %v7862, %v7950
        %v7952 = vpop.f32.mrf.mxu0
        %v7953 = vadd.f32 %v7864, %v7952
        %7954 = vmatmul.bf16.gmra.mxu0 %v4744
        %v7955 = vpop.f32.mrf.mxu0
        %v7956 = vadd.f32 %v7867, %v7955
        %v7957 = vpop.f32.mrf.mxu0
        %v7958 = vadd.f32 %v7869, %v7957
        %7959 = vmatmul.bf16.gmra.mxu0 %v4746
        %v7960 = vpop.f32.mrf.mxu0
        %v7961 = vadd.f32 %v7872, %v7960
        %v7962 = vpop.f32.mrf.mxu0
        %v7963 = vadd.f32 %v7874, %v7962
        %7964 = vmatmul.bf16.gmra.mxu0 %v4748
        %v7965 = vpop.f32.mrf.mxu0
        %v7966 = vadd.f32 %v7877, %v7965
        %v7967 = vpop.f32.mrf.mxu0
        %v7968 = vadd.f32 %v7879, %v7967
        %7969 = vmatmul.bf16.gmra.mxu0 %v4750
        %v7970 = vpop.f32.mrf.mxu0
        %v7971 = vadd.f32 %v7882, %v7970
        %v7972 = vpop.f32.mrf.mxu0
        %v7973 = vadd.f32 %v7884, %v7972
        %7974 = vmatmul.bf16.gmra.mxu0 %v4752
        %v7975 = vpop.f32.mrf.mxu0
        %v7976 = vadd.f32 %v7887, %v7975
        %v7977 = vpop.f32.mrf.mxu0
        %v7978 = vadd.f32 %v7889, %v7977
        %7979 = vmatmul.bf16.gmra.mxu0 %v4754
        %v7980 = vpop.f32.mrf.mxu0
        %v7981 = vadd.f32 %v7892, %v7980
        %v7982 = vpop.f32.mrf.mxu0
        %v7983 = vadd.f32 %v7894, %v7982
        %7984 = vmatmul.bf16.gmra.mxu0 %v4756
        %v7985 = vpop.f32.mrf.mxu0
        %v7986 = vadd.f32 %v7897, %v7985
        %v7987 = vpop.f32.mrf.mxu0
        %v7988 = vadd.f32 %v7899, %v7987
        %7989 = vmatmul.bf16.gmra.mxu0 %v4758
        %v7990 = vpop.f32.mrf.mxu0
        %v7991 = vadd.f32 %v7902, %v7990
        %v7992 = vpop.f32.mrf.mxu0
        %v7993 = vadd.f32 %v7904, %v7992
        %7994 = vmatmul.bf16.gmra.mxu0 %v5502
        %v7995 = vpop.f32.mrf.mxu0
        %v7996 = vadd.f32 %v7907, %v7995
        %v7997 = vpop.f32.mrf.mxu0
        %v7998 = vadd.f32 %v7909, %v7997
        %7999 = vmatmul.bf16.gmra.mxu0 %v5556
        %v8000 = vpop.f32.mrf.mxu0
        %v8001 = vadd.f32 %v7912, %v8000
        %v8002 = vpop.f32.mrf.mxu0
        %v8003 = vadd.f32 %v7914, %v8002
        %8004 = vdwg.mxu0
        %8005 = vmatpush.bf16.msra.mxu0 %v6590
        %8006 = vmatpush.bf16.msra.mxu0 %v6589
        %8007 = vmatpush.bf16.msra.mxu0 %v6588
        %8008 = vmatpush.bf16.msra.mxu0 %v6587
        %8009 = vmatpush.bf16.msra.mxu0 %v6586
        %8010 = vmatpush.bf16.msra.mxu0 %v6585
        %8011 = vmatpush.bf16.msra.mxu0 %v6584
        %8012 = vmatpush.bf16.msra.mxu0 %v6583
        %8013 = vmatmul.bf16.gmra.mxu0 %v4930
        %v8014 = vpop.f32.mrf.mxu0
        %v8015 = vadd.f32 %v7926, %v8014
        %v8016 = vpop.f32.mrf.mxu0
        %v8017 = vadd.f32 %v7928, %v8016
        %8018 = vmatmul.bf16.gmra.mxu0 %v4954
        %v8019 = vpop.f32.mrf.mxu0
        %v8020 = vadd.f32 %v7931, %v8019
        %v8021 = vpop.f32.mrf.mxu0
        %v8022 = vadd.f32 %v7933, %v8021
        %8023 = vmatmul.bf16.gmra.mxu0 %v4978
        %v8024 = vpop.f32.mrf.mxu0
        %v8025 = vadd.f32 %v7936, %v8024
        %v8026 = vpop.f32.mrf.mxu0
        %v8027 = vadd.f32 %v7938, %v8026
        %8028 = vmatmul.bf16.gmra.mxu0 %v5002
        %v8029 = vpop.f32.mrf.mxu0
        %v8030 = vadd.f32 %v7941, %v8029
        %v8031 = vpop.f32.mrf.mxu0
        %v8032 = vadd.f32 %v7943, %v8031
        %8033 = vmatmul.bf16.gmra.mxu0 %v5026
        %v8034 = vpop.f32.mrf.mxu0
        %v8035 = vadd.f32 %v7946, %v8034
        %v8036 = vpop.f32.mrf.mxu0
        %v8037 = vadd.f32 %v7948, %v8036
        %8038 = vmatmul.bf16.gmra.mxu0 %v5050
        %v8039 = vpop.f32.mrf.mxu0
        %v8040 = vadd.f32 %v7951, %v8039
        %v8041 = vpop.f32.mrf.mxu0
        %v8042 = vadd.f32 %v7953, %v8041
        %8043 = vmatmul.bf16.gmra.mxu0 %v5074
        %v8044 = vpop.f32.mrf.mxu0
        %v8045 = vadd.f32 %v7956, %v8044
        %v8046 = vpop.f32.mrf.mxu0
        %v8047 = vadd.f32 %v7958, %v8046
        %8048 = vmatmul.bf16.gmra.mxu0 %v5098
        %v8049 = vpop.f32.mrf.mxu0
        %v8050 = vadd.f32 %v7961, %v8049
        %v8051 = vpop.f32.mrf.mxu0
        %v8052 = vadd.f32 %v7963, %v8051
        %8053 = vmatmul.bf16.gmra.mxu0 %v5122
        %v8054 = vpop.f32.mrf.mxu0
        %v8055 = vadd.f32 %v7966, %v8054
        %v8056 = vpop.f32.mrf.mxu0
        %v8057 = vadd.f32 %v7968, %v8056
        %8058 = vmatmul.bf16.gmra.mxu0 %v5146
        %v8059 = vpop.f32.mrf.mxu0
        %v8060 = vadd.f32 %v7971, %v8059
        %v8061 = vpop.f32.mrf.mxu0
        %v8062 = vadd.f32 %v7973, %v8061
        %8063 = vmatmul.bf16.gmra.mxu0 %v5170
        %v8064 = vpop.f32.mrf.mxu0
        %v8065 = vadd.f32 %v7976, %v8064
        %v8066 = vpop.f32.mrf.mxu0
        %v8067 = vadd.f32 %v7978, %v8066
        %8068 = vmatmul.bf16.gmra.mxu0 %v5194
        %v8069 = vpop.f32.mrf.mxu0
        %v8070 = vadd.f32 %v7981, %v8069
        %v8071 = vpop.f32.mrf.mxu0
        %v8072 = vadd.f32 %v7983, %v8071
        %8073 = vmatmul.bf16.gmra.mxu0 %v5218
        %v8074 = vpop.f32.mrf.mxu0
        %v8075 = vadd.f32 %v7986, %v8074
        %v8076 = vpop.f32.mrf.mxu0
        %v8077 = vadd.f32 %v7988, %v8076
        %8078 = vmatmul.bf16.gmra.mxu0 %v5242
        %v8079 = vpop.f32.mrf.mxu0
        %v8080 = vadd.f32 %v7991, %v8079
        %v8081 = vpop.f32.mrf.mxu0
        %v8082 = vadd.f32 %v7993, %v8081
        %8083 = vmatmul.bf16.gmra.mxu0 %v5521
        %v8084 = vpop.f32.mrf.mxu0
        %v8085 = vadd.f32 %v7996, %v8084
        %v8086 = vpop.f32.mrf.mxu0
        %v8087 = vadd.f32 %v7998, %v8086
        %8088 = vmatmul.bf16.gmra.mxu0 %v5575
        %v8089 = vpop.f32.mrf.mxu0
        %v8090 = vadd.f32 %v8001, %v8089
        %v8091 = vpop.f32.mrf.mxu0
        %v8092 = vadd.f32 %v8003, %v8091
        %8093 = vdwg.mxu0
        %8094 = vmatpush.bf16.msra.mxu0 %v6598
        %8095 = vmatpush.bf16.msra.mxu0 %v6597
        %8096 = vmatpush.bf16.msra.mxu0 %v6596
        %8097 = vmatpush.bf16.msra.mxu0 %v6595
        %8098 = vmatpush.bf16.msra.mxu0 %v6594
        %8099 = vmatpush.bf16.msra.mxu0 %v6593
        %8100 = vmatpush.bf16.msra.mxu0 %v6592
        %8101 = vmatpush.bf16.msra.mxu0 %v6591
        %8102 = vmatmul.bf16.gmra.mxu0 %v4942
        %v8103 = vpop.f32.mrf.mxu0
        %v8104 = vadd.f32 %v8015, %v8103
        %v8105 = vpop.f32.mrf.mxu0
        %v8106 = vadd.f32 %v8017, %v8105
        %8107 = vmatmul.bf16.gmra.mxu0 %v4966
        %v8108 = vpop.f32.mrf.mxu0
        %v8109 = vadd.f32 %v8020, %v8108
        %v8110 = vpop.f32.mrf.mxu0
        %v8111 = vadd.f32 %v8022, %v8110
        %8112 = vmatmul.bf16.gmra.mxu0 %v4990
        %v8113 = vpop.f32.mrf.mxu0
        %v8114 = vadd.f32 %v8025, %v8113
        %v8115 = vpop.f32.mrf.mxu0
        %v8116 = vadd.f32 %v8027, %v8115
        %8117 = vmatmul.bf16.gmra.mxu0 %v5014
        %v8118 = vpop.f32.mrf.mxu0
        %v8119 = vadd.f32 %v8030, %v8118
        %v8120 = vpop.f32.mrf.mxu0
        %v8121 = vadd.f32 %v8032, %v8120
        %8122 = vmatmul.bf16.gmra.mxu0 %v5038
        %v8123 = vpop.f32.mrf.mxu0
        %v8124 = vadd.f32 %v8035, %v8123
        %v8125 = vpop.f32.mrf.mxu0
        %v8126 = vadd.f32 %v8037, %v8125
        %8127 = vmatmul.bf16.gmra.mxu0 %v5062
        %v8128 = vpop.f32.mrf.mxu0
        %v8129 = vadd.f32 %v8040, %v8128
        %v8130 = vpop.f32.mrf.mxu0
        %v8131 = vadd.f32 %v8042, %v8130
        %8132 = vmatmul.bf16.gmra.mxu0 %v5086
        %v8133 = vpop.f32.mrf.mxu0
        %v8134 = vadd.f32 %v8045, %v8133
        %v8135 = vpop.f32.mrf.mxu0
        %v8136 = vadd.f32 %v8047, %v8135
        %8137 = vmatmul.bf16.gmra.mxu0 %v5110
        %v8138 = vpop.f32.mrf.mxu0
        %v8139 = vadd.f32 %v8050, %v8138
        %v8140 = vpop.f32.mrf.mxu0
        %v8141 = vadd.f32 %v8052, %v8140
        %8142 = vmatmul.bf16.gmra.mxu0 %v5134
        %v8143 = vpop.f32.mrf.mxu0
        %v8144 = vadd.f32 %v8055, %v8143
        %v8145 = vpop.f32.mrf.mxu0
        %v8146 = vadd.f32 %v8057, %v8145
        %8147 = vmatmul.bf16.gmra.mxu0 %v5158
        %v8148 = vpop.f32.mrf.mxu0
        %v8149 = vadd.f32 %v8060, %v8148
        %v8150 = vpop.f32.mrf.mxu0
        %v8151 = vadd.f32 %v8062, %v8150
        %8152 = vmatmul.bf16.gmra.mxu0 %v5182
        %v8153 = vpop.f32.mrf.mxu0
        %v8154 = vadd.f32 %v8065, %v8153
        %v8155 = vpop.f32.mrf.mxu0
        %v8156 = vadd.f32 %v8067, %v8155
        %8157 = vmatmul.bf16.gmra.mxu0 %v5206
        %v8158 = vpop.f32.mrf.mxu0
        %v8159 = vadd.f32 %v8070, %v8158
        %v8160 = vpop.f32.mrf.mxu0
        %v8161 = vadd.f32 %v8072, %v8160
        %8162 = vmatmul.bf16.gmra.mxu0 %v5230
        %v8163 = vpop.f32.mrf.mxu0
        %v8164 = vadd.f32 %v8075, %v8163
        %v8165 = vpop.f32.mrf.mxu0
        %v8166 = vadd.f32 %v8077, %v8165
        %8167 = vmatmul.bf16.gmra.mxu0 %v5254
        %v8168 = vpop.f32.mrf.mxu0
        %v8169 = vadd.f32 %v8080, %v8168
        %v8170 = vpop.f32.mrf.mxu0
        %v8171 = vadd.f32 %v8082, %v8170
        %8172 = vmatmul.bf16.gmra.mxu0 %v5533
        %v8173 = vpop.f32.mrf.mxu0
        %v8174 = vadd.f32 %v8085, %v8173
        %v8175 = vpop.f32.mrf.mxu0
        %v8176 = vadd.f32 %v8087, %v8175
        %8177 = vmatmul.bf16.gmra.mxu0 %v5587
        %v8178 = vpop.f32.mrf.mxu0
        %v8179 = vadd.f32 %v8090, %v8178
        %v8180 = vpop.f32.mrf.mxu0
        %v8181 = vadd.f32 %v8092, %v8180
        %8182 = vdwg.mxu0
        %8183 = vmatpush.bf16.msra.mxu0 %v6606
        %8184 = vmatpush.bf16.msra.mxu0 %v6605
        %8185 = vmatpush.bf16.msra.mxu0 %v6604
        %8186 = vmatpush.bf16.msra.mxu0 %v6603
        %8187 = vmatpush.bf16.msra.mxu0 %v6602
        %8188 = vmatpush.bf16.msra.mxu0 %v6601
        %8189 = vmatpush.bf16.msra.mxu0 %v6600
        %8190 = vmatpush.bf16.msra.mxu0 %v6599
        %8191 = vmatmul.bf16.gmra.mxu0 %v5381
        %v8192 = vpop.f32.mrf.mxu0
        %v8193 = vadd.f32 %v8104, %v8192
        %v8194 = vpop.f32.mrf.mxu0
        %v8195 = vadd.f32 %v8106, %v8194
        %8196 = vmatmul.bf16.gmra.mxu0 %v5387
        %v8197 = vpop.f32.mrf.mxu0
        %v8198 = vadd.f32 %v8109, %v8197
        %v8199 = vpop.f32.mrf.mxu0
        %v8200 = vadd.f32 %v8111, %v8199
        %8201 = vmatmul.bf16.gmra.mxu0 %v5393
        %v8202 = vpop.f32.mrf.mxu0
        %v8203 = vadd.f32 %v8114, %v8202
        %v8204 = vpop.f32.mrf.mxu0
        %v8205 = vadd.f32 %v8116, %v8204
        %8206 = vmatmul.bf16.gmra.mxu0 %v5399
        %v8207 = vpop.f32.mrf.mxu0
        %v8208 = vadd.f32 %v8119, %v8207
        %v8209 = vpop.f32.mrf.mxu0
        %v8210 = vadd.f32 %v8121, %v8209
        %8211 = vmatmul.bf16.gmra.mxu0 %v5405
        %v8212 = vpop.f32.mrf.mxu0
        %v8213 = vadd.f32 %v8124, %v8212
        %v8214 = vpop.f32.mrf.mxu0
        %v8215 = vadd.f32 %v8126, %v8214
        %8216 = vmatmul.bf16.gmra.mxu0 %v5411
        %v8217 = vpop.f32.mrf.mxu0
        %v8218 = vadd.f32 %v8129, %v8217
        %v8219 = vpop.f32.mrf.mxu0
        %v8220 = vadd.f32 %v8131, %v8219
        %8221 = vmatmul.bf16.gmra.mxu0 %v5417
        %v8222 = vpop.f32.mrf.mxu0
        %v8223 = vadd.f32 %v8134, %v8222
        %v8224 = vpop.f32.mrf.mxu0
        %v8225 = vadd.f32 %v8136, %v8224
        %8226 = vmatmul.bf16.gmra.mxu0 %v5423
        %v8227 = vpop.f32.mrf.mxu0
        %v8228 = vadd.f32 %v8139, %v8227
        %v8229 = vpop.f32.mrf.mxu0
        %v8230 = vadd.f32 %v8141, %v8229
        %8231 = vmatmul.bf16.gmra.mxu0 %v5429
        %v8232 = vpop.f32.mrf.mxu0
        %v8233 = vadd.f32 %v8144, %v8232
        %v8234 = vpop.f32.mrf.mxu0
        %v8235 = vadd.f32 %v8146, %v8234
        %8236 = vmatmul.bf16.gmra.mxu0 %v5435
        %v8237 = vpop.f32.mrf.mxu0
        %v8238 = vadd.f32 %v8149, %v8237
        %v8239 = vpop.f32.mrf.mxu0
        %v8240 = vadd.f32 %v8151, %v8239
        %8241 = vmatmul.bf16.gmra.mxu0 %v5441
        %v8242 = vpop.f32.mrf.mxu0
        %v8243 = vadd.f32 %v8154, %v8242
        %v8244 = vpop.f32.mrf.mxu0
        %v8245 = vadd.f32 %v8156, %v8244
        %8246 = vmatmul.bf16.gmra.mxu0 %v5447
        %v8247 = vpop.f32.mrf.mxu0
        %v8248 = vadd.f32 %v8159, %v8247
        %v8249 = vpop.f32.mrf.mxu0
        %v8250 = vadd.f32 %v8161, %v8249
        %8251 = vmatmul.bf16.gmra.mxu0 %v5453
        %v8252 = vpop.f32.mrf.mxu0
        %v8253 = vadd.f32 %v8164, %v8252
        %v8254 = vpop.f32.mrf.mxu0
        %v8255 = vadd.f32 %v8166, %v8254
        %8256 = vmatmul.bf16.gmra.mxu0 %v5459
        %v8257 = vpop.f32.mrf.mxu0
        %v8258 = vadd.f32 %v8169, %v8257
        %v8259 = vpop.f32.mrf.mxu0
        %v8260 = vadd.f32 %v8171, %v8259
        %8261 = vmatmul.bf16.gmra.mxu0 %v5543
        %v8262 = vpop.f32.mrf.mxu0
        %v8263 = vadd.f32 %v8174, %v8262
        %v8264 = vpop.f32.mrf.mxu0
        %v8265 = vadd.f32 %v8176, %v8264
        %8266 = vmatmul.bf16.gmra.mxu0 %v5597
        %v8267 = vpop.f32.mrf.mxu0
        %v8268 = vadd.f32 %v8179, %v8267
        %v8269 = vpop.f32.mrf.mxu0
        %v8270 = vadd.f32 %v8181, %v8269
        %8271 = vdwg.mxu0
        %8272 = vmatpush.bf16.msra.mxu0 %v6614
        %8273 = vmatpush.bf16.msra.mxu0 %v6613
        %8274 = vmatpush.bf16.msra.mxu0 %v6612
        %8275 = vmatpush.bf16.msra.mxu0 %v6611
        %8276 = vmatpush.bf16.msra.mxu0 %v6610
        %8277 = vmatpush.bf16.msra.mxu0 %v6609
        %8278 = vmatpush.bf16.msra.mxu0 %v6608
        %8279 = vmatpush.bf16.msra.mxu0 %v6607
        %8280 = vmatmul.bf16.gmra.mxu0 %v5384
        %v8281 = vpop.f32.mrf.mxu0
        %v8282 = vadd.f32 %v8193, %v8281
        %v8283 = vpop.f32.mrf.mxu0
        %v8284 = vadd.f32 %v8195, %v8283
        %8285 = vmatmul.bf16.gmra.mxu0 %v5390
        %v8286 = vpop.f32.mrf.mxu0
        %v8287 = vadd.f32 %v8198, %v8286
        %v8288 = vpop.f32.mrf.mxu0
        %v8289 = vadd.f32 %v8200, %v8288
        %8290 = vmatmul.bf16.gmra.mxu0 %v5396
        %v8291 = vpop.f32.mrf.mxu0
        %v8292 = vadd.f32 %v8203, %v8291
        %v8293 = vpop.f32.mrf.mxu0
        %v8294 = vadd.f32 %v8205, %v8293
        %8295 = vmatmul.bf16.gmra.mxu0 %v5402
        %v8296 = vpop.f32.mrf.mxu0
        %v8297 = vadd.f32 %v8208, %v8296
        %v8298 = vpop.f32.mrf.mxu0
        %v8299 = vadd.f32 %v8210, %v8298
        %8300 = vmatmul.bf16.gmra.mxu0 %v5408
        %v8301 = vpop.f32.mrf.mxu0
        %v8302 = vadd.f32 %v8213, %v8301
        %v8303 = vpop.f32.mrf.mxu0
        %v8304 = vadd.f32 %v8215, %v8303
        %8305 = vmatmul.bf16.gmra.mxu0 %v5414
        %v8306 = vpop.f32.mrf.mxu0
        %v8307 = vadd.f32 %v8218, %v8306
        %v8308 = vpop.f32.mrf.mxu0
        %v8309 = vadd.f32 %v8220, %v8308
        %8310 = vmatmul.bf16.gmra.mxu0 %v5420
        %v8311 = vpop.f32.mrf.mxu0
        %v8312 = vadd.f32 %v8223, %v8311
        %v8313 = vpop.f32.mrf.mxu0
        %v8314 = vadd.f32 %v8225, %v8313
        %8315 = vmatmul.bf16.gmra.mxu0 %v5426
        %v8316 = vpop.f32.mrf.mxu0
        %v8317 = vadd.f32 %v8228, %v8316
        %v8318 = vpop.f32.mrf.mxu0
        %v8319 = vadd.f32 %v8230, %v8318
        %8320 = vmatmul.bf16.gmra.mxu0 %v5432
        %v8321 = vpop.f32.mrf.mxu0
        %v8322 = vadd.f32 %v8233, %v8321
        %v8323 = vpop.f32.mrf.mxu0
        %v8324 = vadd.f32 %v8235, %v8323
        %8325 = vmatmul.bf16.gmra.mxu0 %v5438
        %v8326 = vpop.f32.mrf.mxu0
        %v8327 = vadd.f32 %v8238, %v8326
        %v8328 = vpop.f32.mrf.mxu0
        %v8329 = vadd.f32 %v8240, %v8328
        %8330 = vmatmul.bf16.gmra.mxu0 %v5444
        %v8331 = vpop.f32.mrf.mxu0
        %v8332 = vadd.f32 %v8243, %v8331
        %v8333 = vpop.f32.mrf.mxu0
        %v8334 = vadd.f32 %v8245, %v8333
        %8335 = vmatmul.bf16.gmra.mxu0 %v5450
        %v8336 = vpop.f32.mrf.mxu0
        %v8337 = vadd.f32 %v8248, %v8336
        %v8338 = vpop.f32.mrf.mxu0
        %v8339 = vadd.f32 %v8250, %v8338
        %8340 = vmatmul.bf16.gmra.mxu0 %v5456
        %v8341 = vpop.f32.mrf.mxu0
        %v8342 = vadd.f32 %v8253, %v8341
        %v8343 = vpop.f32.mrf.mxu0
        %v8344 = vadd.f32 %v8255, %v8343
        %8345 = vmatmul.bf16.gmra.mxu0 %v5462
        %v8346 = vpop.f32.mrf.mxu0
        %v8347 = vadd.f32 %v8258, %v8346
        %v8348 = vpop.f32.mrf.mxu0
        %v8349 = vadd.f32 %v8260, %v8348
        %8350 = vmatmul.bf16.gmra.mxu0 %v5546
        %v8351 = vpop.f32.mrf.mxu0
        %v8352 = vadd.f32 %v8263, %v8351
        %v8353 = vpop.f32.mrf.mxu0
        %v8354 = vadd.f32 %v8265, %v8353
        %8355 = vmatmul.bf16.gmra.mxu0 %v5600
        %v8356 = vpop.f32.mrf.mxu0
        %v8357 = vadd.f32 %v8268, %v8356
        %v8358 = vpop.f32.mrf.mxu0
        %v8359 = vadd.f32 %v8270, %v8358
        %8360 = vdwg.mxu0
        %vm8361 = vcmask 15360
        %8362 = vst.msk [vmem:[%s246] sm:$0xff] %vm8361, %v8282
        %8363 = vst.msk [vmem:[%s246 + $0x8] sm:$0xff] %vm8361, %v8284
        %8364 = vst.msk [vmem:[%s246 + $0x10] sm:$0xff] %vm8361, %v8287
        %8365 = vst.msk [vmem:[%s246 + $0x18] sm:$0xff] %vm8361, %v8289
        %8366 = vst.msk [vmem:[%s246 + $0x20] sm:$0xff] %vm8361, %v8292
        %8367 = vst.msk [vmem:[%s246 + $0x28] sm:$0xff] %vm8361, %v8294
        %8368 = vst.msk [vmem:[%s246 + $0x30] sm:$0xff] %vm8361, %v8297
        %8369 = vst.msk [vmem:[%s246 + $0x38] sm:$0xff] %vm8361, %v8299
        %8370 = vst.msk [vmem:[%s246 + $0x40] sm:$0xff] %vm8361, %v8302
        %8371 = vst.msk [vmem:[%s246 + $0x48] sm:$0xff] %vm8361, %v8304
        %8372 = vst.msk [vmem:[%s246 + $0x50] sm:$0xff] %vm8361, %v8307
        %8373 = vst.msk [vmem:[%s246 + $0x58] sm:$0xff] %vm8361, %v8309
        %8374 = vst.msk [vmem:[%s246 + $0x60] sm:$0xff] %vm8361, %v8312
        %8375 = vst.msk [vmem:[%s246 + $0x68] sm:$0xff] %vm8361, %v8314
        %8376 = vst.msk [vmem:[%s246 + $0x70] sm:$0xff] %vm8361, %v8317
        %8377 = vst.msk [vmem:[%s246 + $0x78] sm:$0xff] %vm8361, %v8319
        %8378 = vst.msk [vmem:[%s246 + $0x80] sm:$0xff] %vm8361, %v8322
        %8379 = vst.msk [vmem:[%s246 + $0x88] sm:$0xff] %vm8361, %v8324
        %8380 = vst.msk [vmem:[%s246 + $0x90] sm:$0xff] %vm8361, %v8327
        %8381 = vst.msk [vmem:[%s246 + $0x98] sm:$0xff] %vm8361, %v8329
        %8382 = vst.msk [vmem:[%s246 + $0xa0] sm:$0xff] %vm8361, %v8332
        %8383 = vst.msk [vmem:[%s246 + $0xa8] sm:$0xff] %vm8361, %v8334
        %8384 = vst.msk [vmem:[%s246 + $0xb0] sm:$0xff] %vm8361, %v8337
        %8385 = vst.msk [vmem:[%s246 + $0xb8] sm:$0xff] %vm8361, %v8339
        %8386 = vst.msk [vmem:[%s246 + $0xc0] sm:$0xff] %vm8361, %v8342
        %8387 = vst.msk [vmem:[%s246 + $0xc8] sm:$0xff] %vm8361, %v8344
        %8388 = vst.msk [vmem:[%s246 + $0xd0] sm:$0xff] %vm8361, %v8347
        %8389 = vst.msk [vmem:[%s246 + $0xd8] sm:$0xff] %vm8361, %v8349
        %8390 = vst.msk [vmem:[%s246 + $0xe0] sm:$0xff] %vm8361, %v8352
        %8391 = vst.msk [vmem:[%s246 + $0xe8] sm:$0xff] %vm8361, %v8354
        %8392 = vst.msk [vmem:[%s246 + $0xf0] sm:$0xff] %vm8361, %v8357
        %8393 = vst.msk [vmem:[%s246 + $0xf8] sm:$0xff] %vm8361, %v8359
        %p8394 = scmp.lt.s32.totalorder %s19, 1
        %s8395 = scalar_select %p8394, %s19, 1
        %s8396 = smul.addr %s8395, 32
        %s8397 = smul.addr %s8396, 8
        %s8398 = scalar_lea.vmem %s5, %s8397
        // Predicated region
        $region45: #{tpu_custom_call.1} parent=39 // pred_check
          %p8399 = pneg %p147
        $region46: #{tpu_custom_call.1} parent=39 // pred_check_branch
          %8401 = sbr.rel (%p8399) target = $region48
        $region47: #{tpu_custom_call.1} parent=39 // pred_region
          _
        $region48: #{tpu_custom_call.1} parent=39 // pred_fallthru
          _
      $region40: #{tpu_custom_call.1} parent=5 // pred_fallthru
        _
      %p8402 = scmp.le.s32.totalorder 2, %s14
      // Predicated region
      $region49: #{tpu_custom_call.1} parent=5 // pred_check
        %p8403 = pneg %p8402
      $region50: #{tpu_custom_call.1} parent=5 // pred_check_branch
        %8405 = sbr.rel (%p8403) target = $region52
      $region51: #{tpu_custom_call.1} parent=5 // pred_region
        %s8406 = ssub.s32 %s14, 2
        // Predicated region
        $region53: #{tpu_custom_call.1} parent=51 // pred_check
          %p8407 = pneg %p153
        $region54: #{tpu_custom_call.1} parent=51 // pred_check_branch
          %8409 = sbr.rel (%p8407) target = $region56
        $region55: #{tpu_custom_call.1} parent=51 // pred_region
          %p8410 = scmp.lt.s32.totalorder %s20, 1
          %s8411 = scalar_select %p8410, %s20, 1
          %s8412 = smul.addr %s8411, 32
          %s8413 = smul.addr %s8412, 8
          %s8414 = scalar_lea.vmem %s5, %s8413
        $region56: #{tpu_custom_call.1} parent=51 // pred_fallthru
          _
      $region52: #{tpu_custom_call.1} parent=5 // pred_fallthru
        _
    $region6: #{tpu_custom_call.1} parent=1 // loop_footer
      %s18 = sadd.s32 1, %s14
    $region7: #{tpu_custom_call.1} parent=1 // loop_footer_branch
      %13 = sbr.rel target = $region3
    $region8: #{tpu_custom_call.1} parent=1 // loop_exit
      _
    %8415 = vsyncpa [#allocation5], 1
    %s8416 = scalar_lea.sflag [#allocation5], 1
    %8417 = vsyncpa %s8416, 1

</llo_original>
